<compile_context>
chip_gen: v5e
topology: v5e:2x2
jax: 0.10.0
libtpu: 0.0.40
codegen_flags: <defaults>
</compile_context>

<pallas_src>
import functools

import jax
import jax.numpy as jnp
from jax import lax
from jax.experimental import pallas as pl
from jax.experimental.pallas import tpu as pltpu

LANE = 128
F32 = jnp.float32


# ------------------------------- Pallas kernel -------------------------------

def _pool_rows(conv, width, bias):
    """2x2/2 max-pool + bias + ReLU on "full-stride" conv rows.

    conv : (CL, C) valid-conv rows at full row stride `width` (row r corresponds
           to spatial (oh, ow) with r = oh*width + ow relative to chunk start).
    Returns (CL - width - 1, C); row 2*pw holds relu(maxpool(2x2) + bias) for
    pooled column pw.  Odd / tail rows are never selected by the callers.
    """
    m1 = jnp.maximum(conv[:-1, :], conv[1:, :])          # max over (r, r+1)
    m2 = jnp.maximum(m1[:-width, :], m1[width:, :])      # + (r+W, r+W+1)
    return jnp.maximum(m2 + bias, 0.0)


def _cnn_fused_kernel(xp_ref, w1_ref, b1_ref, w2_ref, b2_ref, w3_ref, b3_ref,
                      f1_ref, fb1_ref, f2_ref, fb2_ref, f3_ref, fb3_ref,
                      out_ref,
                      act1_ref, act2_ref, acc2_ref, sel_ref, fcin_ref, *, nb):
    # conv3's tap slices read two rows past the 6x6 act2 image; keep them finite.
    act2_ref[36:40, :] = jnp.zeros((4, LANE), F32)

    b1 = b1_ref[...]
    b2 = b2_ref[...]
    b3 = b3_ref[...]

    def per_image(b, carry):
        # ---- conv1 (im2col, single K=32 tap) + pool + ReLU : 32x32x3 -> 15x15x32
        for ph in range(15):
            conv = jnp.dot(xp_ref[b, pl.ds(64 * ph, 64), :], w1_ref[...],
                           preferred_element_type=F32)            # (64, 128)
            sel_ref[0:31, :] = _pool_rows(conv, 32, b1)
            act1_ref[15 * ph:15 * ph + 15, :] = sel_ref[pl.ds(0, 15, stride=2), :]

        # ---- conv2 (9 taps, register-accumulated M tiles) : 15x15x32 -> 13x13x64
        for m0, mlen in ((0, 96), (96, 88)):
            conv = jnp.dot(act1_ref[m0:m0 + mlen, :], w2_ref[0],
                           preferred_element_type=F32)
            for k in range(1, 9):
                kh, kw = divmod(k, 3)
                off = m0 + kh * 15 + kw
                conv = conv + jnp.dot(act1_ref[off:off + mlen, :], w2_ref[k],
                                      preferred_element_type=F32)
            acc2_ref[m0:m0 + mlen, :] = conv                      # one write pass
        # pool + ReLU : 13x13 -> 6x6
        for ph in range(6):
            chunk = acc2_ref[30 * ph:30 * ph + 32, :]
            sel_ref[0:16, :] = _pool_rows(chunk, 15, b2)
            act2_ref[6 * ph:6 * ph + 6, :] = sel_ref[pl.ds(0, 6, stride=2), :]

        # ---- conv3 (9 taps, fully register resident) + pool : 6x6x64 -> 2x2x128
        conv = jnp.dot(act2_ref[0:24, :], w3_ref[0], preferred_element_type=F32)
        for k in range(1, 9):
            kh, kw = divmod(k, 3)
            off = kh * 6 + kw
            conv = conv + jnp.dot(act2_ref[off:off + 24, :], w3_ref[k],
                                  preferred_element_type=F32)
        pooled = _pool_rows(conv, 6, b3)         # rows {0,2,12,14} = the 2x2 outputs
        for ph in range(2):
            for pw in range(2):
                r = 12 * ph + 2 * pw
                fcin_ref[2 * ph + pw, pl.ds(b, 1), :] = pooled[r:r + 1, :]
        return carry

    lax.fori_loop(0, nb, per_image, 0)

    # ---- fc1 + ReLU + fc2 + ReLU + fc3 + log_softmax on the whole batch tile.
    h = jnp.dot(fcin_ref[0], f1_ref[0], preferred_element_type=F32)
    for hw in range(1, 4):
        h = h + jnp.dot(fcin_ref[hw], f1_ref[hw], preferred_element_type=F32)
    h = jnp.maximum(h + fb1_ref[...], 0.0)
    h = jnp.maximum(jnp.dot(h, f2_ref[...], preferred_element_type=F32)
                    + fb2_ref[...], 0.0)
    logits = jnp.dot(h, f3_ref[...], preferred_element_type=F32) + fb3_ref[...]
    m = jnp.max(logits, axis=-1, keepdims=True)
    s = logits - m
    lse = jnp.log(jnp.sum(jnp.exp(s), axis=-1, keepdims=True))
    out_ref[...] = (s - lse).astype(out_ref.dtype)


# ------------------------------ Pallas wrapper --------------------------------

def _pack_conv1_patches(x):
    """NCHW (B,3,32,32) -> (B, 1024, 32); row h*32+w holds the 3x3x3 patch at
    (h, w), zero-padded past the image edge (those rows are never selected)."""
    b = x.shape[0]
    xn = jnp.transpose(x, (0, 2, 3, 1))                         # (B,32,32,3)
    xn = jnp.pad(xn, ((0, 0), (0, 2), (0, 2), (0, 0)))          # (B,34,34,3)
    patches = [xn[:, kh:kh + 32, kw:kw + 32, :]
               for kh in range(3) for kw in range(3)]
    xp = jnp.stack(patches, axis=3).reshape(b, 32 * 32, 27)     # (kh*3+kw)*3 + c
    return jnp.pad(xp, ((0, 0), (0, 0), (0, 5)))                # K 27 -> 32


@jax.jit
def cnn_classifier_forward(prep, x):
    # x: (B, 3, 32, 32) NCHW float32, same as the PyTorch module.
    B = x.shape[0]
    nb = min(8, B)
    bpad = ((B + nb - 1) // nb) * nb
    xp = _pack_conv1_patches(x)
    if bpad != B:
        xp = jnp.pad(xp, ((0, bpad - B), (0, 0), (0, 0)))

    kernel = functools.partial(_cnn_fused_kernel, nb=nb)
    rep2 = lambda i: (0, 0)
    rep3 = lambda i: (0, 0, 0)
    out = pl.pallas_call(
        kernel,
        out_shape=jax.ShapeDtypeStruct((bpad, LANE), F32),
        grid=(bpad // nb,),
        in_specs=[
            pl.BlockSpec((nb, 1024, 32), lambda i: (i, 0, 0)),   # packed input
            pl.BlockSpec((32, LANE), rep2),                      # conv1 w (im2col)
            pl.BlockSpec((1, LANE), rep2),                       # conv1 b
            pl.BlockSpec((9, LANE, LANE), rep3),                 # conv2 w
            pl.BlockSpec((1, LANE), rep2),                       # conv2 b
            pl.BlockSpec((9, LANE, LANE), rep3),                 # conv3 w
            pl.BlockSpec((1, LANE), rep2),                       # conv3 b
            pl.BlockSpec((4, LANE, LANE), rep3),                 # fc1 w (per hw pos)
            pl.BlockSpec((1, LANE), rep2),                       # fc1 b
            pl.BlockSpec((LANE, LANE), rep2),                    # fc2 w
            pl.BlockSpec((1, LANE), rep2),                       # fc2 b
            pl.BlockSpec((LANE, LANE), rep2),                    # fc3 w
            pl.BlockSpec((1, LANE), rep2),                       # fc3 b (-1e30 pad)
        ],
        out_specs=pl.BlockSpec((nb, LANE), lambda i: (i, 0)),
        scratch_shapes=[
            pltpu.VMEM((232, LANE), F32),    # act1: conv1 pooled 15x15, row h*15+w
            pltpu.VMEM((40, LANE), F32),     # act2: conv2 pooled 6x6,   row h*6+w
            pltpu.VMEM((184, LANE), F32),    # acc2: conv2 full-stride rows
            pltpu.VMEM((32, LANE), F32),     # sel : pooled-row decimation staging
            pltpu.VMEM((4, nb, LANE), F32),  # fcin: conv3 pooled per spatial pos
        ],
        compiler_params=pltpu.CompilerParams(
            dimension_semantics=("parallel",),
            vmem_limit_bytes=48 * 1024 * 1024),
    )(xp, prep["conv1_w"], prep["conv1_b"], prep["conv2_w"], prep["conv2_b"],
      prep["conv3_w"], prep["conv3_b"], prep["fc1_w"], prep["fc1_b"],
      prep["fc2_w"], prep["fc2_b"], prep["fc3_w"], prep["fc3_b"])
    return out[:B, :10]


# ------------------------------ Parameter setup -------------------------------

def _uniform(key, shape, bound):
    return jax.random.uniform(key, shape, jnp.float32, -bound, bound)


def init_params(key):
    """PyTorch-layout params with default U(-1/sqrt(fan_in), 1/sqrt(fan_in)) init."""
    ks = jax.random.split(key, 12)
    params = {}

    def conv_init(kw_, kb_, cout, cin, k):
        bound = 1.0 / jnp.sqrt(cin * k * k)
        return _uniform(kw_, (cout, cin, k, k), bound), _uniform(kb_, (cout,), bound)

    def fc_init(kw_, kb_, n_out, n_in):
        bound = 1.0 / jnp.sqrt(n_in)
        return _uniform(kw_, (n_out, n_in), bound), _uniform(kb_, (n_out,), bound)

    params["conv1_w"], params["conv1_b"] = conv_init(ks[0], ks[1], 32, 3, 3)
    params["conv2_w"], params["conv2_b"] = conv_init(ks[2], ks[3], 64, 32, 3)
    params["conv3_w"], params["conv3_b"] = conv_init(ks[4], ks[5], 128, 64, 3)
    params["fc1_w"], params["fc1_b"] = fc_init(ks[6], ks[7], 120, 128 * 2 * 2)
    params["fc2_w"], params["fc2_b"] = fc_init(ks[8], ks[9], 84, 120)
    params["fc3_w"], params["fc3_b"] = fc_init(ks[10], ks[11], 10, 84)
    return params


def prepare_params(p):
    """One-time repack of PyTorch-layout params into kernel layouts (lane-padded)."""
    def conv_prep(w, b):
        cout, cin, kh, kw = w.shape
        wk = jnp.transpose(w, (2, 3, 1, 0)).reshape(kh * kw, cin, cout)
        wk = jnp.pad(wk, ((0, 0), (0, LANE - cin), (0, LANE - cout)))
        bk = jnp.pad(b, (0, LANE - cout)).reshape(1, LANE)
        return wk, bk

    prep = {}
    # conv1: whole 3x3x3 patch folded into the contraction (rows = (kh*3+kw)*3+c).
    w1 = jnp.transpose(p["conv1_w"], (2, 3, 1, 0)).reshape(27, 32)
    prep["conv1_w"] = jnp.pad(w1, ((0, 5), (0, LANE - 32)))          # (32, 128)
    prep["conv1_b"] = jnp.pad(p["conv1_b"], (0, LANE - 32)).reshape(1, LANE)
    prep["conv2_w"], prep["conv2_b"] = conv_prep(p["conv2_w"], p["conv2_b"])
    prep["conv3_w"], prep["conv3_b"] = conv_prep(p["conv3_w"], p["conv3_b"])

    # fc1 as 4 per-spatial-position (128x128) matmuls: wf1[hw, c, out].
    # (PyTorch flattens NCHW -> index c*4 + hw; our activation is per (hw, c).)
    w1f = jnp.transpose(p["fc1_w"].reshape(120, LANE, 4), (2, 1, 0))  # (4,128,120)
    prep["fc1_w"] = jnp.pad(w1f, ((0, 0), (0, 0), (0, LANE - 120)))
    prep["fc1_b"] = jnp.pad(p["fc1_b"], (0, LANE - 120)).reshape(1, LANE)
    prep["fc2_w"] = jnp.pad(p["fc2_w"].T, ((0, LANE - 120), (0, LANE - 84)))
    prep["fc2_b"] = jnp.pad(p["fc2_b"], (0, LANE - 84)).reshape(1, LANE)
    prep["fc3_w"] = jnp.pad(p["fc3_w"].T, ((0, LANE - 84), (0, LANE - 10)))
    # Padded logit columns get a huge negative bias so log_softmax ignores them.
    prep["fc3_b"] = jnp.concatenate(
        [p["fc3_b"], jnp.full((LANE - 10,), -1e30, jnp.float32)]).reshape(1, LANE)
    return prep


# ------------------------- Pure-XLA reference (checking) ----------------------

def reference_forward(params, x):
    """Straight XLA implementation of the PyTorch module, for validation."""
    def conv(v, w, b):
        out = lax.conv_general_dilated(
            v, w, window_strides=(1, 1), padding="VALID",
            dimension_numbers=("NCHW", "OIHW", "NCHW"))
        return out + b.reshape(1, -1, 1, 1)

    def pool_relu(v):
        B, C, H, W = v.shape
        PH, PW = H // 2, W // 2
        v = v[:, :, :2 * PH, :2 * PW].reshape(B, C, PH, 2, PW, 2).max(axis=(3, 5))
        return jnp.maximum(v, 0.0)

    h = pool_relu(conv(x, params["conv1_w"], params["conv1_b"]))
    h = pool_relu(conv(h, params["conv2_w"], params["conv2_b"]))
    h = pool_relu(conv(h, params["conv3_w"], params["conv3_b"]))
    h = h.reshape(h.shape[0], -1)
    h = jnp.maximum(h @ params["fc1_w"].T + params["fc1_b"], 0.0)
    h = jnp.maximum(h @ params["fc2_w"].T + params["fc2_b"], 0.0)
    logits = h @ params["fc3_w"].T + params["fc3_b"]
    return jax.nn.log_softmax(logits, axis=-1)


# ----------------------------------- Main -------------------------------------

if __name__ == "__main__":
    key = jax.random.PRNGKey(0)
    k_params, k_x = jax.random.split(key)
    params = init_params(k_params)       # PyTorch-layout parameters
    prep = prepare_params(params)        # one-time repack for the fused kernel
    # CIFAR-sized input is required by the 128*2*2 flatten; keep batch small.
    x = jax.random.normal(k_x, (2, 3, 32, 32), dtype=jnp.float32)

    out = jax.block_until_ready(cnn_classifier_forward(prep, x))

    assert out.shape == (2, 10)
    # log_softmax rows must sum (in prob space) to ~1.
    assert bool(jnp.allclose(jnp.exp(out).sum(-1), 1.0, atol=1e-4))
    # Validate against the pure-XLA reference of the PyTorch module.
    ref = reference_forward(params, x)
    max_err = float(jnp.max(jnp.abs(out - ref)))
    assert bool(jnp.allclose(out, ref, atol=2e-3, rtol=2e-3)), max_err
    print("KERNEL_OK")
</pallas_src>

<mosaic_0001>
module attributes {stable_mosaic.version = 11 : i64} {
  func.func @_cnn_fused_kernel(%arg0: i32, %arg1: memref<2x1024x32xf32, #tpu.memory_space<vmem>>, %arg2: memref<32x128xf32, #tpu.memory_space<vmem>>, %arg3: memref<1x128xf32, #tpu.memory_space<vmem>>, %arg4: memref<9x128x128xf32, #tpu.memory_space<vmem>>, %arg5: memref<1x128xf32, #tpu.memory_space<vmem>>, %arg6: memref<9x128x128xf32, #tpu.memory_space<vmem>>, %arg7: memref<1x128xf32, #tpu.memory_space<vmem>>, %arg8: memref<4x128x128xf32, #tpu.memory_space<vmem>>, %arg9: memref<1x128xf32, #tpu.memory_space<vmem>>, %arg10: memref<128x128xf32, #tpu.memory_space<vmem>>, %arg11: memref<1x128xf32, #tpu.memory_space<vmem>>, %arg12: memref<128x128xf32, #tpu.memory_space<vmem>>, %arg13: memref<1x128xf32, #tpu.memory_space<vmem>>, %arg14: memref<2x128xf32, #tpu.memory_space<vmem>>, %arg15: memref<232x128xf32, #tpu.memory_space<vmem>>, %arg16: memref<40x128xf32, #tpu.memory_space<vmem>>, %arg17: memref<184x128xf32, #tpu.memory_space<vmem>>, %arg18: memref<32x128xf32, #tpu.memory_space<vmem>>, %arg19: memref<4x2x128xf32, #tpu.memory_space<vmem>>) attributes {dimension_semantics = [#tpu.dimension_semantics<parallel>], iteration_bounds = array<i64: 1>, scalar_prefetch = 0 : i64, scratch_operands = 5 : i64, tpu.core_type = #tpu.core_type<tc>, window_params = [{transform_indices = @transform_0, window_bounds = array<i64: 2, 1024, 32>}, {pipeline_mode = #tpu.pipeline_mode<synchronous>, transform_indices = @transform_1, window_bounds = array<i64: 32, 128>}, {pipeline_mode = #tpu.pipeline_mode<synchronous>, transform_indices = @transform_2, window_bounds = array<i64: 1, 128>}, {pipeline_mode = #tpu.pipeline_mode<synchronous>, transform_indices = @transform_3, window_bounds = array<i64: 9, 128, 128>}, {pipeline_mode = #tpu.pipeline_mode<synchronous>, transform_indices = @transform_4, window_bounds = array<i64: 1, 128>}, {pipeline_mode = #tpu.pipeline_mode<synchronous>, transform_indices = @transform_5, window_bounds = array<i64: 9, 128, 128>}, {pipeline_mode = #tpu.pipeline_mode<synchronous>, transform_indices = @transform_6, window_bounds = array<i64: 1, 128>}, {pipeline_mode = #tpu.pipeline_mode<synchronous>, transform_indices = @transform_7, window_bounds = array<i64: 4, 128, 128>}, {pipeline_mode = #tpu.pipeline_mode<synchronous>, transform_indices = @transform_8, window_bounds = array<i64: 1, 128>}, {pipeline_mode = #tpu.pipeline_mode<synchronous>, transform_indices = @transform_9, window_bounds = array<i64: 128, 128>}, {pipeline_mode = #tpu.pipeline_mode<synchronous>, transform_indices = @transform_10, window_bounds = array<i64: 1, 128>}, {pipeline_mode = #tpu.pipeline_mode<synchronous>, transform_indices = @transform_11, window_bounds = array<i64: 128, 128>}, {pipeline_mode = #tpu.pipeline_mode<synchronous>, transform_indices = @transform_12, window_bounds = array<i64: 1, 128>}, {transform_indices = @transform_13, window_bounds = array<i64: 2, 128>}]} {
    %cst = arith.constant 0.000000e+00 : f32
    %0 = vector.broadcast %cst : f32 to vector<4x128xf32>
    %c36 = arith.constant 36 : index
    %c0 = arith.constant 0 : index
    %1 = vector.load %arg16[%c36, %c0] : memref<40x128xf32, #tpu.memory_space<vmem>>, vector<4x128xf32>
    tpu.vector_store %arg16[%c36, %c0], %0 {strides = array<i32>} : memref<40x128xf32, #tpu.memory_space<vmem>>, vector<4x128xf32>,
    %c0_0 = arith.constant 0 : index
    %c0_1 = arith.constant 0 : index
    %2 = vector.load %arg3[%c0_0, %c0_1] : memref<1x128xf32, #tpu.memory_space<vmem>>, vector<1x128xf32>
    %c0_2 = arith.constant 0 : index
    %c0_3 = arith.constant 0 : index
    %3 = vector.load %arg5[%c0_2, %c0_3] : memref<1x128xf32, #tpu.memory_space<vmem>>, vector<1x128xf32>
    %c0_4 = arith.constant 0 : index
    %c0_5 = arith.constant 0 : index
    %4 = vector.load %arg7[%c0_4, %c0_5] : memref<1x128xf32, #tpu.memory_space<vmem>>, vector<1x128xf32>
    %c0_i32 = arith.constant 0 : i32
    %c2_i32 = arith.constant 2 : i32
    %5 = arith.addi %c0_i32, %c2_i32 : i32
    %c1_i32 = arith.constant 1 : i32
    scf.for %arg20 = %c0_i32 to %5 step %c1_i32  : i32 {
      %57 = arith.index_cast %arg20 : i32 to index
      %c0_50 = arith.constant 0 : index
      %c0_51 = arith.constant 0 : index
      %58 = vector.load %arg1[%57, %c0_50, %c0_51] : memref<2x1024x32xf32, #tpu.memory_space<vmem>>, vector<1x64x32xf32>
      %59 = vector.shape_cast %58 : vector<1x64x32xf32> to vector<64x32xf32>
      %c0_52 = arith.constant 0 : index
      %c0_53 = arith.constant 0 : index
      %60 = vector.load %arg2[%c0_52, %c0_53] : memref<32x128xf32, #tpu.memory_space<vmem>>, vector<32x128xf32>
      %cst_54 = arith.constant dense<0.000000e+00> : vector<64x128xf32>
      %61 = tpu.matmul %59, %60, %cst_54 {dimension_numbers = #tpu.dot_dimension_numbers<[1], [0], [0], [1], [0, 0, 1, 1], [], []>} : vector<64x32xf32>, vector<32x128xf32>, vector<64x128xf32> -> vector<64x128xf32>
      %62 = vector.extract_strided_slice %61 {offsets = [0, 0], sizes = [63, 128], strides = [1, 1]} : vector<64x128xf32> to vector<63x128xf32>
      %63 = vector.extract_strided_slice %61 {offsets = [1, 0], sizes = [63, 128], strides = [1, 1]} : vector<64x128xf32> to vector<63x128xf32>
      %64 = arith.maximumf %62, %63 : vector<63x128xf32>
      %65 = vector.extract_strided_slice %64 {offsets = [0, 0], sizes = [31, 128], strides = [1, 1]} : vector<63x128xf32> to vector<31x128xf32>
      %66 = vector.extract_strided_slice %64 {offsets = [32, 0], sizes = [31, 128], strides = [1, 1]} : vector<63x128xf32> to vector<31x128xf32>
      %67 = arith.maximumf %65, %66 : vector<31x128xf32>
      %68 = vector.broadcast %2 : vector<1x128xf32> to vector<31x128xf32>
      %69 = arith.addf %67, %68 : vector<31x128xf32>
      %cst_55 = arith.constant 0.000000e+00 : f32
      %70 = vector.broadcast %cst_55 : f32 to vector<31x128xf32>
      %71 = arith.maximumf %69, %70 : vector<31x128xf32>
      %c0_56 = arith.constant 0 : index
      %c0_57 = arith.constant 0 : index
      %72 = vector.load %arg18[%c0_56, %c0_57] : memref<32x128xf32, #tpu.memory_space<vmem>>, vector<31x128xf32>
      tpu.vector_store %arg18[%c0_56, %c0_57], %71 {strides = array<i32>} : memref<32x128xf32, #tpu.memory_space<vmem>>, vector<31x128xf32>,
      %c0_58 = arith.constant 0 : index
      %c0_59 = arith.constant 0 : index
      %73 = tpu.strided_load %arg18[%c0_58, %c0_59] {strides = array<i32: 2, 1>} : memref<32x128xf32, #tpu.memory_space<vmem>>, vector<15x128xf32>
      %c0_60 = arith.constant 0 : index
      %c0_61 = arith.constant 0 : index
      %74 = vector.load %arg15[%c0_60, %c0_61] : memref<232x128xf32, #tpu.memory_space<vmem>>, vector<15x128xf32>
      tpu.vector_store %arg15[%c0_60, %c0_61], %73 {strides = array<i32>} : memref<232x128xf32, #tpu.memory_space<vmem>>, vector<15x128xf32>,
      %75 = arith.index_cast %arg20 : i32 to index
      %c64 = arith.constant 64 : index
      %c0_62 = arith.constant 0 : index
      %76 = vector.load %arg1[%75, %c64, %c0_62] : memref<2x1024x32xf32, #tpu.memory_space<vmem>>, vector<1x64x32xf32>
      %77 = vector.shape_cast %76 : vector<1x64x32xf32> to vector<64x32xf32>
      %c0_63 = arith.constant 0 : index
      %c0_64 = arith.constant 0 : index
      %78 = vector.load %arg2[%c0_63, %c0_64] : memref<32x128xf32, #tpu.memory_space<vmem>>, vector<32x128xf32>
      %cst_65 = arith.constant dense<0.000000e+00> : vector<64x128xf32>
      %79 = tpu.matmul %77, %78, %cst_65 {dimension_numbers = #tpu.dot_dimension_numbers<[1], [0], [0], [1], [0, 0, 1, 1], [], []>} : vector<64x32xf32>, vector<32x128xf32>, vector<64x128xf32> -> vector<64x128xf32>
      %80 = vector.extract_strided_slice %79 {offsets = [0, 0], sizes = [63, 128], strides = [1, 1]} : vector<64x128xf32> to vector<63x128xf32>
      %81 = vector.extract_strided_slice %79 {offsets = [1, 0], sizes = [63, 128], strides = [1, 1]} : vector<64x128xf32> to vector<63x128xf32>
      %82 = arith.maximumf %80, %81 : vector<63x128xf32>
      %83 = vector.extract_strided_slice %82 {offsets = [0, 0], sizes = [31, 128], strides = [1, 1]} : vector<63x128xf32> to vector<31x128xf32>
      %84 = vector.extract_strided_slice %82 {offsets = [32, 0], sizes = [31, 128], strides = [1, 1]} : vector<63x128xf32> to vector<31x128xf32>
      %85 = arith.maximumf %83, %84 : vector<31x128xf32>
      %86 = vector.broadcast %2 : vector<1x128xf32> to vector<31x128xf32>
      %87 = arith.addf %85, %86 : vector<31x128xf32>
      %cst_66 = arith.constant 0.000000e+00 : f32
      %88 = vector.broadcast %cst_66 : f32 to vector<31x128xf32>
      %89 = arith.maximumf %87, %88 : vector<31x128xf32>
      %c0_67 = arith.constant 0 : index
      %c0_68 = arith.constant 0 : index
      %90 = vector.load %arg18[%c0_67, %c0_68] : memref<32x128xf32, #tpu.memory_space<vmem>>, vector<31x128xf32>
      tpu.vector_store %arg18[%c0_67, %c0_68], %89 {strides = array<i32>} : memref<32x128xf32, #tpu.memory_space<vmem>>, vector<31x128xf32>,
      %c0_69 = arith.constant 0 : index
      %c0_70 = arith.constant 0 : index
      %91 = tpu.strided_load %arg18[%c0_69, %c0_70] {strides = array<i32: 2, 1>} : memref<32x128xf32, #tpu.memory_space<vmem>>, vector<15x128xf32>
      %c15 = arith.constant 15 : index
      %c0_71 = arith.constant 0 : index
      %92 = vector.load %arg15[%c15, %c0_71] : memref<232x128xf32, #tpu.memory_space<vmem>>, vector<15x128xf32>
      tpu.vector_store %arg15[%c15, %c0_71], %91 {strides = array<i32>} : memref<232x128xf32, #tpu.memory_space<vmem>>, vector<15x128xf32>,
      %93 = arith.index_cast %arg20 : i32 to index
      %c128 = arith.constant 128 : index
      %c0_72 = arith.constant 0 : index
      %94 = vector.load %arg1[%93, %c128, %c0_72] : memref<2x1024x32xf32, #tpu.memory_space<vmem>>, vector<1x64x32xf32>
      %95 = vector.shape_cast %94 : vector<1x64x32xf32> to vector<64x32xf32>
      %c0_73 = arith.constant 0 : index
      %c0_74 = arith.constant 0 : index
      %96 = vector.load %arg2[%c0_73, %c0_74] : memref<32x128xf32, #tpu.memory_space<vmem>>, vector<32x128xf32>
      %cst_75 = arith.constant dense<0.000000e+00> : vector<64x128xf32>
      %97 = tpu.matmul %95, %96, %cst_75 {dimension_numbers = #tpu.dot_dimension_numbers<[1], [0], [0], [1], [0, 0, 1, 1], [], []>} : vector<64x32xf32>, vector<32x128xf32>, vector<64x128xf32> -> vector<64x128xf32>
      %98 = vector.extract_strided_slice %97 {offsets = [0, 0], sizes = [63, 128], strides = [1, 1]} : vector<64x128xf32> to vector<63x128xf32>
      %99 = vector.extract_strided_slice %97 {offsets = [1, 0], sizes = [63, 128], strides = [1, 1]} : vector<64x128xf32> to vector<63x128xf32>
      %100 = arith.maximumf %98, %99 : vector<63x128xf32>
      %101 = vector.extract_strided_slice %100 {offsets = [0, 0], sizes = [31, 128], strides = [1, 1]} : vector<63x128xf32> to vector<31x128xf32>
      %102 = vector.extract_strided_slice %100 {offsets = [32, 0], sizes = [31, 128], strides = [1, 1]} : vector<63x128xf32> to vector<31x128xf32>
      %103 = arith.maximumf %101, %102 : vector<31x128xf32>
      %104 = vector.broadcast %2 : vector<1x128xf32> to vector<31x128xf32>
      %105 = arith.addf %103, %104 : vector<31x128xf32>
      %cst_76 = arith.constant 0.000000e+00 : f32
      %106 = vector.broadcast %cst_76 : f32 to vector<31x128xf32>
      %107 = arith.maximumf %105, %106 : vector<31x128xf32>
      %c0_77 = arith.constant 0 : index
      %c0_78 = arith.constant 0 : index
      %108 = vector.load %arg18[%c0_77, %c0_78] : memref<32x128xf32, #tpu.memory_space<vmem>>, vector<31x128xf32>
      tpu.vector_store %arg18[%c0_77, %c0_78], %107 {strides = array<i32>} : memref<32x128xf32, #tpu.memory_space<vmem>>, vector<31x128xf32>,
      %c0_79 = arith.constant 0 : index
      %c0_80 = arith.constant 0 : index
      %109 = tpu.strided_load %arg18[%c0_79, %c0_80] {strides = array<i32: 2, 1>} : memref<32x128xf32, #tpu.memory_space<vmem>>, vector<15x128xf32>
      %c30 = arith.constant 30 : index
      %c0_81 = arith.constant 0 : index
      %110 = vector.load %arg15[%c30, %c0_81] : memref<232x128xf32, #tpu.memory_space<vmem>>, vector<15x128xf32>
      tpu.vector_store %arg15[%c30, %c0_81], %109 {strides = array<i32>} : memref<232x128xf32, #tpu.memory_space<vmem>>, vector<15x128xf32>,
      %111 = arith.index_cast %arg20 : i32 to index
      %c192 = arith.constant 192 : index
      %c0_82 = arith.constant 0 : index
      %112 = vector.load %arg1[%111, %c192, %c0_82] : memref<2x1024x32xf32, #tpu.memory_space<vmem>>, vector<1x64x32xf32>
      %113 = vector.shape_cast %112 : vector<1x64x32xf32> to vector<64x32xf32>
      %c0_83 = arith.constant 0 : index
      %c0_84 = arith.constant 0 : index
      %114 = vector.load %arg2[%c0_83, %c0_84] : memref<32x128xf32, #tpu.memory_space<vmem>>, vector<32x128xf32>
      %cst_85 = arith.constant dense<0.000000e+00> : vector<64x128xf32>
      %115 = tpu.matmul %113, %114, %cst_85 {dimension_numbers = #tpu.dot_dimension_numbers<[1], [0], [0], [1], [0, 0, 1, 1], [], []>} : vector<64x32xf32>, vector<32x128xf32>, vector<64x128xf32> -> vector<64x128xf32>
      %116 = vector.extract_strided_slice %115 {offsets = [0, 0], sizes = [63, 128], strides = [1, 1]} : vector<64x128xf32> to vector<63x128xf32>
      %117 = vector.extract_strided_slice %115 {offsets = [1, 0], sizes = [63, 128], strides = [1, 1]} : vector<64x128xf32> to vector<63x128xf32>
      %118 = arith.maximumf %116, %117 : vector<63x128xf32>
      %119 = vector.extract_strided_slice %118 {offsets = [0, 0], sizes = [31, 128], strides = [1, 1]} : vector<63x128xf32> to vector<31x128xf32>
      %120 = vector.extract_strided_slice %118 {offsets = [32, 0], sizes = [31, 128], strides = [1, 1]} : vector<63x128xf32> to vector<31x128xf32>
      %121 = arith.maximumf %119, %120 : vector<31x128xf32>
      %122 = vector.broadcast %2 : vector<1x128xf32> to vector<31x128xf32>
      %123 = arith.addf %121, %122 : vector<31x128xf32>
      %cst_86 = arith.constant 0.000000e+00 : f32
      %124 = vector.broadcast %cst_86 : f32 to vector<31x128xf32>
      %125 = arith.maximumf %123, %124 : vector<31x128xf32>
      %c0_87 = arith.constant 0 : index
      %c0_88 = arith.constant 0 : index
      %126 = vector.load %arg18[%c0_87, %c0_88] : memref<32x128xf32, #tpu.memory_space<vmem>>, vector<31x128xf32>
      tpu.vector_store %arg18[%c0_87, %c0_88], %125 {strides = array<i32>} : memref<32x128xf32, #tpu.memory_space<vmem>>, vector<31x128xf32>,
      %c0_89 = arith.constant 0 : index
      %c0_90 = arith.constant 0 : index
      %127 = tpu.strided_load %arg18[%c0_89, %c0_90] {strides = array<i32: 2, 1>} : memref<32x128xf32, #tpu.memory_space<vmem>>, vector<15x128xf32>
      %c45 = arith.constant 45 : index
      %c0_91 = arith.constant 0 : index
      %128 = vector.load %arg15[%c45, %c0_91] : memref<232x128xf32, #tpu.memory_space<vmem>>, vector<15x128xf32>
      tpu.vector_store %arg15[%c45, %c0_91], %127 {strides = array<i32>} : memref<232x128xf32, #tpu.memory_space<vmem>>, vector<15x128xf32>,
      %129 = arith.index_cast %arg20 : i32 to index
      %c256 = arith.constant 256 : index
      %c0_92 = arith.constant 0 : index
      %130 = vector.load %arg1[%129, %c256, %c0_92] : memref<2x1024x32xf32, #tpu.memory_space<vmem>>, vector<1x64x32xf32>
      %131 = vector.shape_cast %130 : vector<1x64x32xf32> to vector<64x32xf32>
      %c0_93 = arith.constant 0 : index
      %c0_94 = arith.constant 0 : index
      %132 = vector.load %arg2[%c0_93, %c0_94] : memref<32x128xf32, #tpu.memory_space<vmem>>, vector<32x128xf32>
      %cst_95 = arith.constant dense<0.000000e+00> : vector<64x128xf32>
      %133 = tpu.matmul %131, %132, %cst_95 {dimension_numbers = #tpu.dot_dimension_numbers<[1], [0], [0], [1], [0, 0, 1, 1], [], []>} : vector<64x32xf32>, vector<32x128xf32>, vector<64x128xf32> -> vector<64x128xf32>
      %134 = vector.extract_strided_slice %133 {offsets = [0, 0], sizes = [63, 128], strides = [1, 1]} : vector<64x128xf32> to vector<63x128xf32>
      %135 = vector.extract_strided_slice %133 {offsets = [1, 0], sizes = [63, 128], strides = [1, 1]} : vector<64x128xf32> to vector<63x128xf32>
      %136 = arith.maximumf %134, %135 : vector<63x128xf32>
      %137 = vector.extract_strided_slice %136 {offsets = [0, 0], sizes = [31, 128], strides = [1, 1]} : vector<63x128xf32> to vector<31x128xf32>
      %138 = vector.extract_strided_slice %136 {offsets = [32, 0], sizes = [31, 128], strides = [1, 1]} : vector<63x128xf32> to vector<31x128xf32>
      %139 = arith.maximumf %137, %138 : vector<31x128xf32>
      %140 = vector.broadcast %2 : vector<1x128xf32> to vector<31x128xf32>
      %141 = arith.addf %139, %140 : vector<31x128xf32>
      %cst_96 = arith.constant 0.000000e+00 : f32
      %142 = vector.broadcast %cst_96 : f32 to vector<31x128xf32>
      %143 = arith.maximumf %141, %142 : vector<31x128xf32>
      %c0_97 = arith.constant 0 : index
      %c0_98 = arith.constant 0 : index
      %144 = vector.load %arg18[%c0_97, %c0_98] : memref<32x128xf32, #tpu.memory_space<vmem>>, vector<31x128xf32>
      tpu.vector_store %arg18[%c0_97, %c0_98], %143 {strides = array<i32>} : memref<32x128xf32, #tpu.memory_space<vmem>>, vector<31x128xf32>,
      %c0_99 = arith.constant 0 : index
      %c0_100 = arith.constant 0 : index
      %145 = tpu.strided_load %arg18[%c0_99, %c0_100] {strides = array<i32: 2, 1>} : memref<32x128xf32, #tpu.memory_space<vmem>>, vector<15x128xf32>
      %c60 = arith.constant 60 : index
      %c0_101 = arith.constant 0 : index
      %146 = vector.load %arg15[%c60, %c0_101] : memref<232x128xf32, #tpu.memory_space<vmem>>, vector<15x128xf32>
      tpu.vector_store %arg15[%c60, %c0_101], %145 {strides = array<i32>} : memref<232x128xf32, #tpu.memory_space<vmem>>, vector<15x128xf32>,
      %147 = arith.index_cast %arg20 : i32 to index
      %c320 = arith.constant 320 : index
      %c0_102 = arith.constant 0 : index
      %148 = vector.load %arg1[%147, %c320, %c0_102] : memref<2x1024x32xf32, #tpu.memory_space<vmem>>, vector<1x64x32xf32>
      %149 = vector.shape_cast %148 : vector<1x64x32xf32> to vector<64x32xf32>
      %c0_103 = arith.constant 0 : index
      %c0_104 = arith.constant 0 : index
      %150 = vector.load %arg2[%c0_103, %c0_104] : memref<32x128xf32, #tpu.memory_space<vmem>>, vector<32x128xf32>
      %cst_105 = arith.constant dense<0.000000e+00> : vector<64x128xf32>
      %151 = tpu.matmul %149, %150, %cst_105 {dimension_numbers = #tpu.dot_dimension_numbers<[1], [0], [0], [1], [0, 0, 1, 1], [], []>} : vector<64x32xf32>, vector<32x128xf32>, vector<64x128xf32> -> vector<64x128xf32>
      %152 = vector.extract_strided_slice %151 {offsets = [0, 0], sizes = [63, 128], strides = [1, 1]} : vector<64x128xf32> to vector<63x128xf32>
      %153 = vector.extract_strided_slice %151 {offsets = [1, 0], sizes = [63, 128], strides = [1, 1]} : vector<64x128xf32> to vector<63x128xf32>
      %154 = arith.maximumf %152, %153 : vector<63x128xf32>
      %155 = vector.extract_strided_slice %154 {offsets = [0, 0], sizes = [31, 128], strides = [1, 1]} : vector<63x128xf32> to vector<31x128xf32>
      %156 = vector.extract_strided_slice %154 {offsets = [32, 0], sizes = [31, 128], strides = [1, 1]} : vector<63x128xf32> to vector<31x128xf32>
      %157 = arith.maximumf %155, %156 : vector<31x128xf32>
      %158 = vector.broadcast %2 : vector<1x128xf32> to vector<31x128xf32>
      %159 = arith.addf %157, %158 : vector<31x128xf32>
      %cst_106 = arith.constant 0.000000e+00 : f32
      %160 = vector.broadcast %cst_106 : f32 to vector<31x128xf32>
      %161 = arith.maximumf %159, %160 : vector<31x128xf32>
      %c0_107 = arith.constant 0 : index
      %c0_108 = arith.constant 0 : index
      %162 = vector.load %arg18[%c0_107, %c0_108] : memref<32x128xf32, #tpu.memory_space<vmem>>, vector<31x128xf32>
      tpu.vector_store %arg18[%c0_107, %c0_108], %161 {strides = array<i32>} : memref<32x128xf32, #tpu.memory_space<vmem>>, vector<31x128xf32>,
      %c0_109 = arith.constant 0 : index
      %c0_110 = arith.constant 0 : index
      %163 = tpu.strided_load %arg18[%c0_109, %c0_110] {strides = array<i32: 2, 1>} : memref<32x128xf32, #tpu.memory_space<vmem>>, vector<15x128xf32>
      %c75 = arith.constant 75 : index
      %c0_111 = arith.constant 0 : index
      %164 = vector.load %arg15[%c75, %c0_111] : memref<232x128xf32, #tpu.memory_space<vmem>>, vector<15x128xf32>
      tpu.vector_store %arg15[%c75, %c0_111], %163 {strides = array<i32>} : memref<232x128xf32, #tpu.memory_space<vmem>>, vector<15x128xf32>,
      %165 = arith.index_cast %arg20 : i32 to index
      %c384 = arith.constant 384 : index
      %c0_112 = arith.constant 0 : index
      %166 = vector.load %arg1[%165, %c384, %c0_112] : memref<2x1024x32xf32, #tpu.memory_space<vmem>>, vector<1x64x32xf32>
      %167 = vector.shape_cast %166 : vector<1x64x32xf32> to vector<64x32xf32>
      %c0_113 = arith.constant 0 : index
      %c0_114 = arith.constant 0 : index
      %168 = vector.load %arg2[%c0_113, %c0_114] : memref<32x128xf32, #tpu.memory_space<vmem>>, vector<32x128xf32>
      %cst_115 = arith.constant dense<0.000000e+00> : vector<64x128xf32>
      %169 = tpu.matmul %167, %168, %cst_115 {dimension_numbers = #tpu.dot_dimension_numbers<[1], [0], [0], [1], [0, 0, 1, 1], [], []>} : vector<64x32xf32>, vector<32x128xf32>, vector<64x128xf32> -> vector<64x128xf32>
      %170 = vector.extract_strided_slice %169 {offsets = [0, 0], sizes = [63, 128], strides = [1, 1]} : vector<64x128xf32> to vector<63x128xf32>
      %171 = vector.extract_strided_slice %169 {offsets = [1, 0], sizes = [63, 128], strides = [1, 1]} : vector<64x128xf32> to vector<63x128xf32>
      %172 = arith.maximumf %170, %171 : vector<63x128xf32>
      %173 = vector.extract_strided_slice %172 {offsets = [0, 0], sizes = [31, 128], strides = [1, 1]} : vector<63x128xf32> to vector<31x128xf32>
      %174 = vector.extract_strided_slice %172 {offsets = [32, 0], sizes = [31, 128], strides = [1, 1]} : vector<63x128xf32> to vector<31x128xf32>
      %175 = arith.maximumf %173, %174 : vector<31x128xf32>
      %176 = vector.broadcast %2 : vector<1x128xf32> to vector<31x128xf32>
      %177 = arith.addf %175, %176 : vector<31x128xf32>
      %cst_116 = arith.constant 0.000000e+00 : f32
      %178 = vector.broadcast %cst_116 : f32 to vector<31x128xf32>
      %179 = arith.maximumf %177, %178 : vector<31x128xf32>
      %c0_117 = arith.constant 0 : index
      %c0_118 = arith.constant 0 : index
      %180 = vector.load %arg18[%c0_117, %c0_118] : memref<32x128xf32, #tpu.memory_space<vmem>>, vector<31x128xf32>
      tpu.vector_store %arg18[%c0_117, %c0_118], %179 {strides = array<i32>} : memref<32x128xf32, #tpu.memory_space<vmem>>, vector<31x128xf32>,
      %c0_119 = arith.constant 0 : index
      %c0_120 = arith.constant 0 : index
      %181 = tpu.strided_load %arg18[%c0_119, %c0_120] {strides = array<i32: 2, 1>} : memref<32x128xf32, #tpu.memory_space<vmem>>, vector<15x128xf32>
      %c90 = arith.constant 90 : index
      %c0_121 = arith.constant 0 : index
      %182 = vector.load %arg15[%c90, %c0_121] : memref<232x128xf32, #tpu.memory_space<vmem>>, vector<15x128xf32>
      tpu.vector_store %arg15[%c90, %c0_121], %181 {strides = array<i32>} : memref<232x128xf32, #tpu.memory_space<vmem>>, vector<15x128xf32>,
      %183 = arith.index_cast %arg20 : i32 to index
      %c448 = arith.constant 448 : index
      %c0_122 = arith.constant 0 : index
      %184 = vector.load %arg1[%183, %c448, %c0_122] : memref<2x1024x32xf32, #tpu.memory_space<vmem>>, vector<1x64x32xf32>
      %185 = vector.shape_cast %184 : vector<1x64x32xf32> to vector<64x32xf32>
      %c0_123 = arith.constant 0 : index
      %c0_124 = arith.constant 0 : index
      %186 = vector.load %arg2[%c0_123, %c0_124] : memref<32x128xf32, #tpu.memory_space<vmem>>, vector<32x128xf32>
      %cst_125 = arith.constant dense<0.000000e+00> : vector<64x128xf32>
      %187 = tpu.matmul %185, %186, %cst_125 {dimension_numbers = #tpu.dot_dimension_numbers<[1], [0], [0], [1], [0, 0, 1, 1], [], []>} : vector<64x32xf32>, vector<32x128xf32>, vector<64x128xf32> -> vector<64x128xf32>
      %188 = vector.extract_strided_slice %187 {offsets = [0, 0], sizes = [63, 128], strides = [1, 1]} : vector<64x128xf32> to vector<63x128xf32>
      %189 = vector.extract_strided_slice %187 {offsets = [1, 0], sizes = [63, 128], strides = [1, 1]} : vector<64x128xf32> to vector<63x128xf32>
      %190 = arith.maximumf %188, %189 : vector<63x128xf32>
      %191 = vector.extract_strided_slice %190 {offsets = [0, 0], sizes = [31, 128], strides = [1, 1]} : vector<63x128xf32> to vector<31x128xf32>
      %192 = vector.extract_strided_slice %190 {offsets = [32, 0], sizes = [31, 128], strides = [1, 1]} : vector<63x128xf32> to vector<31x128xf32>
      %193 = arith.maximumf %191, %192 : vector<31x128xf32>
      %194 = vector.broadcast %2 : vector<1x128xf32> to vector<31x128xf32>
      %195 = arith.addf %193, %194 : vector<31x128xf32>
      %cst_126 = arith.constant 0.000000e+00 : f32
      %196 = vector.broadcast %cst_126 : f32 to vector<31x128xf32>
      %197 = arith.maximumf %195, %196 : vector<31x128xf32>
      %c0_127 = arith.constant 0 : index
      %c0_128 = arith.constant 0 : index
      %198 = vector.load %arg18[%c0_127, %c0_128] : memref<32x128xf32, #tpu.memory_space<vmem>>, vector<31x128xf32>
      tpu.vector_store %arg18[%c0_127, %c0_128], %197 {strides = array<i32>} : memref<32x128xf32, #tpu.memory_space<vmem>>, vector<31x128xf32>,
      %c0_129 = arith.constant 0 : index
      %c0_130 = arith.constant 0 : index
      %199 = tpu.strided_load %arg18[%c0_129, %c0_130] {strides = array<i32: 2, 1>} : memref<32x128xf32, #tpu.memory_space<vmem>>, vector<15x128xf32>
      %c105 = arith.constant 105 : index
      %c0_131 = arith.constant 0 : index
      %200 = vector.load %arg15[%c105, %c0_131] : memref<232x128xf32, #tpu.memory_space<vmem>>, vector<15x128xf32>
      tpu.vector_store %arg15[%c105, %c0_131], %199 {strides = array<i32>} : memref<232x128xf32, #tpu.memory_space<vmem>>, vector<15x128xf32>,
      %201 = arith.index_cast %arg20 : i32 to index
      %c512 = arith.constant 512 : index
      %c0_132 = arith.constant 0 : index
      %202 = vector.load %arg1[%201, %c512, %c0_132] : memref<2x1024x32xf32, #tpu.memory_space<vmem>>, vector<1x64x32xf32>
      %203 = vector.shape_cast %202 : vector<1x64x32xf32> to vector<64x32xf32>
      %c0_133 = arith.constant 0 : index
      %c0_134 = arith.constant 0 : index
      %204 = vector.load %arg2[%c0_133, %c0_134] : memref<32x128xf32, #tpu.memory_space<vmem>>, vector<32x128xf32>
      %cst_135 = arith.constant dense<0.000000e+00> : vector<64x128xf32>
      %205 = tpu.matmul %203, %204, %cst_135 {dimension_numbers = #tpu.dot_dimension_numbers<[1], [0], [0], [1], [0, 0, 1, 1], [], []>} : vector<64x32xf32>, vector<32x128xf32>, vector<64x128xf32> -> vector<64x128xf32>
      %206 = vector.extract_strided_slice %205 {offsets = [0, 0], sizes = [63, 128], strides = [1, 1]} : vector<64x128xf32> to vector<63x128xf32>
      %207 = vector.extract_strided_slice %205 {offsets = [1, 0], sizes = [63, 128], strides = [1, 1]} : vector<64x128xf32> to vector<63x128xf32>
      %208 = arith.maximumf %206, %207 : vector<63x128xf32>
      %209 = vector.extract_strided_slice %208 {offsets = [0, 0], sizes = [31, 128], strides = [1, 1]} : vector<63x128xf32> to vector<31x128xf32>
      %210 = vector.extract_strided_slice %208 {offsets = [32, 0], sizes = [31, 128], strides = [1, 1]} : vector<63x128xf32> to vector<31x128xf32>
      %211 = arith.maximumf %209, %210 : vector<31x128xf32>
      %212 = vector.broadcast %2 : vector<1x128xf32> to vector<31x128xf32>
      %213 = arith.addf %211, %212 : vector<31x128xf32>
      %cst_136 = arith.constant 0.000000e+00 : f32
      %214 = vector.broadcast %cst_136 : f32 to vector<31x128xf32>
      %215 = arith.maximumf %213, %214 : vector<31x128xf32>
      %c0_137 = arith.constant 0 : index
      %c0_138 = arith.constant 0 : index
      %216 = vector.load %arg18[%c0_137, %c0_138] : memref<32x128xf32, #tpu.memory_space<vmem>>, vector<31x128xf32>
      tpu.vector_store %arg18[%c0_137, %c0_138], %215 {strides = array<i32>} : memref<32x128xf32, #tpu.memory_space<vmem>>, vector<31x128xf32>,
      %c0_139 = arith.constant 0 : index
      %c0_140 = arith.constant 0 : index
      %217 = tpu.strided_load %arg18[%c0_139, %c0_140] {strides = array<i32: 2, 1>} : memref<32x128xf32, #tpu.memory_space<vmem>>, vector<15x128xf32>
      %c120 = arith.constant 120 : index
      %c0_141 = arith.constant 0 : index
      %218 = vector.load %arg15[%c120, %c0_141] : memref<232x128xf32, #tpu.memory_space<vmem>>, vector<15x128xf32>
      tpu.vector_store %arg15[%c120, %c0_141], %217 {strides = array<i32>} : memref<232x128xf32, #tpu.memory_space<vmem>>, vector<15x128xf32>,
      %219 = arith.index_cast %arg20 : i32 to index
      %c576 = arith.constant 576 : index
      %c0_142 = arith.constant 0 : index
      %220 = vector.load %arg1[%219, %c576, %c0_142] : memref<2x1024x32xf32, #tpu.memory_space<vmem>>, vector<1x64x32xf32>
      %221 = vector.shape_cast %220 : vector<1x64x32xf32> to vector<64x32xf32>
      %c0_143 = arith.constant 0 : index
      %c0_144 = arith.constant 0 : index
      %222 = vector.load %arg2[%c0_143, %c0_144] : memref<32x128xf32, #tpu.memory_space<vmem>>, vector<32x128xf32>
      %cst_145 = arith.constant dense<0.000000e+00> : vector<64x128xf32>
      %223 = tpu.matmul %221, %222, %cst_145 {dimension_numbers = #tpu.dot_dimension_numbers<[1], [0], [0], [1], [0, 0, 1, 1], [], []>} : vector<64x32xf32>, vector<32x128xf32>, vector<64x128xf32> -> vector<64x128xf32>
      %224 = vector.extract_strided_slice %223 {offsets = [0, 0], sizes = [63, 128], strides = [1, 1]} : vector<64x128xf32> to vector<63x128xf32>
      %225 = vector.extract_strided_slice %223 {offsets = [1, 0], sizes = [63, 128], strides = [1, 1]} : vector<64x128xf32> to vector<63x128xf32>
      %226 = arith.maximumf %224, %225 : vector<63x128xf32>
      %227 = vector.extract_strided_slice %226 {offsets = [0, 0], sizes = [31, 128], strides = [1, 1]} : vector<63x128xf32> to vector<31x128xf32>
      %228 = vector.extract_strided_slice %226 {offsets = [32, 0], sizes = [31, 128], strides = [1, 1]} : vector<63x128xf32> to vector<31x128xf32>
      %229 = arith.maximumf %227, %228 : vector<31x128xf32>
      %230 = vector.broadcast %2 : vector<1x128xf32> to vector<31x128xf32>
      %231 = arith.addf %229, %230 : vector<31x128xf32>
      %cst_146 = arith.constant 0.000000e+00 : f32
      %232 = vector.broadcast %cst_146 : f32 to vector<31x128xf32>
      %233 = arith.maximumf %231, %232 : vector<31x128xf32>
      %c0_147 = arith.constant 0 : index
      %c0_148 = arith.constant 0 : index
      %234 = vector.load %arg18[%c0_147, %c0_148] : memref<32x128xf32, #tpu.memory_space<vmem>>, vector<31x128xf32>
      tpu.vector_store %arg18[%c0_147, %c0_148], %233 {strides = array<i32>} : memref<32x128xf32, #tpu.memory_space<vmem>>, vector<31x128xf32>,
      %c0_149 = arith.constant 0 : index
      %c0_150 = arith.constant 0 : index
      %235 = tpu.strided_load %arg18[%c0_149, %c0_150] {strides = array<i32: 2, 1>} : memref<32x128xf32, #tpu.memory_space<vmem>>, vector<15x128xf32>
      %c135 = arith.constant 135 : index
      %c0_151 = arith.constant 0 : index
      %236 = vector.load %arg15[%c135, %c0_151] : memref<232x128xf32, #tpu.memory_space<vmem>>, vector<15x128xf32>
      tpu.vector_store %arg15[%c135, %c0_151], %235 {strides = array<i32>} : memref<232x128xf32, #tpu.memory_space<vmem>>, vector<15x128xf32>,
      %237 = arith.index_cast %arg20 : i32 to index
      %c640 = arith.constant 640 : index
      %c0_152 = arith.constant 0 : index
      %238 = vector.load %arg1[%237, %c640, %c0_152] : memref<2x1024x32xf32, #tpu.memory_space<vmem>>, vector<1x64x32xf32>
      %239 = vector.shape_cast %238 : vector<1x64x32xf32> to vector<64x32xf32>
      %c0_153 = arith.constant 0 : index
      %c0_154 = arith.constant 0 : index
      %240 = vector.load %arg2[%c0_153, %c0_154] : memref<32x128xf32, #tpu.memory_space<vmem>>, vector<32x128xf32>
      %cst_155 = arith.constant dense<0.000000e+00> : vector<64x128xf32>
      %241 = tpu.matmul %239, %240, %cst_155 {dimension_numbers = #tpu.dot_dimension_numbers<[1], [0], [0], [1], [0, 0, 1, 1], [], []>} : vector<64x32xf32>, vector<32x128xf32>, vector<64x128xf32> -> vector<64x128xf32>
      %242 = vector.extract_strided_slice %241 {offsets = [0, 0], sizes = [63, 128], strides = [1, 1]} : vector<64x128xf32> to vector<63x128xf32>
      %243 = vector.extract_strided_slice %241 {offsets = [1, 0], sizes = [63, 128], strides = [1, 1]} : vector<64x128xf32> to vector<63x128xf32>
      %244 = arith.maximumf %242, %243 : vector<63x128xf32>
      %245 = vector.extract_strided_slice %244 {offsets = [0, 0], sizes = [31, 128], strides = [1, 1]} : vector<63x128xf32> to vector<31x128xf32>
      %246 = vector.extract_strided_slice %244 {offsets = [32, 0], sizes = [31, 128], strides = [1, 1]} : vector<63x128xf32> to vector<31x128xf32>
      %247 = arith.maximumf %245, %246 : vector<31x128xf32>
      %248 = vector.broadcast %2 : vector<1x128xf32> to vector<31x128xf32>
      %249 = arith.addf %247, %248 : vector<31x128xf32>
      %cst_156 = arith.constant 0.000000e+00 : f32
      %250 = vector.broadcast %cst_156 : f32 to vector<31x128xf32>
      %251 = arith.maximumf %249, %250 : vector<31x128xf32>
      %c0_157 = arith.constant 0 : index
      %c0_158 = arith.constant 0 : index
      %252 = vector.load %arg18[%c0_157, %c0_158] : memref<32x128xf32, #tpu.memory_space<vmem>>, vector<31x128xf32>
      tpu.vector_store %arg18[%c0_157, %c0_158], %251 {strides = array<i32>} : memref<32x128xf32, #tpu.memory_space<vmem>>, vector<31x128xf32>,
      %c0_159 = arith.constant 0 : index
      %c0_160 = arith.constant 0 : index
      %253 = tpu.strided_load %arg18[%c0_159, %c0_160] {strides = array<i32: 2, 1>} : memref<32x128xf32, #tpu.memory_space<vmem>>, vector<15x128xf32>
      %c150 = arith.constant 150 : index
      %c0_161 = arith.constant 0 : index
      %254 = vector.load %arg15[%c150, %c0_161] : memref<232x128xf32, #tpu.memory_space<vmem>>, vector<15x128xf32>
      tpu.vector_store %arg15[%c150, %c0_161], %253 {strides = array<i32>} : memref<232x128xf32, #tpu.memory_space<vmem>>, vector<15x128xf32>,
      %255 = arith.index_cast %arg20 : i32 to index
      %c704 = arith.constant 704 : index
      %c0_162 = arith.constant 0 : index
      %256 = vector.load %arg1[%255, %c704, %c0_162] : memref<2x1024x32xf32, #tpu.memory_space<vmem>>, vector<1x64x32xf32>
      %257 = vector.shape_cast %256 : vector<1x64x32xf32> to vector<64x32xf32>
      %c0_163 = arith.constant 0 : index
      %c0_164 = arith.constant 0 : index
      %258 = vector.load %arg2[%c0_163, %c0_164] : memref<32x128xf32, #tpu.memory_space<vmem>>, vector<32x128xf32>
      %cst_165 = arith.constant dense<0.000000e+00> : vector<64x128xf32>
      %259 = tpu.matmul %257, %258, %cst_165 {dimension_numbers = #tpu.dot_dimension_numbers<[1], [0], [0], [1], [0, 0, 1, 1], [], []>} : vector<64x32xf32>, vector<32x128xf32>, vector<64x128xf32> -> vector<64x128xf32>
      %260 = vector.extract_strided_slice %259 {offsets = [0, 0], sizes = [63, 128], strides = [1, 1]} : vector<64x128xf32> to vector<63x128xf32>
      %261 = vector.extract_strided_slice %259 {offsets = [1, 0], sizes = [63, 128], strides = [1, 1]} : vector<64x128xf32> to vector<63x128xf32>
      %262 = arith.maximumf %260, %261 : vector<63x128xf32>
      %263 = vector.extract_strided_slice %262 {offsets = [0, 0], sizes = [31, 128], strides = [1, 1]} : vector<63x128xf32> to vector<31x128xf32>
      %264 = vector.extract_strided_slice %262 {offsets = [32, 0], sizes = [31, 128], strides = [1, 1]} : vector<63x128xf32> to vector<31x128xf32>
      %265 = arith.maximumf %263, %264 : vector<31x128xf32>
      %266 = vector.broadcast %2 : vector<1x128xf32> to vector<31x128xf32>
      %267 = arith.addf %265, %266 : vector<31x128xf32>
      %cst_166 = arith.constant 0.000000e+00 : f32
      %268 = vector.broadcast %cst_166 : f32 to vector<31x128xf32>
      %269 = arith.maximumf %267, %268 : vector<31x128xf32>
      %c0_167 = arith.constant 0 : index
      %c0_168 = arith.constant 0 : index
      %270 = vector.load %arg18[%c0_167, %c0_168] : memref<32x128xf32, #tpu.memory_space<vmem>>, vector<31x128xf32>
      tpu.vector_store %arg18[%c0_167, %c0_168], %269 {strides = array<i32>} : memref<32x128xf32, #tpu.memory_space<vmem>>, vector<31x128xf32>,
      %c0_169 = arith.constant 0 : index
      %c0_170 = arith.constant 0 : index
      %271 = tpu.strided_load %arg18[%c0_169, %c0_170] {strides = array<i32: 2, 1>} : memref<32x128xf32, #tpu.memory_space<vmem>>, vector<15x128xf32>
      %c165 = arith.constant 165 : index
      %c0_171 = arith.constant 0 : index
      %272 = vector.load %arg15[%c165, %c0_171] : memref<232x128xf32, #tpu.memory_space<vmem>>, vector<15x128xf32>
      tpu.vector_store %arg15[%c165, %c0_171], %271 {strides = array<i32>} : memref<232x128xf32, #tpu.memory_space<vmem>>, vector<15x128xf32>,
      %273 = arith.index_cast %arg20 : i32 to index
      %c768 = arith.constant 768 : index
      %c0_172 = arith.constant 0 : index
      %274 = vector.load %arg1[%273, %c768, %c0_172] : memref<2x1024x32xf32, #tpu.memory_space<vmem>>, vector<1x64x32xf32>
      %275 = vector.shape_cast %274 : vector<1x64x32xf32> to vector<64x32xf32>
      %c0_173 = arith.constant 0 : index
      %c0_174 = arith.constant 0 : index
      %276 = vector.load %arg2[%c0_173, %c0_174] : memref<32x128xf32, #tpu.memory_space<vmem>>, vector<32x128xf32>
      %cst_175 = arith.constant dense<0.000000e+00> : vector<64x128xf32>
      %277 = tpu.matmul %275, %276, %cst_175 {dimension_numbers = #tpu.dot_dimension_numbers<[1], [0], [0], [1], [0, 0, 1, 1], [], []>} : vector<64x32xf32>, vector<32x128xf32>, vector<64x128xf32> -> vector<64x128xf32>
      %278 = vector.extract_strided_slice %277 {offsets = [0, 0], sizes = [63, 128], strides = [1, 1]} : vector<64x128xf32> to vector<63x128xf32>
      %279 = vector.extract_strided_slice %277 {offsets = [1, 0], sizes = [63, 128], strides = [1, 1]} : vector<64x128xf32> to vector<63x128xf32>
      %280 = arith.maximumf %278, %279 : vector<63x128xf32>
      %281 = vector.extract_strided_slice %280 {offsets = [0, 0], sizes = [31, 128], strides = [1, 1]} : vector<63x128xf32> to vector<31x128xf32>
      %282 = vector.extract_strided_slice %280 {offsets = [32, 0], sizes = [31, 128], strides = [1, 1]} : vector<63x128xf32> to vector<31x128xf32>
      %283 = arith.maximumf %281, %282 : vector<31x128xf32>
      %284 = vector.broadcast %2 : vector<1x128xf32> to vector<31x128xf32>
      %285 = arith.addf %283, %284 : vector<31x128xf32>
      %cst_176 = arith.constant 0.000000e+00 : f32
      %286 = vector.broadcast %cst_176 : f32 to vector<31x128xf32>
      %287 = arith.maximumf %285, %286 : vector<31x128xf32>
      %c0_177 = arith.constant 0 : index
      %c0_178 = arith.constant 0 : index
      %288 = vector.load %arg18[%c0_177, %c0_178] : memref<32x128xf32, #tpu.memory_space<vmem>>, vector<31x128xf32>
      tpu.vector_store %arg18[%c0_177, %c0_178], %287 {strides = array<i32>} : memref<32x128xf32, #tpu.memory_space<vmem>>, vector<31x128xf32>,
      %c0_179 = arith.constant 0 : index
      %c0_180 = arith.constant 0 : index
      %289 = tpu.strided_load %arg18[%c0_179, %c0_180] {strides = array<i32: 2, 1>} : memref<32x128xf32, #tpu.memory_space<vmem>>, vector<15x128xf32>
      %c180 = arith.constant 180 : index
      %c0_181 = arith.constant 0 : index
      %290 = vector.load %arg15[%c180, %c0_181] : memref<232x128xf32, #tpu.memory_space<vmem>>, vector<15x128xf32>
      tpu.vector_store %arg15[%c180, %c0_181], %289 {strides = array<i32>} : memref<232x128xf32, #tpu.memory_space<vmem>>, vector<15x128xf32>,
      %291 = arith.index_cast %arg20 : i32 to index
      %c832 = arith.constant 832 : index
      %c0_182 = arith.constant 0 : index
      %292 = vector.load %arg1[%291, %c832, %c0_182] : memref<2x1024x32xf32, #tpu.memory_space<vmem>>, vector<1x64x32xf32>
      %293 = vector.shape_cast %292 : vector<1x64x32xf32> to vector<64x32xf32>
      %c0_183 = arith.constant 0 : index
      %c0_184 = arith.constant 0 : index
      %294 = vector.load %arg2[%c0_183, %c0_184] : memref<32x128xf32, #tpu.memory_space<vmem>>, vector<32x128xf32>
      %cst_185 = arith.constant dense<0.000000e+00> : vector<64x128xf32>
      %295 = tpu.matmul %293, %294, %cst_185 {dimension_numbers = #tpu.dot_dimension_numbers<[1], [0], [0], [1], [0, 0, 1, 1], [], []>} : vector<64x32xf32>, vector<32x128xf32>, vector<64x128xf32> -> vector<64x128xf32>
      %296 = vector.extract_strided_slice %295 {offsets = [0, 0], sizes = [63, 128], strides = [1, 1]} : vector<64x128xf32> to vector<63x128xf32>
      %297 = vector.extract_strided_slice %295 {offsets = [1, 0], sizes = [63, 128], strides = [1, 1]} : vector<64x128xf32> to vector<63x128xf32>
      %298 = arith.maximumf %296, %297 : vector<63x128xf32>
      %299 = vector.extract_strided_slice %298 {offsets = [0, 0], sizes = [31, 128], strides = [1, 1]} : vector<63x128xf32> to vector<31x128xf32>
      %300 = vector.extract_strided_slice %298 {offsets = [32, 0], sizes = [31, 128], strides = [1, 1]} : vector<63x128xf32> to vector<31x128xf32>
      %301 = arith.maximumf %299, %300 : vector<31x128xf32>
      %302 = vector.broadcast %2 : vector<1x128xf32> to vector<31x128xf32>
      %303 = arith.addf %301, %302 : vector<31x128xf32>
      %cst_186 = arith.constant 0.000000e+00 : f32
      %304 = vector.broadcast %cst_186 : f32 to vector<31x128xf32>
      %305 = arith.maximumf %303, %304 : vector<31x128xf32>
      %c0_187 = arith.constant 0 : index
      %c0_188 = arith.constant 0 : index
      %306 = vector.load %arg18[%c0_187, %c0_188] : memref<32x128xf32, #tpu.memory_space<vmem>>, vector<31x128xf32>
      tpu.vector_store %arg18[%c0_187, %c0_188], %305 {strides = array<i32>} : memref<32x128xf32, #tpu.memory_space<vmem>>, vector<31x128xf32>,
      %c0_189 = arith.constant 0 : index
      %c0_190 = arith.constant 0 : index
      %307 = tpu.strided_load %arg18[%c0_189, %c0_190] {strides = array<i32: 2, 1>} : memref<32x128xf32, #tpu.memory_space<vmem>>, vector<15x128xf32>
      %c195 = arith.constant 195 : index
      %c0_191 = arith.constant 0 : index
      %308 = vector.load %arg15[%c195, %c0_191] : memref<232x128xf32, #tpu.memory_space<vmem>>, vector<15x128xf32>
      tpu.vector_store %arg15[%c195, %c0_191], %307 {strides = array<i32>} : memref<232x128xf32, #tpu.memory_space<vmem>>, vector<15x128xf32>,
      %309 = arith.index_cast %arg20 : i32 to index
      %c896 = arith.constant 896 : index
      %c0_192 = arith.constant 0 : index
      %310 = vector.load %arg1[%309, %c896, %c0_192] : memref<2x1024x32xf32, #tpu.memory_space<vmem>>, vector<1x64x32xf32>
      %311 = vector.shape_cast %310 : vector<1x64x32xf32> to vector<64x32xf32>
      %c0_193 = arith.constant 0 : index
      %c0_194 = arith.constant 0 : index
      %312 = vector.load %arg2[%c0_193, %c0_194] : memref<32x128xf32, #tpu.memory_space<vmem>>, vector<32x128xf32>
      %cst_195 = arith.constant dense<0.000000e+00> : vector<64x128xf32>
      %313 = tpu.matmul %311, %312, %cst_195 {dimension_numbers = #tpu.dot_dimension_numbers<[1], [0], [0], [1], [0, 0, 1, 1], [], []>} : vector<64x32xf32>, vector<32x128xf32>, vector<64x128xf32> -> vector<64x128xf32>
      %314 = vector.extract_strided_slice %313 {offsets = [0, 0], sizes = [63, 128], strides = [1, 1]} : vector<64x128xf32> to vector<63x128xf32>
      %315 = vector.extract_strided_slice %313 {offsets = [1, 0], sizes = [63, 128], strides = [1, 1]} : vector<64x128xf32> to vector<63x128xf32>
      %316 = arith.maximumf %314, %315 : vector<63x128xf32>
      %317 = vector.extract_strided_slice %316 {offsets = [0, 0], sizes = [31, 128], strides = [1, 1]} : vector<63x128xf32> to vector<31x128xf32>
      %318 = vector.extract_strided_slice %316 {offsets = [32, 0], sizes = [31, 128], strides = [1, 1]} : vector<63x128xf32> to vector<31x128xf32>
      %319 = arith.maximumf %317, %318 : vector<31x128xf32>
      %320 = vector.broadcast %2 : vector<1x128xf32> to vector<31x128xf32>
      %321 = arith.addf %319, %320 : vector<31x128xf32>
      %cst_196 = arith.constant 0.000000e+00 : f32
      %322 = vector.broadcast %cst_196 : f32 to vector<31x128xf32>
      %323 = arith.maximumf %321, %322 : vector<31x128xf32>
      %c0_197 = arith.constant 0 : index
      %c0_198 = arith.constant 0 : index
      %324 = vector.load %arg18[%c0_197, %c0_198] : memref<32x128xf32, #tpu.memory_space<vmem>>, vector<31x128xf32>
      tpu.vector_store %arg18[%c0_197, %c0_198], %323 {strides = array<i32>} : memref<32x128xf32, #tpu.memory_space<vmem>>, vector<31x128xf32>,
      %c0_199 = arith.constant 0 : index
      %c0_200 = arith.constant 0 : index
      %325 = tpu.strided_load %arg18[%c0_199, %c0_200] {strides = array<i32: 2, 1>} : memref<32x128xf32, #tpu.memory_space<vmem>>, vector<15x128xf32>
      %c210 = arith.constant 210 : index
      %c0_201 = arith.constant 0 : index
      %326 = vector.load %arg15[%c210, %c0_201] : memref<232x128xf32, #tpu.memory_space<vmem>>, vector<15x128xf32>
      tpu.vector_store %arg15[%c210, %c0_201], %325 {strides = array<i32>} : memref<232x128xf32, #tpu.memory_space<vmem>>, vector<15x128xf32>,
      %c0_202 = arith.constant 0 : index
      %c0_203 = arith.constant 0 : index
      %327 = vector.load %arg15[%c0_202, %c0_203] : memref<232x128xf32, #tpu.memory_space<vmem>>, vector<96x128xf32>
      %c0_204 = arith.constant 0 : index
      %c0_205 = arith.constant 0 : index
      %c0_206 = arith.constant 0 : index
      %328 = vector.load %arg4[%c0_204, %c0_205, %c0_206] : memref<9x128x128xf32, #tpu.memory_space<vmem>>, vector<1x128x128xf32>
      %329 = vector.shape_cast %328 : vector<1x128x128xf32> to vector<128x128xf32>
      %cst_207 = arith.constant dense<0.000000e+00> : vector<96x128xf32>
      %330 = tpu.matmul %327, %329, %cst_207 {dimension_numbers = #tpu.dot_dimension_numbers<[1], [0], [0], [1], [0, 0, 1, 1], [], []>} : vector<96x128xf32>, vector<128x128xf32>, vector<96x128xf32> -> vector<96x128xf32>
      %c1_208 = arith.constant 1 : index
      %c0_209 = arith.constant 0 : index
      %331 = vector.load %arg15[%c1_208, %c0_209] : memref<232x128xf32, #tpu.memory_space<vmem>>, vector<96x128xf32>
      %c1_210 = arith.constant 1 : index
      %c0_211 = arith.constant 0 : index
      %c0_212 = arith.constant 0 : index
      %332 = vector.load %arg4[%c1_210, %c0_211, %c0_212] : memref<9x128x128xf32, #tpu.memory_space<vmem>>, vector<1x128x128xf32>
      %333 = vector.shape_cast %332 : vector<1x128x128xf32> to vector<128x128xf32>
      %cst_213 = arith.constant dense<0.000000e+00> : vector<96x128xf32>
      %334 = tpu.matmul %331, %333, %cst_213 {dimension_numbers = #tpu.dot_dimension_numbers<[1], [0], [0], [1], [0, 0, 1, 1], [], []>} : vector<96x128xf32>, vector<128x128xf32>, vector<96x128xf32> -> vector<96x128xf32>
      %335 = arith.addf %330, %334 : vector<96x128xf32>
      %c2_214 = arith.constant 2 : index
      %c0_215 = arith.constant 0 : index
      %336 = vector.load %arg15[%c2_214, %c0_215] : memref<232x128xf32, #tpu.memory_space<vmem>>, vector<96x128xf32>
      %c2_216 = arith.constant 2 : index
      %c0_217 = arith.constant 0 : index
      %c0_218 = arith.constant 0 : index
      %337 = vector.load %arg4[%c2_216, %c0_217, %c0_218] : memref<9x128x128xf32, #tpu.memory_space<vmem>>, vector<1x128x128xf32>
      %338 = vector.shape_cast %337 : vector<1x128x128xf32> to vector<128x128xf32>
      %cst_219 = arith.constant dense<0.000000e+00> : vector<96x128xf32>
      %339 = tpu.matmul %336, %338, %cst_219 {dimension_numbers = #tpu.dot_dimension_numbers<[1], [0], [0], [1], [0, 0, 1, 1], [], []>} : vector<96x128xf32>, vector<128x128xf32>, vector<96x128xf32> -> vector<96x128xf32>
      %340 = arith.addf %335, %339 : vector<96x128xf32>
      %c15_220 = arith.constant 15 : index
      %c0_221 = arith.constant 0 : index
      %341 = vector.load %arg15[%c15_220, %c0_221] : memref<232x128xf32, #tpu.memory_space<vmem>>, vector<96x128xf32>
      %c3_222 = arith.constant 3 : index
      %c0_223 = arith.constant 0 : index
      %c0_224 = arith.constant 0 : index
      %342 = vector.load %arg4[%c3_222, %c0_223, %c0_224] : memref<9x128x128xf32, #tpu.memory_space<vmem>>, vector<1x128x128xf32>
      %343 = vector.shape_cast %342 : vector<1x128x128xf32> to vector<128x128xf32>
      %cst_225 = arith.constant dense<0.000000e+00> : vector<96x128xf32>
      %344 = tpu.matmul %341, %343, %cst_225 {dimension_numbers = #tpu.dot_dimension_numbers<[1], [0], [0], [1], [0, 0, 1, 1], [], []>} : vector<96x128xf32>, vector<128x128xf32>, vector<96x128xf32> -> vector<96x128xf32>
      %345 = arith.addf %340, %344 : vector<96x128xf32>
      %c16 = arith.constant 16 : index
      %c0_226 = arith.constant 0 : index
      %346 = vector.load %arg15[%c16, %c0_226] : memref<232x128xf32, #tpu.memory_space<vmem>>, vector<96x128xf32>
      %c4 = arith.constant 4 : index
      %c0_227 = arith.constant 0 : index
      %c0_228 = arith.constant 0 : index
      %347 = vector.load %arg4[%c4, %c0_227, %c0_228] : memref<9x128x128xf32, #tpu.memory_space<vmem>>, vector<1x128x128xf32>
      %348 = vector.shape_cast %347 : vector<1x128x128xf32> to vector<128x128xf32>
      %cst_229 = arith.constant dense<0.000000e+00> : vector<96x128xf32>
      %349 = tpu.matmul %346, %348, %cst_229 {dimension_numbers = #tpu.dot_dimension_numbers<[1], [0], [0], [1], [0, 0, 1, 1], [], []>} : vector<96x128xf32>, vector<128x128xf32>, vector<96x128xf32> -> vector<96x128xf32>
      %350 = arith.addf %345, %349 : vector<96x128xf32>
      %c17 = arith.constant 17 : index
      %c0_230 = arith.constant 0 : index
      %351 = vector.load %arg15[%c17, %c0_230] : memref<232x128xf32, #tpu.memory_space<vmem>>, vector<96x128xf32>
      %c5 = arith.constant 5 : index
      %c0_231 = arith.constant 0 : index
      %c0_232 = arith.constant 0 : index
      %352 = vector.load %arg4[%c5, %c0_231, %c0_232] : memref<9x128x128xf32, #tpu.memory_space<vmem>>, vector<1x128x128xf32>
      %353 = vector.shape_cast %352 : vector<1x128x128xf32> to vector<128x128xf32>
      %cst_233 = arith.constant dense<0.000000e+00> : vector<96x128xf32>
      %354 = tpu.matmul %351, %353, %cst_233 {dimension_numbers = #tpu.dot_dimension_numbers<[1], [0], [0], [1], [0, 0, 1, 1], [], []>} : vector<96x128xf32>, vector<128x128xf32>, vector<96x128xf32> -> vector<96x128xf32>
      %355 = arith.addf %350, %354 : vector<96x128xf32>
      %c30_234 = arith.constant 30 : index
      %c0_235 = arith.constant 0 : index
      %356 = vector.load %arg15[%c30_234, %c0_235] : memref<232x128xf32, #tpu.memory_space<vmem>>, vector<96x128xf32>
      %c6 = arith.constant 6 : index
      %c0_236 = arith.constant 0 : index
      %c0_237 = arith.constant 0 : index
      %357 = vector.load %arg4[%c6, %c0_236, %c0_237] : memref<9x128x128xf32, #tpu.memory_space<vmem>>, vector<1x128x128xf32>
      %358 = vector.shape_cast %357 : vector<1x128x128xf32> to vector<128x128xf32>
      %cst_238 = arith.constant dense<0.000000e+00> : vector<96x128xf32>
      %359 = tpu.matmul %356, %358, %cst_238 {dimension_numbers = #tpu.dot_dimension_numbers<[1], [0], [0], [1], [0, 0, 1, 1], [], []>} : vector<96x128xf32>, vector<128x128xf32>, vector<96x128xf32> -> vector<96x128xf32>
      %360 = arith.addf %355, %359 : vector<96x128xf32>
      %c31 = arith.constant 31 : index
      %c0_239 = arith.constant 0 : index
      %361 = vector.load %arg15[%c31, %c0_239] : memref<232x128xf32, #tpu.memory_space<vmem>>, vector<96x128xf32>
      %c7 = arith.constant 7 : index
      %c0_240 = arith.constant 0 : index
      %c0_241 = arith.constant 0 : index
      %362 = vector.load %arg4[%c7, %c0_240, %c0_241] : memref<9x128x128xf32, #tpu.memory_space<vmem>>, vector<1x128x128xf32>
      %363 = vector.shape_cast %362 : vector<1x128x128xf32> to vector<128x128xf32>
      %cst_242 = arith.constant dense<0.000000e+00> : vector<96x128xf32>
      %364 = tpu.matmul %361, %363, %cst_242 {dimension_numbers = #tpu.dot_dimension_numbers<[1], [0], [0], [1], [0, 0, 1, 1], [], []>} : vector<96x128xf32>, vector<128x128xf32>, vector<96x128xf32> -> vector<96x128xf32>
      %365 = arith.addf %360, %364 : vector<96x128xf32>
      %c32 = arith.constant 32 : index
      %c0_243 = arith.constant 0 : index
      %366 = vector.load %arg15[%c32, %c0_243] : memref<232x128xf32, #tpu.memory_space<vmem>>, vector<96x128xf32>
      %c8 = arith.constant 8 : index
      %c0_244 = arith.constant 0 : index
      %c0_245 = arith.constant 0 : index
      %367 = vector.load %arg4[%c8, %c0_244, %c0_245] : memref<9x128x128xf32, #tpu.memory_space<vmem>>, vector<1x128x128xf32>
      %368 = vector.shape_cast %367 : vector<1x128x128xf32> to vector<128x128xf32>
      %cst_246 = arith.constant dense<0.000000e+00> : vector<96x128xf32>
      %369 = tpu.matmul %366, %368, %cst_246 {dimension_numbers = #tpu.dot_dimension_numbers<[1], [0], [0], [1], [0, 0, 1, 1], [], []>} : vector<96x128xf32>, vector<128x128xf32>, vector<96x128xf32> -> vector<96x128xf32>
      %370 = arith.addf %365, %369 : vector<96x128xf32>
      %c0_247 = arith.constant 0 : index
      %c0_248 = arith.constant 0 : index
      %371 = vector.load %arg17[%c0_247, %c0_248] : memref<184x128xf32, #tpu.memory_space<vmem>>, vector<96x128xf32>
      tpu.vector_store %arg17[%c0_247, %c0_248], %370 {strides = array<i32>} : memref<184x128xf32, #tpu.memory_space<vmem>>, vector<96x128xf32>,
      %c96 = arith.constant 96 : index
      %c0_249 = arith.constant 0 : index
      %372 = vector.load %arg15[%c96, %c0_249] : memref<232x128xf32, #tpu.memory_space<vmem>>, vector<88x128xf32>
      %c0_250 = arith.constant 0 : index
      %c0_251 = arith.constant 0 : index
      %c0_252 = arith.constant 0 : index
      %373 = vector.load %arg4[%c0_250, %c0_251, %c0_252] : memref<9x128x128xf32, #tpu.memory_space<vmem>>, vector<1x128x128xf32>
      %374 = vector.shape_cast %373 : vector<1x128x128xf32> to vector<128x128xf32>
      %cst_253 = arith.constant dense<0.000000e+00> : vector<88x128xf32>
      %375 = tpu.matmul %372, %374, %cst_253 {dimension_numbers = #tpu.dot_dimension_numbers<[1], [0], [0], [1], [0, 0, 1, 1], [], []>} : vector<88x128xf32>, vector<128x128xf32>, vector<88x128xf32> -> vector<88x128xf32>
      %c97 = arith.constant 97 : index
      %c0_254 = arith.constant 0 : index
      %376 = vector.load %arg15[%c97, %c0_254] : memref<232x128xf32, #tpu.memory_space<vmem>>, vector<88x128xf32>
      %c1_255 = arith.constant 1 : index
      %c0_256 = arith.constant 0 : index
      %c0_257 = arith.constant 0 : index
      %377 = vector.load %arg4[%c1_255, %c0_256, %c0_257] : memref<9x128x128xf32, #tpu.memory_space<vmem>>, vector<1x128x128xf32>
      %378 = vector.shape_cast %377 : vector<1x128x128xf32> to vector<128x128xf32>
      %cst_258 = arith.constant dense<0.000000e+00> : vector<88x128xf32>
      %379 = tpu.matmul %376, %378, %cst_258 {dimension_numbers = #tpu.dot_dimension_numbers<[1], [0], [0], [1], [0, 0, 1, 1], [], []>} : vector<88x128xf32>, vector<128x128xf32>, vector<88x128xf32> -> vector<88x128xf32>
      %380 = arith.addf %375, %379 : vector<88x128xf32>
      %c98 = arith.constant 98 : index
      %c0_259 = arith.constant 0 : index
      %381 = vector.load %arg15[%c98, %c0_259] : memref<232x128xf32, #tpu.memory_space<vmem>>, vector<88x128xf32>
      %c2_260 = arith.constant 2 : index
      %c0_261 = arith.constant 0 : index
      %c0_262 = arith.constant 0 : index
      %382 = vector.load %arg4[%c2_260, %c0_261, %c0_262] : memref<9x128x128xf32, #tpu.memory_space<vmem>>, vector<1x128x128xf32>
      %383 = vector.shape_cast %382 : vector<1x128x128xf32> to vector<128x128xf32>
      %cst_263 = arith.constant dense<0.000000e+00> : vector<88x128xf32>
      %384 = tpu.matmul %381, %383, %cst_263 {dimension_numbers = #tpu.dot_dimension_numbers<[1], [0], [0], [1], [0, 0, 1, 1], [], []>} : vector<88x128xf32>, vector<128x128xf32>, vector<88x128xf32> -> vector<88x128xf32>
      %385 = arith.addf %380, %384 : vector<88x128xf32>
      %c111 = arith.constant 111 : index
      %c0_264 = arith.constant 0 : index
      %386 = vector.load %arg15[%c111, %c0_264] : memref<232x128xf32, #tpu.memory_space<vmem>>, vector<88x128xf32>
      %c3_265 = arith.constant 3 : index
      %c0_266 = arith.constant 0 : index
      %c0_267 = arith.constant 0 : index
      %387 = vector.load %arg4[%c3_265, %c0_266, %c0_267] : memref<9x128x128xf32, #tpu.memory_space<vmem>>, vector<1x128x128xf32>
      %388 = vector.shape_cast %387 : vector<1x128x128xf32> to vector<128x128xf32>
      %cst_268 = arith.constant dense<0.000000e+00> : vector<88x128xf32>
      %389 = tpu.matmul %386, %388, %cst_268 {dimension_numbers = #tpu.dot_dimension_numbers<[1], [0], [0], [1], [0, 0, 1, 1], [], []>} : vector<88x128xf32>, vector<128x128xf32>, vector<88x128xf32> -> vector<88x128xf32>
      %390 = arith.addf %385, %389 : vector<88x128xf32>
      %c112 = arith.constant 112 : index
      %c0_269 = arith.constant 0 : index
      %391 = vector.load %arg15[%c112, %c0_269] : memref<232x128xf32, #tpu.memory_space<vmem>>, vector<88x128xf32>
      %c4_270 = arith.constant 4 : index
      %c0_271 = arith.constant 0 : index
      %c0_272 = arith.constant 0 : index
      %392 = vector.load %arg4[%c4_270, %c0_271, %c0_272] : memref<9x128x128xf32, #tpu.memory_space<vmem>>, vector<1x128x128xf32>
      %393 = vector.shape_cast %392 : vector<1x128x128xf32> to vector<128x128xf32>
      %cst_273 = arith.constant dense<0.000000e+00> : vector<88x128xf32>
      %394 = tpu.matmul %391, %393, %cst_273 {dimension_numbers = #tpu.dot_dimension_numbers<[1], [0], [0], [1], [0, 0, 1, 1], [], []>} : vector<88x128xf32>, vector<128x128xf32>, vector<88x128xf32> -> vector<88x128xf32>
      %395 = arith.addf %390, %394 : vector<88x128xf32>
      %c113 = arith.constant 113 : index
      %c0_274 = arith.constant 0 : index
      %396 = vector.load %arg15[%c113, %c0_274] : memref<232x128xf32, #tpu.memory_space<vmem>>, vector<88x128xf32>
      %c5_275 = arith.constant 5 : index
      %c0_276 = arith.constant 0 : index
      %c0_277 = arith.constant 0 : index
      %397 = vector.load %arg4[%c5_275, %c0_276, %c0_277] : memref<9x128x128xf32, #tpu.memory_space<vmem>>, vector<1x128x128xf32>
      %398 = vector.shape_cast %397 : vector<1x128x128xf32> to vector<128x128xf32>
      %cst_278 = arith.constant dense<0.000000e+00> : vector<88x128xf32>
      %399 = tpu.matmul %396, %398, %cst_278 {dimension_numbers = #tpu.dot_dimension_numbers<[1], [0], [0], [1], [0, 0, 1, 1], [], []>} : vector<88x128xf32>, vector<128x128xf32>, vector<88x128xf32> -> vector<88x128xf32>
      %400 = arith.addf %395, %399 : vector<88x128xf32>
      %c126 = arith.constant 126 : index
      %c0_279 = arith.constant 0 : index
      %401 = vector.load %arg15[%c126, %c0_279] : memref<232x128xf32, #tpu.memory_space<vmem>>, vector<88x128xf32>
      %c6_280 = arith.constant 6 : index
      %c0_281 = arith.constant 0 : index
      %c0_282 = arith.constant 0 : index
      %402 = vector.load %arg4[%c6_280, %c0_281, %c0_282] : memref<9x128x128xf32, #tpu.memory_space<vmem>>, vector<1x128x128xf32>
      %403 = vector.shape_cast %402 : vector<1x128x128xf32> to vector<128x128xf32>
      %cst_283 = arith.constant dense<0.000000e+00> : vector<88x128xf32>
      %404 = tpu.matmul %401, %403, %cst_283 {dimension_numbers = #tpu.dot_dimension_numbers<[1], [0], [0], [1], [0, 0, 1, 1], [], []>} : vector<88x128xf32>, vector<128x128xf32>, vector<88x128xf32> -> vector<88x128xf32>
      %405 = arith.addf %400, %404 : vector<88x128xf32>
      %c127 = arith.constant 127 : index
      %c0_284 = arith.constant 0 : index
      %406 = vector.load %arg15[%c127, %c0_284] : memref<232x128xf32, #tpu.memory_space<vmem>>, vector<88x128xf32>
      %c7_285 = arith.constant 7 : index
      %c0_286 = arith.constant 0 : index
      %c0_287 = arith.constant 0 : index
      %407 = vector.load %arg4[%c7_285, %c0_286, %c0_287] : memref<9x128x128xf32, #tpu.memory_space<vmem>>, vector<1x128x128xf32>
      %408 = vector.shape_cast %407 : vector<1x128x128xf32> to vector<128x128xf32>
      %cst_288 = arith.constant dense<0.000000e+00> : vector<88x128xf32>
      %409 = tpu.matmul %406, %408, %cst_288 {dimension_numbers = #tpu.dot_dimension_numbers<[1], [0], [0], [1], [0, 0, 1, 1], [], []>} : vector<88x128xf32>, vector<128x128xf32>, vector<88x128xf32> -> vector<88x128xf32>
      %410 = arith.addf %405, %409 : vector<88x128xf32>
      %c128_289 = arith.constant 128 : index
      %c0_290 = arith.constant 0 : index
      %411 = vector.load %arg15[%c128_289, %c0_290] : memref<232x128xf32, #tpu.memory_space<vmem>>, vector<88x128xf32>
      %c8_291 = arith.constant 8 : index
      %c0_292 = arith.constant 0 : index
      %c0_293 = arith.constant 0 : index
      %412 = vector.load %arg4[%c8_291, %c0_292, %c0_293] : memref<9x128x128xf32, #tpu.memory_space<vmem>>, vector<1x128x128xf32>
      %413 = vector.shape_cast %412 : vector<1x128x128xf32> to vector<128x128xf32>
      %cst_294 = arith.constant dense<0.000000e+00> : vector<88x128xf32>
      %414 = tpu.matmul %411, %413, %cst_294 {dimension_numbers = #tpu.dot_dimension_numbers<[1], [0], [0], [1], [0, 0, 1, 1], [], []>} : vector<88x128xf32>, vector<128x128xf32>, vector<88x128xf32> -> vector<88x128xf32>
      %415 = arith.addf %410, %414 : vector<88x128xf32>
      %c96_295 = arith.constant 96 : index
      %c0_296 = arith.constant 0 : index
      %416 = vector.load %arg17[%c96_295, %c0_296] : memref<184x128xf32, #tpu.memory_space<vmem>>, vector<88x128xf32>
      tpu.vector_store %arg17[%c96_295, %c0_296], %415 {strides = array<i32>} : memref<184x128xf32, #tpu.memory_space<vmem>>, vector<88x128xf32>,
      %c0_297 = arith.constant 0 : index
      %c0_298 = arith.constant 0 : index
      %417 = vector.load %arg17[%c0_297, %c0_298] : memref<184x128xf32, #tpu.memory_space<vmem>>, vector<32x128xf32>
      %418 = vector.extract_strided_slice %417 {offsets = [0, 0], sizes = [31, 128], strides = [1, 1]} : vector<32x128xf32> to vector<31x128xf32>
      %419 = vector.extract_strided_slice %417 {offsets = [1, 0], sizes = [31, 128], strides = [1, 1]} : vector<32x128xf32> to vector<31x128xf32>
      %420 = arith.maximumf %418, %419 : vector<31x128xf32>
      %421 = vector.extract_strided_slice %420 {offsets = [0, 0], sizes = [16, 128], strides = [1, 1]} : vector<31x128xf32> to vector<16x128xf32>
      %422 = vector.extract_strided_slice %420 {offsets = [15, 0], sizes = [16, 128], strides = [1, 1]} : vector<31x128xf32> to vector<16x128xf32>
      %423 = arith.maximumf %421, %422 : vector<16x128xf32>
      %424 = vector.broadcast %3 : vector<1x128xf32> to vector<16x128xf32>
      %425 = arith.addf %423, %424 : vector<16x128xf32>
      %cst_299 = arith.constant 0.000000e+00 : f32
      %426 = vector.broadcast %cst_299 : f32 to vector<16x128xf32>
      %427 = arith.maximumf %425, %426 : vector<16x128xf32>
      %c0_300 = arith.constant 0 : index
      %c0_301 = arith.constant 0 : index
      %428 = vector.load %arg18[%c0_300, %c0_301] : memref<32x128xf32, #tpu.memory_space<vmem>>, vector<16x128xf32>
      tpu.vector_store %arg18[%c0_300, %c0_301], %427 {strides = array<i32>} : memref<32x128xf32, #tpu.memory_space<vmem>>, vector<16x128xf32>,
      %c0_302 = arith.constant 0 : index
      %c0_303 = arith.constant 0 : index
      %429 = tpu.strided_load %arg18[%c0_302, %c0_303] {strides = array<i32: 2, 1>} : memref<32x128xf32, #tpu.memory_space<vmem>>, vector<6x128xf32>
      %c0_304 = arith.constant 0 : index
      %c0_305 = arith.constant 0 : index
      %430 = vector.load %arg16[%c0_304, %c0_305] : memref<40x128xf32, #tpu.memory_space<vmem>>, vector<6x128xf32>
      tpu.vector_store %arg16[%c0_304, %c0_305], %429 {strides = array<i32>} : memref<40x128xf32, #tpu.memory_space<vmem>>, vector<6x128xf32>,
      %c30_306 = arith.constant 30 : index
      %c0_307 = arith.constant 0 : index
      %431 = vector.load %arg17[%c30_306, %c0_307] : memref<184x128xf32, #tpu.memory_space<vmem>>, vector<32x128xf32>
      %432 = vector.extract_strided_slice %431 {offsets = [0, 0], sizes = [31, 128], strides = [1, 1]} : vector<32x128xf32> to vector<31x128xf32>
      %433 = vector.extract_strided_slice %431 {offsets = [1, 0], sizes = [31, 128], strides = [1, 1]} : vector<32x128xf32> to vector<31x128xf32>
      %434 = arith.maximumf %432, %433 : vector<31x128xf32>
      %435 = vector.extract_strided_slice %434 {offsets = [0, 0], sizes = [16, 128], strides = [1, 1]} : vector<31x128xf32> to vector<16x128xf32>
      %436 = vector.extract_strided_slice %434 {offsets = [15, 0], sizes = [16, 128], strides = [1, 1]} : vector<31x128xf32> to vector<16x128xf32>
      %437 = arith.maximumf %435, %436 : vector<16x128xf32>
      %438 = vector.broadcast %3 : vector<1x128xf32> to vector<16x128xf32>
      %439 = arith.addf %437, %438 : vector<16x128xf32>
      %cst_308 = arith.constant 0.000000e+00 : f32
      %440 = vector.broadcast %cst_308 : f32 to vector<16x128xf32>
      %441 = arith.maximumf %439, %440 : vector<16x128xf32>
      %c0_309 = arith.constant 0 : index
      %c0_310 = arith.constant 0 : index
      %442 = vector.load %arg18[%c0_309, %c0_310] : memref<32x128xf32, #tpu.memory_space<vmem>>, vector<16x128xf32>
      tpu.vector_store %arg18[%c0_309, %c0_310], %441 {strides = array<i32>} : memref<32x128xf32, #tpu.memory_space<vmem>>, vector<16x128xf32>,
      %c0_311 = arith.constant 0 : index
      %c0_312 = arith.constant 0 : index
      %443 = tpu.strided_load %arg18[%c0_311, %c0_312] {strides = array<i32: 2, 1>} : memref<32x128xf32, #tpu.memory_space<vmem>>, vector<6x128xf32>
      %c6_313 = arith.constant 6 : index
      %c0_314 = arith.constant 0 : index
      %444 = vector.load %arg16[%c6_313, %c0_314] : memref<40x128xf32, #tpu.memory_space<vmem>>, vector<6x128xf32>
      tpu.vector_store %arg16[%c6_313, %c0_314], %443 {strides = array<i32>} : memref<40x128xf32, #tpu.memory_space<vmem>>, vector<6x128xf32>,
      %c60_315 = arith.constant 60 : index
      %c0_316 = arith.constant 0 : index
      %445 = vector.load %arg17[%c60_315, %c0_316] : memref<184x128xf32, #tpu.memory_space<vmem>>, vector<32x128xf32>
      %446 = vector.extract_strided_slice %445 {offsets = [0, 0], sizes = [31, 128], strides = [1, 1]} : vector<32x128xf32> to vector<31x128xf32>
      %447 = vector.extract_strided_slice %445 {offsets = [1, 0], sizes = [31, 128], strides = [1, 1]} : vector<32x128xf32> to vector<31x128xf32>
      %448 = arith.maximumf %446, %447 : vector<31x128xf32>
      %449 = vector.extract_strided_slice %448 {offsets = [0, 0], sizes = [16, 128], strides = [1, 1]} : vector<31x128xf32> to vector<16x128xf32>
      %450 = vector.extract_strided_slice %448 {offsets = [15, 0], sizes = [16, 128], strides = [1, 1]} : vector<31x128xf32> to vector<16x128xf32>
      %451 = arith.maximumf %449, %450 : vector<16x128xf32>
      %452 = vector.broadcast %3 : vector<1x128xf32> to vector<16x128xf32>
      %453 = arith.addf %451, %452 : vector<16x128xf32>
      %cst_317 = arith.constant 0.000000e+00 : f32
      %454 = vector.broadcast %cst_317 : f32 to vector<16x128xf32>
      %455 = arith.maximumf %453, %454 : vector<16x128xf32>
      %c0_318 = arith.constant 0 : index
      %c0_319 = arith.constant 0 : index
      %456 = vector.load %arg18[%c0_318, %c0_319] : memref<32x128xf32, #tpu.memory_space<vmem>>, vector<16x128xf32>
      tpu.vector_store %arg18[%c0_318, %c0_319], %455 {strides = array<i32>} : memref<32x128xf32, #tpu.memory_space<vmem>>, vector<16x128xf32>,
      %c0_320 = arith.constant 0 : index
      %c0_321 = arith.constant 0 : index
      %457 = tpu.strided_load %arg18[%c0_320, %c0_321] {strides = array<i32: 2, 1>} : memref<32x128xf32, #tpu.memory_space<vmem>>, vector<6x128xf32>
      %c12 = arith.constant 12 : index
      %c0_322 = arith.constant 0 : index
      %458 = vector.load %arg16[%c12, %c0_322] : memref<40x128xf32, #tpu.memory_space<vmem>>, vector<6x128xf32>
      tpu.vector_store %arg16[%c12, %c0_322], %457 {strides = array<i32>} : memref<40x128xf32, #tpu.memory_space<vmem>>, vector<6x128xf32>,
      %c90_323 = arith.constant 90 : index
      %c0_324 = arith.constant 0 : index
      %459 = vector.load %arg17[%c90_323, %c0_324] : memref<184x128xf32, #tpu.memory_space<vmem>>, vector<32x128xf32>
      %460 = vector.extract_strided_slice %459 {offsets = [0, 0], sizes = [31, 128], strides = [1, 1]} : vector<32x128xf32> to vector<31x128xf32>
      %461 = vector.extract_strided_slice %459 {offsets = [1, 0], sizes = [31, 128], strides = [1, 1]} : vector<32x128xf32> to vector<31x128xf32>
      %462 = arith.maximumf %460, %461 : vector<31x128xf32>
      %463 = vector.extract_strided_slice %462 {offsets = [0, 0], sizes = [16, 128], strides = [1, 1]} : vector<31x128xf32> to vector<16x128xf32>
      %464 = vector.extract_strided_slice %462 {offsets = [15, 0], sizes = [16, 128], strides = [1, 1]} : vector<31x128xf32> to vector<16x128xf32>
      %465 = arith.maximumf %463, %464 : vector<16x128xf32>
      %466 = vector.broadcast %3 : vector<1x128xf32> to vector<16x128xf32>
      %467 = arith.addf %465, %466 : vector<16x128xf32>
      %cst_325 = arith.constant 0.000000e+00 : f32
      %468 = vector.broadcast %cst_325 : f32 to vector<16x128xf32>
      %469 = arith.maximumf %467, %468 : vector<16x128xf32>
      %c0_326 = arith.constant 0 : index
      %c0_327 = arith.constant 0 : index
      %470 = vector.load %arg18[%c0_326, %c0_327] : memref<32x128xf32, #tpu.memory_space<vmem>>, vector<16x128xf32>
      tpu.vector_store %arg18[%c0_326, %c0_327], %469 {strides = array<i32>} : memref<32x128xf32, #tpu.memory_space<vmem>>, vector<16x128xf32>,
      %c0_328 = arith.constant 0 : index
      %c0_329 = arith.constant 0 : index
      %471 = tpu.strided_load %arg18[%c0_328, %c0_329] {strides = array<i32: 2, 1>} : memref<32x128xf32, #tpu.memory_space<vmem>>, vector<6x128xf32>
      %c18 = arith.constant 18 : index
      %c0_330 = arith.constant 0 : index
      %472 = vector.load %arg16[%c18, %c0_330] : memref<40x128xf32, #tpu.memory_space<vmem>>, vector<6x128xf32>
      tpu.vector_store %arg16[%c18, %c0_330], %471 {strides = array<i32>} : memref<40x128xf32, #tpu.memory_space<vmem>>, vector<6x128xf32>,
      %c120_331 = arith.constant 120 : index
      %c0_332 = arith.constant 0 : index
      %473 = vector.load %arg17[%c120_331, %c0_332] : memref<184x128xf32, #tpu.memory_space<vmem>>, vector<32x128xf32>
      %474 = vector.extract_strided_slice %473 {offsets = [0, 0], sizes = [31, 128], strides = [1, 1]} : vector<32x128xf32> to vector<31x128xf32>
      %475 = vector.extract_strided_slice %473 {offsets = [1, 0], sizes = [31, 128], strides = [1, 1]} : vector<32x128xf32> to vector<31x128xf32>
      %476 = arith.maximumf %474, %475 : vector<31x128xf32>
      %477 = vector.extract_strided_slice %476 {offsets = [0, 0], sizes = [16, 128], strides = [1, 1]} : vector<31x128xf32> to vector<16x128xf32>
      %478 = vector.extract_strided_slice %476 {offsets = [15, 0], sizes = [16, 128], strides = [1, 1]} : vector<31x128xf32> to vector<16x128xf32>
      %479 = arith.maximumf %477, %478 : vector<16x128xf32>
      %480 = vector.broadcast %3 : vector<1x128xf32> to vector<16x128xf32>
      %481 = arith.addf %479, %480 : vector<16x128xf32>
      %cst_333 = arith.constant 0.000000e+00 : f32
      %482 = vector.broadcast %cst_333 : f32 to vector<16x128xf32>
      %483 = arith.maximumf %481, %482 : vector<16x128xf32>
      %c0_334 = arith.constant 0 : index
      %c0_335 = arith.constant 0 : index
      %484 = vector.load %arg18[%c0_334, %c0_335] : memref<32x128xf32, #tpu.memory_space<vmem>>, vector<16x128xf32>
      tpu.vector_store %arg18[%c0_334, %c0_335], %483 {strides = array<i32>} : memref<32x128xf32, #tpu.memory_space<vmem>>, vector<16x128xf32>,
      %c0_336 = arith.constant 0 : index
      %c0_337 = arith.constant 0 : index
      %485 = tpu.strided_load %arg18[%c0_336, %c0_337] {strides = array<i32: 2, 1>} : memref<32x128xf32, #tpu.memory_space<vmem>>, vector<6x128xf32>
      %c24 = arith.constant 24 : index
      %c0_338 = arith.constant 0 : index
      %486 = vector.load %arg16[%c24, %c0_338] : memref<40x128xf32, #tpu.memory_space<vmem>>, vector<6x128xf32>
      tpu.vector_store %arg16[%c24, %c0_338], %485 {strides = array<i32>} : memref<40x128xf32, #tpu.memory_space<vmem>>, vector<6x128xf32>,
      %c150_339 = arith.constant 150 : index
      %c0_340 = arith.constant 0 : index
      %487 = vector.load %arg17[%c150_339, %c0_340] : memref<184x128xf32, #tpu.memory_space<vmem>>, vector<32x128xf32>
      %488 = vector.extract_strided_slice %487 {offsets = [0, 0], sizes = [31, 128], strides = [1, 1]} : vector<32x128xf32> to vector<31x128xf32>
      %489 = vector.extract_strided_slice %487 {offsets = [1, 0], sizes = [31, 128], strides = [1, 1]} : vector<32x128xf32> to vector<31x128xf32>
      %490 = arith.maximumf %488, %489 : vector<31x128xf32>
      %491 = vector.extract_strided_slice %490 {offsets = [0, 0], sizes = [16, 128], strides = [1, 1]} : vector<31x128xf32> to vector<16x128xf32>
      %492 = vector.extract_strided_slice %490 {offsets = [15, 0], sizes = [16, 128], strides = [1, 1]} : vector<31x128xf32> to vector<16x128xf32>
      %493 = arith.maximumf %491, %492 : vector<16x128xf32>
      %494 = vector.broadcast %3 : vector<1x128xf32> to vector<16x128xf32>
      %495 = arith.addf %493, %494 : vector<16x128xf32>
      %cst_341 = arith.constant 0.000000e+00 : f32
      %496 = vector.broadcast %cst_341 : f32 to vector<16x128xf32>
      %497 = arith.maximumf %495, %496 : vector<16x128xf32>
      %c0_342 = arith.constant 0 : index
      %c0_343 = arith.constant 0 : index
      %498 = vector.load %arg18[%c0_342, %c0_343] : memref<32x128xf32, #tpu.memory_space<vmem>>, vector<16x128xf32>
      tpu.vector_store %arg18[%c0_342, %c0_343], %497 {strides = array<i32>} : memref<32x128xf32, #tpu.memory_space<vmem>>, vector<16x128xf32>,
      %c0_344 = arith.constant 0 : index
      %c0_345 = arith.constant 0 : index
      %499 = tpu.strided_load %arg18[%c0_344, %c0_345] {strides = array<i32: 2, 1>} : memref<32x128xf32, #tpu.memory_space<vmem>>, vector<6x128xf32>
      %c30_346 = arith.constant 30 : index
      %c0_347 = arith.constant 0 : index
      %500 = vector.load %arg16[%c30_346, %c0_347] : memref<40x128xf32, #tpu.memory_space<vmem>>, vector<6x128xf32>
      tpu.vector_store %arg16[%c30_346, %c0_347], %499 {strides = array<i32>} : memref<40x128xf32, #tpu.memory_space<vmem>>, vector<6x128xf32>,
      %c0_348 = arith.constant 0 : index
      %c0_349 = arith.constant 0 : index
      %501 = vector.load %arg16[%c0_348, %c0_349] : memref<40x128xf32, #tpu.memory_space<vmem>>, vector<24x128xf32>
      %c0_350 = arith.constant 0 : index
      %c0_351 = arith.constant 0 : index
      %c0_352 = arith.constant 0 : index
      %502 = vector.load %arg6[%c0_350, %c0_351, %c0_352] : memref<9x128x128xf32, #tpu.memory_space<vmem>>, vector<1x128x128xf32>
      %503 = vector.shape_cast %502 : vector<1x128x128xf32> to vector<128x128xf32>
      %cst_353 = arith.constant dense<0.000000e+00> : vector<24x128xf32>
      %504 = tpu.matmul %501, %503, %cst_353 {dimension_numbers = #tpu.dot_dimension_numbers<[1], [0], [0], [1], [0, 0, 1, 1], [], []>} : vector<24x128xf32>, vector<128x128xf32>, vector<24x128xf32> -> vector<24x128xf32>
      %c1_354 = arith.constant 1 : index
      %c0_355 = arith.constant 0 : index
      %505 = vector.load %arg16[%c1_354, %c0_355] : memref<40x128xf32, #tpu.memory_space<vmem>>, vector<24x128xf32>
      %c1_356 = arith.constant 1 : index
      %c0_357 = arith.constant 0 : index
      %c0_358 = arith.constant 0 : index
      %506 = vector.load %arg6[%c1_356, %c0_357, %c0_358] : memref<9x128x128xf32, #tpu.memory_space<vmem>>, vector<1x128x128xf32>
      %507 = vector.shape_cast %506 : vector<1x128x128xf32> to vector<128x128xf32>
      %cst_359 = arith.constant dense<0.000000e+00> : vector<24x128xf32>
      %508 = tpu.matmul %505, %507, %cst_359 {dimension_numbers = #tpu.dot_dimension_numbers<[1], [0], [0], [1], [0, 0, 1, 1], [], []>} : vector<24x128xf32>, vector<128x128xf32>, vector<24x128xf32> -> vector<24x128xf32>
      %509 = arith.addf %504, %508 : vector<24x128xf32>
      %c2_360 = arith.constant 2 : index
      %c0_361 = arith.constant 0 : index
      %510 = vector.load %arg16[%c2_360, %c0_361] : memref<40x128xf32, #tpu.memory_space<vmem>>, vector<24x128xf32>
      %c2_362 = arith.constant 2 : index
      %c0_363 = arith.constant 0 : index
      %c0_364 = arith.constant 0 : index
      %511 = vector.load %arg6[%c2_362, %c0_363, %c0_364] : memref<9x128x128xf32, #tpu.memory_space<vmem>>, vector<1x128x128xf32>
      %512 = vector.shape_cast %511 : vector<1x128x128xf32> to vector<128x128xf32>
      %cst_365 = arith.constant dense<0.000000e+00> : vector<24x128xf32>
      %513 = tpu.matmul %510, %512, %cst_365 {dimension_numbers = #tpu.dot_dimension_numbers<[1], [0], [0], [1], [0, 0, 1, 1], [], []>} : vector<24x128xf32>, vector<128x128xf32>, vector<24x128xf32> -> vector<24x128xf32>
      %514 = arith.addf %509, %513 : vector<24x128xf32>
      %c6_366 = arith.constant 6 : index
      %c0_367 = arith.constant 0 : index
      %515 = vector.load %arg16[%c6_366, %c0_367] : memref<40x128xf32, #tpu.memory_space<vmem>>, vector<24x128xf32>
      %c3_368 = arith.constant 3 : index
      %c0_369 = arith.constant 0 : index
      %c0_370 = arith.constant 0 : index
      %516 = vector.load %arg6[%c3_368, %c0_369, %c0_370] : memref<9x128x128xf32, #tpu.memory_space<vmem>>, vector<1x128x128xf32>
      %517 = vector.shape_cast %516 : vector<1x128x128xf32> to vector<128x128xf32>
      %cst_371 = arith.constant dense<0.000000e+00> : vector<24x128xf32>
      %518 = tpu.matmul %515, %517, %cst_371 {dimension_numbers = #tpu.dot_dimension_numbers<[1], [0], [0], [1], [0, 0, 1, 1], [], []>} : vector<24x128xf32>, vector<128x128xf32>, vector<24x128xf32> -> vector<24x128xf32>
      %519 = arith.addf %514, %518 : vector<24x128xf32>
      %c7_372 = arith.constant 7 : index
      %c0_373 = arith.constant 0 : index
      %520 = vector.load %arg16[%c7_372, %c0_373] : memref<40x128xf32, #tpu.memory_space<vmem>>, vector<24x128xf32>
      %c4_374 = arith.constant 4 : index
      %c0_375 = arith.constant 0 : index
      %c0_376 = arith.constant 0 : index
      %521 = vector.load %arg6[%c4_374, %c0_375, %c0_376] : memref<9x128x128xf32, #tpu.memory_space<vmem>>, vector<1x128x128xf32>
      %522 = vector.shape_cast %521 : vector<1x128x128xf32> to vector<128x128xf32>
      %cst_377 = arith.constant dense<0.000000e+00> : vector<24x128xf32>
      %523 = tpu.matmul %520, %522, %cst_377 {dimension_numbers = #tpu.dot_dimension_numbers<[1], [0], [0], [1], [0, 0, 1, 1], [], []>} : vector<24x128xf32>, vector<128x128xf32>, vector<24x128xf32> -> vector<24x128xf32>
      %524 = arith.addf %519, %523 : vector<24x128xf32>
      %c8_378 = arith.constant 8 : index
      %c0_379 = arith.constant 0 : index
      %525 = vector.load %arg16[%c8_378, %c0_379] : memref<40x128xf32, #tpu.memory_space<vmem>>, vector<24x128xf32>
      %c5_380 = arith.constant 5 : index
      %c0_381 = arith.constant 0 : index
      %c0_382 = arith.constant 0 : index
      %526 = vector.load %arg6[%c5_380, %c0_381, %c0_382] : memref<9x128x128xf32, #tpu.memory_space<vmem>>, vector<1x128x128xf32>
      %527 = vector.shape_cast %526 : vector<1x128x128xf32> to vector<128x128xf32>
      %cst_383 = arith.constant dense<0.000000e+00> : vector<24x128xf32>
      %528 = tpu.matmul %525, %527, %cst_383 {dimension_numbers = #tpu.dot_dimension_numbers<[1], [0], [0], [1], [0, 0, 1, 1], [], []>} : vector<24x128xf32>, vector<128x128xf32>, vector<24x128xf32> -> vector<24x128xf32>
      %529 = arith.addf %524, %528 : vector<24x128xf32>
      %c12_384 = arith.constant 12 : index
      %c0_385 = arith.constant 0 : index
      %530 = vector.load %arg16[%c12_384, %c0_385] : memref<40x128xf32, #tpu.memory_space<vmem>>, vector<24x128xf32>
      %c6_386 = arith.constant 6 : index
      %c0_387 = arith.constant 0 : index
      %c0_388 = arith.constant 0 : index
      %531 = vector.load %arg6[%c6_386, %c0_387, %c0_388] : memref<9x128x128xf32, #tpu.memory_space<vmem>>, vector<1x128x128xf32>
      %532 = vector.shape_cast %531 : vector<1x128x128xf32> to vector<128x128xf32>
      %cst_389 = arith.constant dense<0.000000e+00> : vector<24x128xf32>
      %533 = tpu.matmul %530, %532, %cst_389 {dimension_numbers = #tpu.dot_dimension_numbers<[1], [0], [0], [1], [0, 0, 1, 1], [], []>} : vector<24x128xf32>, vector<128x128xf32>, vector<24x128xf32> -> vector<24x128xf32>
      %534 = arith.addf %529, %533 : vector<24x128xf32>
      %c13 = arith.constant 13 : index
      %c0_390 = arith.constant 0 : index
      %535 = vector.load %arg16[%c13, %c0_390] : memref<40x128xf32, #tpu.memory_space<vmem>>, vector<24x128xf32>
      %c7_391 = arith.constant 7 : index
      %c0_392 = arith.constant 0 : index
      %c0_393 = arith.constant 0 : index
      %536 = vector.load %arg6[%c7_391, %c0_392, %c0_393] : memref<9x128x128xf32, #tpu.memory_space<vmem>>, vector<1x128x128xf32>
      %537 = vector.shape_cast %536 : vector<1x128x128xf32> to vector<128x128xf32>
      %cst_394 = arith.constant dense<0.000000e+00> : vector<24x128xf32>
      %538 = tpu.matmul %535, %537, %cst_394 {dimension_numbers = #tpu.dot_dimension_numbers<[1], [0], [0], [1], [0, 0, 1, 1], [], []>} : vector<24x128xf32>, vector<128x128xf32>, vector<24x128xf32> -> vector<24x128xf32>
      %539 = arith.addf %534, %538 : vector<24x128xf32>
      %c14 = arith.constant 14 : index
      %c0_395 = arith.constant 0 : index
      %540 = vector.load %arg16[%c14, %c0_395] : memref<40x128xf32, #tpu.memory_space<vmem>>, vector<24x128xf32>
      %c8_396 = arith.constant 8 : index
      %c0_397 = arith.constant 0 : index
      %c0_398 = arith.constant 0 : index
      %541 = vector.load %arg6[%c8_396, %c0_397, %c0_398] : memref<9x128x128xf32, #tpu.memory_space<vmem>>, vector<1x128x128xf32>
      %542 = vector.shape_cast %541 : vector<1x128x128xf32> to vector<128x128xf32>
      %cst_399 = arith.constant dense<0.000000e+00> : vector<24x128xf32>
      %543 = tpu.matmul %540, %542, %cst_399 {dimension_numbers = #tpu.dot_dimension_numbers<[1], [0], [0], [1], [0, 0, 1, 1], [], []>} : vector<24x128xf32>, vector<128x128xf32>, vector<24x128xf32> -> vector<24x128xf32>
      %544 = arith.addf %539, %543 : vector<24x128xf32>
      %545 = vector.extract_strided_slice %544 {offsets = [0, 0], sizes = [23, 128], strides = [1, 1]} : vector<24x128xf32> to vector<23x128xf32>
      %546 = vector.extract_strided_slice %544 {offsets = [1, 0], sizes = [23, 128], strides = [1, 1]} : vector<24x128xf32> to vector<23x128xf32>
      %547 = arith.maximumf %545, %546 : vector<23x128xf32>
      %548 = vector.extract_strided_slice %547 {offsets = [0, 0], sizes = [17, 128], strides = [1, 1]} : vector<23x128xf32> to vector<17x128xf32>
      %549 = vector.extract_strided_slice %547 {offsets = [6, 0], sizes = [17, 128], strides = [1, 1]} : vector<23x128xf32> to vector<17x128xf32>
      %550 = arith.maximumf %548, %549 : vector<17x128xf32>
      %551 = vector.broadcast %4 : vector<1x128xf32> to vector<17x128xf32>
      %552 = arith.addf %550, %551 : vector<17x128xf32>
      %cst_400 = arith.constant 0.000000e+00 : f32
      %553 = vector.broadcast %cst_400 : f32 to vector<17x128xf32>
      %554 = arith.maximumf %552, %553 : vector<17x128xf32>
      %555 = vector.extract_strided_slice %554 {offsets = [0, 0], sizes = [1, 128], strides = [1, 1]} : vector<17x128xf32> to vector<1x128xf32>
      %c0_401 = arith.constant 0 : index
      %556 = arith.index_cast %arg20 : i32 to index
      %c0_402 = arith.constant 0 : index
      %557 = vector.load %arg19[%c0_401, %556, %c0_402] : memref<4x2x128xf32, #tpu.memory_space<vmem>>, vector<1x1x128xf32>
      %558 = vector.shape_cast %557 : vector<1x1x128xf32> to vector<1x128xf32>
      %559 = vector.shape_cast %555 : vector<1x128xf32> to vector<1x1x128xf32>
      tpu.vector_store %arg19[%c0_401, %556, %c0_402], %559 {strides = array<i32>} : memref<4x2x128xf32, #tpu.memory_space<vmem>>, vector<1x1x128xf32>,
      %560 = vector.extract_strided_slice %554 {offsets = [2, 0], sizes = [1, 128], strides = [1, 1]} : vector<17x128xf32> to vector<1x128xf32>
      %c1_403 = arith.constant 1 : index
      %561 = arith.index_cast %arg20 : i32 to index
      %c0_404 = arith.constant 0 : index
      %562 = vector.load %arg19[%c1_403, %561, %c0_404] : memref<4x2x128xf32, #tpu.memory_space<vmem>>, vector<1x1x128xf32>
      %563 = vector.shape_cast %562 : vector<1x1x128xf32> to vector<1x128xf32>
      %564 = vector.shape_cast %560 : vector<1x128xf32> to vector<1x1x128xf32>
      tpu.vector_store %arg19[%c1_403, %561, %c0_404], %564 {strides = array<i32>} : memref<4x2x128xf32, #tpu.memory_space<vmem>>, vector<1x1x128xf32>,
      %565 = vector.extract_strided_slice %554 {offsets = [12, 0], sizes = [1, 128], strides = [1, 1]} : vector<17x128xf32> to vector<1x128xf32>
      %c2_405 = arith.constant 2 : index
      %566 = arith.index_cast %arg20 : i32 to index
      %c0_406 = arith.constant 0 : index
      %567 = vector.load %arg19[%c2_405, %566, %c0_406] : memref<4x2x128xf32, #tpu.memory_space<vmem>>, vector<1x1x128xf32>
      %568 = vector.shape_cast %567 : vector<1x1x128xf32> to vector<1x128xf32>
      %569 = vector.shape_cast %565 : vector<1x128xf32> to vector<1x1x128xf32>
      tpu.vector_store %arg19[%c2_405, %566, %c0_406], %569 {strides = array<i32>} : memref<4x2x128xf32, #tpu.memory_space<vmem>>, vector<1x1x128xf32>,
      %570 = vector.extract_strided_slice %554 {offsets = [14, 0], sizes = [1, 128], strides = [1, 1]} : vector<17x128xf32> to vector<1x128xf32>
      %c3_407 = arith.constant 3 : index
      %571 = arith.index_cast %arg20 : i32 to index
      %c0_408 = arith.constant 0 : index
      %572 = vector.load %arg19[%c3_407, %571, %c0_408] : memref<4x2x128xf32, #tpu.memory_space<vmem>>, vector<1x1x128xf32>
      %573 = vector.shape_cast %572 : vector<1x1x128xf32> to vector<1x128xf32>
      %574 = vector.shape_cast %570 : vector<1x128xf32> to vector<1x1x128xf32>
      tpu.vector_store %arg19[%c3_407, %571, %c0_408], %574 {strides = array<i32>} : memref<4x2x128xf32, #tpu.memory_space<vmem>>, vector<1x1x128xf32>,
    }
    %c2_i32_6 = arith.constant 2 : i32
    %c0_7 = arith.constant 0 : index
    %c0_8 = arith.constant 0 : index
    %c0_9 = arith.constant 0 : index
    %6 = vector.load %arg19[%c0_7, %c0_8, %c0_9] : memref<4x2x128xf32, #tpu.memory_space<vmem>>, vector<1x2x128xf32>
    %7 = vector.shape_cast %6 : vector<1x2x128xf32> to vector<2x128xf32>
    %c0_10 = arith.constant 0 : index
    %c0_11 = arith.constant 0 : index
    %c0_12 = arith.constant 0 : index
    %8 = vector.load %arg8[%c0_10, %c0_11, %c0_12] : memref<4x128x128xf32, #tpu.memory_space<vmem>>, vector<1x128x128xf32>
    %9 = vector.shape_cast %8 : vector<1x128x128xf32> to vector<128x128xf32>
    %cst_13 = arith.constant dense<0.000000e+00> : vector<2x128xf32>
    %10 = tpu.matmul %7, %9, %cst_13 {dimension_numbers = #tpu.dot_dimension_numbers<[1], [0], [0], [1], [0, 0, 1, 1], [], []>} : vector<2x128xf32>, vector<128x128xf32>, vector<2x128xf32> -> vector<2x128xf32>
    %c1 = arith.constant 1 : index
    %c0_14 = arith.constant 0 : index
    %c0_15 = arith.constant 0 : index
    %11 = vector.load %arg19[%c1, %c0_14, %c0_15] : memref<4x2x128xf32, #tpu.memory_space<vmem>>, vector<1x2x128xf32>
    %12 = vector.shape_cast %11 : vector<1x2x128xf32> to vector<2x128xf32>
    %c1_16 = arith.constant 1 : index
    %c0_17 = arith.constant 0 : index
    %c0_18 = arith.constant 0 : index
    %13 = vector.load %arg8[%c1_16, %c0_17, %c0_18] : memref<4x128x128xf32, #tpu.memory_space<vmem>>, vector<1x128x128xf32>
    %14 = vector.shape_cast %13 : vector<1x128x128xf32> to vector<128x128xf32>
    %cst_19 = arith.constant dense<0.000000e+00> : vector<2x128xf32>
    %15 = tpu.matmul %12, %14, %cst_19 {dimension_numbers = #tpu.dot_dimension_numbers<[1], [0], [0], [1], [0, 0, 1, 1], [], []>} : vector<2x128xf32>, vector<128x128xf32>, vector<2x128xf32> -> vector<2x128xf32>
    %16 = arith.addf %10, %15 : vector<2x128xf32>
    %c2 = arith.constant 2 : index
    %c0_20 = arith.constant 0 : index
    %c0_21 = arith.constant 0 : index
    %17 = vector.load %arg19[%c2, %c0_20, %c0_21] : memref<4x2x128xf32, #tpu.memory_space<vmem>>, vector<1x2x128xf32>
    %18 = vector.shape_cast %17 : vector<1x2x128xf32> to vector<2x128xf32>
    %c2_22 = arith.constant 2 : index
    %c0_23 = arith.constant 0 : index
    %c0_24 = arith.constant 0 : index
    %19 = vector.load %arg8[%c2_22, %c0_23, %c0_24] : memref<4x128x128xf32, #tpu.memory_space<vmem>>, vector<1x128x128xf32>
    %20 = vector.shape_cast %19 : vector<1x128x128xf32> to vector<128x128xf32>
    %cst_25 = arith.constant dense<0.000000e+00> : vector<2x128xf32>
    %21 = tpu.matmul %18, %20, %cst_25 {dimension_numbers = #tpu.dot_dimension_numbers<[1], [0], [0], [1], [0, 0, 1, 1], [], []>} : vector<2x128xf32>, vector<128x128xf32>, vector<2x128xf32> -> vector<2x128xf32>
    %22 = arith.addf %16, %21 : vector<2x128xf32>
    %c3 = arith.constant 3 : index
    %c0_26 = arith.constant 0 : index
    %c0_27 = arith.constant 0 : index
    %23 = vector.load %arg19[%c3, %c0_26, %c0_27] : memref<4x2x128xf32, #tpu.memory_space<vmem>>, vector<1x2x128xf32>
    %24 = vector.shape_cast %23 : vector<1x2x128xf32> to vector<2x128xf32>
    %c3_28 = arith.constant 3 : index
    %c0_29 = arith.constant 0 : index
    %c0_30 = arith.constant 0 : index
    %25 = vector.load %arg8[%c3_28, %c0_29, %c0_30] : memref<4x128x128xf32, #tpu.memory_space<vmem>>, vector<1x128x128xf32>
    %26 = vector.shape_cast %25 : vector<1x128x128xf32> to vector<128x128xf32>
    %cst_31 = arith.constant dense<0.000000e+00> : vector<2x128xf32>
    %27 = tpu.matmul %24, %26, %cst_31 {dimension_numbers = #tpu.dot_dimension_numbers<[1], [0], [0], [1], [0, 0, 1, 1], [], []>} : vector<2x128xf32>, vector<128x128xf32>, vector<2x128xf32> -> vector<2x128xf32>
    %28 = arith.addf %22, %27 : vector<2x128xf32>
    %c0_32 = arith.constant 0 : index
    %c0_33 = arith.constant 0 : index
    %29 = vector.load %arg9[%c0_32, %c0_33] : memref<1x128xf32, #tpu.memory_space<vmem>>, vector<1x128xf32>
    %30 = vector.broadcast %29 : vector<1x128xf32> to vector<2x128xf32>
    %31 = arith.addf %28, %30 : vector<2x128xf32>
    %cst_34 = arith.constant 0.000000e+00 : f32
    %32 = vector.broadcast %cst_34 : f32 to vector<2x128xf32>
    %33 = arith.maximumf %31, %32 : vector<2x128xf32>
    %c0_35 = arith.constant 0 : index
    %c0_36 = arith.constant 0 : index
    %34 = vector.load %arg10[%c0_35, %c0_36] : memref<128x128xf32, #tpu.memory_space<vmem>>, vector<128x128xf32>
    %cst_37 = arith.constant dense<0.000000e+00> : vector<2x128xf32>
    %35 = tpu.matmul %33, %34, %cst_37 {dimension_numbers = #tpu.dot_dimension_numbers<[1], [0], [0], [1], [0, 0, 1, 1], [], []>} : vector<2x128xf32>, vector<128x128xf32>, vector<2x128xf32> -> vector<2x128xf32>
    %c0_38 = arith.constant 0 : index
    %c0_39 = arith.constant 0 : index
    %36 = vector.load %arg11[%c0_38, %c0_39] : memref<1x128xf32, #tpu.memory_space<vmem>>, vector<1x128xf32>
    %37 = vector.broadcast %36 : vector<1x128xf32> to vector<2x128xf32>
    %38 = arith.addf %35, %37 : vector<2x128xf32>
    %cst_40 = arith.constant 0.000000e+00 : f32
    %39 = vector.broadcast %cst_40 : f32 to vector<2x128xf32>
    %40 = arith.maximumf %38, %39 : vector<2x128xf32>
    %c0_41 = arith.constant 0 : index
    %c0_42 = arith.constant 0 : index
    %41 = vector.load %arg12[%c0_41, %c0_42] : memref<128x128xf32, #tpu.memory_space<vmem>>, vector<128x128xf32>
    %cst_43 = arith.constant dense<0.000000e+00> : vector<2x128xf32>
    %42 = tpu.matmul %40, %41, %cst_43 {dimension_numbers = #tpu.dot_dimension_numbers<[1], [0], [0], [1], [0, 0, 1, 1], [], []>} : vector<2x128xf32>, vector<128x128xf32>, vector<2x128xf32> -> vector<2x128xf32>
    %c0_44 = arith.constant 0 : index
    %c0_45 = arith.constant 0 : index
    %43 = vector.load %arg13[%c0_44, %c0_45] : memref<1x128xf32, #tpu.memory_space<vmem>>, vector<1x128xf32>
    %44 = vector.broadcast %43 : vector<1x128xf32> to vector<2x128xf32>
    %45 = arith.addf %42, %44 : vector<2x128xf32>
    %cst_46 = arith.constant dense<0xFF800000> : vector<2xf32>
    %46 = vector.multi_reduction <maximumf>, %45, %cst_46 [1] : vector<2x128xf32> to vector<2xf32>
    %47 = vector.shape_cast %46 : vector<2xf32> to vector<2x1xf32>
    %48 = vector.broadcast %47 : vector<2x1xf32> to vector<2x128xf32>
    %49 = arith.subf %45, %48 : vector<2x128xf32>
    %50 = math.exp %49 : vector<2x128xf32>
    %cst_47 = arith.constant dense<0.000000e+00> : vector<2xf32>
    %51 = vector.multi_reduction <add>, %50, %cst_47 [1] : vector<2x128xf32> to vector<2xf32>
    %52 = vector.shape_cast %51 : vector<2xf32> to vector<2x1xf32>
    %53 = math.log %52 : vector<2x1xf32>
    %54 = vector.broadcast %53 : vector<2x1xf32> to vector<2x128xf32>
    %55 = arith.subf %49, %54 : vector<2x128xf32>
    %c0_48 = arith.constant 0 : index
    %c0_49 = arith.constant 0 : index
    %56 = vector.load %arg14[%c0_48, %c0_49] : memref<2x128xf32, #tpu.memory_space<vmem>>, vector<2x128xf32>
    tpu.vector_store %arg14[%c0_48, %c0_49], %55 {strides = array<i32>} : memref<2x128xf32, #tpu.memory_space<vmem>>, vector<2x128xf32>,
    return
  }
  func.func @transform_0(%arg0: i32) -> (i32, i32, i32) {
    %c0_i32 = arith.constant 0 : i32
    %c0_i32_0 = arith.constant 0 : i32
    %c0_i32_1 = arith.constant 0 : i32
    return %arg0, %c0_i32, %c0_i32_0 : i32, i32, i32
  }
  func.func @transform_1(%arg0: i32) -> (i32, i32) {
    %c0_i32 = arith.constant 0 : i32
    %c0_i32_0 = arith.constant 0 : i32
    %c0_i32_1 = arith.constant 0 : i32
    return %c0_i32, %c0_i32_0 : i32, i32
  }
  func.func @transform_2(%arg0: i32) -> (i32, i32) {
    %c0_i32 = arith.constant 0 : i32
    %c0_i32_0 = arith.constant 0 : i32
    %c0_i32_1 = arith.constant 0 : i32
    return %c0_i32, %c0_i32_0 : i32, i32
  }
  func.func @transform_3(%arg0: i32) -> (i32, i32, i32) {
    %c0_i32 = arith.constant 0 : i32
    %c0_i32_0 = arith.constant 0 : i32
    %c0_i32_1 = arith.constant 0 : i32
    %c0_i32_2 = arith.constant 0 : i32
    return %c0_i32, %c0_i32_0, %c0_i32_1 : i32, i32, i32
  }
  func.func @transform_4(%arg0: i32) -> (i32, i32) {
    %c0_i32 = arith.constant 0 : i32
    %c0_i32_0 = arith.constant 0 : i32
    %c0_i32_1 = arith.constant 0 : i32
    return %c0_i32, %c0_i32_0 : i32, i32
  }
  func.func @transform_5(%arg0: i32) -> (i32, i32, i32) {
    %c0_i32 = arith.constant 0 : i32
    %c0_i32_0 = arith.constant 0 : i32
    %c0_i32_1 = arith.constant 0 : i32
    %c0_i32_2 = arith.constant 0 : i32
    return %c0_i32, %c0_i32_0, %c0_i32_1 : i32, i32, i32
  }
  func.func @transform_6(%arg0: i32) -> (i32, i32) {
    %c0_i32 = arith.constant 0 : i32
    %c0_i32_0 = arith.constant 0 : i32
    %c0_i32_1 = arith.constant 0 : i32
    return %c0_i32, %c0_i32_0 : i32, i32
  }
  func.func @transform_7(%arg0: i32) -> (i32, i32, i32) {
    %c0_i32 = arith.constant 0 : i32
    %c0_i32_0 = arith.constant 0 : i32
    %c0_i32_1 = arith.constant 0 : i32
    %c0_i32_2 = arith.constant 0 : i32
    return %c0_i32, %c0_i32_0, %c0_i32_1 : i32, i32, i32
  }
  func.func @transform_8(%arg0: i32) -> (i32, i32) {
    %c0_i32 = arith.constant 0 : i32
    %c0_i32_0 = arith.constant 0 : i32
    %c0_i32_1 = arith.constant 0 : i32
    return %c0_i32, %c0_i32_0 : i32, i32
  }
  func.func @transform_9(%arg0: i32) -> (i32, i32) {
    %c0_i32 = arith.constant 0 : i32
    %c0_i32_0 = arith.constant 0 : i32
    %c0_i32_1 = arith.constant 0 : i32
    return %c0_i32, %c0_i32_0 : i32, i32
  }
  func.func @transform_10(%arg0: i32) -> (i32, i32) {
    %c0_i32 = arith.constant 0 : i32
    %c0_i32_0 = arith.constant 0 : i32
    %c0_i32_1 = arith.constant 0 : i32
    return %c0_i32, %c0_i32_0 : i32, i32
  }
  func.func @transform_11(%arg0: i32) -> (i32, i32) {
    %c0_i32 = arith.constant 0 : i32
    %c0_i32_0 = arith.constant 0 : i32
    %c0_i32_1 = arith.constant 0 : i32
    return %c0_i32, %c0_i32_0 : i32, i32
  }
  func.func @transform_12(%arg0: i32) -> (i32, i32) {
    %c0_i32 = arith.constant 0 : i32
    %c0_i32_0 = arith.constant 0 : i32
    %c0_i32_1 = arith.constant 0 : i32
    return %c0_i32, %c0_i32_0 : i32, i32
  }
  func.func @transform_13(%arg0: i32) -> (i32, i32) {
    %c0_i32 = arith.constant 0 : i32
    %c0_i32_0 = arith.constant 0 : i32
    return %arg0, %c0_i32 : i32, i32
  }
}

</mosaic_0001>

<llo_original>
// kernel: cnn_classifier_forward.1
$region0: #{cnn_classifier_forward.1}
  #allocation0 [shape = 'u32[]', space=smem, size = 0x4, offset = 0x4, fixed_abs, tag = 'smem constant byte address 0x4 - core index']
  #allocation1 [shape = 'u32[72,128]{1,0:T(1,128)}', space=vmem, size = 0x9000, scoped, tag = 'internal scratch']
  #allocation2 [shape = 'f32[232,128]{1,0:T(8,128)}', space=vmem, size = 0x1d000, scoped, tag = 'scratch operand']
  #allocation3 [shape = 'f32[40,128]{1,0:T(8,128)}', space=vmem, size = 0x5000, scoped, tag = 'scratch operand']
  #allocation4 [shape = 'f32[184,128]{1,0:T(8,128)}', space=vmem, size = 0x17000, scoped, tag = 'scratch operand']
  #allocation5 [shape = 'f32[32,128]{1,0:T(8,128)}', space=vmem, size = 0x4000, scoped, tag = 'scratch operand']
  #allocation6 [shape = 'f32[4,2,128]{2,1,0:T(2,128)}', space=vmem, size = 0x1000, scoped, tag = 'scratch operand']
  %s0 = inlined_call_operand.vmem [shape: f32[2,1024,32], index: 0, kind: input, shape index: {}]
  %s1 = inlined_call_operand.vmem [shape: f32[32,128], index: 1, kind: input, shape index: {}]
  %s2 = inlined_call_operand.vmem [shape: f32[1,128], index: 2, kind: input, shape index: {}]
  %s3 = inlined_call_operand.vmem [shape: f32[9,128,128], index: 3, kind: input, shape index: {}]
  %s4 = inlined_call_operand.vmem [shape: f32[1,128], index: 4, kind: input, shape index: {}]
  %s5 = inlined_call_operand.vmem [shape: f32[9,128,128], index: 5, kind: input, shape index: {}]
  %s6 = inlined_call_operand.vmem [shape: f32[1,128], index: 6, kind: input, shape index: {}]
  %s7 = inlined_call_operand.vmem [shape: f32[4,128,128], index: 7, kind: input, shape index: {}]
  %s8 = inlined_call_operand.vmem [shape: f32[1,128], index: 8, kind: input, shape index: {}]
  %s9 = inlined_call_operand.vmem [shape: f32[128,128], index: 9, kind: input, shape index: {}]
  %s10 = inlined_call_operand.vmem [shape: f32[1,128], index: 10, kind: input, shape index: {}]
  %s11 = inlined_call_operand.vmem [shape: f32[128,128], index: 11, kind: input, shape index: {}]
  %s12 = inlined_call_operand.vmem [shape: f32[1,128], index: 12, kind: input, shape index: {}]
  %s13 = inlined_call_operand.hbm [shape: f32[2,128], index: 13, kind: output, shape index: {}]
  %s14 = sld [smem:[#allocation0]]
  $region69: #{cnn_classifier_forward.1} parent=0
    _
  %s16 = ssub.s32 1, %s14
  %s17 = scalar_select 0, %s16, %s14
  $region1: #{cnn_classifier_forward.1} parent=0
    #allocation7 [shape = 'u8[1024]{0}', space=vmem, size = 0x400, scoped, tag = 'output window, operand 0, single buffered']
    #allocation8 [shape = 's32[1]{0}', space=sflag, size = 0x4, scoped, tag = 'scoped memory for cnn_classifier_forward.1']
    %18 = vsyncpa [#allocation8], 0
    // Predicated region
    $region2: #{cnn_classifier_forward.1} parent=1 // pred_check
      _
    $region3: #{cnn_classifier_forward.1} parent=1 // pred_check_branch
      %20 = sbr.rel (0) target = $region5
    $region4: #{cnn_classifier_forward.1} parent=1 // pred_region
      _
    $region5: #{cnn_classifier_forward.1} parent=1 // pred_fallthru
      _
    // Predicated region
    $region6: #{cnn_classifier_forward.1} parent=1 // pred_check
      _
    $region7: #{cnn_classifier_forward.1} parent=1 // pred_check_branch
      %22 = sbr.rel (0) target = $region9
    $region8: #{cnn_classifier_forward.1} parent=1 // pred_region
      _
    $region9: #{cnn_classifier_forward.1} parent=1 // pred_fallthru
      _
    // Predicated region
    $region10: #{cnn_classifier_forward.1} parent=1 // pred_check
      _
    $region11: #{cnn_classifier_forward.1} parent=1 // pred_check_branch
      %24 = sbr.rel (0) target = $region13
    $region12: #{cnn_classifier_forward.1} parent=1 // pred_region
      _
    $region13: #{cnn_classifier_forward.1} parent=1 // pred_fallthru
      _
    // Predicated region
    $region14: #{cnn_classifier_forward.1} parent=1 // pred_check
      _
    $region15: #{cnn_classifier_forward.1} parent=1 // pred_check_branch
      %26 = sbr.rel (0) target = $region17
    $region16: #{cnn_classifier_forward.1} parent=1 // pred_region
      _
    $region17: #{cnn_classifier_forward.1} parent=1 // pred_fallthru
      _
    // Predicated region
    $region18: #{cnn_classifier_forward.1} parent=1 // pred_check
      _
    $region19: #{cnn_classifier_forward.1} parent=1 // pred_check_branch
      %28 = sbr.rel (0) target = $region21
    $region20: #{cnn_classifier_forward.1} parent=1 // pred_region
      _
    $region21: #{cnn_classifier_forward.1} parent=1 // pred_fallthru
      _
    // Predicated region
    $region22: #{cnn_classifier_forward.1} parent=1 // pred_check
      _
    $region23: #{cnn_classifier_forward.1} parent=1 // pred_check_branch
      %30 = sbr.rel (0) target = $region25
    $region24: #{cnn_classifier_forward.1} parent=1 // pred_region
      _
    $region25: #{cnn_classifier_forward.1} parent=1 // pred_fallthru
      _
    // Predicated region
    $region26: #{cnn_classifier_forward.1} parent=1 // pred_check
      _
    $region27: #{cnn_classifier_forward.1} parent=1 // pred_check_branch
      %32 = sbr.rel (0) target = $region29
    $region28: #{cnn_classifier_forward.1} parent=1 // pred_region
      _
    $region29: #{cnn_classifier_forward.1} parent=1 // pred_fallthru
      _
    // Predicated region
    $region30: #{cnn_classifier_forward.1} parent=1 // pred_check
      _
    $region31: #{cnn_classifier_forward.1} parent=1 // pred_check_branch
      %34 = sbr.rel (0) target = $region33
    $region32: #{cnn_classifier_forward.1} parent=1 // pred_region
      _
    $region33: #{cnn_classifier_forward.1} parent=1 // pred_fallthru
      _
    // Predicated region
    $region34: #{cnn_classifier_forward.1} parent=1 // pred_check
      _
    $region35: #{cnn_classifier_forward.1} parent=1 // pred_check_branch
      %36 = sbr.rel (0) target = $region37
    $region36: #{cnn_classifier_forward.1} parent=1 // pred_region
      _
    $region37: #{cnn_classifier_forward.1} parent=1 // pred_fallthru
      _
    // Predicated region
    $region38: #{cnn_classifier_forward.1} parent=1 // pred_check
      _
    $region39: #{cnn_classifier_forward.1} parent=1 // pred_check_branch
      %38 = sbr.rel (0) target = $region41
    $region40: #{cnn_classifier_forward.1} parent=1 // pred_region
      _
    $region41: #{cnn_classifier_forward.1} parent=1 // pred_fallthru
      _
    // Predicated region
    $region42: #{cnn_classifier_forward.1} parent=1 // pred_check
      _
    $region43: #{cnn_classifier_forward.1} parent=1 // pred_check_branch
      %40 = sbr.rel (0) target = $region45
    $region44: #{cnn_classifier_forward.1} parent=1 // pred_region
      _
    $region45: #{cnn_classifier_forward.1} parent=1 // pred_fallthru
      _
    // Predicated region
    $region46: #{cnn_classifier_forward.1} parent=1 // pred_check
      _
    $region47: #{cnn_classifier_forward.1} parent=1 // pred_check_branch
      %42 = sbr.rel (0) target = $region49
    $region48: #{cnn_classifier_forward.1} parent=1 // pred_region
      _
    $region49: #{cnn_classifier_forward.1} parent=1 // pred_fallthru
      _
    // Predicated region
    $region50: #{cnn_classifier_forward.1} parent=1 // pred_check
      _
    $region51: #{cnn_classifier_forward.1} parent=1 // pred_check_branch
      %44 = sbr.rel (0) target = $region53
    $region52: #{cnn_classifier_forward.1} parent=1 // pred_region
      _
    $region53: #{cnn_classifier_forward.1} parent=1 // pred_fallthru
      _
    %45 = vst [vmem:[#allocation3 + $0x24] sm:$0xf] 0.0
    %v46 = vld [vmem:[%s2] sm:$0x1]
    %v47 = vld [vmem:[%s4] sm:$0x1]
    %v48 = vld [vmem:[%s6] sm:$0x1]
    loop: start=0, step=1, limit=2
    $region54: #{cnn_classifier_forward.1} parent=1 // loop_pre_header
      _
    $region55: #{cnn_classifier_forward.1} parent=1 // loop_header
      %s50 = sphi 0, %s54
      %p51 = scmp.ge.s32.totalorder %s50, 2
    $region56: #{cnn_classifier_forward.1} parent=1 // loop_header_branch
      %53 = sbr.rel (%p51) target = $region60
    $region57: #{cnn_classifier_forward.1} parent=1 // loop_body
      %s55 = smul.u32 %s50, 1024
      %s56 = scalar_lea.vmem %s0, %s55
      %v57 = vld [vmem:[%s56] sm:$0xff]
      %v58 = vld [vmem:[%s56 + $0x8] sm:$0xff]
      %v59 = vld [vmem:[%s56 + $0x10] sm:$0xff]
      %v60 = vld [vmem:[%s56 + $0x18] sm:$0xff]
      %v61 = vld [vmem:[%s56 + $0x20] sm:$0xff]
      %v62 = vld [vmem:[%s56 + $0x28] sm:$0xff]
      %v63 = vld [vmem:[%s56 + $0x30] sm:$0xff]
      %v64 = vld [vmem:[%s56 + $0x38] sm:$0xff]
      %v65 = vld [vmem:[%s1] sm:$0xff]
      %v66 = vld [vmem:[%s1 + $0x8] sm:$0xff]
      %v67 = vld [vmem:[%s1 + $0x10] sm:$0xff]
      %v68 = vld [vmem:[%s1 + $0x18] sm:$0xff]
      %vm69 = vcmask 261120
      %v71 = vsel %vm69, %v57, 0
      %v74 = vsel %vm69, %v58, 0
      %v77 = vsel %vm69, %v59, 0
      %v80 = vsel %vm69, %v60, 0
      %v83 = vsel %vm69, %v61, 0
      %v86 = vsel %vm69, %v62, 0
      %v89 = vsel %vm69, %v63, 0
      %v92 = vsel %vm69, %v64, 0
      %94 = vmatpush.msra.mxu0 0.0
      %95 = vmatpush.msra.mxu0 0.0
      %96 = vmatpush.msra.mxu0 0.0
      %97 = vmatpush.msra.mxu0 0.0
      %98 = vmatpush.msra.mxu0 0.0
      %99 = vmatpush.msra.mxu0 0.0
      %100 = vmatpush.msra.mxu0 0.0
      %101 = vmatpush.msra.mxu0 0.0
      %102 = vmatpush.msra.mxu0 0.0
      %103 = vmatpush.msra.mxu0 0.0
      %104 = vmatpush.msra.mxu0 0.0
      %105 = vmatpush.msra.mxu0 0.0
      %106 = vmatpush.msra.mxu0 %v68
      %107 = vmatpush.msra.mxu0 %v67
      %108 = vmatpush.msra.mxu0 %v66
      %109 = vmatpush.msra.mxu0 %v65
      %110 = vmatmul.f32.gmra.mxu0 %v71
      %v111 = vpop.f32.mrf.mxu0
      %v112 = vadd.f32 0.0, %v111
      %113 = vmatmul.f32.gmra.mxu0 %v74
      %v114 = vpop.f32.mrf.mxu0
      %v115 = vadd.f32 0.0, %v114
      %116 = vmatmul.f32.gmra.mxu0 %v77
      %v117 = vpop.f32.mrf.mxu0
      %v118 = vadd.f32 0.0, %v117
      %119 = vmatmul.f32.gmra.mxu0 %v80
      %v120 = vpop.f32.mrf.mxu0
      %v121 = vadd.f32 0.0, %v120
      %122 = vmatmul.f32.gmra.mxu0 %v83
      %v123 = vpop.f32.mrf.mxu0
      %v124 = vadd.f32 0.0, %v123
      %125 = vmatmul.f32.gmra.mxu0 %v86
      %v126 = vpop.f32.mrf.mxu0
      %v127 = vadd.f32 0.0, %v126
      %128 = vmatmul.f32.gmra.mxu0 %v89
      %v129 = vpop.f32.mrf.mxu0
      %v130 = vadd.f32 0.0, %v129
      %131 = vmatmul.f32.gmra.mxu0 %v92
      %v132 = vpop.f32.mrf.mxu0
      %v133 = vadd.f32 0.0, %v132
      %134 = vdwg.mxu0
      %vm143 = vcmask 1046528
      %v144 = vrot.slane %v112, 1
      %v145 = vrot.slane %v115, 1
      %v146 = vsel %vm143, %v144, %v145
      %v147 = vrot.slane %v118, 1
      %v148 = vsel %vm143, %v145, %v147
      %v149 = vrot.slane %v121, 1
      %v150 = vsel %vm143, %v147, %v149
      %v151 = vrot.slane %v124, 1
      %v152 = vsel %vm143, %v149, %v151
      %v153 = vrot.slane %v127, 1
      %v154 = vsel %vm143, %v151, %v153
      %v155 = vrot.slane %v130, 1
      %v156 = vsel %vm143, %v153, %v155
      %v157 = vrot.slane %v133, 1
      %v158 = vsel %vm143, %v155, %v157
      %v167 = vmax.f32 %v112, %v146
      %v168 = vmax.f32 %v115, %v148
      %v169 = vmax.f32 %v118, %v150
      %v170 = vmax.f32 %v121, %v152
      %v171 = vmax.f32 %v124, %v154
      %v172 = vmax.f32 %v127, %v156
      %v173 = vmax.f32 %v130, %v158
      %v174 = vmax.f32 %v133, %v157
      %v175 = vmax.f32 %v167, %v171
      %v176 = vmax.f32 %v168, %v172
      %v177 = vmax.f32 %v169, %v173
      %v178 = vmax.f32 %v170, %v174
      %v180 = vperm.slane %v46, 0
      %v182 = vadd.f32 %v175, %v180
      %v183 = vadd.f32 %v176, %v180
      %v184 = vadd.f32 %v177, %v180
      %v185 = vadd.f32 %v178, %v180
      %v186 = vmax.f32 %v182, 0.0
      %v187 = vmax.f32 %v183, 0.0
      %v188 = vmax.f32 %v184, 0.0
      %v189 = vmax.f32 %v185, 0.0
      %190 = vst [vmem:[#allocation5] sm:$0xff] %v186
      %191 = vst [vmem:[#allocation5 + $0x8] sm:$0xff] %v187
      %192 = vst [vmem:[#allocation5 + $0x10] sm:$0xff] %v188
      %193 = vst [vmem:[#allocation5 + $0x18] sm:$0x7f] %v189
      %v194 = vld [vmem:[#allocation5] ss:$2 sm:$0xff]
      %s195 = scalar_lea.vmem [#allocation5], 16
      %v196 = vld [vmem:[%s195] ss:$2 sm:$0x7f]
      %197 = vst [vmem:[#allocation2] sm:$0xff] %v194
      %198 = vst [vmem:[#allocation2 + $0x8] sm:$0x7f] %v196
      %v199 = vld [vmem:[%s56 + $0x40] sm:$0xff]
      %v200 = vld [vmem:[%s56 + $0x48] sm:$0xff]
      %v201 = vld [vmem:[%s56 + $0x50] sm:$0xff]
      %v202 = vld [vmem:[%s56 + $0x58] sm:$0xff]
      %v203 = vld [vmem:[%s56 + $0x60] sm:$0xff]
      %v204 = vld [vmem:[%s56 + $0x68] sm:$0xff]
      %v205 = vld [vmem:[%s56 + $0x70] sm:$0xff]
      %v206 = vld [vmem:[%s56 + $0x78] sm:$0xff]
      %v207 = vld [vmem:[%s1] sm:$0xff]
      %v208 = vld [vmem:[%s1 + $0x8] sm:$0xff]
      %v209 = vld [vmem:[%s1 + $0x10] sm:$0xff]
      %v210 = vld [vmem:[%s1 + $0x18] sm:$0xff]
      %v212 = vsel %vm69, %v199, 0
      %v215 = vsel %vm69, %v200, 0
      %v218 = vsel %vm69, %v201, 0
      %v221 = vsel %vm69, %v202, 0
      %v224 = vsel %vm69, %v203, 0
      %v227 = vsel %vm69, %v204, 0
      %v230 = vsel %vm69, %v205, 0
      %v233 = vsel %vm69, %v206, 0
      %235 = vmatpush.msra.mxu0 0.0
      %236 = vmatpush.msra.mxu0 0.0
      %237 = vmatpush.msra.mxu0 0.0
      %238 = vmatpush.msra.mxu0 0.0
      %239 = vmatpush.msra.mxu0 0.0
      %240 = vmatpush.msra.mxu0 0.0
      %241 = vmatpush.msra.mxu0 0.0
      %242 = vmatpush.msra.mxu0 0.0
      %243 = vmatpush.msra.mxu0 0.0
      %244 = vmatpush.msra.mxu0 0.0
      %245 = vmatpush.msra.mxu0 0.0
      %246 = vmatpush.msra.mxu0 0.0
      %247 = vmatpush.msra.mxu0 %v210
      %248 = vmatpush.msra.mxu0 %v209
      %249 = vmatpush.msra.mxu0 %v208
      %250 = vmatpush.msra.mxu0 %v207
      %251 = vmatmul.f32.gmra.mxu0 %v212
      %v252 = vpop.f32.mrf.mxu0
      %v253 = vadd.f32 0.0, %v252
      %254 = vmatmul.f32.gmra.mxu0 %v215
      %v255 = vpop.f32.mrf.mxu0
      %v256 = vadd.f32 0.0, %v255
      %257 = vmatmul.f32.gmra.mxu0 %v218
      %v258 = vpop.f32.mrf.mxu0
      %v259 = vadd.f32 0.0, %v258
      %260 = vmatmul.f32.gmra.mxu0 %v221
      %v261 = vpop.f32.mrf.mxu0
      %v262 = vadd.f32 0.0, %v261
      %263 = vmatmul.f32.gmra.mxu0 %v224
      %v264 = vpop.f32.mrf.mxu0
      %v265 = vadd.f32 0.0, %v264
      %266 = vmatmul.f32.gmra.mxu0 %v227
      %v267 = vpop.f32.mrf.mxu0
      %v268 = vadd.f32 0.0, %v267
      %269 = vmatmul.f32.gmra.mxu0 %v230
      %v270 = vpop.f32.mrf.mxu0
      %v271 = vadd.f32 0.0, %v270
      %272 = vmatmul.f32.gmra.mxu0 %v233
      %v273 = vpop.f32.mrf.mxu0
      %v274 = vadd.f32 0.0, %v273
      %275 = vdwg.mxu0
      %v284 = vrot.slane %v253, 1
      %v285 = vrot.slane %v256, 1
      %v286 = vsel %vm143, %v284, %v285
      %v287 = vrot.slane %v259, 1
      %v288 = vsel %vm143, %v285, %v287
      %v289 = vrot.slane %v262, 1
      %v290 = vsel %vm143, %v287, %v289
      %v291 = vrot.slane %v265, 1
      %v292 = vsel %vm143, %v289, %v291
      %v293 = vrot.slane %v268, 1
      %v294 = vsel %vm143, %v291, %v293
      %v295 = vrot.slane %v271, 1
      %v296 = vsel %vm143, %v293, %v295
      %v297 = vrot.slane %v274, 1
      %v298 = vsel %vm143, %v295, %v297
      %v307 = vmax.f32 %v253, %v286
      %v308 = vmax.f32 %v256, %v288
      %v309 = vmax.f32 %v259, %v290
      %v310 = vmax.f32 %v262, %v292
      %v311 = vmax.f32 %v265, %v294
      %v312 = vmax.f32 %v268, %v296
      %v313 = vmax.f32 %v271, %v298
      %v314 = vmax.f32 %v274, %v297
      %v315 = vmax.f32 %v307, %v311
      %v316 = vmax.f32 %v308, %v312
      %v317 = vmax.f32 %v309, %v313
      %v318 = vmax.f32 %v310, %v314
      %v319 = vadd.f32 %v315, %v180
      %v320 = vadd.f32 %v316, %v180
      %v321 = vadd.f32 %v317, %v180
      %v322 = vadd.f32 %v318, %v180
      %v323 = vmax.f32 %v319, 0.0
      %v324 = vmax.f32 %v320, 0.0
      %v325 = vmax.f32 %v321, 0.0
      %v326 = vmax.f32 %v322, 0.0
      %327 = vst [vmem:[#allocation5] sm:$0xff] %v323
      %328 = vst [vmem:[#allocation5 + $0x8] sm:$0xff] %v324
      %329 = vst [vmem:[#allocation5 + $0x10] sm:$0xff] %v325
      %330 = vst [vmem:[#allocation5 + $0x18] sm:$0x7f] %v326
      %v331 = vld [vmem:[#allocation5] ss:$2 sm:$0xff]
      %v332 = vld [vmem:[%s195] ss:$2 sm:$0x7f]
      %333 = vst [vmem:[#allocation2 + $0xf] sm:$0xff] %v331
      %334 = vst [vmem:[#allocation2 + $0x17] sm:$0x7f] %v332
      %v335 = vld [vmem:[%s56 + $0x80] sm:$0xff]
      %v336 = vld [vmem:[%s56 + $0x88] sm:$0xff]
      %v337 = vld [vmem:[%s56 + $0x90] sm:$0xff]
      %v338 = vld [vmem:[%s56 + $0x98] sm:$0xff]
      %v339 = vld [vmem:[%s56 + $0xa0] sm:$0xff]
      %v340 = vld [vmem:[%s56 + $0xa8] sm:$0xff]
      %v341 = vld [vmem:[%s56 + $0xb0] sm:$0xff]
      %v342 = vld [vmem:[%s56 + $0xb8] sm:$0xff]
      %v343 = vld [vmem:[%s1] sm:$0xff]
      %v344 = vld [vmem:[%s1 + $0x8] sm:$0xff]
      %v345 = vld [vmem:[%s1 + $0x10] sm:$0xff]
      %v346 = vld [vmem:[%s1 + $0x18] sm:$0xff]
      %v348 = vsel %vm69, %v335, 0
      %v351 = vsel %vm69, %v336, 0
      %v354 = vsel %vm69, %v337, 0
      %v357 = vsel %vm69, %v338, 0
      %v360 = vsel %vm69, %v339, 0
      %v363 = vsel %vm69, %v340, 0
      %v366 = vsel %vm69, %v341, 0
      %v369 = vsel %vm69, %v342, 0
      %371 = vmatpush.msra.mxu0 0.0
      %372 = vmatpush.msra.mxu0 0.0
      %373 = vmatpush.msra.mxu0 0.0
      %374 = vmatpush.msra.mxu0 0.0
      %375 = vmatpush.msra.mxu0 0.0
      %376 = vmatpush.msra.mxu0 0.0
      %377 = vmatpush.msra.mxu0 0.0
      %378 = vmatpush.msra.mxu0 0.0
      %379 = vmatpush.msra.mxu0 0.0
      %380 = vmatpush.msra.mxu0 0.0
      %381 = vmatpush.msra.mxu0 0.0
      %382 = vmatpush.msra.mxu0 0.0
      %383 = vmatpush.msra.mxu0 %v346
      %384 = vmatpush.msra.mxu0 %v345
      %385 = vmatpush.msra.mxu0 %v344
      %386 = vmatpush.msra.mxu0 %v343
      %387 = vmatmul.f32.gmra.mxu0 %v348
      %v388 = vpop.f32.mrf.mxu0
      %v389 = vadd.f32 0.0, %v388
      %390 = vmatmul.f32.gmra.mxu0 %v351
      %v391 = vpop.f32.mrf.mxu0
      %v392 = vadd.f32 0.0, %v391
      %393 = vmatmul.f32.gmra.mxu0 %v354
      %v394 = vpop.f32.mrf.mxu0
      %v395 = vadd.f32 0.0, %v394
      %396 = vmatmul.f32.gmra.mxu0 %v357
      %v397 = vpop.f32.mrf.mxu0
      %v398 = vadd.f32 0.0, %v397
      %399 = vmatmul.f32.gmra.mxu0 %v360
      %v400 = vpop.f32.mrf.mxu0
      %v401 = vadd.f32 0.0, %v400
      %402 = vmatmul.f32.gmra.mxu0 %v363
      %v403 = vpop.f32.mrf.mxu0
      %v404 = vadd.f32 0.0, %v403
      %405 = vmatmul.f32.gmra.mxu0 %v366
      %v406 = vpop.f32.mrf.mxu0
      %v407 = vadd.f32 0.0, %v406
      %408 = vmatmul.f32.gmra.mxu0 %v369
      %v409 = vpop.f32.mrf.mxu0
      %v410 = vadd.f32 0.0, %v409
      %411 = vdwg.mxu0
      %v420 = vrot.slane %v389, 1
      %v421 = vrot.slane %v392, 1
      %v422 = vsel %vm143, %v420, %v421
      %v423 = vrot.slane %v395, 1
      %v424 = vsel %vm143, %v421, %v423
      %v425 = vrot.slane %v398, 1
      %v426 = vsel %vm143, %v423, %v425
      %v427 = vrot.slane %v401, 1
      %v428 = vsel %vm143, %v425, %v427
      %v429 = vrot.slane %v404, 1
      %v430 = vsel %vm143, %v427, %v429
      %v431 = vrot.slane %v407, 1
      %v432 = vsel %vm143, %v429, %v431
      %v433 = vrot.slane %v410, 1
      %v434 = vsel %vm143, %v431, %v433
      %v443 = vmax.f32 %v389, %v422
      %v444 = vmax.f32 %v392, %v424
      %v445 = vmax.f32 %v395, %v426
      %v446 = vmax.f32 %v398, %v428
      %v447 = vmax.f32 %v401, %v430
      %v448 = vmax.f32 %v404, %v432
      %v449 = vmax.f32 %v407, %v434
      %v450 = vmax.f32 %v410, %v433
      %v451 = vmax.f32 %v443, %v447
      %v452 = vmax.f32 %v444, %v448
      %v453 = vmax.f32 %v445, %v449
      %v454 = vmax.f32 %v446, %v450
      %v455 = vadd.f32 %v451, %v180
      %v456 = vadd.f32 %v452, %v180
      %v457 = vadd.f32 %v453, %v180
      %v458 = vadd.f32 %v454, %v180
      %v459 = vmax.f32 %v455, 0.0
      %v460 = vmax.f32 %v456, 0.0
      %v461 = vmax.f32 %v457, 0.0
      %v462 = vmax.f32 %v458, 0.0
      %463 = vst [vmem:[#allocation5] sm:$0xff] %v459
      %464 = vst [vmem:[#allocation5 + $0x8] sm:$0xff] %v460
      %465 = vst [vmem:[#allocation5 + $0x10] sm:$0xff] %v461
      %466 = vst [vmem:[#allocation5 + $0x18] sm:$0x7f] %v462
      %v467 = vld [vmem:[#allocation5] ss:$2 sm:$0xff]
      %v468 = vld [vmem:[%s195] ss:$2 sm:$0x7f]
      %469 = vst [vmem:[#allocation2 + $0x1e] sm:$0xff] %v467
      %470 = vst [vmem:[#allocation2 + $0x26] sm:$0x7f] %v468
      %v471 = vld [vmem:[%s56 + $0xc0] sm:$0xff]
      %v472 = vld [vmem:[%s56 + $0xc8] sm:$0xff]
      %v473 = vld [vmem:[%s56 + $0xd0] sm:$0xff]
      %v474 = vld [vmem:[%s56 + $0xd8] sm:$0xff]
      %v475 = vld [vmem:[%s56 + $0xe0] sm:$0xff]
      %v476 = vld [vmem:[%s56 + $0xe8] sm:$0xff]
      %v477 = vld [vmem:[%s56 + $0xf0] sm:$0xff]
      %v478 = vld [vmem:[%s56 + $0xf8] sm:$0xff]
      %v479 = vld [vmem:[%s1] sm:$0xff]
      %v480 = vld [vmem:[%s1 + $0x8] sm:$0xff]
      %v481 = vld [vmem:[%s1 + $0x10] sm:$0xff]
      %v482 = vld [vmem:[%s1 + $0x18] sm:$0xff]
      %v484 = vsel %vm69, %v471, 0
      %v487 = vsel %vm69, %v472, 0
      %v490 = vsel %vm69, %v473, 0
      %v493 = vsel %vm69, %v474, 0
      %v496 = vsel %vm69, %v475, 0
      %v499 = vsel %vm69, %v476, 0
      %v502 = vsel %vm69, %v477, 0
      %v505 = vsel %vm69, %v478, 0
      %507 = vmatpush.msra.mxu0 0.0
      %508 = vmatpush.msra.mxu0 0.0
      %509 = vmatpush.msra.mxu0 0.0
      %510 = vmatpush.msra.mxu0 0.0
      %511 = vmatpush.msra.mxu0 0.0
      %512 = vmatpush.msra.mxu0 0.0
      %513 = vmatpush.msra.mxu0 0.0
      %514 = vmatpush.msra.mxu0 0.0
      %515 = vmatpush.msra.mxu0 0.0
      %516 = vmatpush.msra.mxu0 0.0
      %517 = vmatpush.msra.mxu0 0.0
      %518 = vmatpush.msra.mxu0 0.0
      %519 = vmatpush.msra.mxu0 %v482
      %520 = vmatpush.msra.mxu0 %v481
      %521 = vmatpush.msra.mxu0 %v480
      %522 = vmatpush.msra.mxu0 %v479
      %523 = vmatmul.f32.gmra.mxu0 %v484
      %v524 = vpop.f32.mrf.mxu0
      %v525 = vadd.f32 0.0, %v524
      %526 = vmatmul.f32.gmra.mxu0 %v487
      %v527 = vpop.f32.mrf.mxu0
      %v528 = vadd.f32 0.0, %v527
      %529 = vmatmul.f32.gmra.mxu0 %v490
      %v530 = vpop.f32.mrf.mxu0
      %v531 = vadd.f32 0.0, %v530
      %532 = vmatmul.f32.gmra.mxu0 %v493
      %v533 = vpop.f32.mrf.mxu0
      %v534 = vadd.f32 0.0, %v533
      %535 = vmatmul.f32.gmra.mxu0 %v496
      %v536 = vpop.f32.mrf.mxu0
      %v537 = vadd.f32 0.0, %v536
      %538 = vmatmul.f32.gmra.mxu0 %v499
      %v539 = vpop.f32.mrf.mxu0
      %v540 = vadd.f32 0.0, %v539
      %541 = vmatmul.f32.gmra.mxu0 %v502
      %v542 = vpop.f32.mrf.mxu0
      %v543 = vadd.f32 0.0, %v542
      %544 = vmatmul.f32.gmra.mxu0 %v505
      %v545 = vpop.f32.mrf.mxu0
      %v546 = vadd.f32 0.0, %v545
      %547 = vdwg.mxu0
      %v556 = vrot.slane %v525, 1
      %v557 = vrot.slane %v528, 1
      %v558 = vsel %vm143, %v556, %v557
      %v559 = vrot.slane %v531, 1
      %v560 = vsel %vm143, %v557, %v559
      %v561 = vrot.slane %v534, 1
      %v562 = vsel %vm143, %v559, %v561
      %v563 = vrot.slane %v537, 1
      %v564 = vsel %vm143, %v561, %v563
      %v565 = vrot.slane %v540, 1
      %v566 = vsel %vm143, %v563, %v565
      %v567 = vrot.slane %v543, 1
      %v568 = vsel %vm143, %v565, %v567
      %v569 = vrot.slane %v546, 1
      %v570 = vsel %vm143, %v567, %v569
      %v579 = vmax.f32 %v525, %v558
      %v580 = vmax.f32 %v528, %v560
      %v581 = vmax.f32 %v531, %v562
      %v582 = vmax.f32 %v534, %v564
      %v583 = vmax.f32 %v537, %v566
      %v584 = vmax.f32 %v540, %v568
      %v585 = vmax.f32 %v543, %v570
      %v586 = vmax.f32 %v546, %v569
      %v587 = vmax.f32 %v579, %v583
      %v588 = vmax.f32 %v580, %v584
      %v589 = vmax.f32 %v581, %v585
      %v590 = vmax.f32 %v582, %v586
      %v591 = vadd.f32 %v587, %v180
      %v592 = vadd.f32 %v588, %v180
      %v593 = vadd.f32 %v589, %v180
      %v594 = vadd.f32 %v590, %v180
      %v595 = vmax.f32 %v591, 0.0
      %v596 = vmax.f32 %v592, 0.0
      %v597 = vmax.f32 %v593, 0.0
      %v598 = vmax.f32 %v594, 0.0
      %599 = vst [vmem:[#allocation5] sm:$0xff] %v595
      %600 = vst [vmem:[#allocation5 + $0x8] sm:$0xff] %v596
      %601 = vst [vmem:[#allocation5 + $0x10] sm:$0xff] %v597
      %602 = vst [vmem:[#allocation5 + $0x18] sm:$0x7f] %v598
      %v603 = vld [vmem:[#allocation5] ss:$2 sm:$0xff]
      %v604 = vld [vmem:[%s195] ss:$2 sm:$0x7f]
      %605 = vst [vmem:[#allocation2 + $0x2d] sm:$0xff] %v603
      %606 = vst [vmem:[#allocation2 + $0x35] sm:$0x7f] %v604
      %v607 = vld [vmem:[%s56 + $0x100] sm:$0xff]
      %v608 = vld [vmem:[%s56 + $0x108] sm:$0xff]
      %v609 = vld [vmem:[%s56 + $0x110] sm:$0xff]
      %v610 = vld [vmem:[%s56 + $0x118] sm:$0xff]
      %v611 = vld [vmem:[%s56 + $0x120] sm:$0xff]
      %v612 = vld [vmem:[%s56 + $0x128] sm:$0xff]
      %v613 = vld [vmem:[%s56 + $0x130] sm:$0xff]
      %v614 = vld [vmem:[%s56 + $0x138] sm:$0xff]
      %v615 = vld [vmem:[%s1] sm:$0xff]
      %v616 = vld [vmem:[%s1 + $0x8] sm:$0xff]
      %v617 = vld [vmem:[%s1 + $0x10] sm:$0xff]
      %v618 = vld [vmem:[%s1 + $0x18] sm:$0xff]
      %v620 = vsel %vm69, %v607, 0
      %v623 = vsel %vm69, %v608, 0
      %v626 = vsel %vm69, %v609, 0
      %v629 = vsel %vm69, %v610, 0
      %v632 = vsel %vm69, %v611, 0
      %v635 = vsel %vm69, %v612, 0
      %v638 = vsel %vm69, %v613, 0
      %v641 = vsel %vm69, %v614, 0
      %643 = vmatpush.msra.mxu0 0.0
      %644 = vmatpush.msra.mxu0 0.0
      %645 = vmatpush.msra.mxu0 0.0
      %646 = vmatpush.msra.mxu0 0.0
      %647 = vmatpush.msra.mxu0 0.0
      %648 = vmatpush.msra.mxu0 0.0
      %649 = vmatpush.msra.mxu0 0.0
      %650 = vmatpush.msra.mxu0 0.0
      %651 = vmatpush.msra.mxu0 0.0
      %652 = vmatpush.msra.mxu0 0.0
      %653 = vmatpush.msra.mxu0 0.0
      %654 = vmatpush.msra.mxu0 0.0
      %655 = vmatpush.msra.mxu0 %v618
      %656 = vmatpush.msra.mxu0 %v617
      %657 = vmatpush.msra.mxu0 %v616
      %658 = vmatpush.msra.mxu0 %v615
      %659 = vmatmul.f32.gmra.mxu0 %v620
      %v660 = vpop.f32.mrf.mxu0
      %v661 = vadd.f32 0.0, %v660
      %662 = vmatmul.f32.gmra.mxu0 %v623
      %v663 = vpop.f32.mrf.mxu0
      %v664 = vadd.f32 0.0, %v663
      %665 = vmatmul.f32.gmra.mxu0 %v626
      %v666 = vpop.f32.mrf.mxu0
      %v667 = vadd.f32 0.0, %v666
      %668 = vmatmul.f32.gmra.mxu0 %v629
      %v669 = vpop.f32.mrf.mxu0
      %v670 = vadd.f32 0.0, %v669
      %671 = vmatmul.f32.gmra.mxu0 %v632
      %v672 = vpop.f32.mrf.mxu0
      %v673 = vadd.f32 0.0, %v672
      %674 = vmatmul.f32.gmra.mxu0 %v635
      %v675 = vpop.f32.mrf.mxu0
      %v676 = vadd.f32 0.0, %v675
      %677 = vmatmul.f32.gmra.mxu0 %v638
      %v678 = vpop.f32.mrf.mxu0
      %v679 = vadd.f32 0.0, %v678
      %680 = vmatmul.f32.gmra.mxu0 %v641
      %v681 = vpop.f32.mrf.mxu0
      %v682 = vadd.f32 0.0, %v681
      %683 = vdwg.mxu0
      %v692 = vrot.slane %v661, 1
      %v693 = vrot.slane %v664, 1
      %v694 = vsel %vm143, %v692, %v693
      %v695 = vrot.slane %v667, 1
      %v696 = vsel %vm143, %v693, %v695
      %v697 = vrot.slane %v670, 1
      %v698 = vsel %vm143, %v695, %v697
      %v699 = vrot.slane %v673, 1
      %v700 = vsel %vm143, %v697, %v699
      %v701 = vrot.slane %v676, 1
      %v702 = vsel %vm143, %v699, %v701
      %v703 = vrot.slane %v679, 1
      %v704 = vsel %vm143, %v701, %v703
      %v705 = vrot.slane %v682, 1
      %v706 = vsel %vm143, %v703, %v705
      %v715 = vmax.f32 %v661, %v694
      %v716 = vmax.f32 %v664, %v696
      %v717 = vmax.f32 %v667, %v698
      %v718 = vmax.f32 %v670, %v700
      %v719 = vmax.f32 %v673, %v702
      %v720 = vmax.f32 %v676, %v704
      %v721 = vmax.f32 %v679, %v706
      %v722 = vmax.f32 %v682, %v705
      %v723 = vmax.f32 %v715, %v719
      %v724 = vmax.f32 %v716, %v720
      %v725 = vmax.f32 %v717, %v721
      %v726 = vmax.f32 %v718, %v722
      %v727 = vadd.f32 %v723, %v180
      %v728 = vadd.f32 %v724, %v180
      %v729 = vadd.f32 %v725, %v180
      %v730 = vadd.f32 %v726, %v180
      %v731 = vmax.f32 %v727, 0.0
      %v732 = vmax.f32 %v728, 0.0
      %v733 = vmax.f32 %v729, 0.0
      %v734 = vmax.f32 %v730, 0.0
      %735 = vst [vmem:[#allocation5] sm:$0xff] %v731
      %736 = vst [vmem:[#allocation5 + $0x8] sm:$0xff] %v732
      %737 = vst [vmem:[#allocation5 + $0x10] sm:$0xff] %v733
      %738 = vst [vmem:[#allocation5 + $0x18] sm:$0x7f] %v734
      %v739 = vld [vmem:[#allocation5] ss:$2 sm:$0xff]
      %v740 = vld [vmem:[%s195] ss:$2 sm:$0x7f]
      %741 = vst [vmem:[#allocation2 + $0x3c] sm:$0xff] %v739
      %742 = vst [vmem:[#allocation2 + $0x44] sm:$0x7f] %v740
      %v743 = vld [vmem:[%s56 + $0x140] sm:$0xff]
      %v744 = vld [vmem:[%s56 + $0x148] sm:$0xff]
      %v745 = vld [vmem:[%s56 + $0x150] sm:$0xff]
      %v746 = vld [vmem:[%s56 + $0x158] sm:$0xff]
      %v747 = vld [vmem:[%s56 + $0x160] sm:$0xff]
      %v748 = vld [vmem:[%s56 + $0x168] sm:$0xff]
      %v749 = vld [vmem:[%s56 + $0x170] sm:$0xff]
      %v750 = vld [vmem:[%s56 + $0x178] sm:$0xff]
      %v751 = vld [vmem:[%s1] sm:$0xff]
      %v752 = vld [vmem:[%s1 + $0x8] sm:$0xff]
      %v753 = vld [vmem:[%s1 + $0x10] sm:$0xff]
      %v754 = vld [vmem:[%s1 + $0x18] sm:$0xff]
      %v756 = vsel %vm69, %v743, 0
      %v759 = vsel %vm69, %v744, 0
      %v762 = vsel %vm69, %v745, 0
      %v765 = vsel %vm69, %v746, 0
      %v768 = vsel %vm69, %v747, 0
      %v771 = vsel %vm69, %v748, 0
      %v774 = vsel %vm69, %v749, 0
      %v777 = vsel %vm69, %v750, 0
      %779 = vmatpush.msra.mxu0 0.0
      %780 = vmatpush.msra.mxu0 0.0
      %781 = vmatpush.msra.mxu0 0.0
      %782 = vmatpush.msra.mxu0 0.0
      %783 = vmatpush.msra.mxu0 0.0
      %784 = vmatpush.msra.mxu0 0.0
      %785 = vmatpush.msra.mxu0 0.0
      %786 = vmatpush.msra.mxu0 0.0
      %787 = vmatpush.msra.mxu0 0.0
      %788 = vmatpush.msra.mxu0 0.0
      %789 = vmatpush.msra.mxu0 0.0
      %790 = vmatpush.msra.mxu0 0.0
      %791 = vmatpush.msra.mxu0 %v754
      %792 = vmatpush.msra.mxu0 %v753
      %793 = vmatpush.msra.mxu0 %v752
      %794 = vmatpush.msra.mxu0 %v751
      %795 = vmatmul.f32.gmra.mxu0 %v756
      %v796 = vpop.f32.mrf.mxu0
      %v797 = vadd.f32 0.0, %v796
      %798 = vmatmul.f32.gmra.mxu0 %v759
      %v799 = vpop.f32.mrf.mxu0
      %v800 = vadd.f32 0.0, %v799
      %801 = vmatmul.f32.gmra.mxu0 %v762
      %v802 = vpop.f32.mrf.mxu0
      %v803 = vadd.f32 0.0, %v802
      %804 = vmatmul.f32.gmra.mxu0 %v765
      %v805 = vpop.f32.mrf.mxu0
      %v806 = vadd.f32 0.0, %v805
      %807 = vmatmul.f32.gmra.mxu0 %v768
      %v808 = vpop.f32.mrf.mxu0
      %v809 = vadd.f32 0.0, %v808
      %810 = vmatmul.f32.gmra.mxu0 %v771
      %v811 = vpop.f32.mrf.mxu0
      %v812 = vadd.f32 0.0, %v811
      %813 = vmatmul.f32.gmra.mxu0 %v774
      %v814 = vpop.f32.mrf.mxu0
      %v815 = vadd.f32 0.0, %v814
      %816 = vmatmul.f32.gmra.mxu0 %v777
      %v817 = vpop.f32.mrf.mxu0
      %v818 = vadd.f32 0.0, %v817
      %819 = vdwg.mxu0
      %v828 = vrot.slane %v797, 1
      %v829 = vrot.slane %v800, 1
      %v830 = vsel %vm143, %v828, %v829
      %v831 = vrot.slane %v803, 1
      %v832 = vsel %vm143, %v829, %v831
      %v833 = vrot.slane %v806, 1
      %v834 = vsel %vm143, %v831, %v833
      %v835 = vrot.slane %v809, 1
      %v836 = vsel %vm143, %v833, %v835
      %v837 = vrot.slane %v812, 1
      %v838 = vsel %vm143, %v835, %v837
      %v839 = vrot.slane %v815, 1
      %v840 = vsel %vm143, %v837, %v839
      %v841 = vrot.slane %v818, 1
      %v842 = vsel %vm143, %v839, %v841
      %v851 = vmax.f32 %v797, %v830
      %v852 = vmax.f32 %v800, %v832
      %v853 = vmax.f32 %v803, %v834
      %v854 = vmax.f32 %v806, %v836
      %v855 = vmax.f32 %v809, %v838
      %v856 = vmax.f32 %v812, %v840
      %v857 = vmax.f32 %v815, %v842
      %v858 = vmax.f32 %v818, %v841
      %v859 = vmax.f32 %v851, %v855
      %v860 = vmax.f32 %v852, %v856
      %v861 = vmax.f32 %v853, %v857
      %v862 = vmax.f32 %v854, %v858
      %v863 = vadd.f32 %v859, %v180
      %v864 = vadd.f32 %v860, %v180
      %v865 = vadd.f32 %v861, %v180
      %v866 = vadd.f32 %v862, %v180
      %v867 = vmax.f32 %v863, 0.0
      %v868 = vmax.f32 %v864, 0.0
      %v869 = vmax.f32 %v865, 0.0
      %v870 = vmax.f32 %v866, 0.0
      %871 = vst [vmem:[#allocation5] sm:$0xff] %v867
      %872 = vst [vmem:[#allocation5 + $0x8] sm:$0xff] %v868
      %873 = vst [vmem:[#allocation5 + $0x10] sm:$0xff] %v869
      %874 = vst [vmem:[#allocation5 + $0x18] sm:$0x7f] %v870
      %v875 = vld [vmem:[#allocation5] ss:$2 sm:$0xff]
      %v876 = vld [vmem:[%s195] ss:$2 sm:$0x7f]
      %877 = vst [vmem:[#allocation2 + $0x4b] sm:$0xff] %v875
      %878 = vst [vmem:[#allocation2 + $0x53] sm:$0x7f] %v876
      %v879 = vld [vmem:[%s56 + $0x180] sm:$0xff]
      %v880 = vld [vmem:[%s56 + $0x188] sm:$0xff]
      %v881 = vld [vmem:[%s56 + $0x190] sm:$0xff]
      %v882 = vld [vmem:[%s56 + $0x198] sm:$0xff]
      %v883 = vld [vmem:[%s56 + $0x1a0] sm:$0xff]
      %v884 = vld [vmem:[%s56 + $0x1a8] sm:$0xff]
      %v885 = vld [vmem:[%s56 + $0x1b0] sm:$0xff]
      %v886 = vld [vmem:[%s56 + $0x1b8] sm:$0xff]
      %v887 = vld [vmem:[%s1] sm:$0xff]
      %v888 = vld [vmem:[%s1 + $0x8] sm:$0xff]
      %v889 = vld [vmem:[%s1 + $0x10] sm:$0xff]
      %v890 = vld [vmem:[%s1 + $0x18] sm:$0xff]
      %v892 = vsel %vm69, %v879, 0
      %v895 = vsel %vm69, %v880, 0
      %v898 = vsel %vm69, %v881, 0
      %v901 = vsel %vm69, %v882, 0
      %v904 = vsel %vm69, %v883, 0
      %v907 = vsel %vm69, %v884, 0
      %v910 = vsel %vm69, %v885, 0
      %v913 = vsel %vm69, %v886, 0
      %915 = vmatpush.msra.mxu0 0.0
      %916 = vmatpush.msra.mxu0 0.0
      %917 = vmatpush.msra.mxu0 0.0
      %918 = vmatpush.msra.mxu0 0.0
      %919 = vmatpush.msra.mxu0 0.0
      %920 = vmatpush.msra.mxu0 0.0
      %921 = vmatpush.msra.mxu0 0.0
      %922 = vmatpush.msra.mxu0 0.0
      %923 = vmatpush.msra.mxu0 0.0
      %924 = vmatpush.msra.mxu0 0.0
      %925 = vmatpush.msra.mxu0 0.0
      %926 = vmatpush.msra.mxu0 0.0
      %927 = vmatpush.msra.mxu0 %v890
      %928 = vmatpush.msra.mxu0 %v889
      %929 = vmatpush.msra.mxu0 %v888
      %930 = vmatpush.msra.mxu0 %v887
      %931 = vmatmul.f32.gmra.mxu0 %v892
      %v932 = vpop.f32.mrf.mxu0
      %v933 = vadd.f32 0.0, %v932
      %934 = vmatmul.f32.gmra.mxu0 %v895
      %v935 = vpop.f32.mrf.mxu0
      %v936 = vadd.f32 0.0, %v935
      %937 = vmatmul.f32.gmra.mxu0 %v898
      %v938 = vpop.f32.mrf.mxu0
      %v939 = vadd.f32 0.0, %v938
      %940 = vmatmul.f32.gmra.mxu0 %v901
      %v941 = vpop.f32.mrf.mxu0
      %v942 = vadd.f32 0.0, %v941
      %943 = vmatmul.f32.gmra.mxu0 %v904
      %v944 = vpop.f32.mrf.mxu0
      %v945 = vadd.f32 0.0, %v944
      %946 = vmatmul.f32.gmra.mxu0 %v907
      %v947 = vpop.f32.mrf.mxu0
      %v948 = vadd.f32 0.0, %v947
      %949 = vmatmul.f32.gmra.mxu0 %v910
      %v950 = vpop.f32.mrf.mxu0
      %v951 = vadd.f32 0.0, %v950
      %952 = vmatmul.f32.gmra.mxu0 %v913
      %v953 = vpop.f32.mrf.mxu0
      %v954 = vadd.f32 0.0, %v953
      %955 = vdwg.mxu0
      %v964 = vrot.slane %v933, 1
      %v965 = vrot.slane %v936, 1
      %v966 = vsel %vm143, %v964, %v965
      %v967 = vrot.slane %v939, 1
      %v968 = vsel %vm143, %v965, %v967
      %v969 = vrot.slane %v942, 1
      %v970 = vsel %vm143, %v967, %v969
      %v971 = vrot.slane %v945, 1
      %v972 = vsel %vm143, %v969, %v971
      %v973 = vrot.slane %v948, 1
      %v974 = vsel %vm143, %v971, %v973
      %v975 = vrot.slane %v951, 1
      %v976 = vsel %vm143, %v973, %v975
      %v977 = vrot.slane %v954, 1
      %v978 = vsel %vm143, %v975, %v977
      %v987 = vmax.f32 %v933, %v966
      %v988 = vmax.f32 %v936, %v968
      %v989 = vmax.f32 %v939, %v970
      %v990 = vmax.f32 %v942, %v972
      %v991 = vmax.f32 %v945, %v974
      %v992 = vmax.f32 %v948, %v976
      %v993 = vmax.f32 %v951, %v978
      %v994 = vmax.f32 %v954, %v977
      %v995 = vmax.f32 %v987, %v991
      %v996 = vmax.f32 %v988, %v992
      %v997 = vmax.f32 %v989, %v993
      %v998 = vmax.f32 %v990, %v994
      %v999 = vadd.f32 %v995, %v180
      %v1000 = vadd.f32 %v996, %v180
      %v1001 = vadd.f32 %v997, %v180
      %v1002 = vadd.f32 %v998, %v180
      %v1003 = vmax.f32 %v999, 0.0
      %v1004 = vmax.f32 %v1000, 0.0
      %v1005 = vmax.f32 %v1001, 0.0
      %v1006 = vmax.f32 %v1002, 0.0
      %1007 = vst [vmem:[#allocation5] sm:$0xff] %v1003
      %1008 = vst [vmem:[#allocation5 + $0x8] sm:$0xff] %v1004
      %1009 = vst [vmem:[#allocation5 + $0x10] sm:$0xff] %v1005
      %1010 = vst [vmem:[#allocation5 + $0x18] sm:$0x7f] %v1006
      %v1011 = vld [vmem:[#allocation5] ss:$2 sm:$0xff]
      %v1012 = vld [vmem:[%s195] ss:$2 sm:$0x7f]
      %1013 = vst [vmem:[#allocation2 + $0x5a] sm:$0xff] %v1011
      %1014 = vst [vmem:[#allocation2 + $0x62] sm:$0x7f] %v1012
      %v1015 = vld [vmem:[%s56 + $0x1c0] sm:$0xff]
      %v1016 = vld [vmem:[%s56 + $0x1c8] sm:$0xff]
      %v1017 = vld [vmem:[%s56 + $0x1d0] sm:$0xff]
      %v1018 = vld [vmem:[%s56 + $0x1d8] sm:$0xff]
      %v1019 = vld [vmem:[%s56 + $0x1e0] sm:$0xff]
      %v1020 = vld [vmem:[%s56 + $0x1e8] sm:$0xff]
      %v1021 = vld [vmem:[%s56 + $0x1f0] sm:$0xff]
      %v1022 = vld [vmem:[%s56 + $0x1f8] sm:$0xff]
      %v1023 = vld [vmem:[%s1] sm:$0xff]
      %v1024 = vld [vmem:[%s1 + $0x8] sm:$0xff]
      %v1025 = vld [vmem:[%s1 + $0x10] sm:$0xff]
      %v1026 = vld [vmem:[%s1 + $0x18] sm:$0xff]
      %v1028 = vsel %vm69, %v1015, 0
      %v1031 = vsel %vm69, %v1016, 0
      %v1034 = vsel %vm69, %v1017, 0
      %v1037 = vsel %vm69, %v1018, 0
      %v1040 = vsel %vm69, %v1019, 0
      %v1043 = vsel %vm69, %v1020, 0
      %v1046 = vsel %vm69, %v1021, 0
      %v1049 = vsel %vm69, %v1022, 0
      %1051 = vmatpush.msra.mxu0 0.0
      %1052 = vmatpush.msra.mxu0 0.0
      %1053 = vmatpush.msra.mxu0 0.0
      %1054 = vmatpush.msra.mxu0 0.0
      %1055 = vmatpush.msra.mxu0 0.0
      %1056 = vmatpush.msra.mxu0 0.0
      %1057 = vmatpush.msra.mxu0 0.0
      %1058 = vmatpush.msra.mxu0 0.0
      %1059 = vmatpush.msra.mxu0 0.0
      %1060 = vmatpush.msra.mxu0 0.0
      %1061 = vmatpush.msra.mxu0 0.0
      %1062 = vmatpush.msra.mxu0 0.0
      %1063 = vmatpush.msra.mxu0 %v1026
      %1064 = vmatpush.msra.mxu0 %v1025
      %1065 = vmatpush.msra.mxu0 %v1024
      %1066 = vmatpush.msra.mxu0 %v1023
      %1067 = vmatmul.f32.gmra.mxu0 %v1028
      %v1068 = vpop.f32.mrf.mxu0
      %v1069 = vadd.f32 0.0, %v1068
      %1070 = vmatmul.f32.gmra.mxu0 %v1031
      %v1071 = vpop.f32.mrf.mxu0
      %v1072 = vadd.f32 0.0, %v1071
      %1073 = vmatmul.f32.gmra.mxu0 %v1034
      %v1074 = vpop.f32.mrf.mxu0
      %v1075 = vadd.f32 0.0, %v1074
      %1076 = vmatmul.f32.gmra.mxu0 %v1037
      %v1077 = vpop.f32.mrf.mxu0
      %v1078 = vadd.f32 0.0, %v1077
      %1079 = vmatmul.f32.gmra.mxu0 %v1040
      %v1080 = vpop.f32.mrf.mxu0
      %v1081 = vadd.f32 0.0, %v1080
      %1082 = vmatmul.f32.gmra.mxu0 %v1043
      %v1083 = vpop.f32.mrf.mxu0
      %v1084 = vadd.f32 0.0, %v1083
      %1085 = vmatmul.f32.gmra.mxu0 %v1046
      %v1086 = vpop.f32.mrf.mxu0
      %v1087 = vadd.f32 0.0, %v1086
      %1088 = vmatmul.f32.gmra.mxu0 %v1049
      %v1089 = vpop.f32.mrf.mxu0
      %v1090 = vadd.f32 0.0, %v1089
      %1091 = vdwg.mxu0
      %v1100 = vrot.slane %v1069, 1
      %v1101 = vrot.slane %v1072, 1
      %v1102 = vsel %vm143, %v1100, %v1101
      %v1103 = vrot.slane %v1075, 1
      %v1104 = vsel %vm143, %v1101, %v1103
      %v1105 = vrot.slane %v1078, 1
      %v1106 = vsel %vm143, %v1103, %v1105
      %v1107 = vrot.slane %v1081, 1
      %v1108 = vsel %vm143, %v1105, %v1107
      %v1109 = vrot.slane %v1084, 1
      %v1110 = vsel %vm143, %v1107, %v1109
      %v1111 = vrot.slane %v1087, 1
      %v1112 = vsel %vm143, %v1109, %v1111
      %v1113 = vrot.slane %v1090, 1
      %v1114 = vsel %vm143, %v1111, %v1113
      %v1123 = vmax.f32 %v1069, %v1102
      %v1124 = vmax.f32 %v1072, %v1104
      %v1125 = vmax.f32 %v1075, %v1106
      %v1126 = vmax.f32 %v1078, %v1108
      %v1127 = vmax.f32 %v1081, %v1110
      %v1128 = vmax.f32 %v1084, %v1112
      %v1129 = vmax.f32 %v1087, %v1114
      %v1130 = vmax.f32 %v1090, %v1113
      %v1131 = vmax.f32 %v1123, %v1127
      %v1132 = vmax.f32 %v1124, %v1128
      %v1133 = vmax.f32 %v1125, %v1129
      %v1134 = vmax.f32 %v1126, %v1130
      %v1135 = vadd.f32 %v1131, %v180
      %v1136 = vadd.f32 %v1132, %v180
      %v1137 = vadd.f32 %v1133, %v180
      %v1138 = vadd.f32 %v1134, %v180
      %v1139 = vmax.f32 %v1135, 0.0
      %v1140 = vmax.f32 %v1136, 0.0
      %v1141 = vmax.f32 %v1137, 0.0
      %v1142 = vmax.f32 %v1138, 0.0
      %1143 = vst [vmem:[#allocation5] sm:$0xff] %v1139
      %1144 = vst [vmem:[#allocation5 + $0x8] sm:$0xff] %v1140
      %1145 = vst [vmem:[#allocation5 + $0x10] sm:$0xff] %v1141
      %1146 = vst [vmem:[#allocation5 + $0x18] sm:$0x7f] %v1142
      %v1147 = vld [vmem:[#allocation5] ss:$2 sm:$0xff]
      %v1148 = vld [vmem:[%s195] ss:$2 sm:$0x7f]
      %1149 = vst [vmem:[#allocation2 + $0x69] sm:$0xff] %v1147
      %1150 = vst [vmem:[#allocation2 + $0x71] sm:$0x7f] %v1148
      %v1151 = vld [vmem:[%s56 + $0x200] sm:$0xff]
      %v1152 = vld [vmem:[%s56 + $0x208] sm:$0xff]
      %v1153 = vld [vmem:[%s56 + $0x210] sm:$0xff]
      %v1154 = vld [vmem:[%s56 + $0x218] sm:$0xff]
      %v1155 = vld [vmem:[%s56 + $0x220] sm:$0xff]
      %v1156 = vld [vmem:[%s56 + $0x228] sm:$0xff]
      %v1157 = vld [vmem:[%s56 + $0x230] sm:$0xff]
      %v1158 = vld [vmem:[%s56 + $0x238] sm:$0xff]
      %v1159 = vld [vmem:[%s1] sm:$0xff]
      %v1160 = vld [vmem:[%s1 + $0x8] sm:$0xff]
      %v1161 = vld [vmem:[%s1 + $0x10] sm:$0xff]
      %v1162 = vld [vmem:[%s1 + $0x18] sm:$0xff]
      %v1164 = vsel %vm69, %v1151, 0
      %v1167 = vsel %vm69, %v1152, 0
      %v1170 = vsel %vm69, %v1153, 0
      %v1173 = vsel %vm69, %v1154, 0
      %v1176 = vsel %vm69, %v1155, 0
      %v1179 = vsel %vm69, %v1156, 0
      %v1182 = vsel %vm69, %v1157, 0
      %v1185 = vsel %vm69, %v1158, 0
      %1187 = vmatpush.msra.mxu0 0.0
      %1188 = vmatpush.msra.mxu0 0.0
      %1189 = vmatpush.msra.mxu0 0.0
      %1190 = vmatpush.msra.mxu0 0.0
      %1191 = vmatpush.msra.mxu0 0.0
      %1192 = vmatpush.msra.mxu0 0.0
      %1193 = vmatpush.msra.mxu0 0.0
      %1194 = vmatpush.msra.mxu0 0.0
      %1195 = vmatpush.msra.mxu0 0.0
      %1196 = vmatpush.msra.mxu0 0.0
      %1197 = vmatpush.msra.mxu0 0.0
      %1198 = vmatpush.msra.mxu0 0.0
      %1199 = vmatpush.msra.mxu0 %v1162
      %1200 = vmatpush.msra.mxu0 %v1161
      %1201 = vmatpush.msra.mxu0 %v1160
      %1202 = vmatpush.msra.mxu0 %v1159
      %1203 = vmatmul.f32.gmra.mxu0 %v1164
      %v1204 = vpop.f32.mrf.mxu0
      %v1205 = vadd.f32 0.0, %v1204
      %1206 = vmatmul.f32.gmra.mxu0 %v1167
      %v1207 = vpop.f32.mrf.mxu0
      %v1208 = vadd.f32 0.0, %v1207
      %1209 = vmatmul.f32.gmra.mxu0 %v1170
      %v1210 = vpop.f32.mrf.mxu0
      %v1211 = vadd.f32 0.0, %v1210
      %1212 = vmatmul.f32.gmra.mxu0 %v1173
      %v1213 = vpop.f32.mrf.mxu0
      %v1214 = vadd.f32 0.0, %v1213
      %1215 = vmatmul.f32.gmra.mxu0 %v1176
      %v1216 = vpop.f32.mrf.mxu0
      %v1217 = vadd.f32 0.0, %v1216
      %1218 = vmatmul.f32.gmra.mxu0 %v1179
      %v1219 = vpop.f32.mrf.mxu0
      %v1220 = vadd.f32 0.0, %v1219
      %1221 = vmatmul.f32.gmra.mxu0 %v1182
      %v1222 = vpop.f32.mrf.mxu0
      %v1223 = vadd.f32 0.0, %v1222
      %1224 = vmatmul.f32.gmra.mxu0 %v1185
      %v1225 = vpop.f32.mrf.mxu0
      %v1226 = vadd.f32 0.0, %v1225
      %1227 = vdwg.mxu0
      %v1236 = vrot.slane %v1205, 1
      %v1237 = vrot.slane %v1208, 1
      %v1238 = vsel %vm143, %v1236, %v1237
      %v1239 = vrot.slane %v1211, 1
      %v1240 = vsel %vm143, %v1237, %v1239
      %v1241 = vrot.slane %v1214, 1
      %v1242 = vsel %vm143, %v1239, %v1241
      %v1243 = vrot.slane %v1217, 1
      %v1244 = vsel %vm143, %v1241, %v1243
      %v1245 = vrot.slane %v1220, 1
      %v1246 = vsel %vm143, %v1243, %v1245
      %v1247 = vrot.slane %v1223, 1
      %v1248 = vsel %vm143, %v1245, %v1247
      %v1249 = vrot.slane %v1226, 1
      %v1250 = vsel %vm143, %v1247, %v1249
      %v1259 = vmax.f32 %v1205, %v1238
      %v1260 = vmax.f32 %v1208, %v1240
      %v1261 = vmax.f32 %v1211, %v1242
      %v1262 = vmax.f32 %v1214, %v1244
      %v1263 = vmax.f32 %v1217, %v1246
      %v1264 = vmax.f32 %v1220, %v1248
      %v1265 = vmax.f32 %v1223, %v1250
      %v1266 = vmax.f32 %v1226, %v1249
      %v1267 = vmax.f32 %v1259, %v1263
      %v1268 = vmax.f32 %v1260, %v1264
      %v1269 = vmax.f32 %v1261, %v1265
      %v1270 = vmax.f32 %v1262, %v1266
      %v1271 = vadd.f32 %v1267, %v180
      %v1272 = vadd.f32 %v1268, %v180
      %v1273 = vadd.f32 %v1269, %v180
      %v1274 = vadd.f32 %v1270, %v180
      %v1275 = vmax.f32 %v1271, 0.0
      %v1276 = vmax.f32 %v1272, 0.0
      %v1277 = vmax.f32 %v1273, 0.0
      %v1278 = vmax.f32 %v1274, 0.0
      %1279 = vst [vmem:[#allocation5] sm:$0xff] %v1275
      %1280 = vst [vmem:[#allocation5 + $0x8] sm:$0xff] %v1276
      %1281 = vst [vmem:[#allocation5 + $0x10] sm:$0xff] %v1277
      %1282 = vst [vmem:[#allocation5 + $0x18] sm:$0x7f] %v1278
      %v1283 = vld [vmem:[#allocation5] ss:$2 sm:$0xff]
      %v1284 = vld [vmem:[%s195] ss:$2 sm:$0x7f]
      %1285 = vst [vmem:[#allocation2 + $0x78] sm:$0xff] %v1283
      %1286 = vst [vmem:[#allocation2 + $0x80] sm:$0x7f] %v1284
      %v1287 = vld [vmem:[%s56 + $0x240] sm:$0xff]
      %v1288 = vld [vmem:[%s56 + $0x248] sm:$0xff]
      %v1289 = vld [vmem:[%s56 + $0x250] sm:$0xff]
      %v1290 = vld [vmem:[%s56 + $0x258] sm:$0xff]
      %v1291 = vld [vmem:[%s56 + $0x260] sm:$0xff]
      %v1292 = vld [vmem:[%s56 + $0x268] sm:$0xff]
      %v1293 = vld [vmem:[%s56 + $0x270] sm:$0xff]
      %v1294 = vld [vmem:[%s56 + $0x278] sm:$0xff]
      %v1295 = vld [vmem:[%s1] sm:$0xff]
      %v1296 = vld [vmem:[%s1 + $0x8] sm:$0xff]
      %v1297 = vld [vmem:[%s1 + $0x10] sm:$0xff]
      %v1298 = vld [vmem:[%s1 + $0x18] sm:$0xff]
      %v1300 = vsel %vm69, %v1287, 0
      %v1303 = vsel %vm69, %v1288, 0
      %v1306 = vsel %vm69, %v1289, 0
      %v1309 = vsel %vm69, %v1290, 0
      %v1312 = vsel %vm69, %v1291, 0
      %v1315 = vsel %vm69, %v1292, 0
      %v1318 = vsel %vm69, %v1293, 0
      %v1321 = vsel %vm69, %v1294, 0
      %1323 = vmatpush.msra.mxu0 0.0
      %1324 = vmatpush.msra.mxu0 0.0
      %1325 = vmatpush.msra.mxu0 0.0
      %1326 = vmatpush.msra.mxu0 0.0
      %1327 = vmatpush.msra.mxu0 0.0
      %1328 = vmatpush.msra.mxu0 0.0
      %1329 = vmatpush.msra.mxu0 0.0
      %1330 = vmatpush.msra.mxu0 0.0
      %1331 = vmatpush.msra.mxu0 0.0
      %1332 = vmatpush.msra.mxu0 0.0
      %1333 = vmatpush.msra.mxu0 0.0
      %1334 = vmatpush.msra.mxu0 0.0
      %1335 = vmatpush.msra.mxu0 %v1298
      %1336 = vmatpush.msra.mxu0 %v1297
      %1337 = vmatpush.msra.mxu0 %v1296
      %1338 = vmatpush.msra.mxu0 %v1295
      %1339 = vmatmul.f32.gmra.mxu0 %v1300
      %v1340 = vpop.f32.mrf.mxu0
      %v1341 = vadd.f32 0.0, %v1340
      %1342 = vmatmul.f32.gmra.mxu0 %v1303
      %v1343 = vpop.f32.mrf.mxu0
      %v1344 = vadd.f32 0.0, %v1343
      %1345 = vmatmul.f32.gmra.mxu0 %v1306
      %v1346 = vpop.f32.mrf.mxu0
      %v1347 = vadd.f32 0.0, %v1346
      %1348 = vmatmul.f32.gmra.mxu0 %v1309
      %v1349 = vpop.f32.mrf.mxu0
      %v1350 = vadd.f32 0.0, %v1349
      %1351 = vmatmul.f32.gmra.mxu0 %v1312
      %v1352 = vpop.f32.mrf.mxu0
      %v1353 = vadd.f32 0.0, %v1352
      %1354 = vmatmul.f32.gmra.mxu0 %v1315
      %v1355 = vpop.f32.mrf.mxu0
      %v1356 = vadd.f32 0.0, %v1355
      %1357 = vmatmul.f32.gmra.mxu0 %v1318
      %v1358 = vpop.f32.mrf.mxu0
      %v1359 = vadd.f32 0.0, %v1358
      %1360 = vmatmul.f32.gmra.mxu0 %v1321
      %v1361 = vpop.f32.mrf.mxu0
      %v1362 = vadd.f32 0.0, %v1361
      %1363 = vdwg.mxu0
      %v1372 = vrot.slane %v1341, 1
      %v1373 = vrot.slane %v1344, 1
      %v1374 = vsel %vm143, %v1372, %v1373
      %v1375 = vrot.slane %v1347, 1
      %v1376 = vsel %vm143, %v1373, %v1375
      %v1377 = vrot.slane %v1350, 1
      %v1378 = vsel %vm143, %v1375, %v1377
      %v1379 = vrot.slane %v1353, 1
      %v1380 = vsel %vm143, %v1377, %v1379
      %v1381 = vrot.slane %v1356, 1
      %v1382 = vsel %vm143, %v1379, %v1381
      %v1383 = vrot.slane %v1359, 1
      %v1384 = vsel %vm143, %v1381, %v1383
      %v1385 = vrot.slane %v1362, 1
      %v1386 = vsel %vm143, %v1383, %v1385
      %v1395 = vmax.f32 %v1341, %v1374
      %v1396 = vmax.f32 %v1344, %v1376
      %v1397 = vmax.f32 %v1347, %v1378
      %v1398 = vmax.f32 %v1350, %v1380
      %v1399 = vmax.f32 %v1353, %v1382
      %v1400 = vmax.f32 %v1356, %v1384
      %v1401 = vmax.f32 %v1359, %v1386
      %v1402 = vmax.f32 %v1362, %v1385
      %v1403 = vmax.f32 %v1395, %v1399
      %v1404 = vmax.f32 %v1396, %v1400
      %v1405 = vmax.f32 %v1397, %v1401
      %v1406 = vmax.f32 %v1398, %v1402
      %v1407 = vadd.f32 %v1403, %v180
      %v1408 = vadd.f32 %v1404, %v180
      %v1409 = vadd.f32 %v1405, %v180
      %v1410 = vadd.f32 %v1406, %v180
      %v1411 = vmax.f32 %v1407, 0.0
      %v1412 = vmax.f32 %v1408, 0.0
      %v1413 = vmax.f32 %v1409, 0.0
      %v1414 = vmax.f32 %v1410, 0.0
      %1415 = vst [vmem:[#allocation5] sm:$0xff] %v1411
      %1416 = vst [vmem:[#allocation5 + $0x8] sm:$0xff] %v1412
      %1417 = vst [vmem:[#allocation5 + $0x10] sm:$0xff] %v1413
      %1418 = vst [vmem:[#allocation5 + $0x18] sm:$0x7f] %v1414
      %v1419 = vld [vmem:[#allocation5] ss:$2 sm:$0xff]
      %v1420 = vld [vmem:[%s195] ss:$2 sm:$0x7f]
      %1421 = vst [vmem:[#allocation2 + $0x87] sm:$0xff] %v1419
      %1422 = vst [vmem:[#allocation2 + $0x8f] sm:$0x7f] %v1420
      %v1423 = vld [vmem:[%s56 + $0x280] sm:$0xff]
      %v1424 = vld [vmem:[%s56 + $0x288] sm:$0xff]
      %v1425 = vld [vmem:[%s56 + $0x290] sm:$0xff]
      %v1426 = vld [vmem:[%s56 + $0x298] sm:$0xff]
      %v1427 = vld [vmem:[%s56 + $0x2a0] sm:$0xff]
      %v1428 = vld [vmem:[%s56 + $0x2a8] sm:$0xff]
      %v1429 = vld [vmem:[%s56 + $0x2b0] sm:$0xff]
      %v1430 = vld [vmem:[%s56 + $0x2b8] sm:$0xff]
      %v1431 = vld [vmem:[%s1] sm:$0xff]
      %v1432 = vld [vmem:[%s1 + $0x8] sm:$0xff]
      %v1433 = vld [vmem:[%s1 + $0x10] sm:$0xff]
      %v1434 = vld [vmem:[%s1 + $0x18] sm:$0xff]
      %v1436 = vsel %vm69, %v1423, 0
      %v1439 = vsel %vm69, %v1424, 0
      %v1442 = vsel %vm69, %v1425, 0
      %v1445 = vsel %vm69, %v1426, 0
      %v1448 = vsel %vm69, %v1427, 0
      %v1451 = vsel %vm69, %v1428, 0
      %v1454 = vsel %vm69, %v1429, 0
      %v1457 = vsel %vm69, %v1430, 0
      %1459 = vmatpush.msra.mxu0 0.0
      %1460 = vmatpush.msra.mxu0 0.0
      %1461 = vmatpush.msra.mxu0 0.0
      %1462 = vmatpush.msra.mxu0 0.0
      %1463 = vmatpush.msra.mxu0 0.0
      %1464 = vmatpush.msra.mxu0 0.0
      %1465 = vmatpush.msra.mxu0 0.0
      %1466 = vmatpush.msra.mxu0 0.0
      %1467 = vmatpush.msra.mxu0 0.0
      %1468 = vmatpush.msra.mxu0 0.0
      %1469 = vmatpush.msra.mxu0 0.0
      %1470 = vmatpush.msra.mxu0 0.0
      %1471 = vmatpush.msra.mxu0 %v1434
      %1472 = vmatpush.msra.mxu0 %v1433
      %1473 = vmatpush.msra.mxu0 %v1432
      %1474 = vmatpush.msra.mxu0 %v1431
      %1475 = vmatmul.f32.gmra.mxu0 %v1436
      %v1476 = vpop.f32.mrf.mxu0
      %v1477 = vadd.f32 0.0, %v1476
      %1478 = vmatmul.f32.gmra.mxu0 %v1439
      %v1479 = vpop.f32.mrf.mxu0
      %v1480 = vadd.f32 0.0, %v1479
      %1481 = vmatmul.f32.gmra.mxu0 %v1442
      %v1482 = vpop.f32.mrf.mxu0
      %v1483 = vadd.f32 0.0, %v1482
      %1484 = vmatmul.f32.gmra.mxu0 %v1445
      %v1485 = vpop.f32.mrf.mxu0
      %v1486 = vadd.f32 0.0, %v1485
      %1487 = vmatmul.f32.gmra.mxu0 %v1448
      %v1488 = vpop.f32.mrf.mxu0
      %v1489 = vadd.f32 0.0, %v1488
      %1490 = vmatmul.f32.gmra.mxu0 %v1451
      %v1491 = vpop.f32.mrf.mxu0
      %v1492 = vadd.f32 0.0, %v1491
      %1493 = vmatmul.f32.gmra.mxu0 %v1454
      %v1494 = vpop.f32.mrf.mxu0
      %v1495 = vadd.f32 0.0, %v1494
      %1496 = vmatmul.f32.gmra.mxu0 %v1457
      %v1497 = vpop.f32.mrf.mxu0
      %v1498 = vadd.f32 0.0, %v1497
      %1499 = vdwg.mxu0
      %v1508 = vrot.slane %v1477, 1
      %v1509 = vrot.slane %v1480, 1
      %v1510 = vsel %vm143, %v1508, %v1509
      %v1511 = vrot.slane %v1483, 1
      %v1512 = vsel %vm143, %v1509, %v1511
      %v1513 = vrot.slane %v1486, 1
      %v1514 = vsel %vm143, %v1511, %v1513
      %v1515 = vrot.slane %v1489, 1
      %v1516 = vsel %vm143, %v1513, %v1515
      %v1517 = vrot.slane %v1492, 1
      %v1518 = vsel %vm143, %v1515, %v1517
      %v1519 = vrot.slane %v1495, 1
      %v1520 = vsel %vm143, %v1517, %v1519
      %v1521 = vrot.slane %v1498, 1
      %v1522 = vsel %vm143, %v1519, %v1521
      %v1531 = vmax.f32 %v1477, %v1510
      %v1532 = vmax.f32 %v1480, %v1512
      %v1533 = vmax.f32 %v1483, %v1514
      %v1534 = vmax.f32 %v1486, %v1516
      %v1535 = vmax.f32 %v1489, %v1518
      %v1536 = vmax.f32 %v1492, %v1520
      %v1537 = vmax.f32 %v1495, %v1522
      %v1538 = vmax.f32 %v1498, %v1521
      %v1539 = vmax.f32 %v1531, %v1535
      %v1540 = vmax.f32 %v1532, %v1536
      %v1541 = vmax.f32 %v1533, %v1537
      %v1542 = vmax.f32 %v1534, %v1538
      %v1543 = vadd.f32 %v1539, %v180
      %v1544 = vadd.f32 %v1540, %v180
      %v1545 = vadd.f32 %v1541, %v180
      %v1546 = vadd.f32 %v1542, %v180
      %v1547 = vmax.f32 %v1543, 0.0
      %v1548 = vmax.f32 %v1544, 0.0
      %v1549 = vmax.f32 %v1545, 0.0
      %v1550 = vmax.f32 %v1546, 0.0
      %1551 = vst [vmem:[#allocation5] sm:$0xff] %v1547
      %1552 = vst [vmem:[#allocation5 + $0x8] sm:$0xff] %v1548
      %1553 = vst [vmem:[#allocation5 + $0x10] sm:$0xff] %v1549
      %1554 = vst [vmem:[#allocation5 + $0x18] sm:$0x7f] %v1550
      %v1555 = vld [vmem:[#allocation5] ss:$2 sm:$0xff]
      %v1556 = vld [vmem:[%s195] ss:$2 sm:$0x7f]
      %1557 = vst [vmem:[#allocation2 + $0x96] sm:$0xff] %v1555
      %1558 = vst [vmem:[#allocation2 + $0x9e] sm:$0x7f] %v1556
      %v1559 = vld [vmem:[%s56 + $0x2c0] sm:$0xff]
      %v1560 = vld [vmem:[%s56 + $0x2c8] sm:$0xff]
      %v1561 = vld [vmem:[%s56 + $0x2d0] sm:$0xff]
      %v1562 = vld [vmem:[%s56 + $0x2d8] sm:$0xff]
      %v1563 = vld [vmem:[%s56 + $0x2e0] sm:$0xff]
      %v1564 = vld [vmem:[%s56 + $0x2e8] sm:$0xff]
      %v1565 = vld [vmem:[%s56 + $0x2f0] sm:$0xff]
      %v1566 = vld [vmem:[%s56 + $0x2f8] sm:$0xff]
      %v1567 = vld [vmem:[%s1] sm:$0xff]
      %v1568 = vld [vmem:[%s1 + $0x8] sm:$0xff]
      %v1569 = vld [vmem:[%s1 + $0x10] sm:$0xff]
      %v1570 = vld [vmem:[%s1 + $0x18] sm:$0xff]
      %v1572 = vsel %vm69, %v1559, 0
      %v1575 = vsel %vm69, %v1560, 0
      %v1578 = vsel %vm69, %v1561, 0
      %v1581 = vsel %vm69, %v1562, 0
      %v1584 = vsel %vm69, %v1563, 0
      %v1587 = vsel %vm69, %v1564, 0
      %v1590 = vsel %vm69, %v1565, 0
      %v1593 = vsel %vm69, %v1566, 0
      %1595 = vmatpush.msra.mxu0 0.0
      %1596 = vmatpush.msra.mxu0 0.0
      %1597 = vmatpush.msra.mxu0 0.0
      %1598 = vmatpush.msra.mxu0 0.0
      %1599 = vmatpush.msra.mxu0 0.0
      %1600 = vmatpush.msra.mxu0 0.0
      %1601 = vmatpush.msra.mxu0 0.0
      %1602 = vmatpush.msra.mxu0 0.0
      %1603 = vmatpush.msra.mxu0 0.0
      %1604 = vmatpush.msra.mxu0 0.0
      %1605 = vmatpush.msra.mxu0 0.0
      %1606 = vmatpush.msra.mxu0 0.0
      %1607 = vmatpush.msra.mxu0 %v1570
      %1608 = vmatpush.msra.mxu0 %v1569
      %1609 = vmatpush.msra.mxu0 %v1568
      %1610 = vmatpush.msra.mxu0 %v1567
      %1611 = vmatmul.f32.gmra.mxu0 %v1572
      %v1612 = vpop.f32.mrf.mxu0
      %v1613 = vadd.f32 0.0, %v1612
      %1614 = vmatmul.f32.gmra.mxu0 %v1575
      %v1615 = vpop.f32.mrf.mxu0
      %v1616 = vadd.f32 0.0, %v1615
      %1617 = vmatmul.f32.gmra.mxu0 %v1578
      %v1618 = vpop.f32.mrf.mxu0
      %v1619 = vadd.f32 0.0, %v1618
      %1620 = vmatmul.f32.gmra.mxu0 %v1581
      %v1621 = vpop.f32.mrf.mxu0
      %v1622 = vadd.f32 0.0, %v1621
      %1623 = vmatmul.f32.gmra.mxu0 %v1584
      %v1624 = vpop.f32.mrf.mxu0
      %v1625 = vadd.f32 0.0, %v1624
      %1626 = vmatmul.f32.gmra.mxu0 %v1587
      %v1627 = vpop.f32.mrf.mxu0
      %v1628 = vadd.f32 0.0, %v1627
      %1629 = vmatmul.f32.gmra.mxu0 %v1590
      %v1630 = vpop.f32.mrf.mxu0
      %v1631 = vadd.f32 0.0, %v1630
      %1632 = vmatmul.f32.gmra.mxu0 %v1593
      %v1633 = vpop.f32.mrf.mxu0
      %v1634 = vadd.f32 0.0, %v1633
      %1635 = vdwg.mxu0
      %v1644 = vrot.slane %v1613, 1
      %v1645 = vrot.slane %v1616, 1
      %v1646 = vsel %vm143, %v1644, %v1645
      %v1647 = vrot.slane %v1619, 1
      %v1648 = vsel %vm143, %v1645, %v1647
      %v1649 = vrot.slane %v1622, 1
      %v1650 = vsel %vm143, %v1647, %v1649
      %v1651 = vrot.slane %v1625, 1
      %v1652 = vsel %vm143, %v1649, %v1651
      %v1653 = vrot.slane %v1628, 1
      %v1654 = vsel %vm143, %v1651, %v1653
      %v1655 = vrot.slane %v1631, 1
      %v1656 = vsel %vm143, %v1653, %v1655
      %v1657 = vrot.slane %v1634, 1
      %v1658 = vsel %vm143, %v1655, %v1657
      %v1667 = vmax.f32 %v1613, %v1646
      %v1668 = vmax.f32 %v1616, %v1648
      %v1669 = vmax.f32 %v1619, %v1650
      %v1670 = vmax.f32 %v1622, %v1652
      %v1671 = vmax.f32 %v1625, %v1654
      %v1672 = vmax.f32 %v1628, %v1656
      %v1673 = vmax.f32 %v1631, %v1658
      %v1674 = vmax.f32 %v1634, %v1657
      %v1675 = vmax.f32 %v1667, %v1671
      %v1676 = vmax.f32 %v1668, %v1672
      %v1677 = vmax.f32 %v1669, %v1673
      %v1678 = vmax.f32 %v1670, %v1674
      %v1679 = vadd.f32 %v1675, %v180
      %v1680 = vadd.f32 %v1676, %v180
      %v1681 = vadd.f32 %v1677, %v180
      %v1682 = vadd.f32 %v1678, %v180
      %v1683 = vmax.f32 %v1679, 0.0
      %v1684 = vmax.f32 %v1680, 0.0
      %v1685 = vmax.f32 %v1681, 0.0
      %v1686 = vmax.f32 %v1682, 0.0
      %1687 = vst [vmem:[#allocation5] sm:$0xff] %v1683
      %1688 = vst [vmem:[#allocation5 + $0x8] sm:$0xff] %v1684
      %1689 = vst [vmem:[#allocation5 + $0x10] sm:$0xff] %v1685
      %1690 = vst [vmem:[#allocation5 + $0x18] sm:$0x7f] %v1686
      %v1691 = vld [vmem:[#allocation5] ss:$2 sm:$0xff]
      %v1692 = vld [vmem:[%s195] ss:$2 sm:$0x7f]
      %1693 = vst [vmem:[#allocation2 + $0xa5] sm:$0xff] %v1691
      %1694 = vst [vmem:[#allocation2 + $0xad] sm:$0x7f] %v1692
      %v1695 = vld [vmem:[%s56 + $0x300] sm:$0xff]
      %v1696 = vld [vmem:[%s56 + $0x308] sm:$0xff]
      %v1697 = vld [vmem:[%s56 + $0x310] sm:$0xff]
      %v1698 = vld [vmem:[%s56 + $0x318] sm:$0xff]
      %v1699 = vld [vmem:[%s56 + $0x320] sm:$0xff]
      %v1700 = vld [vmem:[%s56 + $0x328] sm:$0xff]
      %v1701 = vld [vmem:[%s56 + $0x330] sm:$0xff]
      %v1702 = vld [vmem:[%s56 + $0x338] sm:$0xff]
      %v1703 = vld [vmem:[%s1] sm:$0xff]
      %v1704 = vld [vmem:[%s1 + $0x8] sm:$0xff]
      %v1705 = vld [vmem:[%s1 + $0x10] sm:$0xff]
      %v1706 = vld [vmem:[%s1 + $0x18] sm:$0xff]
      %v1708 = vsel %vm69, %v1695, 0
      %v1711 = vsel %vm69, %v1696, 0
      %v1714 = vsel %vm69, %v1697, 0
      %v1717 = vsel %vm69, %v1698, 0
      %v1720 = vsel %vm69, %v1699, 0
      %v1723 = vsel %vm69, %v1700, 0
      %v1726 = vsel %vm69, %v1701, 0
      %v1729 = vsel %vm69, %v1702, 0
      %1731 = vmatpush.msra.mxu0 0.0
      %1732 = vmatpush.msra.mxu0 0.0
      %1733 = vmatpush.msra.mxu0 0.0
      %1734 = vmatpush.msra.mxu0 0.0
      %1735 = vmatpush.msra.mxu0 0.0
      %1736 = vmatpush.msra.mxu0 0.0
      %1737 = vmatpush.msra.mxu0 0.0
      %1738 = vmatpush.msra.mxu0 0.0
      %1739 = vmatpush.msra.mxu0 0.0
      %1740 = vmatpush.msra.mxu0 0.0
      %1741 = vmatpush.msra.mxu0 0.0
      %1742 = vmatpush.msra.mxu0 0.0
      %1743 = vmatpush.msra.mxu0 %v1706
      %1744 = vmatpush.msra.mxu0 %v1705
      %1745 = vmatpush.msra.mxu0 %v1704
      %1746 = vmatpush.msra.mxu0 %v1703
      %1747 = vmatmul.f32.gmra.mxu0 %v1708
      %v1748 = vpop.f32.mrf.mxu0
      %v1749 = vadd.f32 0.0, %v1748
      %1750 = vmatmul.f32.gmra.mxu0 %v1711
      %v1751 = vpop.f32.mrf.mxu0
      %v1752 = vadd.f32 0.0, %v1751
      %1753 = vmatmul.f32.gmra.mxu0 %v1714
      %v1754 = vpop.f32.mrf.mxu0
      %v1755 = vadd.f32 0.0, %v1754
      %1756 = vmatmul.f32.gmra.mxu0 %v1717
      %v1757 = vpop.f32.mrf.mxu0
      %v1758 = vadd.f32 0.0, %v1757
      %1759 = vmatmul.f32.gmra.mxu0 %v1720
      %v1760 = vpop.f32.mrf.mxu0
      %v1761 = vadd.f32 0.0, %v1760
      %1762 = vmatmul.f32.gmra.mxu0 %v1723
      %v1763 = vpop.f32.mrf.mxu0
      %v1764 = vadd.f32 0.0, %v1763
      %1765 = vmatmul.f32.gmra.mxu0 %v1726
      %v1766 = vpop.f32.mrf.mxu0
      %v1767 = vadd.f32 0.0, %v1766
      %1768 = vmatmul.f32.gmra.mxu0 %v1729
      %v1769 = vpop.f32.mrf.mxu0
      %v1770 = vadd.f32 0.0, %v1769
      %1771 = vdwg.mxu0
      %v1780 = vrot.slane %v1749, 1
      %v1781 = vrot.slane %v1752, 1
      %v1782 = vsel %vm143, %v1780, %v1781
      %v1783 = vrot.slane %v1755, 1
      %v1784 = vsel %vm143, %v1781, %v1783
      %v1785 = vrot.slane %v1758, 1
      %v1786 = vsel %vm143, %v1783, %v1785
      %v1787 = vrot.slane %v1761, 1
      %v1788 = vsel %vm143, %v1785, %v1787
      %v1789 = vrot.slane %v1764, 1
      %v1790 = vsel %vm143, %v1787, %v1789
      %v1791 = vrot.slane %v1767, 1
      %v1792 = vsel %vm143, %v1789, %v1791
      %v1793 = vrot.slane %v1770, 1
      %v1794 = vsel %vm143, %v1791, %v1793
      %v1803 = vmax.f32 %v1749, %v1782
      %v1804 = vmax.f32 %v1752, %v1784
      %v1805 = vmax.f32 %v1755, %v1786
      %v1806 = vmax.f32 %v1758, %v1788
      %v1807 = vmax.f32 %v1761, %v1790
      %v1808 = vmax.f32 %v1764, %v1792
      %v1809 = vmax.f32 %v1767, %v1794
      %v1810 = vmax.f32 %v1770, %v1793
      %v1811 = vmax.f32 %v1803, %v1807
      %v1812 = vmax.f32 %v1804, %v1808
      %v1813 = vmax.f32 %v1805, %v1809
      %v1814 = vmax.f32 %v1806, %v1810
      %v1815 = vadd.f32 %v1811, %v180
      %v1816 = vadd.f32 %v1812, %v180
      %v1817 = vadd.f32 %v1813, %v180
      %v1818 = vadd.f32 %v1814, %v180
      %v1819 = vmax.f32 %v1815, 0.0
      %v1820 = vmax.f32 %v1816, 0.0
      %v1821 = vmax.f32 %v1817, 0.0
      %v1822 = vmax.f32 %v1818, 0.0
      %1823 = vst [vmem:[#allocation5] sm:$0xff] %v1819
      %1824 = vst [vmem:[#allocation5 + $0x8] sm:$0xff] %v1820
      %1825 = vst [vmem:[#allocation5 + $0x10] sm:$0xff] %v1821
      %1826 = vst [vmem:[#allocation5 + $0x18] sm:$0x7f] %v1822
      %v1827 = vld [vmem:[#allocation5] ss:$2 sm:$0xff]
      %v1828 = vld [vmem:[%s195] ss:$2 sm:$0x7f]
      %1829 = vst [vmem:[#allocation2 + $0xb4] sm:$0xff] %v1827
      %1830 = vst [vmem:[#allocation2 + $0xbc] sm:$0x7f] %v1828
      %v1831 = vld [vmem:[%s56 + $0x340] sm:$0xff]
      %v1832 = vld [vmem:[%s56 + $0x348] sm:$0xff]
      %v1833 = vld [vmem:[%s56 + $0x350] sm:$0xff]
      %v1834 = vld [vmem:[%s56 + $0x358] sm:$0xff]
      %v1835 = vld [vmem:[%s56 + $0x360] sm:$0xff]
      %v1836 = vld [vmem:[%s56 + $0x368] sm:$0xff]
      %v1837 = vld [vmem:[%s56 + $0x370] sm:$0xff]
      %v1838 = vld [vmem:[%s56 + $0x378] sm:$0xff]
      %v1839 = vld [vmem:[%s1] sm:$0xff]
      %v1840 = vld [vmem:[%s1 + $0x8] sm:$0xff]
      %v1841 = vld [vmem:[%s1 + $0x10] sm:$0xff]
      %v1842 = vld [vmem:[%s1 + $0x18] sm:$0xff]
      %v1844 = vsel %vm69, %v1831, 0
      %v1847 = vsel %vm69, %v1832, 0
      %v1850 = vsel %vm69, %v1833, 0
      %v1853 = vsel %vm69, %v1834, 0
      %v1856 = vsel %vm69, %v1835, 0
      %v1859 = vsel %vm69, %v1836, 0
      %v1862 = vsel %vm69, %v1837, 0
      %v1865 = vsel %vm69, %v1838, 0
      %1867 = vmatpush.msra.mxu0 0.0
      %1868 = vmatpush.msra.mxu0 0.0
      %1869 = vmatpush.msra.mxu0 0.0
      %1870 = vmatpush.msra.mxu0 0.0
      %1871 = vmatpush.msra.mxu0 0.0
      %1872 = vmatpush.msra.mxu0 0.0
      %1873 = vmatpush.msra.mxu0 0.0
      %1874 = vmatpush.msra.mxu0 0.0
      %1875 = vmatpush.msra.mxu0 0.0
      %1876 = vmatpush.msra.mxu0 0.0
      %1877 = vmatpush.msra.mxu0 0.0
      %1878 = vmatpush.msra.mxu0 0.0
      %1879 = vmatpush.msra.mxu0 %v1842
      %1880 = vmatpush.msra.mxu0 %v1841
      %1881 = vmatpush.msra.mxu0 %v1840
      %1882 = vmatpush.msra.mxu0 %v1839
      %1883 = vmatmul.f32.gmra.mxu0 %v1844
      %v1884 = vpop.f32.mrf.mxu0
      %v1885 = vadd.f32 0.0, %v1884
      %1886 = vmatmul.f32.gmra.mxu0 %v1847
      %v1887 = vpop.f32.mrf.mxu0
      %v1888 = vadd.f32 0.0, %v1887
      %1889 = vmatmul.f32.gmra.mxu0 %v1850
      %v1890 = vpop.f32.mrf.mxu0
      %v1891 = vadd.f32 0.0, %v1890
      %1892 = vmatmul.f32.gmra.mxu0 %v1853
      %v1893 = vpop.f32.mrf.mxu0
      %v1894 = vadd.f32 0.0, %v1893
      %1895 = vmatmul.f32.gmra.mxu0 %v1856
      %v1896 = vpop.f32.mrf.mxu0
      %v1897 = vadd.f32 0.0, %v1896
      %1898 = vmatmul.f32.gmra.mxu0 %v1859
      %v1899 = vpop.f32.mrf.mxu0
      %v1900 = vadd.f32 0.0, %v1899
      %1901 = vmatmul.f32.gmra.mxu0 %v1862
      %v1902 = vpop.f32.mrf.mxu0
      %v1903 = vadd.f32 0.0, %v1902
      %1904 = vmatmul.f32.gmra.mxu0 %v1865
      %v1905 = vpop.f32.mrf.mxu0
      %v1906 = vadd.f32 0.0, %v1905
      %1907 = vdwg.mxu0
      %v1916 = vrot.slane %v1885, 1
      %v1917 = vrot.slane %v1888, 1
      %v1918 = vsel %vm143, %v1916, %v1917
      %v1919 = vrot.slane %v1891, 1
      %v1920 = vsel %vm143, %v1917, %v1919
      %v1921 = vrot.slane %v1894, 1
      %v1922 = vsel %vm143, %v1919, %v1921
      %v1923 = vrot.slane %v1897, 1
      %v1924 = vsel %vm143, %v1921, %v1923
      %v1925 = vrot.slane %v1900, 1
      %v1926 = vsel %vm143, %v1923, %v1925
      %v1927 = vrot.slane %v1903, 1
      %v1928 = vsel %vm143, %v1925, %v1927
      %v1929 = vrot.slane %v1906, 1
      %v1930 = vsel %vm143, %v1927, %v1929
      %v1939 = vmax.f32 %v1885, %v1918
      %v1940 = vmax.f32 %v1888, %v1920
      %v1941 = vmax.f32 %v1891, %v1922
      %v1942 = vmax.f32 %v1894, %v1924
      %v1943 = vmax.f32 %v1897, %v1926
      %v1944 = vmax.f32 %v1900, %v1928
      %v1945 = vmax.f32 %v1903, %v1930
      %v1946 = vmax.f32 %v1906, %v1929
      %v1947 = vmax.f32 %v1939, %v1943
      %v1948 = vmax.f32 %v1940, %v1944
      %v1949 = vmax.f32 %v1941, %v1945
      %v1950 = vmax.f32 %v1942, %v1946
      %v1951 = vadd.f32 %v1947, %v180
      %v1952 = vadd.f32 %v1948, %v180
      %v1953 = vadd.f32 %v1949, %v180
      %v1954 = vadd.f32 %v1950, %v180
      %v1955 = vmax.f32 %v1951, 0.0
      %v1956 = vmax.f32 %v1952, 0.0
      %v1957 = vmax.f32 %v1953, 0.0
      %v1958 = vmax.f32 %v1954, 0.0
      %1959 = vst [vmem:[#allocation5] sm:$0xff] %v1955
      %1960 = vst [vmem:[#allocation5 + $0x8] sm:$0xff] %v1956
      %1961 = vst [vmem:[#allocation5 + $0x10] sm:$0xff] %v1957
      %1962 = vst [vmem:[#allocation5 + $0x18] sm:$0x7f] %v1958
      %v1963 = vld [vmem:[#allocation5] ss:$2 sm:$0xff]
      %v1964 = vld [vmem:[%s195] ss:$2 sm:$0x7f]
      %1965 = vst [vmem:[#allocation2 + $0xc3] sm:$0xff] %v1963
      %1966 = vst [vmem:[#allocation2 + $0xcb] sm:$0x7f] %v1964
      %v1967 = vld [vmem:[%s56 + $0x380] sm:$0xff]
      %v1968 = vld [vmem:[%s56 + $0x388] sm:$0xff]
      %v1969 = vld [vmem:[%s56 + $0x390] sm:$0xff]
      %v1970 = vld [vmem:[%s56 + $0x398] sm:$0xff]
      %v1971 = vld [vmem:[%s56 + $0x3a0] sm:$0xff]
      %v1972 = vld [vmem:[%s56 + $0x3a8] sm:$0xff]
      %v1973 = vld [vmem:[%s56 + $0x3b0] sm:$0xff]
      %v1974 = vld [vmem:[%s56 + $0x3b8] sm:$0xff]
      %v1975 = vld [vmem:[%s1] sm:$0xff]
      %v1976 = vld [vmem:[%s1 + $0x8] sm:$0xff]
      %v1977 = vld [vmem:[%s1 + $0x10] sm:$0xff]
      %v1978 = vld [vmem:[%s1 + $0x18] sm:$0xff]
      %v1980 = vsel %vm69, %v1967, 0
      %v1983 = vsel %vm69, %v1968, 0
      %v1986 = vsel %vm69, %v1969, 0
      %v1989 = vsel %vm69, %v1970, 0
      %v1992 = vsel %vm69, %v1971, 0
      %v1995 = vsel %vm69, %v1972, 0
      %v1998 = vsel %vm69, %v1973, 0
      %v2001 = vsel %vm69, %v1974, 0
      %2003 = vmatpush.msra.mxu0 0.0
      %2004 = vmatpush.msra.mxu0 0.0
      %2005 = vmatpush.msra.mxu0 0.0
      %2006 = vmatpush.msra.mxu0 0.0
      %2007 = vmatpush.msra.mxu0 0.0
      %2008 = vmatpush.msra.mxu0 0.0
      %2009 = vmatpush.msra.mxu0 0.0
      %2010 = vmatpush.msra.mxu0 0.0
      %2011 = vmatpush.msra.mxu0 0.0
      %2012 = vmatpush.msra.mxu0 0.0
      %2013 = vmatpush.msra.mxu0 0.0
      %2014 = vmatpush.msra.mxu0 0.0
      %2015 = vmatpush.msra.mxu0 %v1978
      %2016 = vmatpush.msra.mxu0 %v1977
      %2017 = vmatpush.msra.mxu0 %v1976
      %2018 = vmatpush.msra.mxu0 %v1975
      %2019 = vmatmul.f32.gmra.mxu0 %v1980
      %v2020 = vpop.f32.mrf.mxu0
      %v2021 = vadd.f32 0.0, %v2020
      %2022 = vmatmul.f32.gmra.mxu0 %v1983
      %v2023 = vpop.f32.mrf.mxu0
      %v2024 = vadd.f32 0.0, %v2023
      %2025 = vmatmul.f32.gmra.mxu0 %v1986
      %v2026 = vpop.f32.mrf.mxu0
      %v2027 = vadd.f32 0.0, %v2026
      %2028 = vmatmul.f32.gmra.mxu0 %v1989
      %v2029 = vpop.f32.mrf.mxu0
      %v2030 = vadd.f32 0.0, %v2029
      %2031 = vmatmul.f32.gmra.mxu0 %v1992
      %v2032 = vpop.f32.mrf.mxu0
      %v2033 = vadd.f32 0.0, %v2032
      %2034 = vmatmul.f32.gmra.mxu0 %v1995
      %v2035 = vpop.f32.mrf.mxu0
      %v2036 = vadd.f32 0.0, %v2035
      %2037 = vmatmul.f32.gmra.mxu0 %v1998
      %v2038 = vpop.f32.mrf.mxu0
      %v2039 = vadd.f32 0.0, %v2038
      %2040 = vmatmul.f32.gmra.mxu0 %v2001
      %v2041 = vpop.f32.mrf.mxu0
      %v2042 = vadd.f32 0.0, %v2041
      %2043 = vdwg.mxu0
      %v2052 = vrot.slane %v2021, 1
      %v2053 = vrot.slane %v2024, 1
      %v2054 = vsel %vm143, %v2052, %v2053
      %v2055 = vrot.slane %v2027, 1
      %v2056 = vsel %vm143, %v2053, %v2055
      %v2057 = vrot.slane %v2030, 1
      %v2058 = vsel %vm143, %v2055, %v2057
      %v2059 = vrot.slane %v2033, 1
      %v2060 = vsel %vm143, %v2057, %v2059
      %v2061 = vrot.slane %v2036, 1
      %v2062 = vsel %vm143, %v2059, %v2061
      %v2063 = vrot.slane %v2039, 1
      %v2064 = vsel %vm143, %v2061, %v2063
      %v2065 = vrot.slane %v2042, 1
      %v2066 = vsel %vm143, %v2063, %v2065
      %v2075 = vmax.f32 %v2021, %v2054
      %v2076 = vmax.f32 %v2024, %v2056
      %v2077 = vmax.f32 %v2027, %v2058
      %v2078 = vmax.f32 %v2030, %v2060
      %v2079 = vmax.f32 %v2033, %v2062
      %v2080 = vmax.f32 %v2036, %v2064
      %v2081 = vmax.f32 %v2039, %v2066
      %v2082 = vmax.f32 %v2042, %v2065
      %v2083 = vmax.f32 %v2075, %v2079
      %v2084 = vmax.f32 %v2076, %v2080
      %v2085 = vmax.f32 %v2077, %v2081
      %v2086 = vmax.f32 %v2078, %v2082
      %v2087 = vadd.f32 %v2083, %v180
      %v2088 = vadd.f32 %v2084, %v180
      %v2089 = vadd.f32 %v2085, %v180
      %v2090 = vadd.f32 %v2086, %v180
      %v2091 = vmax.f32 %v2087, 0.0
      %v2092 = vmax.f32 %v2088, 0.0
      %v2093 = vmax.f32 %v2089, 0.0
      %v2094 = vmax.f32 %v2090, 0.0
      %2095 = vst [vmem:[#allocation5] sm:$0xff] %v2091
      %2096 = vst [vmem:[#allocation5 + $0x8] sm:$0xff] %v2092
      %2097 = vst [vmem:[#allocation5 + $0x10] sm:$0xff] %v2093
      %2098 = vst [vmem:[#allocation5 + $0x18] sm:$0x7f] %v2094
      %v2099 = vld [vmem:[#allocation5] ss:$2 sm:$0xff]
      %v2100 = vld [vmem:[%s195] ss:$2 sm:$0x7f]
      %2101 = vst [vmem:[#allocation2 + $0xd2] sm:$0xff] %v2099
      %2102 = vst [vmem:[#allocation2 + $0xda] sm:$0x7f] %v2100
      %v2103 = vld [vmem:[#allocation2] sm:$0xff]
      %v2104 = vld [vmem:[#allocation2 + $0x8] sm:$0xff]
      %v2105 = vld [vmem:[#allocation2 + $0x10] sm:$0xff]
      %v2106 = vld [vmem:[#allocation2 + $0x18] sm:$0xff]
      %v2107 = vld [vmem:[#allocation2 + $0x20] sm:$0xff]
      %v2108 = vld [vmem:[#allocation2 + $0x28] sm:$0xff]
      %v2109 = vld [vmem:[#allocation2 + $0x30] sm:$0xff]
      %v2110 = vld [vmem:[#allocation2 + $0x38] sm:$0xff]
      %v2111 = vld [vmem:[#allocation2 + $0x40] sm:$0xff]
      %v2112 = vld [vmem:[#allocation2 + $0x48] sm:$0xff]
      %v2113 = vld [vmem:[#allocation2 + $0x50] sm:$0xff]
      %v2114 = vld [vmem:[#allocation2 + $0x58] sm:$0xff]
      %v2115 = vld [vmem:[%s3] sm:$0xff]
      %v2116 = vld [vmem:[%s3 + $0x8] sm:$0xff]
      %v2117 = vld [vmem:[%s3 + $0x10] sm:$0xff]
      %v2118 = vld [vmem:[%s3 + $0x18] sm:$0xff]
      %v2119 = vld [vmem:[%s3 + $0x20] sm:$0xff]
      %v2120 = vld [vmem:[%s3 + $0x28] sm:$0xff]
      %v2121 = vld [vmem:[%s3 + $0x30] sm:$0xff]
      %v2122 = vld [vmem:[%s3 + $0x38] sm:$0xff]
      %v2123 = vld [vmem:[%s3 + $0x40] sm:$0xff]
      %v2124 = vld [vmem:[%s3 + $0x48] sm:$0xff]
      %v2125 = vld [vmem:[%s3 + $0x50] sm:$0xff]
      %v2126 = vld [vmem:[%s3 + $0x58] sm:$0xff]
      %v2127 = vld [vmem:[%s3 + $0x60] sm:$0xff]
      %v2128 = vld [vmem:[%s3 + $0x68] sm:$0xff]
      %v2129 = vld [vmem:[%s3 + $0x70] sm:$0xff]
      %v2130 = vld [vmem:[%s3 + $0x78] sm:$0xff]
      %v2131 = vld [vmem:[#allocation2 + $0x1] sm:$0xff]
      %v2132 = vld [vmem:[#allocation2 + $0x9] sm:$0xff]
      %v2133 = vld [vmem:[#allocation2 + $0x11] sm:$0xff]
      %v2134 = vld [vmem:[#allocation2 + $0x19] sm:$0xff]
      %v2135 = vld [vmem:[#allocation2 + $0x21] sm:$0xff]
      %v2136 = vld [vmem:[#allocation2 + $0x29] sm:$0xff]
      %v2137 = vld [vmem:[#allocation2 + $0x31] sm:$0xff]
      %v2138 = vld [vmem:[#allocation2 + $0x39] sm:$0xff]
      %v2139 = vld [vmem:[#allocation2 + $0x41] sm:$0xff]
      %v2140 = vld [vmem:[#allocation2 + $0x49] sm:$0xff]
      %v2141 = vld [vmem:[#allocation2 + $0x51] sm:$0xff]
      %v2142 = vld [vmem:[#allocation2 + $0x59] sm:$0xff]
      %s2143 = scalar_lea.vmem %s3, 128
      %v2144 = vld [vmem:[%s2143] sm:$0xff]
      %v2145 = vld [vmem:[%s2143 + $0x8] sm:$0xff]
      %v2146 = vld [vmem:[%s2143 + $0x10] sm:$0xff]
      %v2147 = vld [vmem:[%s2143 + $0x18] sm:$0xff]
      %v2148 = vld [vmem:[%s2143 + $0x20] sm:$0xff]
      %v2149 = vld [vmem:[%s2143 + $0x28] sm:$0xff]
      %v2150 = vld [vmem:[%s2143 + $0x30] sm:$0xff]
      %v2151 = vld [vmem:[%s2143 + $0x38] sm:$0xff]
      %v2152 = vld [vmem:[%s2143 + $0x40] sm:$0xff]
      %v2153 = vld [vmem:[%s2143 + $0x48] sm:$0xff]
      %v2154 = vld [vmem:[%s2143 + $0x50] sm:$0xff]
      %v2155 = vld [vmem:[%s2143 + $0x58] sm:$0xff]
      %v2156 = vld [vmem:[%s2143 + $0x60] sm:$0xff]
      %v2157 = vld [vmem:[%s2143 + $0x68] sm:$0xff]
      %v2158 = vld [vmem:[%s2143 + $0x70] sm:$0xff]
      %v2159 = vld [vmem:[%s2143 + $0x78] sm:$0xff]
      %2160 = vmatpush.msra.mxu0 %v2159
      %2161 = vmatpush.msra.mxu0 %v2158
      %2162 = vmatpush.msra.mxu0 %v2157
      %2163 = vmatpush.msra.mxu0 %v2156
      %2164 = vmatpush.msra.mxu0 %v2155
      %2165 = vmatpush.msra.mxu0 %v2154
      %2166 = vmatpush.msra.mxu0 %v2153
      %2167 = vmatpush.msra.mxu0 %v2152
      %2168 = vmatpush.msra.mxu0 %v2151
      %2169 = vmatpush.msra.mxu0 %v2150
      %2170 = vmatpush.msra.mxu0 %v2149
      %2171 = vmatpush.msra.mxu0 %v2148
      %2172 = vmatpush.msra.mxu0 %v2147
      %2173 = vmatpush.msra.mxu0 %v2146
      %2174 = vmatpush.msra.mxu0 %v2145
      %2175 = vmatpush.msra.mxu0 %v2144
      %2176 = vmatmul.f32.gmra.mxu0 %v2131
      %v2177 = vpop.f32.mrf.mxu0
      %v2178 = vadd.f32 0.0, %v2177
      %2179 = vmatmul.f32.gmra.mxu0 %v2132
      %v2180 = vpop.f32.mrf.mxu0
      %v2181 = vadd.f32 0.0, %v2180
      %2182 = vmatmul.f32.gmra.mxu0 %v2133
      %v2183 = vpop.f32.mrf.mxu0
      %v2184 = vadd.f32 0.0, %v2183
      %2185 = vmatmul.f32.gmra.mxu0 %v2134
      %v2186 = vpop.f32.mrf.mxu0
      %v2187 = vadd.f32 0.0, %v2186
      %2188 = vmatmul.f32.gmra.mxu0 %v2135
      %v2189 = vpop.f32.mrf.mxu0
      %v2190 = vadd.f32 0.0, %v2189
      %2191 = vmatmul.f32.gmra.mxu0 %v2136
      %v2192 = vpop.f32.mrf.mxu0
      %v2193 = vadd.f32 0.0, %v2192
      %2194 = vmatmul.f32.gmra.mxu0 %v2137
      %v2195 = vpop.f32.mrf.mxu0
      %v2196 = vadd.f32 0.0, %v2195
      %2197 = vmatmul.f32.gmra.mxu0 %v2138
      %v2198 = vpop.f32.mrf.mxu0
      %v2199 = vadd.f32 0.0, %v2198
      %2200 = vmatmul.f32.gmra.mxu0 %v2139
      %v2201 = vpop.f32.mrf.mxu0
      %v2202 = vadd.f32 0.0, %v2201
      %2203 = vmatmul.f32.gmra.mxu0 %v2140
      %v2204 = vpop.f32.mrf.mxu0
      %v2205 = vadd.f32 0.0, %v2204
      %2206 = vmatmul.f32.gmra.mxu0 %v2141
      %v2207 = vpop.f32.mrf.mxu0
      %v2208 = vadd.f32 0.0, %v2207
      %2209 = vmatmul.f32.gmra.mxu0 %v2142
      %v2210 = vpop.f32.mrf.mxu0
      %v2211 = vadd.f32 0.0, %v2210
      %2212 = vdwg.mxu0
      %2213 = vmatpush.msra.mxu0 %v2130
      %2214 = vmatpush.msra.mxu0 %v2129
      %2215 = vmatpush.msra.mxu0 %v2128
      %2216 = vmatpush.msra.mxu0 %v2127
      %2217 = vmatpush.msra.mxu0 %v2126
      %2218 = vmatpush.msra.mxu0 %v2125
      %2219 = vmatpush.msra.mxu0 %v2124
      %2220 = vmatpush.msra.mxu0 %v2123
      %2221 = vmatpush.msra.mxu0 %v2122
      %2222 = vmatpush.msra.mxu0 %v2121
      %2223 = vmatpush.msra.mxu0 %v2120
      %2224 = vmatpush.msra.mxu0 %v2119
      %2225 = vmatpush.msra.mxu0 %v2118
      %2226 = vmatpush.msra.mxu0 %v2117
      %2227 = vmatpush.msra.mxu0 %v2116
      %2228 = vmatpush.msra.mxu0 %v2115
      %2229 = vmatmul.f32.gmra.mxu0 %v2103
      %v2230 = vpop.f32.mrf.mxu0
      %v2231 = vadd.f32 %v2178, %v2230
      %2232 = vmatmul.f32.gmra.mxu0 %v2104
      %v2233 = vpop.f32.mrf.mxu0
      %v2234 = vadd.f32 %v2181, %v2233
      %2235 = vmatmul.f32.gmra.mxu0 %v2105
      %v2236 = vpop.f32.mrf.mxu0
      %v2237 = vadd.f32 %v2184, %v2236
      %2238 = vmatmul.f32.gmra.mxu0 %v2106
      %v2239 = vpop.f32.mrf.mxu0
      %v2240 = vadd.f32 %v2187, %v2239
      %2241 = vmatmul.f32.gmra.mxu0 %v2107
      %v2242 = vpop.f32.mrf.mxu0
      %v2243 = vadd.f32 %v2190, %v2242
      %2244 = vmatmul.f32.gmra.mxu0 %v2108
      %v2245 = vpop.f32.mrf.mxu0
      %v2246 = vadd.f32 %v2193, %v2245
      %2247 = vmatmul.f32.gmra.mxu0 %v2109
      %v2248 = vpop.f32.mrf.mxu0
      %v2249 = vadd.f32 %v2196, %v2248
      %2250 = vmatmul.f32.gmra.mxu0 %v2110
      %v2251 = vpop.f32.mrf.mxu0
      %v2252 = vadd.f32 %v2199, %v2251
      %2253 = vmatmul.f32.gmra.mxu0 %v2111
      %v2254 = vpop.f32.mrf.mxu0
      %v2255 = vadd.f32 %v2202, %v2254
      %2256 = vmatmul.f32.gmra.mxu0 %v2112
      %v2257 = vpop.f32.mrf.mxu0
      %v2258 = vadd.f32 %v2205, %v2257
      %2259 = vmatmul.f32.gmra.mxu0 %v2113
      %v2260 = vpop.f32.mrf.mxu0
      %v2261 = vadd.f32 %v2208, %v2260
      %2262 = vmatmul.f32.gmra.mxu0 %v2114
      %v2263 = vpop.f32.mrf.mxu0
      %v2264 = vadd.f32 %v2211, %v2263
      %2265 = vdwg.mxu0
      %v2266 = vld [vmem:[#allocation2 + $0x2] sm:$0xff]
      %v2267 = vld [vmem:[#allocation2 + $0xa] sm:$0xff]
      %v2268 = vld [vmem:[#allocation2 + $0x12] sm:$0xff]
      %v2269 = vld [vmem:[#allocation2 + $0x1a] sm:$0xff]
      %v2270 = vld [vmem:[#allocation2 + $0x22] sm:$0xff]
      %v2271 = vld [vmem:[#allocation2 + $0x2a] sm:$0xff]
      %v2272 = vld [vmem:[#allocation2 + $0x32] sm:$0xff]
      %v2273 = vld [vmem:[#allocation2 + $0x3a] sm:$0xff]
      %v2274 = vld [vmem:[#allocation2 + $0x42] sm:$0xff]
      %v2275 = vld [vmem:[#allocation2 + $0x4a] sm:$0xff]
      %v2276 = vld [vmem:[#allocation2 + $0x52] sm:$0xff]
      %v2277 = vld [vmem:[#allocation2 + $0x5a] sm:$0xff]
      %s2278 = scalar_lea.vmem %s3, 256
      %v2279 = vld [vmem:[%s2278] sm:$0xff]
      %v2280 = vld [vmem:[%s2278 + $0x8] sm:$0xff]
      %v2281 = vld [vmem:[%s2278 + $0x10] sm:$0xff]
      %v2282 = vld [vmem:[%s2278 + $0x18] sm:$0xff]
      %v2283 = vld [vmem:[%s2278 + $0x20] sm:$0xff]
      %v2284 = vld [vmem:[%s2278 + $0x28] sm:$0xff]
      %v2285 = vld [vmem:[%s2278 + $0x30] sm:$0xff]
      %v2286 = vld [vmem:[%s2278 + $0x38] sm:$0xff]
      %v2287 = vld [vmem:[%s2278 + $0x40] sm:$0xff]
      %v2288 = vld [vmem:[%s2278 + $0x48] sm:$0xff]
      %v2289 = vld [vmem:[%s2278 + $0x50] sm:$0xff]
      %v2290 = vld [vmem:[%s2278 + $0x58] sm:$0xff]
      %v2291 = vld [vmem:[%s2278 + $0x60] sm:$0xff]
      %v2292 = vld [vmem:[%s2278 + $0x68] sm:$0xff]
      %v2293 = vld [vmem:[%s2278 + $0x70] sm:$0xff]
      %v2294 = vld [vmem:[%s2278 + $0x78] sm:$0xff]
      %2295 = vmatpush.msra.mxu0 %v2294
      %2296 = vmatpush.msra.mxu0 %v2293
      %2297 = vmatpush.msra.mxu0 %v2292
      %2298 = vmatpush.msra.mxu0 %v2291
      %2299 = vmatpush.msra.mxu0 %v2290
      %2300 = vmatpush.msra.mxu0 %v2289
      %2301 = vmatpush.msra.mxu0 %v2288
      %2302 = vmatpush.msra.mxu0 %v2287
      %2303 = vmatpush.msra.mxu0 %v2286
      %2304 = vmatpush.msra.mxu0 %v2285
      %2305 = vmatpush.msra.mxu0 %v2284
      %2306 = vmatpush.msra.mxu0 %v2283
      %2307 = vmatpush.msra.mxu0 %v2282
      %2308 = vmatpush.msra.mxu0 %v2281
      %2309 = vmatpush.msra.mxu0 %v2280
      %2310 = vmatpush.msra.mxu0 %v2279
      %2311 = vmatmul.f32.gmra.mxu0 %v2266
      %v2312 = vpop.f32.mrf.mxu0
      %v2313 = vadd.f32 0.0, %v2312
      %2314 = vmatmul.f32.gmra.mxu0 %v2267
      %v2315 = vpop.f32.mrf.mxu0
      %v2316 = vadd.f32 0.0, %v2315
      %2317 = vmatmul.f32.gmra.mxu0 %v2268
      %v2318 = vpop.f32.mrf.mxu0
      %v2319 = vadd.f32 0.0, %v2318
      %2320 = vmatmul.f32.gmra.mxu0 %v2269
      %v2321 = vpop.f32.mrf.mxu0
      %v2322 = vadd.f32 0.0, %v2321
      %2323 = vmatmul.f32.gmra.mxu0 %v2270
      %v2324 = vpop.f32.mrf.mxu0
      %v2325 = vadd.f32 0.0, %v2324
      %2326 = vmatmul.f32.gmra.mxu0 %v2271
      %v2327 = vpop.f32.mrf.mxu0
      %v2328 = vadd.f32 0.0, %v2327
      %2329 = vmatmul.f32.gmra.mxu0 %v2272
      %v2330 = vpop.f32.mrf.mxu0
      %v2331 = vadd.f32 0.0, %v2330
      %2332 = vmatmul.f32.gmra.mxu0 %v2273
      %v2333 = vpop.f32.mrf.mxu0
      %v2334 = vadd.f32 0.0, %v2333
      %2335 = vmatmul.f32.gmra.mxu0 %v2274
      %v2336 = vpop.f32.mrf.mxu0
      %v2337 = vadd.f32 0.0, %v2336
      %2338 = vmatmul.f32.gmra.mxu0 %v2275
      %v2339 = vpop.f32.mrf.mxu0
      %v2340 = vadd.f32 0.0, %v2339
      %2341 = vmatmul.f32.gmra.mxu0 %v2276
      %v2342 = vpop.f32.mrf.mxu0
      %v2343 = vadd.f32 0.0, %v2342
      %2344 = vmatmul.f32.gmra.mxu0 %v2277
      %v2345 = vpop.f32.mrf.mxu0
      %v2346 = vadd.f32 0.0, %v2345
      %2347 = vdwg.mxu0
      %v2348 = vadd.f32 %v2231, %v2313
      %v2349 = vadd.f32 %v2234, %v2316
      %v2350 = vadd.f32 %v2237, %v2319
      %v2351 = vadd.f32 %v2240, %v2322
      %v2352 = vadd.f32 %v2243, %v2325
      %v2353 = vadd.f32 %v2246, %v2328
      %v2354 = vadd.f32 %v2249, %v2331
      %v2355 = vadd.f32 %v2252, %v2334
      %v2356 = vadd.f32 %v2255, %v2337
      %v2357 = vadd.f32 %v2258, %v2340
      %v2358 = vadd.f32 %v2261, %v2343
      %v2359 = vadd.f32 %v2264, %v2346
      %v2360 = vld [vmem:[#allocation2 + $0xf] sm:$0xff]
      %v2361 = vld [vmem:[#allocation2 + $0x17] sm:$0xff]
      %v2362 = vld [vmem:[#allocation2 + $0x1f] sm:$0xff]
      %v2363 = vld [vmem:[#allocation2 + $0x27] sm:$0xff]
      %v2364 = vld [vmem:[#allocation2 + $0x2f] sm:$0xff]
      %v2365 = vld [vmem:[#allocation2 + $0x37] sm:$0xff]
      %v2366 = vld [vmem:[#allocation2 + $0x3f] sm:$0xff]
      %v2367 = vld [vmem:[#allocation2 + $0x47] sm:$0xff]
      %v2368 = vld [vmem:[#allocation2 + $0x4f] sm:$0xff]
      %v2369 = vld [vmem:[#allocation2 + $0x57] sm:$0xff]
      %v2370 = vld [vmem:[#allocation2 + $0x5f] sm:$0xff]
      %v2371 = vld [vmem:[#allocation2 + $0x67] sm:$0xff]
      %s2372 = scalar_lea.vmem %s3, 384
      %v2373 = vld [vmem:[%s2372] sm:$0xff]
      %v2374 = vld [vmem:[%s2372 + $0x8] sm:$0xff]
      %v2375 = vld [vmem:[%s2372 + $0x10] sm:$0xff]
      %v2376 = vld [vmem:[%s2372 + $0x18] sm:$0xff]
      %v2377 = vld [vmem:[%s2372 + $0x20] sm:$0xff]
      %v2378 = vld [vmem:[%s2372 + $0x28] sm:$0xff]
      %v2379 = vld [vmem:[%s2372 + $0x30] sm:$0xff]
      %v2380 = vld [vmem:[%s2372 + $0x38] sm:$0xff]
      %v2381 = vld [vmem:[%s2372 + $0x40] sm:$0xff]
      %v2382 = vld [vmem:[%s2372 + $0x48] sm:$0xff]
      %v2383 = vld [vmem:[%s2372 + $0x50] sm:$0xff]
      %v2384 = vld [vmem:[%s2372 + $0x58] sm:$0xff]
      %v2385 = vld [vmem:[%s2372 + $0x60] sm:$0xff]
      %v2386 = vld [vmem:[%s2372 + $0x68] sm:$0xff]
      %v2387 = vld [vmem:[%s2372 + $0x70] sm:$0xff]
      %v2388 = vld [vmem:[%s2372 + $0x78] sm:$0xff]
      %2389 = vmatpush.msra.mxu0 %v2388
      %2390 = vmatpush.msra.mxu0 %v2387
      %2391 = vmatpush.msra.mxu0 %v2386
      %2392 = vmatpush.msra.mxu0 %v2385
      %2393 = vmatpush.msra.mxu0 %v2384
      %2394 = vmatpush.msra.mxu0 %v2383
      %2395 = vmatpush.msra.mxu0 %v2382
      %2396 = vmatpush.msra.mxu0 %v2381
      %2397 = vmatpush.msra.mxu0 %v2380
      %2398 = vmatpush.msra.mxu0 %v2379
      %2399 = vmatpush.msra.mxu0 %v2378
      %2400 = vmatpush.msra.mxu0 %v2377
      %2401 = vmatpush.msra.mxu0 %v2376
      %2402 = vmatpush.msra.mxu0 %v2375
      %2403 = vmatpush.msra.mxu0 %v2374
      %2404 = vmatpush.msra.mxu0 %v2373
      %2405 = vmatmul.f32.gmra.mxu0 %v2360
      %v2406 = vpop.f32.mrf.mxu0
      %v2407 = vadd.f32 0.0, %v2406
      %2408 = vmatmul.f32.gmra.mxu0 %v2361
      %v2409 = vpop.f32.mrf.mxu0
      %v2410 = vadd.f32 0.0, %v2409
      %2411 = vmatmul.f32.gmra.mxu0 %v2362
      %v2412 = vpop.f32.mrf.mxu0
      %v2413 = vadd.f32 0.0, %v2412
      %2414 = vmatmul.f32.gmra.mxu0 %v2363
      %v2415 = vpop.f32.mrf.mxu0
      %v2416 = vadd.f32 0.0, %v2415
      %2417 = vmatmul.f32.gmra.mxu0 %v2364
      %v2418 = vpop.f32.mrf.mxu0
      %v2419 = vadd.f32 0.0, %v2418
      %2420 = vmatmul.f32.gmra.mxu0 %v2365
      %v2421 = vpop.f32.mrf.mxu0
      %v2422 = vadd.f32 0.0, %v2421
      %2423 = vmatmul.f32.gmra.mxu0 %v2366
      %v2424 = vpop.f32.mrf.mxu0
      %v2425 = vadd.f32 0.0, %v2424
      %2426 = vmatmul.f32.gmra.mxu0 %v2367
      %v2427 = vpop.f32.mrf.mxu0
      %v2428 = vadd.f32 0.0, %v2427
      %2429 = vmatmul.f32.gmra.mxu0 %v2368
      %v2430 = vpop.f32.mrf.mxu0
      %v2431 = vadd.f32 0.0, %v2430
      %2432 = vmatmul.f32.gmra.mxu0 %v2369
      %v2433 = vpop.f32.mrf.mxu0
      %v2434 = vadd.f32 0.0, %v2433
      %2435 = vmatmul.f32.gmra.mxu0 %v2370
      %v2436 = vpop.f32.mrf.mxu0
      %v2437 = vadd.f32 0.0, %v2436
      %2438 = vmatmul.f32.gmra.mxu0 %v2371
      %v2439 = vpop.f32.mrf.mxu0
      %v2440 = vadd.f32 0.0, %v2439
      %2441 = vdwg.mxu0
      %v2442 = vadd.f32 %v2348, %v2407
      %v2443 = vadd.f32 %v2349, %v2410
      %v2444 = vadd.f32 %v2350, %v2413
      %v2445 = vadd.f32 %v2351, %v2416
      %v2446 = vadd.f32 %v2352, %v2419
      %v2447 = vadd.f32 %v2353, %v2422
      %v2448 = vadd.f32 %v2354, %v2425
      %v2449 = vadd.f32 %v2355, %v2428
      %v2450 = vadd.f32 %v2356, %v2431
      %v2451 = vadd.f32 %v2357, %v2434
      %v2452 = vadd.f32 %v2358, %v2437
      %v2453 = vadd.f32 %v2359, %v2440
      %v2454 = vld [vmem:[#allocation2 + $0x10] sm:$0xff]
      %v2455 = vld [vmem:[#allocation2 + $0x18] sm:$0xff]
      %v2456 = vld [vmem:[#allocation2 + $0x20] sm:$0xff]
      %v2457 = vld [vmem:[#allocation2 + $0x28] sm:$0xff]
      %v2458 = vld [vmem:[#allocation2 + $0x30] sm:$0xff]
      %v2459 = vld [vmem:[#allocation2 + $0x38] sm:$0xff]
      %v2460 = vld [vmem:[#allocation2 + $0x40] sm:$0xff]
      %v2461 = vld [vmem:[#allocation2 + $0x48] sm:$0xff]
      %v2462 = vld [vmem:[#allocation2 + $0x50] sm:$0xff]
      %v2463 = vld [vmem:[#allocation2 + $0x58] sm:$0xff]
      %v2464 = vld [vmem:[#allocation2 + $0x60] sm:$0xff]
      %v2465 = vld [vmem:[#allocation2 + $0x68] sm:$0xff]
      %s2466 = scalar_lea.vmem %s3, 512
      %v2467 = vld [vmem:[%s2466] sm:$0xff]
      %v2468 = vld [vmem:[%s2466 + $0x8] sm:$0xff]
      %v2469 = vld [vmem:[%s2466 + $0x10] sm:$0xff]
      %v2470 = vld [vmem:[%s2466 + $0x18] sm:$0xff]
      %v2471 = vld [vmem:[%s2466 + $0x20] sm:$0xff]
      %v2472 = vld [vmem:[%s2466 + $0x28] sm:$0xff]
      %v2473 = vld [vmem:[%s2466 + $0x30] sm:$0xff]
      %v2474 = vld [vmem:[%s2466 + $0x38] sm:$0xff]
      %v2475 = vld [vmem:[%s2466 + $0x40] sm:$0xff]
      %v2476 = vld [vmem:[%s2466 + $0x48] sm:$0xff]
      %v2477 = vld [vmem:[%s2466 + $0x50] sm:$0xff]
      %v2478 = vld [vmem:[%s2466 + $0x58] sm:$0xff]
      %v2479 = vld [vmem:[%s2466 + $0x60] sm:$0xff]
      %v2480 = vld [vmem:[%s2466 + $0x68] sm:$0xff]
      %v2481 = vld [vmem:[%s2466 + $0x70] sm:$0xff]
      %v2482 = vld [vmem:[%s2466 + $0x78] sm:$0xff]
      %2483 = vmatpush.msra.mxu0 %v2482
      %2484 = vmatpush.msra.mxu0 %v2481
      %2485 = vmatpush.msra.mxu0 %v2480
      %2486 = vmatpush.msra.mxu0 %v2479
      %2487 = vmatpush.msra.mxu0 %v2478
      %2488 = vmatpush.msra.mxu0 %v2477
      %2489 = vmatpush.msra.mxu0 %v2476
      %2490 = vmatpush.msra.mxu0 %v2475
      %2491 = vmatpush.msra.mxu0 %v2474
      %2492 = vmatpush.msra.mxu0 %v2473
      %2493 = vmatpush.msra.mxu0 %v2472
      %2494 = vmatpush.msra.mxu0 %v2471
      %2495 = vmatpush.msra.mxu0 %v2470
      %2496 = vmatpush.msra.mxu0 %v2469
      %2497 = vmatpush.msra.mxu0 %v2468
      %2498 = vmatpush.msra.mxu0 %v2467
      %2499 = vmatmul.f32.gmra.mxu0 %v2454
      %v2500 = vpop.f32.mrf.mxu0
      %v2501 = vadd.f32 0.0, %v2500
      %2502 = vmatmul.f32.gmra.mxu0 %v2455
      %v2503 = vpop.f32.mrf.mxu0
      %v2504 = vadd.f32 0.0, %v2503
      %2505 = vmatmul.f32.gmra.mxu0 %v2456
      %v2506 = vpop.f32.mrf.mxu0
      %v2507 = vadd.f32 0.0, %v2506
      %2508 = vmatmul.f32.gmra.mxu0 %v2457
      %v2509 = vpop.f32.mrf.mxu0
      %v2510 = vadd.f32 0.0, %v2509
      %2511 = vmatmul.f32.gmra.mxu0 %v2458
      %v2512 = vpop.f32.mrf.mxu0
      %v2513 = vadd.f32 0.0, %v2512
      %2514 = vmatmul.f32.gmra.mxu0 %v2459
      %v2515 = vpop.f32.mrf.mxu0
      %v2516 = vadd.f32 0.0, %v2515
      %2517 = vmatmul.f32.gmra.mxu0 %v2460
      %v2518 = vpop.f32.mrf.mxu0
      %v2519 = vadd.f32 0.0, %v2518
      %2520 = vmatmul.f32.gmra.mxu0 %v2461
      %v2521 = vpop.f32.mrf.mxu0
      %v2522 = vadd.f32 0.0, %v2521
      %2523 = vmatmul.f32.gmra.mxu0 %v2462
      %v2524 = vpop.f32.mrf.mxu0
      %v2525 = vadd.f32 0.0, %v2524
      %2526 = vmatmul.f32.gmra.mxu0 %v2463
      %v2527 = vpop.f32.mrf.mxu0
      %v2528 = vadd.f32 0.0, %v2527
      %2529 = vmatmul.f32.gmra.mxu0 %v2464
      %v2530 = vpop.f32.mrf.mxu0
      %v2531 = vadd.f32 0.0, %v2530
      %2532 = vmatmul.f32.gmra.mxu0 %v2465
      %v2533 = vpop.f32.mrf.mxu0
      %v2534 = vadd.f32 0.0, %v2533
      %2535 = vdwg.mxu0
      %v2536 = vadd.f32 %v2442, %v2501
      %v2537 = vadd.f32 %v2443, %v2504
      %v2538 = vadd.f32 %v2444, %v2507
      %v2539 = vadd.f32 %v2445, %v2510
      %v2540 = vadd.f32 %v2446, %v2513
      %v2541 = vadd.f32 %v2447, %v2516
      %v2542 = vadd.f32 %v2448, %v2519
      %v2543 = vadd.f32 %v2449, %v2522
      %v2544 = vadd.f32 %v2450, %v2525
      %v2545 = vadd.f32 %v2451, %v2528
      %v2546 = vadd.f32 %v2452, %v2531
      %v2547 = vadd.f32 %v2453, %v2534
      %v2548 = vld [vmem:[#allocation2 + $0x11] sm:$0xff]
      %v2549 = vld [vmem:[#allocation2 + $0x19] sm:$0xff]
      %v2550 = vld [vmem:[#allocation2 + $0x21] sm:$0xff]
      %v2551 = vld [vmem:[#allocation2 + $0x29] sm:$0xff]
      %v2552 = vld [vmem:[#allocation2 + $0x31] sm:$0xff]
      %v2553 = vld [vmem:[#allocation2 + $0x39] sm:$0xff]
      %v2554 = vld [vmem:[#allocation2 + $0x41] sm:$0xff]
      %v2555 = vld [vmem:[#allocation2 + $0x49] sm:$0xff]
      %v2556 = vld [vmem:[#allocation2 + $0x51] sm:$0xff]
      %v2557 = vld [vmem:[#allocation2 + $0x59] sm:$0xff]
      %v2558 = vld [vmem:[#allocation2 + $0x61] sm:$0xff]
      %v2559 = vld [vmem:[#allocation2 + $0x69] sm:$0xff]
      %s2560 = scalar_lea.vmem %s3, 640
      %v2561 = vld [vmem:[%s2560] sm:$0xff]
      %v2562 = vld [vmem:[%s2560 + $0x8] sm:$0xff]
      %v2563 = vld [vmem:[%s2560 + $0x10] sm:$0xff]
      %v2564 = vld [vmem:[%s2560 + $0x18] sm:$0xff]
      %v2565 = vld [vmem:[%s2560 + $0x20] sm:$0xff]
      %v2566 = vld [vmem:[%s2560 + $0x28] sm:$0xff]
      %v2567 = vld [vmem:[%s2560 + $0x30] sm:$0xff]
      %v2568 = vld [vmem:[%s2560 + $0x38] sm:$0xff]
      %v2569 = vld [vmem:[%s2560 + $0x40] sm:$0xff]
      %v2570 = vld [vmem:[%s2560 + $0x48] sm:$0xff]
      %v2571 = vld [vmem:[%s2560 + $0x50] sm:$0xff]
      %v2572 = vld [vmem:[%s2560 + $0x58] sm:$0xff]
      %v2573 = vld [vmem:[%s2560 + $0x60] sm:$0xff]
      %v2574 = vld [vmem:[%s2560 + $0x68] sm:$0xff]
      %v2575 = vld [vmem:[%s2560 + $0x70] sm:$0xff]
      %v2576 = vld [vmem:[%s2560 + $0x78] sm:$0xff]
      %2577 = vmatpush.msra.mxu0 %v2576
      %2578 = vmatpush.msra.mxu0 %v2575
      %2579 = vmatpush.msra.mxu0 %v2574
      %2580 = vmatpush.msra.mxu0 %v2573
      %2581 = vmatpush.msra.mxu0 %v2572
      %2582 = vmatpush.msra.mxu0 %v2571
      %2583 = vmatpush.msra.mxu0 %v2570
      %2584 = vmatpush.msra.mxu0 %v2569
      %2585 = vmatpush.msra.mxu0 %v2568
      %2586 = vmatpush.msra.mxu0 %v2567
      %2587 = vmatpush.msra.mxu0 %v2566
      %2588 = vmatpush.msra.mxu0 %v2565
      %2589 = vmatpush.msra.mxu0 %v2564
      %2590 = vmatpush.msra.mxu0 %v2563
      %2591 = vmatpush.msra.mxu0 %v2562
      %2592 = vmatpush.msra.mxu0 %v2561
      %2593 = vmatmul.f32.gmra.mxu0 %v2548
      %v2594 = vpop.f32.mrf.mxu0
      %v2595 = vadd.f32 0.0, %v2594
      %2596 = vmatmul.f32.gmra.mxu0 %v2549
      %v2597 = vpop.f32.mrf.mxu0
      %v2598 = vadd.f32 0.0, %v2597
      %2599 = vmatmul.f32.gmra.mxu0 %v2550
      %v2600 = vpop.f32.mrf.mxu0
      %v2601 = vadd.f32 0.0, %v2600
      %2602 = vmatmul.f32.gmra.mxu0 %v2551
      %v2603 = vpop.f32.mrf.mxu0
      %v2604 = vadd.f32 0.0, %v2603
      %2605 = vmatmul.f32.gmra.mxu0 %v2552
      %v2606 = vpop.f32.mrf.mxu0
      %v2607 = vadd.f32 0.0, %v2606
      %2608 = vmatmul.f32.gmra.mxu0 %v2553
      %v2609 = vpop.f32.mrf.mxu0
      %v2610 = vadd.f32 0.0, %v2609
      %2611 = vmatmul.f32.gmra.mxu0 %v2554
      %v2612 = vpop.f32.mrf.mxu0
      %v2613 = vadd.f32 0.0, %v2612
      %2614 = vmatmul.f32.gmra.mxu0 %v2555
      %v2615 = vpop.f32.mrf.mxu0
      %v2616 = vadd.f32 0.0, %v2615
      %2617 = vmatmul.f32.gmra.mxu0 %v2556
      %v2618 = vpop.f32.mrf.mxu0
      %v2619 = vadd.f32 0.0, %v2618
      %2620 = vmatmul.f32.gmra.mxu0 %v2557
      %v2621 = vpop.f32.mrf.mxu0
      %v2622 = vadd.f32 0.0, %v2621
      %2623 = vmatmul.f32.gmra.mxu0 %v2558
      %v2624 = vpop.f32.mrf.mxu0
      %v2625 = vadd.f32 0.0, %v2624
      %2626 = vmatmul.f32.gmra.mxu0 %v2559
      %v2627 = vpop.f32.mrf.mxu0
      %v2628 = vadd.f32 0.0, %v2627
      %2629 = vdwg.mxu0
      %v2630 = vadd.f32 %v2536, %v2595
      %v2631 = vadd.f32 %v2537, %v2598
      %v2632 = vadd.f32 %v2538, %v2601
      %v2633 = vadd.f32 %v2539, %v2604
      %v2634 = vadd.f32 %v2540, %v2607
      %v2635 = vadd.f32 %v2541, %v2610
      %v2636 = vadd.f32 %v2542, %v2613
      %v2637 = vadd.f32 %v2543, %v2616
      %v2638 = vadd.f32 %v2544, %v2619
      %v2639 = vadd.f32 %v2545, %v2622
      %v2640 = vadd.f32 %v2546, %v2625
      %v2641 = vadd.f32 %v2547, %v2628
      %v2642 = vld [vmem:[#allocation2 + $0x1e] sm:$0xff]
      %v2643 = vld [vmem:[#allocation2 + $0x26] sm:$0xff]
      %v2644 = vld [vmem:[#allocation2 + $0x2e] sm:$0xff]
      %v2645 = vld [vmem:[#allocation2 + $0x36] sm:$0xff]
      %v2646 = vld [vmem:[#allocation2 + $0x3e] sm:$0xff]
      %v2647 = vld [vmem:[#allocation2 + $0x46] sm:$0xff]
      %v2648 = vld [vmem:[#allocation2 + $0x4e] sm:$0xff]
      %v2649 = vld [vmem:[#allocation2 + $0x56] sm:$0xff]
      %v2650 = vld [vmem:[#allocation2 + $0x5e] sm:$0xff]
      %v2651 = vld [vmem:[#allocation2 + $0x66] sm:$0xff]
      %v2652 = vld [vmem:[#allocation2 + $0x6e] sm:$0xff]
      %v2653 = vld [vmem:[#allocation2 + $0x76] sm:$0xff]
      %s2654 = scalar_lea.vmem %s3, 768
      %v2655 = vld [vmem:[%s2654] sm:$0xff]
      %v2656 = vld [vmem:[%s2654 + $0x8] sm:$0xff]
      %v2657 = vld [vmem:[%s2654 + $0x10] sm:$0xff]
      %v2658 = vld [vmem:[%s2654 + $0x18] sm:$0xff]
      %v2659 = vld [vmem:[%s2654 + $0x20] sm:$0xff]
      %v2660 = vld [vmem:[%s2654 + $0x28] sm:$0xff]
      %v2661 = vld [vmem:[%s2654 + $0x30] sm:$0xff]
      %v2662 = vld [vmem:[%s2654 + $0x38] sm:$0xff]
      %v2663 = vld [vmem:[%s2654 + $0x40] sm:$0xff]
      %v2664 = vld [vmem:[%s2654 + $0x48] sm:$0xff]
      %v2665 = vld [vmem:[%s2654 + $0x50] sm:$0xff]
      %v2666 = vld [vmem:[%s2654 + $0x58] sm:$0xff]
      %v2667 = vld [vmem:[%s2654 + $0x60] sm:$0xff]
      %v2668 = vld [vmem:[%s2654 + $0x68] sm:$0xff]
      %v2669 = vld [vmem:[%s2654 + $0x70] sm:$0xff]
      %v2670 = vld [vmem:[%s2654 + $0x78] sm:$0xff]
      %2671 = vmatpush.msra.mxu0 %v2670
      %2672 = vmatpush.msra.mxu0 %v2669
      %2673 = vmatpush.msra.mxu0 %v2668
      %2674 = vmatpush.msra.mxu0 %v2667
      %2675 = vmatpush.msra.mxu0 %v2666
      %2676 = vmatpush.msra.mxu0 %v2665
      %2677 = vmatpush.msra.mxu0 %v2664
      %2678 = vmatpush.msra.mxu0 %v2663
      %2679 = vmatpush.msra.mxu0 %v2662
      %2680 = vmatpush.msra.mxu0 %v2661
      %2681 = vmatpush.msra.mxu0 %v2660
      %2682 = vmatpush.msra.mxu0 %v2659
      %2683 = vmatpush.msra.mxu0 %v2658
      %2684 = vmatpush.msra.mxu0 %v2657
      %2685 = vmatpush.msra.mxu0 %v2656
      %2686 = vmatpush.msra.mxu0 %v2655
      %2687 = vmatmul.f32.gmra.mxu0 %v2642
      %v2688 = vpop.f32.mrf.mxu0
      %v2689 = vadd.f32 0.0, %v2688
      %2690 = vmatmul.f32.gmra.mxu0 %v2643
      %v2691 = vpop.f32.mrf.mxu0
      %v2692 = vadd.f32 0.0, %v2691
      %2693 = vmatmul.f32.gmra.mxu0 %v2644
      %v2694 = vpop.f32.mrf.mxu0
      %v2695 = vadd.f32 0.0, %v2694
      %2696 = vmatmul.f32.gmra.mxu0 %v2645
      %v2697 = vpop.f32.mrf.mxu0
      %v2698 = vadd.f32 0.0, %v2697
      %2699 = vmatmul.f32.gmra.mxu0 %v2646
      %v2700 = vpop.f32.mrf.mxu0
      %v2701 = vadd.f32 0.0, %v2700
      %2702 = vmatmul.f32.gmra.mxu0 %v2647
      %v2703 = vpop.f32.mrf.mxu0
      %v2704 = vadd.f32 0.0, %v2703
      %2705 = vmatmul.f32.gmra.mxu0 %v2648
      %v2706 = vpop.f32.mrf.mxu0
      %v2707 = vadd.f32 0.0, %v2706
      %2708 = vmatmul.f32.gmra.mxu0 %v2649
      %v2709 = vpop.f32.mrf.mxu0
      %v2710 = vadd.f32 0.0, %v2709
      %2711 = vmatmul.f32.gmra.mxu0 %v2650
      %v2712 = vpop.f32.mrf.mxu0
      %v2713 = vadd.f32 0.0, %v2712
      %2714 = vmatmul.f32.gmra.mxu0 %v2651
      %v2715 = vpop.f32.mrf.mxu0
      %v2716 = vadd.f32 0.0, %v2715
      %2717 = vmatmul.f32.gmra.mxu0 %v2652
      %v2718 = vpop.f32.mrf.mxu0
      %v2719 = vadd.f32 0.0, %v2718
      %2720 = vmatmul.f32.gmra.mxu0 %v2653
      %v2721 = vpop.f32.mrf.mxu0
      %v2722 = vadd.f32 0.0, %v2721
      %2723 = vdwg.mxu0
      %v2724 = vadd.f32 %v2630, %v2689
      %v2725 = vadd.f32 %v2631, %v2692
      %v2726 = vadd.f32 %v2632, %v2695
      %v2727 = vadd.f32 %v2633, %v2698
      %v2728 = vadd.f32 %v2634, %v2701
      %v2729 = vadd.f32 %v2635, %v2704
      %v2730 = vadd.f32 %v2636, %v2707
      %v2731 = vadd.f32 %v2637, %v2710
      %v2732 = vadd.f32 %v2638, %v2713
      %v2733 = vadd.f32 %v2639, %v2716
      %v2734 = vadd.f32 %v2640, %v2719
      %v2735 = vadd.f32 %v2641, %v2722
      %v2736 = vld [vmem:[#allocation2 + $0x1f] sm:$0xff]
      %v2737 = vld [vmem:[#allocation2 + $0x27] sm:$0xff]
      %v2738 = vld [vmem:[#allocation2 + $0x2f] sm:$0xff]
      %v2739 = vld [vmem:[#allocation2 + $0x37] sm:$0xff]
      %v2740 = vld [vmem:[#allocation2 + $0x3f] sm:$0xff]
      %v2741 = vld [vmem:[#allocation2 + $0x47] sm:$0xff]
      %v2742 = vld [vmem:[#allocation2 + $0x4f] sm:$0xff]
      %v2743 = vld [vmem:[#allocation2 + $0x57] sm:$0xff]
      %v2744 = vld [vmem:[#allocation2 + $0x5f] sm:$0xff]
      %v2745 = vld [vmem:[#allocation2 + $0x67] sm:$0xff]
      %v2746 = vld [vmem:[#allocation2 + $0x6f] sm:$0xff]
      %v2747 = vld [vmem:[#allocation2 + $0x77] sm:$0xff]
      %s2748 = scalar_lea.vmem %s3, 896
      %v2749 = vld [vmem:[%s2748] sm:$0xff]
      %v2750 = vld [vmem:[%s2748 + $0x8] sm:$0xff]
      %v2751 = vld [vmem:[%s2748 + $0x10] sm:$0xff]
      %v2752 = vld [vmem:[%s2748 + $0x18] sm:$0xff]
      %v2753 = vld [vmem:[%s2748 + $0x20] sm:$0xff]
      %v2754 = vld [vmem:[%s2748 + $0x28] sm:$0xff]
      %v2755 = vld [vmem:[%s2748 + $0x30] sm:$0xff]
      %v2756 = vld [vmem:[%s2748 + $0x38] sm:$0xff]
      %v2757 = vld [vmem:[%s2748 + $0x40] sm:$0xff]
      %v2758 = vld [vmem:[%s2748 + $0x48] sm:$0xff]
      %v2759 = vld [vmem:[%s2748 + $0x50] sm:$0xff]
      %v2760 = vld [vmem:[%s2748 + $0x58] sm:$0xff]
      %v2761 = vld [vmem:[%s2748 + $0x60] sm:$0xff]
      %v2762 = vld [vmem:[%s2748 + $0x68] sm:$0xff]
      %v2763 = vld [vmem:[%s2748 + $0x70] sm:$0xff]
      %v2764 = vld [vmem:[%s2748 + $0x78] sm:$0xff]
      %2765 = vmatpush.msra.mxu0 %v2764
      %2766 = vmatpush.msra.mxu0 %v2763
      %2767 = vmatpush.msra.mxu0 %v2762
      %2768 = vmatpush.msra.mxu0 %v2761
      %2769 = vmatpush.msra.mxu0 %v2760
      %2770 = vmatpush.msra.mxu0 %v2759
      %2771 = vmatpush.msra.mxu0 %v2758
      %2772 = vmatpush.msra.mxu0 %v2757
      %2773 = vmatpush.msra.mxu0 %v2756
      %2774 = vmatpush.msra.mxu0 %v2755
      %2775 = vmatpush.msra.mxu0 %v2754
      %2776 = vmatpush.msra.mxu0 %v2753
      %2777 = vmatpush.msra.mxu0 %v2752
      %2778 = vmatpush.msra.mxu0 %v2751
      %2779 = vmatpush.msra.mxu0 %v2750
      %2780 = vmatpush.msra.mxu0 %v2749
      %2781 = vmatmul.f32.gmra.mxu0 %v2736
      %v2782 = vpop.f32.mrf.mxu0
      %v2783 = vadd.f32 0.0, %v2782
      %2784 = vmatmul.f32.gmra.mxu0 %v2737
      %v2785 = vpop.f32.mrf.mxu0
      %v2786 = vadd.f32 0.0, %v2785
      %2787 = vmatmul.f32.gmra.mxu0 %v2738
      %v2788 = vpop.f32.mrf.mxu0
      %v2789 = vadd.f32 0.0, %v2788
      %2790 = vmatmul.f32.gmra.mxu0 %v2739
      %v2791 = vpop.f32.mrf.mxu0
      %v2792 = vadd.f32 0.0, %v2791
      %2793 = vmatmul.f32.gmra.mxu0 %v2740
      %v2794 = vpop.f32.mrf.mxu0
      %v2795 = vadd.f32 0.0, %v2794
      %2796 = vmatmul.f32.gmra.mxu0 %v2741
      %v2797 = vpop.f32.mrf.mxu0
      %v2798 = vadd.f32 0.0, %v2797
      %2799 = vmatmul.f32.gmra.mxu0 %v2742
      %v2800 = vpop.f32.mrf.mxu0
      %v2801 = vadd.f32 0.0, %v2800
      %2802 = vmatmul.f32.gmra.mxu0 %v2743
      %v2803 = vpop.f32.mrf.mxu0
      %v2804 = vadd.f32 0.0, %v2803
      %2805 = vmatmul.f32.gmra.mxu0 %v2744
      %v2806 = vpop.f32.mrf.mxu0
      %v2807 = vadd.f32 0.0, %v2806
      %2808 = vmatmul.f32.gmra.mxu0 %v2745
      %v2809 = vpop.f32.mrf.mxu0
      %v2810 = vadd.f32 0.0, %v2809
      %2811 = vmatmul.f32.gmra.mxu0 %v2746
      %v2812 = vpop.f32.mrf.mxu0
      %v2813 = vadd.f32 0.0, %v2812
      %2814 = vmatmul.f32.gmra.mxu0 %v2747
      %v2815 = vpop.f32.mrf.mxu0
      %v2816 = vadd.f32 0.0, %v2815
      %2817 = vdwg.mxu0
      %v2818 = vadd.f32 %v2724, %v2783
      %v2819 = vadd.f32 %v2725, %v2786
      %v2820 = vadd.f32 %v2726, %v2789
      %v2821 = vadd.f32 %v2727, %v2792
      %v2822 = vadd.f32 %v2728, %v2795
      %v2823 = vadd.f32 %v2729, %v2798
      %v2824 = vadd.f32 %v2730, %v2801
      %v2825 = vadd.f32 %v2731, %v2804
      %v2826 = vadd.f32 %v2732, %v2807
      %v2827 = vadd.f32 %v2733, %v2810
      %v2828 = vadd.f32 %v2734, %v2813
      %v2829 = vadd.f32 %v2735, %v2816
      %v2830 = vld [vmem:[#allocation2 + $0x20] sm:$0xff]
      %v2831 = vld [vmem:[#allocation2 + $0x28] sm:$0xff]
      %v2832 = vld [vmem:[#allocation2 + $0x30] sm:$0xff]
      %v2833 = vld [vmem:[#allocation2 + $0x38] sm:$0xff]
      %v2834 = vld [vmem:[#allocation2 + $0x40] sm:$0xff]
      %v2835 = vld [vmem:[#allocation2 + $0x48] sm:$0xff]
      %v2836 = vld [vmem:[#allocation2 + $0x50] sm:$0xff]
      %v2837 = vld [vmem:[#allocation2 + $0x58] sm:$0xff]
      %v2838 = vld [vmem:[#allocation2 + $0x60] sm:$0xff]
      %v2839 = vld [vmem:[#allocation2 + $0x68] sm:$0xff]
      %v2840 = vld [vmem:[#allocation2 + $0x70] sm:$0xff]
      %v2841 = vld [vmem:[#allocation2 + $0x78] sm:$0xff]
      %s2842 = scalar_lea.vmem %s3, 1024
      %v2843 = vld [vmem:[%s2842] sm:$0xff]
      %v2844 = vld [vmem:[%s2842 + $0x8] sm:$0xff]
      %v2845 = vld [vmem:[%s2842 + $0x10] sm:$0xff]
      %v2846 = vld [vmem:[%s2842 + $0x18] sm:$0xff]
      %v2847 = vld [vmem:[%s2842 + $0x20] sm:$0xff]
      %v2848 = vld [vmem:[%s2842 + $0x28] sm:$0xff]
      %v2849 = vld [vmem:[%s2842 + $0x30] sm:$0xff]
      %v2850 = vld [vmem:[%s2842 + $0x38] sm:$0xff]
      %v2851 = vld [vmem:[%s2842 + $0x40] sm:$0xff]
      %v2852 = vld [vmem:[%s2842 + $0x48] sm:$0xff]
      %v2853 = vld [vmem:[%s2842 + $0x50] sm:$0xff]
      %v2854 = vld [vmem:[%s2842 + $0x58] sm:$0xff]
      %v2855 = vld [vmem:[%s2842 + $0x60] sm:$0xff]
      %v2856 = vld [vmem:[%s2842 + $0x68] sm:$0xff]
      %v2857 = vld [vmem:[%s2842 + $0x70] sm:$0xff]
      %v2858 = vld [vmem:[%s2842 + $0x78] sm:$0xff]
      %2859 = vmatpush.msra.mxu0 %v2858
      %2860 = vmatpush.msra.mxu0 %v2857
      %2861 = vmatpush.msra.mxu0 %v2856
      %2862 = vmatpush.msra.mxu0 %v2855
      %2863 = vmatpush.msra.mxu0 %v2854
      %2864 = vmatpush.msra.mxu0 %v2853
      %2865 = vmatpush.msra.mxu0 %v2852
      %2866 = vmatpush.msra.mxu0 %v2851
      %2867 = vmatpush.msra.mxu0 %v2850
      %2868 = vmatpush.msra.mxu0 %v2849
      %2869 = vmatpush.msra.mxu0 %v2848
      %2870 = vmatpush.msra.mxu0 %v2847
      %2871 = vmatpush.msra.mxu0 %v2846
      %2872 = vmatpush.msra.mxu0 %v2845
      %2873 = vmatpush.msra.mxu0 %v2844
      %2874 = vmatpush.msra.mxu0 %v2843
      %2875 = vmatmul.f32.gmra.mxu0 %v2830
      %v2876 = vpop.f32.mrf.mxu0
      %v2877 = vadd.f32 0.0, %v2876
      %2878 = vmatmul.f32.gmra.mxu0 %v2831
      %v2879 = vpop.f32.mrf.mxu0
      %v2880 = vadd.f32 0.0, %v2879
      %2881 = vmatmul.f32.gmra.mxu0 %v2832
      %v2882 = vpop.f32.mrf.mxu0
      %v2883 = vadd.f32 0.0, %v2882
      %2884 = vmatmul.f32.gmra.mxu0 %v2833
      %v2885 = vpop.f32.mrf.mxu0
      %v2886 = vadd.f32 0.0, %v2885
      %2887 = vmatmul.f32.gmra.mxu0 %v2834
      %v2888 = vpop.f32.mrf.mxu0
      %v2889 = vadd.f32 0.0, %v2888
      %2890 = vmatmul.f32.gmra.mxu0 %v2835
      %v2891 = vpop.f32.mrf.mxu0
      %v2892 = vadd.f32 0.0, %v2891
      %2893 = vmatmul.f32.gmra.mxu0 %v2836
      %v2894 = vpop.f32.mrf.mxu0
      %v2895 = vadd.f32 0.0, %v2894
      %2896 = vmatmul.f32.gmra.mxu0 %v2837
      %v2897 = vpop.f32.mrf.mxu0
      %v2898 = vadd.f32 0.0, %v2897
      %2899 = vmatmul.f32.gmra.mxu0 %v2838
      %v2900 = vpop.f32.mrf.mxu0
      %v2901 = vadd.f32 0.0, %v2900
      %2902 = vmatmul.f32.gmra.mxu0 %v2839
      %v2903 = vpop.f32.mrf.mxu0
      %v2904 = vadd.f32 0.0, %v2903
      %2905 = vmatmul.f32.gmra.mxu0 %v2840
      %v2906 = vpop.f32.mrf.mxu0
      %v2907 = vadd.f32 0.0, %v2906
      %2908 = vmatmul.f32.gmra.mxu0 %v2841
      %v2909 = vpop.f32.mrf.mxu0
      %v2910 = vadd.f32 0.0, %v2909
      %2911 = vdwg.mxu0
      %v2912 = vadd.f32 %v2818, %v2877
      %v2913 = vadd.f32 %v2819, %v2880
      %v2914 = vadd.f32 %v2820, %v2883
      %v2915 = vadd.f32 %v2821, %v2886
      %v2916 = vadd.f32 %v2822, %v2889
      %v2917 = vadd.f32 %v2823, %v2892
      %v2918 = vadd.f32 %v2824, %v2895
      %v2919 = vadd.f32 %v2825, %v2898
      %v2920 = vadd.f32 %v2826, %v2901
      %v2921 = vadd.f32 %v2827, %v2904
      %v2922 = vadd.f32 %v2828, %v2907
      %v2923 = vadd.f32 %v2829, %v2910
      %2924 = vst [vmem:[#allocation4] sm:$0xff] %v2912
      %2925 = vst [vmem:[#allocation4 + $0x8] sm:$0xff] %v2913
      %2926 = vst [vmem:[#allocation4 + $0x10] sm:$0xff] %v2914
      %2927 = vst [vmem:[#allocation4 + $0x18] sm:$0xff] %v2915
      %2928 = vst [vmem:[#allocation4 + $0x20] sm:$0xff] %v2916
      %2929 = vst [vmem:[#allocation4 + $0x28] sm:$0xff] %v2917
      %2930 = vst [vmem:[#allocation4 + $0x30] sm:$0xff] %v2918
      %2931 = vst [vmem:[#allocation4 + $0x38] sm:$0xff] %v2919
      %2932 = vst [vmem:[#allocation4 + $0x40] sm:$0xff] %v2920
      %2933 = vst [vmem:[#allocation4 + $0x48] sm:$0xff] %v2921
      %2934 = vst [vmem:[#allocation4 + $0x50] sm:$0xff] %v2922
      %2935 = vst [vmem:[#allocation4 + $0x58] sm:$0xff] %v2923
      %v2936 = vld [vmem:[#allocation2 + $0x60] sm:$0xff]
      %v2937 = vld [vmem:[#allocation2 + $0x68] sm:$0xff]
      %v2938 = vld [vmem:[#allocation2 + $0x70] sm:$0xff]
      %v2939 = vld [vmem:[#allocation2 + $0x78] sm:$0xff]
      %v2940 = vld [vmem:[#allocation2 + $0x80] sm:$0xff]
      %v2941 = vld [vmem:[#allocation2 + $0x88] sm:$0xff]
      %v2942 = vld [vmem:[#allocation2 + $0x90] sm:$0xff]
      %v2943 = vld [vmem:[#allocation2 + $0x98] sm:$0xff]
      %v2944 = vld [vmem:[#allocation2 + $0xa0] sm:$0xff]
      %v2945 = vld [vmem:[#allocation2 + $0xa8] sm:$0xff]
      %v2946 = vld [vmem:[#allocation2 + $0xb0] sm:$0xff]
      %v2947 = vld [vmem:[%s3] sm:$0xff]
      %v2948 = vld [vmem:[%s3 + $0x8] sm:$0xff]
      %v2949 = vld [vmem:[%s3 + $0x10] sm:$0xff]
      %v2950 = vld [vmem:[%s3 + $0x18] sm:$0xff]
      %v2951 = vld [vmem:[%s3 + $0x20] sm:$0xff]
      %v2952 = vld [vmem:[%s3 + $0x28] sm:$0xff]
      %v2953 = vld [vmem:[%s3 + $0x30] sm:$0xff]
      %v2954 = vld [vmem:[%s3 + $0x38] sm:$0xff]
      %v2955 = vld [vmem:[%s3 + $0x40] sm:$0xff]
      %v2956 = vld [vmem:[%s3 + $0x48] sm:$0xff]
      %v2957 = vld [vmem:[%s3 + $0x50] sm:$0xff]
      %v2958 = vld [vmem:[%s3 + $0x58] sm:$0xff]
      %v2959 = vld [vmem:[%s3 + $0x60] sm:$0xff]
      %v2960 = vld [vmem:[%s3 + $0x68] sm:$0xff]
      %v2961 = vld [vmem:[%s3 + $0x70] sm:$0xff]
      %v2962 = vld [vmem:[%s3 + $0x78] sm:$0xff]
      %v2963 = vld [vmem:[#allocation2 + $0x61] sm:$0xff]
      %v2964 = vld [vmem:[#allocation2 + $0x69] sm:$0xff]
      %v2965 = vld [vmem:[#allocation2 + $0x71] sm:$0xff]
      %v2966 = vld [vmem:[#allocation2 + $0x79] sm:$0xff]
      %v2967 = vld [vmem:[#allocation2 + $0x81] sm:$0xff]
      %v2968 = vld [vmem:[#allocation2 + $0x89] sm:$0xff]
      %v2969 = vld [vmem:[#allocation2 + $0x91] sm:$0xff]
      %v2970 = vld [vmem:[#allocation2 + $0x99] sm:$0xff]
      %v2971 = vld [vmem:[#allocation2 + $0xa1] sm:$0xff]
      %v2972 = vld [vmem:[#allocation2 + $0xa9] sm:$0xff]
      %v2973 = vld [vmem:[#allocation2 + $0xb1] sm:$0xff]
      %v2974 = vld [vmem:[%s2143] sm:$0xff]
      %v2975 = vld [vmem:[%s2143 + $0x8] sm:$0xff]
      %v2976 = vld [vmem:[%s2143 + $0x10] sm:$0xff]
      %v2977 = vld [vmem:[%s2143 + $0x18] sm:$0xff]
      %v2978 = vld [vmem:[%s2143 + $0x20] sm:$0xff]
      %v2979 = vld [vmem:[%s2143 + $0x28] sm:$0xff]
      %v2980 = vld [vmem:[%s2143 + $0x30] sm:$0xff]
      %v2981 = vld [vmem:[%s2143 + $0x38] sm:$0xff]
      %v2982 = vld [vmem:[%s2143 + $0x40] sm:$0xff]
      %v2983 = vld [vmem:[%s2143 + $0x48] sm:$0xff]
      %v2984 = vld [vmem:[%s2143 + $0x50] sm:$0xff]
      %v2985 = vld [vmem:[%s2143 + $0x58] sm:$0xff]
      %v2986 = vld [vmem:[%s2143 + $0x60] sm:$0xff]
      %v2987 = vld [vmem:[%s2143 + $0x68] sm:$0xff]
      %v2988 = vld [vmem:[%s2143 + $0x70] sm:$0xff]
      %v2989 = vld [vmem:[%s2143 + $0x78] sm:$0xff]
      %2990 = vmatpush.msra.mxu0 %v2989
      %2991 = vmatpush.msra.mxu0 %v2988
      %2992 = vmatpush.msra.mxu0 %v2987
      %2993 = vmatpush.msra.mxu0 %v2986
      %2994 = vmatpush.msra.mxu0 %v2985
      %2995 = vmatpush.msra.mxu0 %v2984
      %2996 = vmatpush.msra.mxu0 %v2983
      %2997 = vmatpush.msra.mxu0 %v2982
      %2998 = vmatpush.msra.mxu0 %v2981
      %2999 = vmatpush.msra.mxu0 %v2980
      %3000 = vmatpush.msra.mxu0 %v2979
      %3001 = vmatpush.msra.mxu0 %v2978
      %3002 = vmatpush.msra.mxu0 %v2977
      %3003 = vmatpush.msra.mxu0 %v2976
      %3004 = vmatpush.msra.mxu0 %v2975
      %3005 = vmatpush.msra.mxu0 %v2974
      %3006 = vmatmul.f32.gmra.mxu0 %v2963
      %v3007 = vpop.f32.mrf.mxu0
      %v3008 = vadd.f32 0.0, %v3007
      %3009 = vmatmul.f32.gmra.mxu0 %v2964
      %v3010 = vpop.f32.mrf.mxu0
      %v3011 = vadd.f32 0.0, %v3010
      %3012 = vmatmul.f32.gmra.mxu0 %v2965
      %v3013 = vpop.f32.mrf.mxu0
      %v3014 = vadd.f32 0.0, %v3013
      %3015 = vmatmul.f32.gmra.mxu0 %v2966
      %v3016 = vpop.f32.mrf.mxu0
      %v3017 = vadd.f32 0.0, %v3016
      %3018 = vmatmul.f32.gmra.mxu0 %v2967
      %v3019 = vpop.f32.mrf.mxu0
      %v3020 = vadd.f32 0.0, %v3019
      %3021 = vmatmul.f32.gmra.mxu0 %v2968
      %v3022 = vpop.f32.mrf.mxu0
      %v3023 = vadd.f32 0.0, %v3022
      %3024 = vmatmul.f32.gmra.mxu0 %v2969
      %v3025 = vpop.f32.mrf.mxu0
      %v3026 = vadd.f32 0.0, %v3025
      %3027 = vmatmul.f32.gmra.mxu0 %v2970
      %v3028 = vpop.f32.mrf.mxu0
      %v3029 = vadd.f32 0.0, %v3028
      %3030 = vmatmul.f32.gmra.mxu0 %v2971
      %v3031 = vpop.f32.mrf.mxu0
      %v3032 = vadd.f32 0.0, %v3031
      %3033 = vmatmul.f32.gmra.mxu0 %v2972
      %v3034 = vpop.f32.mrf.mxu0
      %v3035 = vadd.f32 0.0, %v3034
      %3036 = vmatmul.f32.gmra.mxu0 %v2973
      %v3037 = vpop.f32.mrf.mxu0
      %v3038 = vadd.f32 0.0, %v3037
      %3039 = vdwg.mxu0
      %3040 = vmatpush.msra.mxu0 %v2962
      %3041 = vmatpush.msra.mxu0 %v2961
      %3042 = vmatpush.msra.mxu0 %v2960
      %3043 = vmatpush.msra.mxu0 %v2959
      %3044 = vmatpush.msra.mxu0 %v2958
      %3045 = vmatpush.msra.mxu0 %v2957
      %3046 = vmatpush.msra.mxu0 %v2956
      %3047 = vmatpush.msra.mxu0 %v2955
      %3048 = vmatpush.msra.mxu0 %v2954
      %3049 = vmatpush.msra.mxu0 %v2953
      %3050 = vmatpush.msra.mxu0 %v2952
      %3051 = vmatpush.msra.mxu0 %v2951
      %3052 = vmatpush.msra.mxu0 %v2950
      %3053 = vmatpush.msra.mxu0 %v2949
      %3054 = vmatpush.msra.mxu0 %v2948
      %3055 = vmatpush.msra.mxu0 %v2947
      %3056 = vmatmul.f32.gmra.mxu0 %v2936
      %v3057 = vpop.f32.mrf.mxu0
      %v3058 = vadd.f32 %v3008, %v3057
      %3059 = vmatmul.f32.gmra.mxu0 %v2937
      %v3060 = vpop.f32.mrf.mxu0
      %v3061 = vadd.f32 %v3011, %v3060
      %3062 = vmatmul.f32.gmra.mxu0 %v2938
      %v3063 = vpop.f32.mrf.mxu0
      %v3064 = vadd.f32 %v3014, %v3063
      %3065 = vmatmul.f32.gmra.mxu0 %v2939
      %v3066 = vpop.f32.mrf.mxu0
      %v3067 = vadd.f32 %v3017, %v3066
      %3068 = vmatmul.f32.gmra.mxu0 %v2940
      %v3069 = vpop.f32.mrf.mxu0
      %v3070 = vadd.f32 %v3020, %v3069
      %3071 = vmatmul.f32.gmra.mxu0 %v2941
      %v3072 = vpop.f32.mrf.mxu0
      %v3073 = vadd.f32 %v3023, %v3072
      %3074 = vmatmul.f32.gmra.mxu0 %v2942
      %v3075 = vpop.f32.mrf.mxu0
      %v3076 = vadd.f32 %v3026, %v3075
      %3077 = vmatmul.f32.gmra.mxu0 %v2943
      %v3078 = vpop.f32.mrf.mxu0
      %v3079 = vadd.f32 %v3029, %v3078
      %3080 = vmatmul.f32.gmra.mxu0 %v2944
      %v3081 = vpop.f32.mrf.mxu0
      %v3082 = vadd.f32 %v3032, %v3081
      %3083 = vmatmul.f32.gmra.mxu0 %v2945
      %v3084 = vpop.f32.mrf.mxu0
      %v3085 = vadd.f32 %v3035, %v3084
      %3086 = vmatmul.f32.gmra.mxu0 %v2946
      %v3087 = vpop.f32.mrf.mxu0
      %v3088 = vadd.f32 %v3038, %v3087
      %3089 = vdwg.mxu0
      %v3090 = vld [vmem:[#allocation2 + $0x62] sm:$0xff]
      %v3091 = vld [vmem:[#allocation2 + $0x6a] sm:$0xff]
      %v3092 = vld [vmem:[#allocation2 + $0x72] sm:$0xff]
      %v3093 = vld [vmem:[#allocation2 + $0x7a] sm:$0xff]
      %v3094 = vld [vmem:[#allocation2 + $0x82] sm:$0xff]
      %v3095 = vld [vmem:[#allocation2 + $0x8a] sm:$0xff]
      %v3096 = vld [vmem:[#allocation2 + $0x92] sm:$0xff]
      %v3097 = vld [vmem:[#allocation2 + $0x9a] sm:$0xff]
      %v3098 = vld [vmem:[#allocation2 + $0xa2] sm:$0xff]
      %v3099 = vld [vmem:[#allocation2 + $0xaa] sm:$0xff]
      %v3100 = vld [vmem:[#allocation2 + $0xb2] sm:$0xff]
      %v3101 = vld [vmem:[%s2278] sm:$0xff]
      %v3102 = vld [vmem:[%s2278 + $0x8] sm:$0xff]
      %v3103 = vld [vmem:[%s2278 + $0x10] sm:$0xff]
      %v3104 = vld [vmem:[%s2278 + $0x18] sm:$0xff]
      %v3105 = vld [vmem:[%s2278 + $0x20] sm:$0xff]
      %v3106 = vld [vmem:[%s2278 + $0x28] sm:$0xff]
      %v3107 = vld [vmem:[%s2278 + $0x30] sm:$0xff]
      %v3108 = vld [vmem:[%s2278 + $0x38] sm:$0xff]
      %v3109 = vld [vmem:[%s2278 + $0x40] sm:$0xff]
      %v3110 = vld [vmem:[%s2278 + $0x48] sm:$0xff]
      %v3111 = vld [vmem:[%s2278 + $0x50] sm:$0xff]
      %v3112 = vld [vmem:[%s2278 + $0x58] sm:$0xff]
      %v3113 = vld [vmem:[%s2278 + $0x60] sm:$0xff]
      %v3114 = vld [vmem:[%s2278 + $0x68] sm:$0xff]
      %v3115 = vld [vmem:[%s2278 + $0x70] sm:$0xff]
      %v3116 = vld [vmem:[%s2278 + $0x78] sm:$0xff]
      %3117 = vmatpush.msra.mxu0 %v3116
      %3118 = vmatpush.msra.mxu0 %v3115
      %3119 = vmatpush.msra.mxu0 %v3114
      %3120 = vmatpush.msra.mxu0 %v3113
      %3121 = vmatpush.msra.mxu0 %v3112
      %3122 = vmatpush.msra.mxu0 %v3111
      %3123 = vmatpush.msra.mxu0 %v3110
      %3124 = vmatpush.msra.mxu0 %v3109
      %3125 = vmatpush.msra.mxu0 %v3108
      %3126 = vmatpush.msra.mxu0 %v3107
      %3127 = vmatpush.msra.mxu0 %v3106
      %3128 = vmatpush.msra.mxu0 %v3105
      %3129 = vmatpush.msra.mxu0 %v3104
      %3130 = vmatpush.msra.mxu0 %v3103
      %3131 = vmatpush.msra.mxu0 %v3102
      %3132 = vmatpush.msra.mxu0 %v3101
      %3133 = vmatmul.f32.gmra.mxu0 %v3090
      %v3134 = vpop.f32.mrf.mxu0
      %v3135 = vadd.f32 0.0, %v3134
      %3136 = vmatmul.f32.gmra.mxu0 %v3091
      %v3137 = vpop.f32.mrf.mxu0
      %v3138 = vadd.f32 0.0, %v3137
      %3139 = vmatmul.f32.gmra.mxu0 %v3092
      %v3140 = vpop.f32.mrf.mxu0
      %v3141 = vadd.f32 0.0, %v3140
      %3142 = vmatmul.f32.gmra.mxu0 %v3093
      %v3143 = vpop.f32.mrf.mxu0
      %v3144 = vadd.f32 0.0, %v3143
      %3145 = vmatmul.f32.gmra.mxu0 %v3094
      %v3146 = vpop.f32.mrf.mxu0
      %v3147 = vadd.f32 0.0, %v3146
      %3148 = vmatmul.f32.gmra.mxu0 %v3095
      %v3149 = vpop.f32.mrf.mxu0
      %v3150 = vadd.f32 0.0, %v3149
      %3151 = vmatmul.f32.gmra.mxu0 %v3096
      %v3152 = vpop.f32.mrf.mxu0
      %v3153 = vadd.f32 0.0, %v3152
      %3154 = vmatmul.f32.gmra.mxu0 %v3097
      %v3155 = vpop.f32.mrf.mxu0
      %v3156 = vadd.f32 0.0, %v3155
      %3157 = vmatmul.f32.gmra.mxu0 %v3098
      %v3158 = vpop.f32.mrf.mxu0
      %v3159 = vadd.f32 0.0, %v3158
      %3160 = vmatmul.f32.gmra.mxu0 %v3099
      %v3161 = vpop.f32.mrf.mxu0
      %v3162 = vadd.f32 0.0, %v3161
      %3163 = vmatmul.f32.gmra.mxu0 %v3100
      %v3164 = vpop.f32.mrf.mxu0
      %v3165 = vadd.f32 0.0, %v3164
      %3166 = vdwg.mxu0
      %v3167 = vadd.f32 %v3058, %v3135
      %v3168 = vadd.f32 %v3061, %v3138
      %v3169 = vadd.f32 %v3064, %v3141
      %v3170 = vadd.f32 %v3067, %v3144
      %v3171 = vadd.f32 %v3070, %v3147
      %v3172 = vadd.f32 %v3073, %v3150
      %v3173 = vadd.f32 %v3076, %v3153
      %v3174 = vadd.f32 %v3079, %v3156
      %v3175 = vadd.f32 %v3082, %v3159
      %v3176 = vadd.f32 %v3085, %v3162
      %v3177 = vadd.f32 %v3088, %v3165
      %v3178 = vld [vmem:[#allocation2 + $0x6f] sm:$0xff]
      %v3179 = vld [vmem:[#allocation2 + $0x77] sm:$0xff]
      %v3180 = vld [vmem:[#allocation2 + $0x7f] sm:$0xff]
      %v3181 = vld [vmem:[#allocation2 + $0x87] sm:$0xff]
      %v3182 = vld [vmem:[#allocation2 + $0x8f] sm:$0xff]
      %v3183 = vld [vmem:[#allocation2 + $0x97] sm:$0xff]
      %v3184 = vld [vmem:[#allocation2 + $0x9f] sm:$0xff]
      %v3185 = vld [vmem:[#allocation2 + $0xa7] sm:$0xff]
      %v3186 = vld [vmem:[#allocation2 + $0xaf] sm:$0xff]
      %v3187 = vld [vmem:[#allocation2 + $0xb7] sm:$0xff]
      %v3188 = vld [vmem:[#allocation2 + $0xbf] sm:$0xff]
      %v3189 = vld [vmem:[%s2372] sm:$0xff]
      %v3190 = vld [vmem:[%s2372 + $0x8] sm:$0xff]
      %v3191 = vld [vmem:[%s2372 + $0x10] sm:$0xff]
      %v3192 = vld [vmem:[%s2372 + $0x18] sm:$0xff]
      %v3193 = vld [vmem:[%s2372 + $0x20] sm:$0xff]
      %v3194 = vld [vmem:[%s2372 + $0x28] sm:$0xff]
      %v3195 = vld [vmem:[%s2372 + $0x30] sm:$0xff]
      %v3196 = vld [vmem:[%s2372 + $0x38] sm:$0xff]
      %v3197 = vld [vmem:[%s2372 + $0x40] sm:$0xff]
      %v3198 = vld [vmem:[%s2372 + $0x48] sm:$0xff]
      %v3199 = vld [vmem:[%s2372 + $0x50] sm:$0xff]
      %v3200 = vld [vmem:[%s2372 + $0x58] sm:$0xff]
      %v3201 = vld [vmem:[%s2372 + $0x60] sm:$0xff]
      %v3202 = vld [vmem:[%s2372 + $0x68] sm:$0xff]
      %v3203 = vld [vmem:[%s2372 + $0x70] sm:$0xff]
      %v3204 = vld [vmem:[%s2372 + $0x78] sm:$0xff]
      %3205 = vmatpush.msra.mxu0 %v3204
      %3206 = vmatpush.msra.mxu0 %v3203
      %3207 = vmatpush.msra.mxu0 %v3202
      %3208 = vmatpush.msra.mxu0 %v3201
      %3209 = vmatpush.msra.mxu0 %v3200
      %3210 = vmatpush.msra.mxu0 %v3199
      %3211 = vmatpush.msra.mxu0 %v3198
      %3212 = vmatpush.msra.mxu0 %v3197
      %3213 = vmatpush.msra.mxu0 %v3196
      %3214 = vmatpush.msra.mxu0 %v3195
      %3215 = vmatpush.msra.mxu0 %v3194
      %3216 = vmatpush.msra.mxu0 %v3193
      %3217 = vmatpush.msra.mxu0 %v3192
      %3218 = vmatpush.msra.mxu0 %v3191
      %3219 = vmatpush.msra.mxu0 %v3190
      %3220 = vmatpush.msra.mxu0 %v3189
      %3221 = vmatmul.f32.gmra.mxu0 %v3178
      %v3222 = vpop.f32.mrf.mxu0
      %v3223 = vadd.f32 0.0, %v3222
      %3224 = vmatmul.f32.gmra.mxu0 %v3179
      %v3225 = vpop.f32.mrf.mxu0
      %v3226 = vadd.f32 0.0, %v3225
      %3227 = vmatmul.f32.gmra.mxu0 %v3180
      %v3228 = vpop.f32.mrf.mxu0
      %v3229 = vadd.f32 0.0, %v3228
      %3230 = vmatmul.f32.gmra.mxu0 %v3181
      %v3231 = vpop.f32.mrf.mxu0
      %v3232 = vadd.f32 0.0, %v3231
      %3233 = vmatmul.f32.gmra.mxu0 %v3182
      %v3234 = vpop.f32.mrf.mxu0
      %v3235 = vadd.f32 0.0, %v3234
      %3236 = vmatmul.f32.gmra.mxu0 %v3183
      %v3237 = vpop.f32.mrf.mxu0
      %v3238 = vadd.f32 0.0, %v3237
      %3239 = vmatmul.f32.gmra.mxu0 %v3184
      %v3240 = vpop.f32.mrf.mxu0
      %v3241 = vadd.f32 0.0, %v3240
      %3242 = vmatmul.f32.gmra.mxu0 %v3185
      %v3243 = vpop.f32.mrf.mxu0
      %v3244 = vadd.f32 0.0, %v3243
      %3245 = vmatmul.f32.gmra.mxu0 %v3186
      %v3246 = vpop.f32.mrf.mxu0
      %v3247 = vadd.f32 0.0, %v3246
      %3248 = vmatmul.f32.gmra.mxu0 %v3187
      %v3249 = vpop.f32.mrf.mxu0
      %v3250 = vadd.f32 0.0, %v3249
      %3251 = vmatmul.f32.gmra.mxu0 %v3188
      %v3252 = vpop.f32.mrf.mxu0
      %v3253 = vadd.f32 0.0, %v3252
      %3254 = vdwg.mxu0
      %v3255 = vadd.f32 %v3167, %v3223
      %v3256 = vadd.f32 %v3168, %v3226
      %v3257 = vadd.f32 %v3169, %v3229
      %v3258 = vadd.f32 %v3170, %v3232
      %v3259 = vadd.f32 %v3171, %v3235
      %v3260 = vadd.f32 %v3172, %v3238
      %v3261 = vadd.f32 %v3173, %v3241
      %v3262 = vadd.f32 %v3174, %v3244
      %v3263 = vadd.f32 %v3175, %v3247
      %v3264 = vadd.f32 %v3176, %v3250
      %v3265 = vadd.f32 %v3177, %v3253
      %v3266 = vld [vmem:[#allocation2 + $0x70] sm:$0xff]
      %v3267 = vld [vmem:[#allocation2 + $0x78] sm:$0xff]
      %v3268 = vld [vmem:[#allocation2 + $0x80] sm:$0xff]
      %v3269 = vld [vmem:[#allocation2 + $0x88] sm:$0xff]
      %v3270 = vld [vmem:[#allocation2 + $0x90] sm:$0xff]
      %v3271 = vld [vmem:[#allocation2 + $0x98] sm:$0xff]
      %v3272 = vld [vmem:[#allocation2 + $0xa0] sm:$0xff]
      %v3273 = vld [vmem:[#allocation2 + $0xa8] sm:$0xff]
      %v3274 = vld [vmem:[#allocation2 + $0xb0] sm:$0xff]
      %v3275 = vld [vmem:[#allocation2 + $0xb8] sm:$0xff]
      %v3276 = vld [vmem:[#allocation2 + $0xc0] sm:$0xff]
      %v3277 = vld [vmem:[%s2466] sm:$0xff]
      %v3278 = vld [vmem:[%s2466 + $0x8] sm:$0xff]
      %v3279 = vld [vmem:[%s2466 + $0x10] sm:$0xff]
      %v3280 = vld [vmem:[%s2466 + $0x18] sm:$0xff]
      %v3281 = vld [vmem:[%s2466 + $0x20] sm:$0xff]
      %v3282 = vld [vmem:[%s2466 + $0x28] sm:$0xff]
      %v3283 = vld [vmem:[%s2466 + $0x30] sm:$0xff]
      %v3284 = vld [vmem:[%s2466 + $0x38] sm:$0xff]
      %v3285 = vld [vmem:[%s2466 + $0x40] sm:$0xff]
      %v3286 = vld [vmem:[%s2466 + $0x48] sm:$0xff]
      %v3287 = vld [vmem:[%s2466 + $0x50] sm:$0xff]
      %v3288 = vld [vmem:[%s2466 + $0x58] sm:$0xff]
      %v3289 = vld [vmem:[%s2466 + $0x60] sm:$0xff]
      %v3290 = vld [vmem:[%s2466 + $0x68] sm:$0xff]
      %v3291 = vld [vmem:[%s2466 + $0x70] sm:$0xff]
      %v3292 = vld [vmem:[%s2466 + $0x78] sm:$0xff]
      %3293 = vmatpush.msra.mxu0 %v3292
      %3294 = vmatpush.msra.mxu0 %v3291
      %3295 = vmatpush.msra.mxu0 %v3290
      %3296 = vmatpush.msra.mxu0 %v3289
      %3297 = vmatpush.msra.mxu0 %v3288
      %3298 = vmatpush.msra.mxu0 %v3287
      %3299 = vmatpush.msra.mxu0 %v3286
      %3300 = vmatpush.msra.mxu0 %v3285
      %3301 = vmatpush.msra.mxu0 %v3284
      %3302 = vmatpush.msra.mxu0 %v3283
      %3303 = vmatpush.msra.mxu0 %v3282
      %3304 = vmatpush.msra.mxu0 %v3281
      %3305 = vmatpush.msra.mxu0 %v3280
      %3306 = vmatpush.msra.mxu0 %v3279
      %3307 = vmatpush.msra.mxu0 %v3278
      %3308 = vmatpush.msra.mxu0 %v3277
      %3309 = vmatmul.f32.gmra.mxu0 %v3266
      %v3310 = vpop.f32.mrf.mxu0
      %v3311 = vadd.f32 0.0, %v3310
      %3312 = vmatmul.f32.gmra.mxu0 %v3267
      %v3313 = vpop.f32.mrf.mxu0
      %v3314 = vadd.f32 0.0, %v3313
      %3315 = vmatmul.f32.gmra.mxu0 %v3268
      %v3316 = vpop.f32.mrf.mxu0
      %v3317 = vadd.f32 0.0, %v3316
      %3318 = vmatmul.f32.gmra.mxu0 %v3269
      %v3319 = vpop.f32.mrf.mxu0
      %v3320 = vadd.f32 0.0, %v3319
      %3321 = vmatmul.f32.gmra.mxu0 %v3270
      %v3322 = vpop.f32.mrf.mxu0
      %v3323 = vadd.f32 0.0, %v3322
      %3324 = vmatmul.f32.gmra.mxu0 %v3271
      %v3325 = vpop.f32.mrf.mxu0
      %v3326 = vadd.f32 0.0, %v3325
      %3327 = vmatmul.f32.gmra.mxu0 %v3272
      %v3328 = vpop.f32.mrf.mxu0
      %v3329 = vadd.f32 0.0, %v3328
      %3330 = vmatmul.f32.gmra.mxu0 %v3273
      %v3331 = vpop.f32.mrf.mxu0
      %v3332 = vadd.f32 0.0, %v3331
      %3333 = vmatmul.f32.gmra.mxu0 %v3274
      %v3334 = vpop.f32.mrf.mxu0
      %v3335 = vadd.f32 0.0, %v3334
      %3336 = vmatmul.f32.gmra.mxu0 %v3275
      %v3337 = vpop.f32.mrf.mxu0
      %v3338 = vadd.f32 0.0, %v3337
      %3339 = vmatmul.f32.gmra.mxu0 %v3276
      %v3340 = vpop.f32.mrf.mxu0
      %v3341 = vadd.f32 0.0, %v3340
      %3342 = vdwg.mxu0
      %v3343 = vadd.f32 %v3255, %v3311
      %v3344 = vadd.f32 %v3256, %v3314
      %v3345 = vadd.f32 %v3257, %v3317
      %v3346 = vadd.f32 %v3258, %v3320
      %v3347 = vadd.f32 %v3259, %v3323
      %v3348 = vadd.f32 %v3260, %v3326
      %v3349 = vadd.f32 %v3261, %v3329
      %v3350 = vadd.f32 %v3262, %v3332
      %v3351 = vadd.f32 %v3263, %v3335
      %v3352 = vadd.f32 %v3264, %v3338
      %v3353 = vadd.f32 %v3265, %v3341
      %v3354 = vld [vmem:[#allocation2 + $0x71] sm:$0xff]
      %v3355 = vld [vmem:[#allocation2 + $0x79] sm:$0xff]
      %v3356 = vld [vmem:[#allocation2 + $0x81] sm:$0xff]
      %v3357 = vld [vmem:[#allocation2 + $0x89] sm:$0xff]
      %v3358 = vld [vmem:[#allocation2 + $0x91] sm:$0xff]
      %v3359 = vld [vmem:[#allocation2 + $0x99] sm:$0xff]
      %v3360 = vld [vmem:[#allocation2 + $0xa1] sm:$0xff]
      %v3361 = vld [vmem:[#allocation2 + $0xa9] sm:$0xff]
      %v3362 = vld [vmem:[#allocation2 + $0xb1] sm:$0xff]
      %v3363 = vld [vmem:[#allocation2 + $0xb9] sm:$0xff]
      %v3364 = vld [vmem:[#allocation2 + $0xc1] sm:$0xff]
      %v3365 = vld [vmem:[%s2560] sm:$0xff]
      %v3366 = vld [vmem:[%s2560 + $0x8] sm:$0xff]
      %v3367 = vld [vmem:[%s2560 + $0x10] sm:$0xff]
      %v3368 = vld [vmem:[%s2560 + $0x18] sm:$0xff]
      %v3369 = vld [vmem:[%s2560 + $0x20] sm:$0xff]
      %v3370 = vld [vmem:[%s2560 + $0x28] sm:$0xff]
      %v3371 = vld [vmem:[%s2560 + $0x30] sm:$0xff]
      %v3372 = vld [vmem:[%s2560 + $0x38] sm:$0xff]
      %v3373 = vld [vmem:[%s2560 + $0x40] sm:$0xff]
      %v3374 = vld [vmem:[%s2560 + $0x48] sm:$0xff]
      %v3375 = vld [vmem:[%s2560 + $0x50] sm:$0xff]
      %v3376 = vld [vmem:[%s2560 + $0x58] sm:$0xff]
      %v3377 = vld [vmem:[%s2560 + $0x60] sm:$0xff]
      %v3378 = vld [vmem:[%s2560 + $0x68] sm:$0xff]
      %v3379 = vld [vmem:[%s2560 + $0x70] sm:$0xff]
      %v3380 = vld [vmem:[%s2560 + $0x78] sm:$0xff]
      %3381 = vmatpush.msra.mxu0 %v3380
      %3382 = vmatpush.msra.mxu0 %v3379
      %3383 = vmatpush.msra.mxu0 %v3378
      %3384 = vmatpush.msra.mxu0 %v3377
      %3385 = vmatpush.msra.mxu0 %v3376
      %3386 = vmatpush.msra.mxu0 %v3375
      %3387 = vmatpush.msra.mxu0 %v3374
      %3388 = vmatpush.msra.mxu0 %v3373
      %3389 = vmatpush.msra.mxu0 %v3372
      %3390 = vmatpush.msra.mxu0 %v3371
      %3391 = vmatpush.msra.mxu0 %v3370
      %3392 = vmatpush.msra.mxu0 %v3369
      %3393 = vmatpush.msra.mxu0 %v3368
      %3394 = vmatpush.msra.mxu0 %v3367
      %3395 = vmatpush.msra.mxu0 %v3366
      %3396 = vmatpush.msra.mxu0 %v3365
      %3397 = vmatmul.f32.gmra.mxu0 %v3354
      %v3398 = vpop.f32.mrf.mxu0
      %v3399 = vadd.f32 0.0, %v3398
      %3400 = vmatmul.f32.gmra.mxu0 %v3355
      %v3401 = vpop.f32.mrf.mxu0
      %v3402 = vadd.f32 0.0, %v3401
      %3403 = vmatmul.f32.gmra.mxu0 %v3356
      %v3404 = vpop.f32.mrf.mxu0
      %v3405 = vadd.f32 0.0, %v3404
      %3406 = vmatmul.f32.gmra.mxu0 %v3357
      %v3407 = vpop.f32.mrf.mxu0
      %v3408 = vadd.f32 0.0, %v3407
      %3409 = vmatmul.f32.gmra.mxu0 %v3358
      %v3410 = vpop.f32.mrf.mxu0
      %v3411 = vadd.f32 0.0, %v3410
      %3412 = vmatmul.f32.gmra.mxu0 %v3359
      %v3413 = vpop.f32.mrf.mxu0
      %v3414 = vadd.f32 0.0, %v3413
      %3415 = vmatmul.f32.gmra.mxu0 %v3360
      %v3416 = vpop.f32.mrf.mxu0
      %v3417 = vadd.f32 0.0, %v3416
      %3418 = vmatmul.f32.gmra.mxu0 %v3361
      %v3419 = vpop.f32.mrf.mxu0
      %v3420 = vadd.f32 0.0, %v3419
      %3421 = vmatmul.f32.gmra.mxu0 %v3362
      %v3422 = vpop.f32.mrf.mxu0
      %v3423 = vadd.f32 0.0, %v3422
      %3424 = vmatmul.f32.gmra.mxu0 %v3363
      %v3425 = vpop.f32.mrf.mxu0
      %v3426 = vadd.f32 0.0, %v3425
      %3427 = vmatmul.f32.gmra.mxu0 %v3364
      %v3428 = vpop.f32.mrf.mxu0
      %v3429 = vadd.f32 0.0, %v3428
      %3430 = vdwg.mxu0
      %v3431 = vadd.f32 %v3343, %v3399
      %v3432 = vadd.f32 %v3344, %v3402
      %v3433 = vadd.f32 %v3345, %v3405
      %v3434 = vadd.f32 %v3346, %v3408
      %v3435 = vadd.f32 %v3347, %v3411
      %v3436 = vadd.f32 %v3348, %v3414
      %v3437 = vadd.f32 %v3349, %v3417
      %v3438 = vadd.f32 %v3350, %v3420
      %v3439 = vadd.f32 %v3351, %v3423
      %v3440 = vadd.f32 %v3352, %v3426
      %v3441 = vadd.f32 %v3353, %v3429
      %v3442 = vld [vmem:[#allocation2 + $0x7e] sm:$0xff]
      %v3443 = vld [vmem:[#allocation2 + $0x86] sm:$0xff]
      %v3444 = vld [vmem:[#allocation2 + $0x8e] sm:$0xff]
      %v3445 = vld [vmem:[#allocation2 + $0x96] sm:$0xff]
      %v3446 = vld [vmem:[#allocation2 + $0x9e] sm:$0xff]
      %v3447 = vld [vmem:[#allocation2 + $0xa6] sm:$0xff]
      %v3448 = vld [vmem:[#allocation2 + $0xae] sm:$0xff]
      %v3449 = vld [vmem:[#allocation2 + $0xb6] sm:$0xff]
      %v3450 = vld [vmem:[#allocation2 + $0xbe] sm:$0xff]
      %v3451 = vld [vmem:[#allocation2 + $0xc6] sm:$0xff]
      %v3452 = vld [vmem:[#allocation2 + $0xce] sm:$0xff]
      %v3453 = vld [vmem:[%s2654] sm:$0xff]
      %v3454 = vld [vmem:[%s2654 + $0x8] sm:$0xff]
      %v3455 = vld [vmem:[%s2654 + $0x10] sm:$0xff]
      %v3456 = vld [vmem:[%s2654 + $0x18] sm:$0xff]
      %v3457 = vld [vmem:[%s2654 + $0x20] sm:$0xff]
      %v3458 = vld [vmem:[%s2654 + $0x28] sm:$0xff]
      %v3459 = vld [vmem:[%s2654 + $0x30] sm:$0xff]
      %v3460 = vld [vmem:[%s2654 + $0x38] sm:$0xff]
      %v3461 = vld [vmem:[%s2654 + $0x40] sm:$0xff]
      %v3462 = vld [vmem:[%s2654 + $0x48] sm:$0xff]
      %v3463 = vld [vmem:[%s2654 + $0x50] sm:$0xff]
      %v3464 = vld [vmem:[%s2654 + $0x58] sm:$0xff]
      %v3465 = vld [vmem:[%s2654 + $0x60] sm:$0xff]
      %v3466 = vld [vmem:[%s2654 + $0x68] sm:$0xff]
      %v3467 = vld [vmem:[%s2654 + $0x70] sm:$0xff]
      %v3468 = vld [vmem:[%s2654 + $0x78] sm:$0xff]
      %3469 = vmatpush.msra.mxu0 %v3468
      %3470 = vmatpush.msra.mxu0 %v3467
      %3471 = vmatpush.msra.mxu0 %v3466
      %3472 = vmatpush.msra.mxu0 %v3465
      %3473 = vmatpush.msra.mxu0 %v3464
      %3474 = vmatpush.msra.mxu0 %v3463
      %3475 = vmatpush.msra.mxu0 %v3462
      %3476 = vmatpush.msra.mxu0 %v3461
      %3477 = vmatpush.msra.mxu0 %v3460
      %3478 = vmatpush.msra.mxu0 %v3459
      %3479 = vmatpush.msra.mxu0 %v3458
      %3480 = vmatpush.msra.mxu0 %v3457
      %3481 = vmatpush.msra.mxu0 %v3456
      %3482 = vmatpush.msra.mxu0 %v3455
      %3483 = vmatpush.msra.mxu0 %v3454
      %3484 = vmatpush.msra.mxu0 %v3453
      %3485 = vmatmul.f32.gmra.mxu0 %v3442
      %v3486 = vpop.f32.mrf.mxu0
      %v3487 = vadd.f32 0.0, %v3486
      %3488 = vmatmul.f32.gmra.mxu0 %v3443
      %v3489 = vpop.f32.mrf.mxu0
      %v3490 = vadd.f32 0.0, %v3489
      %3491 = vmatmul.f32.gmra.mxu0 %v3444
      %v3492 = vpop.f32.mrf.mxu0
      %v3493 = vadd.f32 0.0, %v3492
      %3494 = vmatmul.f32.gmra.mxu0 %v3445
      %v3495 = vpop.f32.mrf.mxu0
      %v3496 = vadd.f32 0.0, %v3495
      %3497 = vmatmul.f32.gmra.mxu0 %v3446
      %v3498 = vpop.f32.mrf.mxu0
      %v3499 = vadd.f32 0.0, %v3498
      %3500 = vmatmul.f32.gmra.mxu0 %v3447
      %v3501 = vpop.f32.mrf.mxu0
      %v3502 = vadd.f32 0.0, %v3501
      %3503 = vmatmul.f32.gmra.mxu0 %v3448
      %v3504 = vpop.f32.mrf.mxu0
      %v3505 = vadd.f32 0.0, %v3504
      %3506 = vmatmul.f32.gmra.mxu0 %v3449
      %v3507 = vpop.f32.mrf.mxu0
      %v3508 = vadd.f32 0.0, %v3507
      %3509 = vmatmul.f32.gmra.mxu0 %v3450
      %v3510 = vpop.f32.mrf.mxu0
      %v3511 = vadd.f32 0.0, %v3510
      %3512 = vmatmul.f32.gmra.mxu0 %v3451
      %v3513 = vpop.f32.mrf.mxu0
      %v3514 = vadd.f32 0.0, %v3513
      %3515 = vmatmul.f32.gmra.mxu0 %v3452
      %v3516 = vpop.f32.mrf.mxu0
      %v3517 = vadd.f32 0.0, %v3516
      %3518 = vdwg.mxu0
      %v3519 = vadd.f32 %v3431, %v3487
      %v3520 = vadd.f32 %v3432, %v3490
      %v3521 = vadd.f32 %v3433, %v3493
      %v3522 = vadd.f32 %v3434, %v3496
      %v3523 = vadd.f32 %v3435, %v3499
      %v3524 = vadd.f32 %v3436, %v3502
      %v3525 = vadd.f32 %v3437, %v3505
      %v3526 = vadd.f32 %v3438, %v3508
      %v3527 = vadd.f32 %v3439, %v3511
      %v3528 = vadd.f32 %v3440, %v3514
      %v3529 = vadd.f32 %v3441, %v3517
      %v3530 = vld [vmem:[#allocation2 + $0x7f] sm:$0xff]
      %v3531 = vld [vmem:[#allocation2 + $0x87] sm:$0xff]
      %v3532 = vld [vmem:[#allocation2 + $0x8f] sm:$0xff]
      %v3533 = vld [vmem:[#allocation2 + $0x97] sm:$0xff]
      %v3534 = vld [vmem:[#allocation2 + $0x9f] sm:$0xff]
      %v3535 = vld [vmem:[#allocation2 + $0xa7] sm:$0xff]
      %v3536 = vld [vmem:[#allocation2 + $0xaf] sm:$0xff]
      %v3537 = vld [vmem:[#allocation2 + $0xb7] sm:$0xff]
      %v3538 = vld [vmem:[#allocation2 + $0xbf] sm:$0xff]
      %v3539 = vld [vmem:[#allocation2 + $0xc7] sm:$0xff]
      %v3540 = vld [vmem:[#allocation2 + $0xcf] sm:$0xff]
      %v3541 = vld [vmem:[%s2748] sm:$0xff]
      %v3542 = vld [vmem:[%s2748 + $0x8] sm:$0xff]
      %v3543 = vld [vmem:[%s2748 + $0x10] sm:$0xff]
      %v3544 = vld [vmem:[%s2748 + $0x18] sm:$0xff]
      %v3545 = vld [vmem:[%s2748 + $0x20] sm:$0xff]
      %v3546 = vld [vmem:[%s2748 + $0x28] sm:$0xff]
      %v3547 = vld [vmem:[%s2748 + $0x30] sm:$0xff]
      %v3548 = vld [vmem:[%s2748 + $0x38] sm:$0xff]
      %v3549 = vld [vmem:[%s2748 + $0x40] sm:$0xff]
      %v3550 = vld [vmem:[%s2748 + $0x48] sm:$0xff]
      %v3551 = vld [vmem:[%s2748 + $0x50] sm:$0xff]
      %v3552 = vld [vmem:[%s2748 + $0x58] sm:$0xff]
      %v3553 = vld [vmem:[%s2748 + $0x60] sm:$0xff]
      %v3554 = vld [vmem:[%s2748 + $0x68] sm:$0xff]
      %v3555 = vld [vmem:[%s2748 + $0x70] sm:$0xff]
      %v3556 = vld [vmem:[%s2748 + $0x78] sm:$0xff]
      %3557 = vmatpush.msra.mxu0 %v3556
      %3558 = vmatpush.msra.mxu0 %v3555
      %3559 = vmatpush.msra.mxu0 %v3554
      %3560 = vmatpush.msra.mxu0 %v3553
      %3561 = vmatpush.msra.mxu0 %v3552
      %3562 = vmatpush.msra.mxu0 %v3551
      %3563 = vmatpush.msra.mxu0 %v3550
      %3564 = vmatpush.msra.mxu0 %v3549
      %3565 = vmatpush.msra.mxu0 %v3548
      %3566 = vmatpush.msra.mxu0 %v3547
      %3567 = vmatpush.msra.mxu0 %v3546
      %3568 = vmatpush.msra.mxu0 %v3545
      %3569 = vmatpush.msra.mxu0 %v3544
      %3570 = vmatpush.msra.mxu0 %v3543
      %3571 = vmatpush.msra.mxu0 %v3542
      %3572 = vmatpush.msra.mxu0 %v3541
      %3573 = vmatmul.f32.gmra.mxu0 %v3530
      %v3574 = vpop.f32.mrf.mxu0
      %v3575 = vadd.f32 0.0, %v3574
      %3576 = vmatmul.f32.gmra.mxu0 %v3531
      %v3577 = vpop.f32.mrf.mxu0
      %v3578 = vadd.f32 0.0, %v3577
      %3579 = vmatmul.f32.gmra.mxu0 %v3532
      %v3580 = vpop.f32.mrf.mxu0
      %v3581 = vadd.f32 0.0, %v3580
      %3582 = vmatmul.f32.gmra.mxu0 %v3533
      %v3583 = vpop.f32.mrf.mxu0
      %v3584 = vadd.f32 0.0, %v3583
      %3585 = vmatmul.f32.gmra.mxu0 %v3534
      %v3586 = vpop.f32.mrf.mxu0
      %v3587 = vadd.f32 0.0, %v3586
      %3588 = vmatmul.f32.gmra.mxu0 %v3535
      %v3589 = vpop.f32.mrf.mxu0
      %v3590 = vadd.f32 0.0, %v3589
      %3591 = vmatmul.f32.gmra.mxu0 %v3536
      %v3592 = vpop.f32.mrf.mxu0
      %v3593 = vadd.f32 0.0, %v3592
      %3594 = vmatmul.f32.gmra.mxu0 %v3537
      %v3595 = vpop.f32.mrf.mxu0
      %v3596 = vadd.f32 0.0, %v3595
      %3597 = vmatmul.f32.gmra.mxu0 %v3538
      %v3598 = vpop.f32.mrf.mxu0
      %v3599 = vadd.f32 0.0, %v3598
      %3600 = vmatmul.f32.gmra.mxu0 %v3539
      %v3601 = vpop.f32.mrf.mxu0
      %v3602 = vadd.f32 0.0, %v3601
      %3603 = vmatmul.f32.gmra.mxu0 %v3540
      %v3604 = vpop.f32.mrf.mxu0
      %v3605 = vadd.f32 0.0, %v3604
      %3606 = vdwg.mxu0
      %v3607 = vadd.f32 %v3519, %v3575
      %v3608 = vadd.f32 %v3520, %v3578
      %v3609 = vadd.f32 %v3521, %v3581
      %v3610 = vadd.f32 %v3522, %v3584
      %v3611 = vadd.f32 %v3523, %v3587
      %v3612 = vadd.f32 %v3524, %v3590
      %v3613 = vadd.f32 %v3525, %v3593
      %v3614 = vadd.f32 %v3526, %v3596
      %v3615 = vadd.f32 %v3527, %v3599
      %v3616 = vadd.f32 %v3528, %v3602
      %v3617 = vadd.f32 %v3529, %v3605
      %v3618 = vld [vmem:[#allocation2 + $0x80] sm:$0xff]
      %v3619 = vld [vmem:[#allocation2 + $0x88] sm:$0xff]
      %v3620 = vld [vmem:[#allocation2 + $0x90] sm:$0xff]
      %v3621 = vld [vmem:[#allocation2 + $0x98] sm:$0xff]
      %v3622 = vld [vmem:[#allocation2 + $0xa0] sm:$0xff]
      %v3623 = vld [vmem:[#allocation2 + $0xa8] sm:$0xff]
      %v3624 = vld [vmem:[#allocation2 + $0xb0] sm:$0xff]
      %v3625 = vld [vmem:[#allocation2 + $0xb8] sm:$0xff]
      %v3626 = vld [vmem:[#allocation2 + $0xc0] sm:$0xff]
      %v3627 = vld [vmem:[#allocation2 + $0xc8] sm:$0xff]
      %v3628 = vld [vmem:[#allocation2 + $0xd0] sm:$0xff]
      %v3629 = vld [vmem:[%s2842] sm:$0xff]
      %v3630 = vld [vmem:[%s2842 + $0x8] sm:$0xff]
      %v3631 = vld [vmem:[%s2842 + $0x10] sm:$0xff]
      %v3632 = vld [vmem:[%s2842 + $0x18] sm:$0xff]
      %v3633 = vld [vmem:[%s2842 + $0x20] sm:$0xff]
      %v3634 = vld [vmem:[%s2842 + $0x28] sm:$0xff]
      %v3635 = vld [vmem:[%s2842 + $0x30] sm:$0xff]
      %v3636 = vld [vmem:[%s2842 + $0x38] sm:$0xff]
      %v3637 = vld [vmem:[%s2842 + $0x40] sm:$0xff]
      %v3638 = vld [vmem:[%s2842 + $0x48] sm:$0xff]
      %v3639 = vld [vmem:[%s2842 + $0x50] sm:$0xff]
      %v3640 = vld [vmem:[%s2842 + $0x58] sm:$0xff]
      %v3641 = vld [vmem:[%s2842 + $0x60] sm:$0xff]
      %v3642 = vld [vmem:[%s2842 + $0x68] sm:$0xff]
      %v3643 = vld [vmem:[%s2842 + $0x70] sm:$0xff]
      %v3644 = vld [vmem:[%s2842 + $0x78] sm:$0xff]
      %3645 = vmatpush.msra.mxu0 %v3644
      %3646 = vmatpush.msra.mxu0 %v3643
      %3647 = vmatpush.msra.mxu0 %v3642
      %3648 = vmatpush.msra.mxu0 %v3641
      %3649 = vmatpush.msra.mxu0 %v3640
      %3650 = vmatpush.msra.mxu0 %v3639
      %3651 = vmatpush.msra.mxu0 %v3638
      %3652 = vmatpush.msra.mxu0 %v3637
      %3653 = vmatpush.msra.mxu0 %v3636
      %3654 = vmatpush.msra.mxu0 %v3635
      %3655 = vmatpush.msra.mxu0 %v3634
      %3656 = vmatpush.msra.mxu0 %v3633
      %3657 = vmatpush.msra.mxu0 %v3632
      %3658 = vmatpush.msra.mxu0 %v3631
      %3659 = vmatpush.msra.mxu0 %v3630
      %3660 = vmatpush.msra.mxu0 %v3629
      %3661 = vmatmul.f32.gmra.mxu0 %v3618
      %v3662 = vpop.f32.mrf.mxu0
      %v3663 = vadd.f32 0.0, %v3662
      %3664 = vmatmul.f32.gmra.mxu0 %v3619
      %v3665 = vpop.f32.mrf.mxu0
      %v3666 = vadd.f32 0.0, %v3665
      %3667 = vmatmul.f32.gmra.mxu0 %v3620
      %v3668 = vpop.f32.mrf.mxu0
      %v3669 = vadd.f32 0.0, %v3668
      %3670 = vmatmul.f32.gmra.mxu0 %v3621
      %v3671 = vpop.f32.mrf.mxu0
      %v3672 = vadd.f32 0.0, %v3671
      %3673 = vmatmul.f32.gmra.mxu0 %v3622
      %v3674 = vpop.f32.mrf.mxu0
      %v3675 = vadd.f32 0.0, %v3674
      %3676 = vmatmul.f32.gmra.mxu0 %v3623
      %v3677 = vpop.f32.mrf.mxu0
      %v3678 = vadd.f32 0.0, %v3677
      %3679 = vmatmul.f32.gmra.mxu0 %v3624
      %v3680 = vpop.f32.mrf.mxu0
      %v3681 = vadd.f32 0.0, %v3680
      %3682 = vmatmul.f32.gmra.mxu0 %v3625
      %v3683 = vpop.f32.mrf.mxu0
      %v3684 = vadd.f32 0.0, %v3683
      %3685 = vmatmul.f32.gmra.mxu0 %v3626
      %v3686 = vpop.f32.mrf.mxu0
      %v3687 = vadd.f32 0.0, %v3686
      %3688 = vmatmul.f32.gmra.mxu0 %v3627
      %v3689 = vpop.f32.mrf.mxu0
      %v3690 = vadd.f32 0.0, %v3689
      %3691 = vmatmul.f32.gmra.mxu0 %v3628
      %v3692 = vpop.f32.mrf.mxu0
      %v3693 = vadd.f32 0.0, %v3692
      %3694 = vdwg.mxu0
      %v3695 = vadd.f32 %v3607, %v3663
      %v3696 = vadd.f32 %v3608, %v3666
      %v3697 = vadd.f32 %v3609, %v3669
      %v3698 = vadd.f32 %v3610, %v3672
      %v3699 = vadd.f32 %v3611, %v3675
      %v3700 = vadd.f32 %v3612, %v3678
      %v3701 = vadd.f32 %v3613, %v3681
      %v3702 = vadd.f32 %v3614, %v3684
      %v3703 = vadd.f32 %v3615, %v3687
      %v3704 = vadd.f32 %v3616, %v3690
      %v3705 = vadd.f32 %v3617, %v3693
      %3706 = vst [vmem:[#allocation4 + $0x60] sm:$0xff] %v3695
      %3707 = vst [vmem:[#allocation4 + $0x68] sm:$0xff] %v3696
      %3708 = vst [vmem:[#allocation4 + $0x70] sm:$0xff] %v3697
      %3709 = vst [vmem:[#allocation4 + $0x78] sm:$0xff] %v3698
      %3710 = vst [vmem:[#allocation4 + $0x80] sm:$0xff] %v3699
      %3711 = vst [vmem:[#allocation4 + $0x88] sm:$0xff] %v3700
      %3712 = vst [vmem:[#allocation4 + $0x90] sm:$0xff] %v3701
      %3713 = vst [vmem:[#allocation4 + $0x98] sm:$0xff] %v3702
      %3714 = vst [vmem:[#allocation4 + $0xa0] sm:$0xff] %v3703
      %3715 = vst [vmem:[#allocation4 + $0xa8] sm:$0xff] %v3704
      %3716 = vst [vmem:[#allocation4 + $0xb0] sm:$0xff] %v3705
      %v3717 = vld [vmem:[#allocation4] sm:$0xff]
      %v3718 = vld [vmem:[#allocation4 + $0x8] sm:$0xff]
      %v3719 = vld [vmem:[#allocation4 + $0x10] sm:$0xff]
      %v3720 = vld [vmem:[#allocation4 + $0x18] sm:$0xff]
      %v3725 = vrot.slane %v3717, 1
      %v3726 = vrot.slane %v3718, 1
      %v3727 = vsel %vm143, %v3725, %v3726
      %v3728 = vrot.slane %v3719, 1
      %v3729 = vsel %vm143, %v3726, %v3728
      %v3730 = vrot.slane %v3720, 1
      %v3731 = vsel %vm143, %v3728, %v3730
      %v3736 = vmax.f32 %v3717, %v3727
      %v3737 = vmax.f32 %v3718, %v3729
      %v3738 = vmax.f32 %v3719, %v3731
      %v3739 = vmax.f32 %v3720, %v3730
      %vm3743 = vcmask 1040384
      %v3744 = vrot.slane %v3737, 7
      %v3745 = vrot.slane %v3738, 7
      %v3746 = vsel %vm3743, %v3744, %v3745
      %v3747 = vrot.slane %v3739, 7
      %v3748 = vsel %vm3743, %v3745, %v3747
      %v3751 = vmax.f32 %v3736, %v3746
      %v3752 = vmax.f32 %v3737, %v3748
      %v3754 = vperm.slane %v47, 0
      %v3756 = vadd.f32 %v3751, %v3754
      %v3757 = vadd.f32 %v3752, %v3754
      %v3758 = vmax.f32 %v3756, 0.0
      %v3759 = vmax.f32 %v3757, 0.0
      %3760 = vst [vmem:[#allocation5] sm:$0xff] %v3758
      %3761 = vst [vmem:[#allocation5 + $0x8] sm:$0xff] %v3759
      %v3762 = vld [vmem:[#allocation5] ss:$2 sm:$0x3f]
      %3763 = vst [vmem:[#allocation3] sm:$0x3f] %v3762
      %v3764 = vld [vmem:[#allocation4 + $0x1e] sm:$0xff]
      %v3765 = vld [vmem:[#allocation4 + $0x26] sm:$0xff]
      %v3766 = vld [vmem:[#allocation4 + $0x2e] sm:$0xff]
      %v3767 = vld [vmem:[#allocation4 + $0x36] sm:$0xff]
      %v3772 = vrot.slane %v3764, 1
      %v3773 = vrot.slane %v3765, 1
      %v3774 = vsel %vm143, %v3772, %v3773
      %v3775 = vrot.slane %v3766, 1
      %v3776 = vsel %vm143, %v3773, %v3775
      %v3777 = vrot.slane %v3767, 1
      %v3778 = vsel %vm143, %v3775, %v3777
      %v3783 = vmax.f32 %v3764, %v3774
      %v3784 = vmax.f32 %v3765, %v3776
      %v3785 = vmax.f32 %v3766, %v3778
      %v3786 = vmax.f32 %v3767, %v3777
      %v3790 = vrot.slane %v3784, 7
      %v3791 = vrot.slane %v3785, 7
      %v3792 = vsel %vm3743, %v3790, %v3791
      %v3793 = vrot.slane %v3786, 7
      %v3794 = vsel %vm3743, %v3791, %v3793
      %v3797 = vmax.f32 %v3783, %v3792
      %v3798 = vmax.f32 %v3784, %v3794
      %v3799 = vadd.f32 %v3797, %v3754
      %v3800 = vadd.f32 %v3798, %v3754
      %v3801 = vmax.f32 %v3799, 0.0
      %v3802 = vmax.f32 %v3800, 0.0
      %3803 = vst [vmem:[#allocation5] sm:$0xff] %v3801
      %3804 = vst [vmem:[#allocation5 + $0x8] sm:$0xff] %v3802
      %v3805 = vld [vmem:[#allocation5] ss:$2 sm:$0x3f]
      %3806 = vst [vmem:[#allocation3 + $0x6] sm:$0x3f] %v3805
      %v3807 = vld [vmem:[#allocation4 + $0x3c] sm:$0xff]
      %v3808 = vld [vmem:[#allocation4 + $0x44] sm:$0xff]
      %v3809 = vld [vmem:[#allocation4 + $0x4c] sm:$0xff]
      %v3810 = vld [vmem:[#allocation4 + $0x54] sm:$0xff]
      %v3815 = vrot.slane %v3807, 1
      %v3816 = vrot.slane %v3808, 1
      %v3817 = vsel %vm143, %v3815, %v3816
      %v3818 = vrot.slane %v3809, 1
      %v3819 = vsel %vm143, %v3816, %v3818
      %v3820 = vrot.slane %v3810, 1
      %v3821 = vsel %vm143, %v3818, %v3820
      %v3826 = vmax.f32 %v3807, %v3817
      %v3827 = vmax.f32 %v3808, %v3819
      %v3828 = vmax.f32 %v3809, %v3821
      %v3829 = vmax.f32 %v3810, %v3820
      %v3833 = vrot.slane %v3827, 7
      %v3834 = vrot.slane %v3828, 7
      %v3835 = vsel %vm3743, %v3833, %v3834
      %v3836 = vrot.slane %v3829, 7
      %v3837 = vsel %vm3743, %v3834, %v3836
      %v3840 = vmax.f32 %v3826, %v3835
      %v3841 = vmax.f32 %v3827, %v3837
      %v3842 = vadd.f32 %v3840, %v3754
      %v3843 = vadd.f32 %v3841, %v3754
      %v3844 = vmax.f32 %v3842, 0.0
      %v3845 = vmax.f32 %v3843, 0.0
      %3846 = vst [vmem:[#allocation5] sm:$0xff] %v3844
      %3847 = vst [vmem:[#allocation5 + $0x8] sm:$0xff] %v3845
      %v3848 = vld [vmem:[#allocation5] ss:$2 sm:$0x3f]
      %3849 = vst [vmem:[#allocation3 + $0xc] sm:$0x3f] %v3848
      %v3850 = vld [vmem:[#allocation4 + $0x5a] sm:$0xff]
      %v3851 = vld [vmem:[#allocation4 + $0x62] sm:$0xff]
      %v3852 = vld [vmem:[#allocation4 + $0x6a] sm:$0xff]
      %v3853 = vld [vmem:[#allocation4 + $0x72] sm:$0xff]
      %v3858 = vrot.slane %v3850, 1
      %v3859 = vrot.slane %v3851, 1
      %v3860 = vsel %vm143, %v3858, %v3859
      %v3861 = vrot.slane %v3852, 1
      %v3862 = vsel %vm143, %v3859, %v3861
      %v3863 = vrot.slane %v3853, 1
      %v3864 = vsel %vm143, %v3861, %v3863
      %v3869 = vmax.f32 %v3850, %v3860
      %v3870 = vmax.f32 %v3851, %v3862
      %v3871 = vmax.f32 %v3852, %v3864
      %v3872 = vmax.f32 %v3853, %v3863
      %v3876 = vrot.slane %v3870, 7
      %v3877 = vrot.slane %v3871, 7
      %v3878 = vsel %vm3743, %v3876, %v3877
      %v3879 = vrot.slane %v3872, 7
      %v3880 = vsel %vm3743, %v3877, %v3879
      %v3883 = vmax.f32 %v3869, %v3878
      %v3884 = vmax.f32 %v3870, %v3880
      %v3885 = vadd.f32 %v3883, %v3754
      %v3886 = vadd.f32 %v3884, %v3754
      %v3887 = vmax.f32 %v3885, 0.0
      %v3888 = vmax.f32 %v3886, 0.0
      %3889 = vst [vmem:[#allocation5] sm:$0xff] %v3887
      %3890 = vst [vmem:[#allocation5 + $0x8] sm:$0xff] %v3888
      %v3891 = vld [vmem:[#allocation5] ss:$2 sm:$0x3f]
      %3892 = vst [vmem:[#allocation3 + $0x12] sm:$0x3f] %v3891
      %v3893 = vld [vmem:[#allocation4 + $0x78] sm:$0xff]
      %v3894 = vld [vmem:[#allocation4 + $0x80] sm:$0xff]
      %v3895 = vld [vmem:[#allocation4 + $0x88] sm:$0xff]
      %v3896 = vld [vmem:[#allocation4 + $0x90] sm:$0xff]
      %v3901 = vrot.slane %v3893, 1
      %v3902 = vrot.slane %v3894, 1
      %v3903 = vsel %vm143, %v3901, %v3902
      %v3904 = vrot.slane %v3895, 1
      %v3905 = vsel %vm143, %v3902, %v3904
      %v3906 = vrot.slane %v3896, 1
      %v3907 = vsel %vm143, %v3904, %v3906
      %v3912 = vmax.f32 %v3893, %v3903
      %v3913 = vmax.f32 %v3894, %v3905
      %v3914 = vmax.f32 %v3895, %v3907
      %v3915 = vmax.f32 %v3896, %v3906
      %v3919 = vrot.slane %v3913, 7
      %v3920 = vrot.slane %v3914, 7
      %v3921 = vsel %vm3743, %v3919, %v3920
      %v3922 = vrot.slane %v3915, 7
      %v3923 = vsel %vm3743, %v3920, %v3922
      %v3926 = vmax.f32 %v3912, %v3921
      %v3927 = vmax.f32 %v3913, %v3923
      %v3928 = vadd.f32 %v3926, %v3754
      %v3929 = vadd.f32 %v3927, %v3754
      %v3930 = vmax.f32 %v3928, 0.0
      %v3931 = vmax.f32 %v3929, 0.0
      %3932 = vst [vmem:[#allocation5] sm:$0xff] %v3930
      %3933 = vst [vmem:[#allocation5 + $0x8] sm:$0xff] %v3931
      %v3934 = vld [vmem:[#allocation5] ss:$2 sm:$0x3f]
      %3935 = vst [vmem:[#allocation3 + $0x18] sm:$0x3f] %v3934
      %v3936 = vld [vmem:[#allocation4 + $0x96] sm:$0xff]
      %v3937 = vld [vmem:[#allocation4 + $0x9e] sm:$0xff]
      %v3938 = vld [vmem:[#allocation4 + $0xa6] sm:$0xff]
      %v3939 = vld [vmem:[#allocation4 + $0xae] sm:$0xff]
      %v3944 = vrot.slane %v3936, 1
      %v3945 = vrot.slane %v3937, 1
      %v3946 = vsel %vm143, %v3944, %v3945
      %v3947 = vrot.slane %v3938, 1
      %v3948 = vsel %vm143, %v3945, %v3947
      %v3949 = vrot.slane %v3939, 1
      %v3950 = vsel %vm143, %v3947, %v3949
      %v3955 = vmax.f32 %v3936, %v3946
      %v3956 = vmax.f32 %v3937, %v3948
      %v3957 = vmax.f32 %v3938, %v3950
      %v3958 = vmax.f32 %v3939, %v3949
      %v3962 = vrot.slane %v3956, 7
      %v3963 = vrot.slane %v3957, 7
      %v3964 = vsel %vm3743, %v3962, %v3963
      %v3965 = vrot.slane %v3958, 7
      %v3966 = vsel %vm3743, %v3963, %v3965
      %v3969 = vmax.f32 %v3955, %v3964
      %v3970 = vmax.f32 %v3956, %v3966
      %v3971 = vadd.f32 %v3969, %v3754
      %v3972 = vadd.f32 %v3970, %v3754
      %v3973 = vmax.f32 %v3971, 0.0
      %v3974 = vmax.f32 %v3972, 0.0
      %3975 = vst [vmem:[#allocation5] sm:$0xff] %v3973
      %3976 = vst [vmem:[#allocation5 + $0x8] sm:$0xff] %v3974
      %v3977 = vld [vmem:[#allocation5] ss:$2 sm:$0x3f]
      %3978 = vst [vmem:[#allocation3 + $0x1e] sm:$0x3f] %v3977
      %v3979 = vld [vmem:[#allocation3] sm:$0xff]
      %v3980 = vld [vmem:[#allocation3 + $0x8] sm:$0xff]
      %v3981 = vld [vmem:[#allocation3 + $0x10] sm:$0xff]
      %v3982 = vld [vmem:[%s5] sm:$0xff]
      %v3983 = vld [vmem:[%s5 + $0x8] sm:$0xff]
      %v3984 = vld [vmem:[%s5 + $0x10] sm:$0xff]
      %v3985 = vld [vmem:[%s5 + $0x18] sm:$0xff]
      %v3986 = vld [vmem:[%s5 + $0x20] sm:$0xff]
      %v3987 = vld [vmem:[%s5 + $0x28] sm:$0xff]
      %v3988 = vld [vmem:[%s5 + $0x30] sm:$0xff]
      %v3989 = vld [vmem:[%s5 + $0x38] sm:$0xff]
      %v3990 = vld [vmem:[%s5 + $0x40] sm:$0xff]
      %v3991 = vld [vmem:[%s5 + $0x48] sm:$0xff]
      %v3992 = vld [vmem:[%s5 + $0x50] sm:$0xff]
      %v3993 = vld [vmem:[%s5 + $0x58] sm:$0xff]
      %v3994 = vld [vmem:[%s5 + $0x60] sm:$0xff]
      %v3995 = vld [vmem:[%s5 + $0x68] sm:$0xff]
      %v3996 = vld [vmem:[%s5 + $0x70] sm:$0xff]
      %v3997 = vld [vmem:[%s5 + $0x78] sm:$0xff]
      %v3998 = vld [vmem:[#allocation3 + $0x1] sm:$0xff]
      %v3999 = vld [vmem:[#allocation3 + $0x9] sm:$0xff]
      %v4000 = vld [vmem:[#allocation3 + $0x11] sm:$0xff]
      %s4001 = scalar_lea.vmem %s5, 128
      %v4002 = vld [vmem:[%s4001] sm:$0xff]
      %v4003 = vld [vmem:[%s4001 + $0x8] sm:$0xff]
      %v4004 = vld [vmem:[%s4001 + $0x10] sm:$0xff]
      %v4005 = vld [vmem:[%s4001 + $0x18] sm:$0xff]
      %v4006 = vld [vmem:[%s4001 + $0x20] sm:$0xff]
      %v4007 = vld [vmem:[%s4001 + $0x28] sm:$0xff]
      %v4008 = vld [vmem:[%s4001 + $0x30] sm:$0xff]
      %v4009 = vld [vmem:[%s4001 + $0x38] sm:$0xff]
      %v4010 = vld [vmem:[%s4001 + $0x40] sm:$0xff]
      %v4011 = vld [vmem:[%s4001 + $0x48] sm:$0xff]
      %v4012 = vld [vmem:[%s4001 + $0x50] sm:$0xff]
      %v4013 = vld [vmem:[%s4001 + $0x58] sm:$0xff]
      %v4014 = vld [vmem:[%s4001 + $0x60] sm:$0xff]
      %v4015 = vld [vmem:[%s4001 + $0x68] sm:$0xff]
      %v4016 = vld [vmem:[%s4001 + $0x70] sm:$0xff]
      %v4017 = vld [vmem:[%s4001 + $0x78] sm:$0xff]
      %4018 = vmatpush.msra.mxu0 %v4017
      %4019 = vmatpush.msra.mxu0 %v4016
      %4020 = vmatpush.msra.mxu0 %v4015
      %4021 = vmatpush.msra.mxu0 %v4014
      %4022 = vmatpush.msra.mxu0 %v4013
      %4023 = vmatpush.msra.mxu0 %v4012
      %4024 = vmatpush.msra.mxu0 %v4011
      %4025 = vmatpush.msra.mxu0 %v4010
      %4026 = vmatpush.msra.mxu0 %v4009
      %4027 = vmatpush.msra.mxu0 %v4008
      %4028 = vmatpush.msra.mxu0 %v4007
      %4029 = vmatpush.msra.mxu0 %v4006
      %4030 = vmatpush.msra.mxu0 %v4005
      %4031 = vmatpush.msra.mxu0 %v4004
      %4032 = vmatpush.msra.mxu0 %v4003
      %4033 = vmatpush.msra.mxu0 %v4002
      %4034 = vmatmul.f32.gmra.mxu0 %v3998
      %v4035 = vpop.f32.mrf.mxu0
      %v4036 = vadd.f32 0.0, %v4035
      %4037 = vmatmul.f32.gmra.mxu0 %v3999
      %v4038 = vpop.f32.mrf.mxu0
      %v4039 = vadd.f32 0.0, %v4038
      %4040 = vmatmul.f32.gmra.mxu0 %v4000
      %v4041 = vpop.f32.mrf.mxu0
      %v4042 = vadd.f32 0.0, %v4041
      %4043 = vdwg.mxu0
      %4044 = vmatpush.msra.mxu0 %v3997
      %4045 = vmatpush.msra.mxu0 %v3996
      %4046 = vmatpush.msra.mxu0 %v3995
      %4047 = vmatpush.msra.mxu0 %v3994
      %4048 = vmatpush.msra.mxu0 %v3993
      %4049 = vmatpush.msra.mxu0 %v3992
      %4050 = vmatpush.msra.mxu0 %v3991
      %4051 = vmatpush.msra.mxu0 %v3990
      %4052 = vmatpush.msra.mxu0 %v3989
      %4053 = vmatpush.msra.mxu0 %v3988
      %4054 = vmatpush.msra.mxu0 %v3987
      %4055 = vmatpush.msra.mxu0 %v3986
      %4056 = vmatpush.msra.mxu0 %v3985
      %4057 = vmatpush.msra.mxu0 %v3984
      %4058 = vmatpush.msra.mxu0 %v3983
      %4059 = vmatpush.msra.mxu0 %v3982
      %4060 = vmatmul.f32.gmra.mxu0 %v3979
      %v4061 = vpop.f32.mrf.mxu0
      %v4062 = vadd.f32 %v4036, %v4061
      %4063 = vmatmul.f32.gmra.mxu0 %v3980
      %v4064 = vpop.f32.mrf.mxu0
      %v4065 = vadd.f32 %v4039, %v4064
      %4066 = vmatmul.f32.gmra.mxu0 %v3981
      %v4067 = vpop.f32.mrf.mxu0
      %v4068 = vadd.f32 %v4042, %v4067
      %4069 = vdwg.mxu0
      %v4070 = vld [vmem:[#allocation3 + $0x2] sm:$0xff]
      %v4071 = vld [vmem:[#allocation3 + $0xa] sm:$0xff]
      %v4072 = vld [vmem:[#allocation3 + $0x12] sm:$0xff]
      %s4073 = scalar_lea.vmem %s5, 256
      %v4074 = vld [vmem:[%s4073] sm:$0xff]
      %v4075 = vld [vmem:[%s4073 + $0x8] sm:$0xff]
      %v4076 = vld [vmem:[%s4073 + $0x10] sm:$0xff]
      %v4077 = vld [vmem:[%s4073 + $0x18] sm:$0xff]
      %v4078 = vld [vmem:[%s4073 + $0x20] sm:$0xff]
      %v4079 = vld [vmem:[%s4073 + $0x28] sm:$0xff]
      %v4080 = vld [vmem:[%s4073 + $0x30] sm:$0xff]
      %v4081 = vld [vmem:[%s4073 + $0x38] sm:$0xff]
      %v4082 = vld [vmem:[%s4073 + $0x40] sm:$0xff]
      %v4083 = vld [vmem:[%s4073 + $0x48] sm:$0xff]
      %v4084 = vld [vmem:[%s4073 + $0x50] sm:$0xff]
      %v4085 = vld [vmem:[%s4073 + $0x58] sm:$0xff]
      %v4086 = vld [vmem:[%s4073 + $0x60] sm:$0xff]
      %v4087 = vld [vmem:[%s4073 + $0x68] sm:$0xff]
      %v4088 = vld [vmem:[%s4073 + $0x70] sm:$0xff]
      %v4089 = vld [vmem:[%s4073 + $0x78] sm:$0xff]
      %4090 = vmatpush.msra.mxu0 %v4089
      %4091 = vmatpush.msra.mxu0 %v4088
      %4092 = vmatpush.msra.mxu0 %v4087
      %4093 = vmatpush.msra.mxu0 %v4086
      %4094 = vmatpush.msra.mxu0 %v4085
      %4095 = vmatpush.msra.mxu0 %v4084
      %4096 = vmatpush.msra.mxu0 %v4083
      %4097 = vmatpush.msra.mxu0 %v4082
      %4098 = vmatpush.msra.mxu0 %v4081
      %4099 = vmatpush.msra.mxu0 %v4080
      %4100 = vmatpush.msra.mxu0 %v4079
      %4101 = vmatpush.msra.mxu0 %v4078
      %4102 = vmatpush.msra.mxu0 %v4077
      %4103 = vmatpush.msra.mxu0 %v4076
      %4104 = vmatpush.msra.mxu0 %v4075
      %4105 = vmatpush.msra.mxu0 %v4074
      %4106 = vmatmul.f32.gmra.mxu0 %v4070
      %v4107 = vpop.f32.mrf.mxu0
      %v4108 = vadd.f32 0.0, %v4107
      %4109 = vmatmul.f32.gmra.mxu0 %v4071
      %v4110 = vpop.f32.mrf.mxu0
      %v4111 = vadd.f32 0.0, %v4110
      %4112 = vmatmul.f32.gmra.mxu0 %v4072
      %v4113 = vpop.f32.mrf.mxu0
      %v4114 = vadd.f32 0.0, %v4113
      %4115 = vdwg.mxu0
      %v4116 = vadd.f32 %v4062, %v4108
      %v4117 = vadd.f32 %v4065, %v4111
      %v4118 = vadd.f32 %v4068, %v4114
      %v4119 = vld [vmem:[#allocation3 + $0x6] sm:$0xff]
      %v4120 = vld [vmem:[#allocation3 + $0xe] sm:$0xff]
      %v4121 = vld [vmem:[#allocation3 + $0x16] sm:$0xff]
      %s4122 = scalar_lea.vmem %s5, 384
      %v4123 = vld [vmem:[%s4122] sm:$0xff]
      %v4124 = vld [vmem:[%s4122 + $0x8] sm:$0xff]
      %v4125 = vld [vmem:[%s4122 + $0x10] sm:$0xff]
      %v4126 = vld [vmem:[%s4122 + $0x18] sm:$0xff]
      %v4127 = vld [vmem:[%s4122 + $0x20] sm:$0xff]
      %v4128 = vld [vmem:[%s4122 + $0x28] sm:$0xff]
      %v4129 = vld [vmem:[%s4122 + $0x30] sm:$0xff]
      %v4130 = vld [vmem:[%s4122 + $0x38] sm:$0xff]
      %v4131 = vld [vmem:[%s4122 + $0x40] sm:$0xff]
      %v4132 = vld [vmem:[%s4122 + $0x48] sm:$0xff]
      %v4133 = vld [vmem:[%s4122 + $0x50] sm:$0xff]
      %v4134 = vld [vmem:[%s4122 + $0x58] sm:$0xff]
      %v4135 = vld [vmem:[%s4122 + $0x60] sm:$0xff]
      %v4136 = vld [vmem:[%s4122 + $0x68] sm:$0xff]
      %v4137 = vld [vmem:[%s4122 + $0x70] sm:$0xff]
      %v4138 = vld [vmem:[%s4122 + $0x78] sm:$0xff]
      %4139 = vmatpush.msra.mxu0 %v4138
      %4140 = vmatpush.msra.mxu0 %v4137
      %4141 = vmatpush.msra.mxu0 %v4136
      %4142 = vmatpush.msra.mxu0 %v4135
      %4143 = vmatpush.msra.mxu0 %v4134
      %4144 = vmatpush.msra.mxu0 %v4133
      %4145 = vmatpush.msra.mxu0 %v4132
      %4146 = vmatpush.msra.mxu0 %v4131
      %4147 = vmatpush.msra.mxu0 %v4130
      %4148 = vmatpush.msra.mxu0 %v4129
      %4149 = vmatpush.msra.mxu0 %v4128
      %4150 = vmatpush.msra.mxu0 %v4127
      %4151 = vmatpush.msra.mxu0 %v4126
      %4152 = vmatpush.msra.mxu0 %v4125
      %4153 = vmatpush.msra.mxu0 %v4124
      %4154 = vmatpush.msra.mxu0 %v4123
      %4155 = vmatmul.f32.gmra.mxu0 %v4119
      %v4156 = vpop.f32.mrf.mxu0
      %v4157 = vadd.f32 0.0, %v4156
      %4158 = vmatmul.f32.gmra.mxu0 %v4120
      %v4159 = vpop.f32.mrf.mxu0
      %v4160 = vadd.f32 0.0, %v4159
      %4161 = vmatmul.f32.gmra.mxu0 %v4121
      %v4162 = vpop.f32.mrf.mxu0
      %v4163 = vadd.f32 0.0, %v4162
      %4164 = vdwg.mxu0
      %v4165 = vadd.f32 %v4116, %v4157
      %v4166 = vadd.f32 %v4117, %v4160
      %v4167 = vadd.f32 %v4118, %v4163
      %v4168 = vld [vmem:[#allocation3 + $0x7] sm:$0xff]
      %v4169 = vld [vmem:[#allocation3 + $0xf] sm:$0xff]
      %v4170 = vld [vmem:[#allocation3 + $0x17] sm:$0xff]
      %s4171 = scalar_lea.vmem %s5, 512
      %v4172 = vld [vmem:[%s4171] sm:$0xff]
      %v4173 = vld [vmem:[%s4171 + $0x8] sm:$0xff]
      %v4174 = vld [vmem:[%s4171 + $0x10] sm:$0xff]
      %v4175 = vld [vmem:[%s4171 + $0x18] sm:$0xff]
      %v4176 = vld [vmem:[%s4171 + $0x20] sm:$0xff]
      %v4177 = vld [vmem:[%s4171 + $0x28] sm:$0xff]
      %v4178 = vld [vmem:[%s4171 + $0x30] sm:$0xff]
      %v4179 = vld [vmem:[%s4171 + $0x38] sm:$0xff]
      %v4180 = vld [vmem:[%s4171 + $0x40] sm:$0xff]
      %v4181 = vld [vmem:[%s4171 + $0x48] sm:$0xff]
      %v4182 = vld [vmem:[%s4171 + $0x50] sm:$0xff]
      %v4183 = vld [vmem:[%s4171 + $0x58] sm:$0xff]
      %v4184 = vld [vmem:[%s4171 + $0x60] sm:$0xff]
      %v4185 = vld [vmem:[%s4171 + $0x68] sm:$0xff]
      %v4186 = vld [vmem:[%s4171 + $0x70] sm:$0xff]
      %v4187 = vld [vmem:[%s4171 + $0x78] sm:$0xff]
      %4188 = vmatpush.msra.mxu0 %v4187
      %4189 = vmatpush.msra.mxu0 %v4186
      %4190 = vmatpush.msra.mxu0 %v4185
      %4191 = vmatpush.msra.mxu0 %v4184
      %4192 = vmatpush.msra.mxu0 %v4183
      %4193 = vmatpush.msra.mxu0 %v4182
      %4194 = vmatpush.msra.mxu0 %v4181
      %4195 = vmatpush.msra.mxu0 %v4180
      %4196 = vmatpush.msra.mxu0 %v4179
      %4197 = vmatpush.msra.mxu0 %v4178
      %4198 = vmatpush.msra.mxu0 %v4177
      %4199 = vmatpush.msra.mxu0 %v4176
      %4200 = vmatpush.msra.mxu0 %v4175
      %4201 = vmatpush.msra.mxu0 %v4174
      %4202 = vmatpush.msra.mxu0 %v4173
      %4203 = vmatpush.msra.mxu0 %v4172
      %4204 = vmatmul.f32.gmra.mxu0 %v4168
      %v4205 = vpop.f32.mrf.mxu0
      %v4206 = vadd.f32 0.0, %v4205
      %4207 = vmatmul.f32.gmra.mxu0 %v4169
      %v4208 = vpop.f32.mrf.mxu0
      %v4209 = vadd.f32 0.0, %v4208
      %4210 = vmatmul.f32.gmra.mxu0 %v4170
      %v4211 = vpop.f32.mrf.mxu0
      %v4212 = vadd.f32 0.0, %v4211
      %4213 = vdwg.mxu0
      %v4214 = vadd.f32 %v4165, %v4206
      %v4215 = vadd.f32 %v4166, %v4209
      %v4216 = vadd.f32 %v4167, %v4212
      %v4217 = vld [vmem:[#allocation3 + $0x8] sm:$0xff]
      %v4218 = vld [vmem:[#allocation3 + $0x10] sm:$0xff]
      %v4219 = vld [vmem:[#allocation3 + $0x18] sm:$0xff]
      %s4220 = scalar_lea.vmem %s5, 640
      %v4221 = vld [vmem:[%s4220] sm:$0xff]
      %v4222 = vld [vmem:[%s4220 + $0x8] sm:$0xff]
      %v4223 = vld [vmem:[%s4220 + $0x10] sm:$0xff]
      %v4224 = vld [vmem:[%s4220 + $0x18] sm:$0xff]
      %v4225 = vld [vmem:[%s4220 + $0x20] sm:$0xff]
      %v4226 = vld [vmem:[%s4220 + $0x28] sm:$0xff]
      %v4227 = vld [vmem:[%s4220 + $0x30] sm:$0xff]
      %v4228 = vld [vmem:[%s4220 + $0x38] sm:$0xff]
      %v4229 = vld [vmem:[%s4220 + $0x40] sm:$0xff]
      %v4230 = vld [vmem:[%s4220 + $0x48] sm:$0xff]
      %v4231 = vld [vmem:[%s4220 + $0x50] sm:$0xff]
      %v4232 = vld [vmem:[%s4220 + $0x58] sm:$0xff]
      %v4233 = vld [vmem:[%s4220 + $0x60] sm:$0xff]
      %v4234 = vld [vmem:[%s4220 + $0x68] sm:$0xff]
      %v4235 = vld [vmem:[%s4220 + $0x70] sm:$0xff]
      %v4236 = vld [vmem:[%s4220 + $0x78] sm:$0xff]
      %4237 = vmatpush.msra.mxu0 %v4236
      %4238 = vmatpush.msra.mxu0 %v4235
      %4239 = vmatpush.msra.mxu0 %v4234
      %4240 = vmatpush.msra.mxu0 %v4233
      %4241 = vmatpush.msra.mxu0 %v4232
      %4242 = vmatpush.msra.mxu0 %v4231
      %4243 = vmatpush.msra.mxu0 %v4230
      %4244 = vmatpush.msra.mxu0 %v4229
      %4245 = vmatpush.msra.mxu0 %v4228
      %4246 = vmatpush.msra.mxu0 %v4227
      %4247 = vmatpush.msra.mxu0 %v4226
      %4248 = vmatpush.msra.mxu0 %v4225
      %4249 = vmatpush.msra.mxu0 %v4224
      %4250 = vmatpush.msra.mxu0 %v4223
      %4251 = vmatpush.msra.mxu0 %v4222
      %4252 = vmatpush.msra.mxu0 %v4221
      %4253 = vmatmul.f32.gmra.mxu0 %v4217
      %v4254 = vpop.f32.mrf.mxu0
      %v4255 = vadd.f32 0.0, %v4254
      %4256 = vmatmul.f32.gmra.mxu0 %v4218
      %v4257 = vpop.f32.mrf.mxu0
      %v4258 = vadd.f32 0.0, %v4257
      %4259 = vmatmul.f32.gmra.mxu0 %v4219
      %v4260 = vpop.f32.mrf.mxu0
      %v4261 = vadd.f32 0.0, %v4260
      %4262 = vdwg.mxu0
      %v4263 = vadd.f32 %v4214, %v4255
      %v4264 = vadd.f32 %v4215, %v4258
      %v4265 = vadd.f32 %v4216, %v4261
      %v4266 = vld [vmem:[#allocation3 + $0xc] sm:$0xff]
      %v4267 = vld [vmem:[#allocation3 + $0x14] sm:$0xff]
      %v4268 = vld [vmem:[#allocation3 + $0x1c] sm:$0xff]
      %s4269 = scalar_lea.vmem %s5, 768
      %v4270 = vld [vmem:[%s4269] sm:$0xff]
      %v4271 = vld [vmem:[%s4269 + $0x8] sm:$0xff]
      %v4272 = vld [vmem:[%s4269 + $0x10] sm:$0xff]
      %v4273 = vld [vmem:[%s4269 + $0x18] sm:$0xff]
      %v4274 = vld [vmem:[%s4269 + $0x20] sm:$0xff]
      %v4275 = vld [vmem:[%s4269 + $0x28] sm:$0xff]
      %v4276 = vld [vmem:[%s4269 + $0x30] sm:$0xff]
      %v4277 = vld [vmem:[%s4269 + $0x38] sm:$0xff]
      %v4278 = vld [vmem:[%s4269 + $0x40] sm:$0xff]
      %v4279 = vld [vmem:[%s4269 + $0x48] sm:$0xff]
      %v4280 = vld [vmem:[%s4269 + $0x50] sm:$0xff]
      %v4281 = vld [vmem:[%s4269 + $0x58] sm:$0xff]
      %v4282 = vld [vmem:[%s4269 + $0x60] sm:$0xff]
      %v4283 = vld [vmem:[%s4269 + $0x68] sm:$0xff]
      %v4284 = vld [vmem:[%s4269 + $0x70] sm:$0xff]
      %v4285 = vld [vmem:[%s4269 + $0x78] sm:$0xff]
      %4286 = vmatpush.msra.mxu0 %v4285
      %4287 = vmatpush.msra.mxu0 %v4284
      %4288 = vmatpush.msra.mxu0 %v4283
      %4289 = vmatpush.msra.mxu0 %v4282
      %4290 = vmatpush.msra.mxu0 %v4281
      %4291 = vmatpush.msra.mxu0 %v4280
      %4292 = vmatpush.msra.mxu0 %v4279
      %4293 = vmatpush.msra.mxu0 %v4278
      %4294 = vmatpush.msra.mxu0 %v4277
      %4295 = vmatpush.msra.mxu0 %v4276
      %4296 = vmatpush.msra.mxu0 %v4275
      %4297 = vmatpush.msra.mxu0 %v4274
      %4298 = vmatpush.msra.mxu0 %v4273
      %4299 = vmatpush.msra.mxu0 %v4272
      %4300 = vmatpush.msra.mxu0 %v4271
      %4301 = vmatpush.msra.mxu0 %v4270
      %4302 = vmatmul.f32.gmra.mxu0 %v4266
      %v4303 = vpop.f32.mrf.mxu0
      %v4304 = vadd.f32 0.0, %v4303
      %4305 = vmatmul.f32.gmra.mxu0 %v4267
      %v4306 = vpop.f32.mrf.mxu0
      %v4307 = vadd.f32 0.0, %v4306
      %4308 = vmatmul.f32.gmra.mxu0 %v4268
      %v4309 = vpop.f32.mrf.mxu0
      %v4310 = vadd.f32 0.0, %v4309
      %4311 = vdwg.mxu0
      %v4312 = vadd.f32 %v4263, %v4304
      %v4313 = vadd.f32 %v4264, %v4307
      %v4314 = vadd.f32 %v4265, %v4310
      %v4315 = vld [vmem:[#allocation3 + $0xd] sm:$0xff]
      %v4316 = vld [vmem:[#allocation3 + $0x15] sm:$0xff]
      %v4317 = vld [vmem:[#allocation3 + $0x1d] sm:$0xff]
      %s4318 = scalar_lea.vmem %s5, 896
      %v4319 = vld [vmem:[%s4318] sm:$0xff]
      %v4320 = vld [vmem:[%s4318 + $0x8] sm:$0xff]
      %v4321 = vld [vmem:[%s4318 + $0x10] sm:$0xff]
      %v4322 = vld [vmem:[%s4318 + $0x18] sm:$0xff]
      %v4323 = vld [vmem:[%s4318 + $0x20] sm:$0xff]
      %v4324 = vld [vmem:[%s4318 + $0x28] sm:$0xff]
      %v4325 = vld [vmem:[%s4318 + $0x30] sm:$0xff]
      %v4326 = vld [vmem:[%s4318 + $0x38] sm:$0xff]
      %v4327 = vld [vmem:[%s4318 + $0x40] sm:$0xff]
      %v4328 = vld [vmem:[%s4318 + $0x48] sm:$0xff]
      %v4329 = vld [vmem:[%s4318 + $0x50] sm:$0xff]
      %v4330 = vld [vmem:[%s4318 + $0x58] sm:$0xff]
      %v4331 = vld [vmem:[%s4318 + $0x60] sm:$0xff]
      %v4332 = vld [vmem:[%s4318 + $0x68] sm:$0xff]
      %v4333 = vld [vmem:[%s4318 + $0x70] sm:$0xff]
      %v4334 = vld [vmem:[%s4318 + $0x78] sm:$0xff]
      %4335 = vmatpush.msra.mxu0 %v4334
      %4336 = vmatpush.msra.mxu0 %v4333
      %4337 = vmatpush.msra.mxu0 %v4332
      %4338 = vmatpush.msra.mxu0 %v4331
      %4339 = vmatpush.msra.mxu0 %v4330
      %4340 = vmatpush.msra.mxu0 %v4329
      %4341 = vmatpush.msra.mxu0 %v4328
      %4342 = vmatpush.msra.mxu0 %v4327
      %4343 = vmatpush.msra.mxu0 %v4326
      %4344 = vmatpush.msra.mxu0 %v4325
      %4345 = vmatpush.msra.mxu0 %v4324
      %4346 = vmatpush.msra.mxu0 %v4323
      %4347 = vmatpush.msra.mxu0 %v4322
      %4348 = vmatpush.msra.mxu0 %v4321
      %4349 = vmatpush.msra.mxu0 %v4320
      %4350 = vmatpush.msra.mxu0 %v4319
      %4351 = vmatmul.f32.gmra.mxu0 %v4315
      %v4352 = vpop.f32.mrf.mxu0
      %v4353 = vadd.f32 0.0, %v4352
      %4354 = vmatmul.f32.gmra.mxu0 %v4316
      %v4355 = vpop.f32.mrf.mxu0
      %v4356 = vadd.f32 0.0, %v4355
      %4357 = vmatmul.f32.gmra.mxu0 %v4317
      %v4358 = vpop.f32.mrf.mxu0
      %v4359 = vadd.f32 0.0, %v4358
      %4360 = vdwg.mxu0
      %v4361 = vadd.f32 %v4312, %v4353
      %v4362 = vadd.f32 %v4313, %v4356
      %v4363 = vadd.f32 %v4314, %v4359
      %v4364 = vld [vmem:[#allocation3 + $0xe] sm:$0xff]
      %v4365 = vld [vmem:[#allocation3 + $0x16] sm:$0xff]
      %v4366 = vld [vmem:[#allocation3 + $0x1e] sm:$0xff]
      %s4367 = scalar_lea.vmem %s5, 1024
      %v4368 = vld [vmem:[%s4367] sm:$0xff]
      %v4369 = vld [vmem:[%s4367 + $0x8] sm:$0xff]
      %v4370 = vld [vmem:[%s4367 + $0x10] sm:$0xff]
      %v4371 = vld [vmem:[%s4367 + $0x18] sm:$0xff]
      %v4372 = vld [vmem:[%s4367 + $0x20] sm:$0xff]
      %v4373 = vld [vmem:[%s4367 + $0x28] sm:$0xff]
      %v4374 = vld [vmem:[%s4367 + $0x30] sm:$0xff]
      %v4375 = vld [vmem:[%s4367 + $0x38] sm:$0xff]
      %v4376 = vld [vmem:[%s4367 + $0x40] sm:$0xff]
      %v4377 = vld [vmem:[%s4367 + $0x48] sm:$0xff]
      %v4378 = vld [vmem:[%s4367 + $0x50] sm:$0xff]
      %v4379 = vld [vmem:[%s4367 + $0x58] sm:$0xff]
      %v4380 = vld [vmem:[%s4367 + $0x60] sm:$0xff]
      %v4381 = vld [vmem:[%s4367 + $0x68] sm:$0xff]
      %v4382 = vld [vmem:[%s4367 + $0x70] sm:$0xff]
      %v4383 = vld [vmem:[%s4367 + $0x78] sm:$0xff]
      %4384 = vmatpush.msra.mxu0 %v4383
      %4385 = vmatpush.msra.mxu0 %v4382
      %4386 = vmatpush.msra.mxu0 %v4381
      %4387 = vmatpush.msra.mxu0 %v4380
      %4388 = vmatpush.msra.mxu0 %v4379
      %4389 = vmatpush.msra.mxu0 %v4378
      %4390 = vmatpush.msra.mxu0 %v4377
      %4391 = vmatpush.msra.mxu0 %v4376
      %4392 = vmatpush.msra.mxu0 %v4375
      %4393 = vmatpush.msra.mxu0 %v4374
      %4394 = vmatpush.msra.mxu0 %v4373
      %4395 = vmatpush.msra.mxu0 %v4372
      %4396 = vmatpush.msra.mxu0 %v4371
      %4397 = vmatpush.msra.mxu0 %v4370
      %4398 = vmatpush.msra.mxu0 %v4369
      %4399 = vmatpush.msra.mxu0 %v4368
      %4400 = vmatmul.f32.gmra.mxu0 %v4364
      %v4401 = vpop.f32.mrf.mxu0
      %v4402 = vadd.f32 0.0, %v4401
      %4403 = vmatmul.f32.gmra.mxu0 %v4365
      %v4404 = vpop.f32.mrf.mxu0
      %v4405 = vadd.f32 0.0, %v4404
      %4406 = vmatmul.f32.gmra.mxu0 %v4366
      %v4407 = vpop.f32.mrf.mxu0
      %v4408 = vadd.f32 0.0, %v4407
      %4409 = vdwg.mxu0
      %v4410 = vadd.f32 %v4361, %v4402
      %v4411 = vadd.f32 %v4362, %v4405
      %v4412 = vadd.f32 %v4363, %v4408
      %v4416 = vrot.slane %v4410, 1
      %v4417 = vrot.slane %v4411, 1
      %v4418 = vsel %vm143, %v4416, %v4417
      %v4419 = vrot.slane %v4412, 1
      %v4420 = vsel %vm143, %v4417, %v4419
      %v4424 = vmax.f32 %v4410, %v4418
      %v4425 = vmax.f32 %v4411, %v4420
      %v4426 = vmax.f32 %v4412, %v4419
      %vm4430 = vcmask 1041408
      %v4431 = vrot.slane %v4424, 6
      %v4432 = vrot.slane %v4425, 6
      %v4433 = vsel %vm4430, %v4431, %v4432
      %v4434 = vrot.slane %v4426, 6
      %v4435 = vsel %vm4430, %v4432, %v4434
      %v4438 = vmax.f32 %v4424, %v4433
      %v4439 = vmax.f32 %v4425, %v4435
      %v4441 = vperm.slane %v48, 0
      %v4443 = vadd.f32 %v4438, %v4441
      %v4444 = vadd.f32 %v4439, %v4441
      %v4445 = vmax.f32 %v4443, 0.0
      %v4446 = vmax.f32 %v4444, 0.0
      %s4447 = scalar_lea.vmem [#allocation6], %s50
      %4448 = vst [vmem:[%s4447] sm:$0x1] %v4445
      %s4449 = sadd.s32 %s50, 2
      %s4450 = scalar_lea.vmem [#allocation6], %s4449
      %4451 = vst [vmem:[%s4450 - $0x2] sm:$0x4] %v4445
      %s4452 = sadd.s32 %s50, 4
      %s4453 = scalar_lea.vmem [#allocation6], %s4452
      %4454 = vst [vmem:[%s4453 - $0x4] sm:$0x10] %v4446
      %s4455 = sadd.s32 %s50, 6
      %s4456 = scalar_lea.vmem [#allocation6], %s4455
      %4457 = vst [vmem:[%s4456 - $0x6] sm:$0x40] %v4446
    $region58: #{cnn_classifier_forward.1} parent=1 // loop_footer
      %s54 = sadd.s32 1, %s50
    $region59: #{cnn_classifier_forward.1} parent=1 // loop_footer_branch
      %49 = sbr.rel target = $region55
    $region60: #{cnn_classifier_forward.1} parent=1 // loop_exit
      _
    %v4458 = vld [vmem:[#allocation6] sm:$0x3]
    %v4459 = vld [vmem:[%s7] sm:$0xff]
    %v4460 = vld [vmem:[%s7 + $0x8] sm:$0xff]
    %v4461 = vld [vmem:[%s7 + $0x10] sm:$0xff]
    %v4462 = vld [vmem:[%s7 + $0x18] sm:$0xff]
    %v4463 = vld [vmem:[%s7 + $0x20] sm:$0xff]
    %v4464 = vld [vmem:[%s7 + $0x28] sm:$0xff]
    %v4465 = vld [vmem:[%s7 + $0x30] sm:$0xff]
    %v4466 = vld [vmem:[%s7 + $0x38] sm:$0xff]
    %v4467 = vld [vmem:[%s7 + $0x40] sm:$0xff]
    %v4468 = vld [vmem:[%s7 + $0x48] sm:$0xff]
    %v4469 = vld [vmem:[%s7 + $0x50] sm:$0xff]
    %v4470 = vld [vmem:[%s7 + $0x58] sm:$0xff]
    %v4471 = vld [vmem:[%s7 + $0x60] sm:$0xff]
    %v4472 = vld [vmem:[%s7 + $0x68] sm:$0xff]
    %v4473 = vld [vmem:[%s7 + $0x70] sm:$0xff]
    %v4474 = vld [vmem:[%s7 + $0x78] sm:$0xff]
    %s4475 = scalar_lea.vmem [#allocation6], 2
    %v4476 = vld [vmem:[%s4475] sm:$0x3]
    %s4477 = scalar_lea.vmem %s7, 128
    %v4478 = vld [vmem:[%s4477] sm:$0xff]
    %v4479 = vld [vmem:[%s4477 + $0x8] sm:$0xff]
    %v4480 = vld [vmem:[%s4477 + $0x10] sm:$0xff]
    %v4481 = vld [vmem:[%s4477 + $0x18] sm:$0xff]
    %v4482 = vld [vmem:[%s4477 + $0x20] sm:$0xff]
    %v4483 = vld [vmem:[%s4477 + $0x28] sm:$0xff]
    %v4484 = vld [vmem:[%s4477 + $0x30] sm:$0xff]
    %v4485 = vld [vmem:[%s4477 + $0x38] sm:$0xff]
    %v4486 = vld [vmem:[%s4477 + $0x40] sm:$0xff]
    %v4487 = vld [vmem:[%s4477 + $0x48] sm:$0xff]
    %v4488 = vld [vmem:[%s4477 + $0x50] sm:$0xff]
    %v4489 = vld [vmem:[%s4477 + $0x58] sm:$0xff]
    %v4490 = vld [vmem:[%s4477 + $0x60] sm:$0xff]
    %v4491 = vld [vmem:[%s4477 + $0x68] sm:$0xff]
    %v4492 = vld [vmem:[%s4477 + $0x70] sm:$0xff]
    %v4493 = vld [vmem:[%s4477 + $0x78] sm:$0xff]
    %4494 = vmatpush.msra.mxu0 %v4493
    %4495 = vmatpush.msra.mxu0 %v4492
    %4496 = vmatpush.msra.mxu0 %v4491
    %4497 = vmatpush.msra.mxu0 %v4490
    %4498 = vmatpush.msra.mxu0 %v4489
    %4499 = vmatpush.msra.mxu0 %v4488
    %4500 = vmatpush.msra.mxu0 %v4487
    %4501 = vmatpush.msra.mxu0 %v4486
    %4502 = vmatpush.msra.mxu0 %v4485
    %4503 = vmatpush.msra.mxu0 %v4484
    %4504 = vmatpush.msra.mxu0 %v4483
    %4505 = vmatpush.msra.mxu0 %v4482
    %4506 = vmatpush.msra.mxu0 %v4481
    %4507 = vmatpush.msra.mxu0 %v4480
    %4508 = vmatpush.msra.mxu0 %v4479
    %4509 = vmatpush.msra.mxu0 %v4478
    %4510 = vmatmul.f32.gmra.mxu0 %v4476
    %v4511 = vpop.f32.mrf.mxu0
    %v4512 = vadd.f32 0.0, %v4511
    %4513 = vdwg.mxu0
    %4514 = vmatpush.msra.mxu0 %v4474
    %4515 = vmatpush.msra.mxu0 %v4473
    %4516 = vmatpush.msra.mxu0 %v4472
    %4517 = vmatpush.msra.mxu0 %v4471
    %4518 = vmatpush.msra.mxu0 %v4470
    %4519 = vmatpush.msra.mxu0 %v4469
    %4520 = vmatpush.msra.mxu0 %v4468
    %4521 = vmatpush.msra.mxu0 %v4467
    %4522 = vmatpush.msra.mxu0 %v4466
    %4523 = vmatpush.msra.mxu0 %v4465
    %4524 = vmatpush.msra.mxu0 %v4464
    %4525 = vmatpush.msra.mxu0 %v4463
    %4526 = vmatpush.msra.mxu0 %v4462
    %4527 = vmatpush.msra.mxu0 %v4461
    %4528 = vmatpush.msra.mxu0 %v4460
    %4529 = vmatpush.msra.mxu0 %v4459
    %4530 = vmatmul.f32.gmra.mxu0 %v4458
    %v4531 = vpop.f32.mrf.mxu0
    %v4532 = vadd.f32 %v4512, %v4531
    %4533 = vdwg.mxu0
    %s4534 = scalar_lea.vmem [#allocation6], 4
    %v4535 = vld [vmem:[%s4534] sm:$0x3]
    %s4536 = scalar_lea.vmem %s7, 256
    %v4537 = vld [vmem:[%s4536] sm:$0xff]
    %v4538 = vld [vmem:[%s4536 + $0x8] sm:$0xff]
    %v4539 = vld [vmem:[%s4536 + $0x10] sm:$0xff]
    %v4540 = vld [vmem:[%s4536 + $0x18] sm:$0xff]
    %v4541 = vld [vmem:[%s4536 + $0x20] sm:$0xff]
    %v4542 = vld [vmem:[%s4536 + $0x28] sm:$0xff]
    %v4543 = vld [vmem:[%s4536 + $0x30] sm:$0xff]
    %v4544 = vld [vmem:[%s4536 + $0x38] sm:$0xff]
    %v4545 = vld [vmem:[%s4536 + $0x40] sm:$0xff]
    %v4546 = vld [vmem:[%s4536 + $0x48] sm:$0xff]
    %v4547 = vld [vmem:[%s4536 + $0x50] sm:$0xff]
    %v4548 = vld [vmem:[%s4536 + $0x58] sm:$0xff]
    %v4549 = vld [vmem:[%s4536 + $0x60] sm:$0xff]
    %v4550 = vld [vmem:[%s4536 + $0x68] sm:$0xff]
    %v4551 = vld [vmem:[%s4536 + $0x70] sm:$0xff]
    %v4552 = vld [vmem:[%s4536 + $0x78] sm:$0xff]
    %4553 = vmatpush.msra.mxu0 %v4552
    %4554 = vmatpush.msra.mxu0 %v4551
    %4555 = vmatpush.msra.mxu0 %v4550
    %4556 = vmatpush.msra.mxu0 %v4549
    %4557 = vmatpush.msra.mxu0 %v4548
    %4558 = vmatpush.msra.mxu0 %v4547
    %4559 = vmatpush.msra.mxu0 %v4546
    %4560 = vmatpush.msra.mxu0 %v4545
    %4561 = vmatpush.msra.mxu0 %v4544
    %4562 = vmatpush.msra.mxu0 %v4543
    %4563 = vmatpush.msra.mxu0 %v4542
    %4564 = vmatpush.msra.mxu0 %v4541
    %4565 = vmatpush.msra.mxu0 %v4540
    %4566 = vmatpush.msra.mxu0 %v4539
    %4567 = vmatpush.msra.mxu0 %v4538
    %4568 = vmatpush.msra.mxu0 %v4537
    %4569 = vmatmul.f32.gmra.mxu0 %v4535
    %v4570 = vpop.f32.mrf.mxu0
    %v4571 = vadd.f32 0.0, %v4570
    %4572 = vdwg.mxu0
    %v4573 = vadd.f32 %v4532, %v4571
    %s4574 = scalar_lea.vmem [#allocation6], 6
    %v4575 = vld [vmem:[%s4574] sm:$0x3]
    %s4576 = scalar_lea.vmem %s7, 384
    %v4577 = vld [vmem:[%s4576] sm:$0xff]
    %v4578 = vld [vmem:[%s4576 + $0x8] sm:$0xff]
    %v4579 = vld [vmem:[%s4576 + $0x10] sm:$0xff]
    %v4580 = vld [vmem:[%s4576 + $0x18] sm:$0xff]
    %v4581 = vld [vmem:[%s4576 + $0x20] sm:$0xff]
    %v4582 = vld [vmem:[%s4576 + $0x28] sm:$0xff]
    %v4583 = vld [vmem:[%s4576 + $0x30] sm:$0xff]
    %v4584 = vld [vmem:[%s4576 + $0x38] sm:$0xff]
    %v4585 = vld [vmem:[%s4576 + $0x40] sm:$0xff]
    %v4586 = vld [vmem:[%s4576 + $0x48] sm:$0xff]
    %v4587 = vld [vmem:[%s4576 + $0x50] sm:$0xff]
    %v4588 = vld [vmem:[%s4576 + $0x58] sm:$0xff]
    %v4589 = vld [vmem:[%s4576 + $0x60] sm:$0xff]
    %v4590 = vld [vmem:[%s4576 + $0x68] sm:$0xff]
    %v4591 = vld [vmem:[%s4576 + $0x70] sm:$0xff]
    %v4592 = vld [vmem:[%s4576 + $0x78] sm:$0xff]
    %4593 = vmatpush.msra.mxu0 %v4592
    %4594 = vmatpush.msra.mxu0 %v4591
    %4595 = vmatpush.msra.mxu0 %v4590
    %4596 = vmatpush.msra.mxu0 %v4589
    %4597 = vmatpush.msra.mxu0 %v4588
    %4598 = vmatpush.msra.mxu0 %v4587
    %4599 = vmatpush.msra.mxu0 %v4586
    %4600 = vmatpush.msra.mxu0 %v4585
    %4601 = vmatpush.msra.mxu0 %v4584
    %4602 = vmatpush.msra.mxu0 %v4583
    %4603 = vmatpush.msra.mxu0 %v4582
    %4604 = vmatpush.msra.mxu0 %v4581
    %4605 = vmatpush.msra.mxu0 %v4580
    %4606 = vmatpush.msra.mxu0 %v4579
    %4607 = vmatpush.msra.mxu0 %v4578
    %4608 = vmatpush.msra.mxu0 %v4577
    %4609 = vmatmul.f32.gmra.mxu0 %v4575
    %v4610 = vpop.f32.mrf.mxu0
    %v4611 = vadd.f32 0.0, %v4610
    %4612 = vdwg.mxu0
    %v4613 = vadd.f32 %v4573, %v4611
    %v4614 = vld [vmem:[%s8] sm:$0x1]
    %v4616 = vperm.slane %v4614, 0
    %v4618 = vadd.f32 %v4613, %v4616
    %v4619 = vmax.f32 %v4618, 0.0
    %v4620 = vld [vmem:[%s9] sm:$0xff]
    %v4621 = vld [vmem:[%s9 + $0x8] sm:$0xff]
    %v4622 = vld [vmem:[%s9 + $0x10] sm:$0xff]
    %v4623 = vld [vmem:[%s9 + $0x18] sm:$0xff]
    %v4624 = vld [vmem:[%s9 + $0x20] sm:$0xff]
    %v4625 = vld [vmem:[%s9 + $0x28] sm:$0xff]
    %v4626 = vld [vmem:[%s9 + $0x30] sm:$0xff]
    %v4627 = vld [vmem:[%s9 + $0x38] sm:$0xff]
    %v4628 = vld [vmem:[%s9 + $0x40] sm:$0xff]
    %v4629 = vld [vmem:[%s9 + $0x48] sm:$0xff]
    %v4630 = vld [vmem:[%s9 + $0x50] sm:$0xff]
    %v4631 = vld [vmem:[%s9 + $0x58] sm:$0xff]
    %v4632 = vld [vmem:[%s9 + $0x60] sm:$0xff]
    %v4633 = vld [vmem:[%s9 + $0x68] sm:$0xff]
    %v4634 = vld [vmem:[%s9 + $0x70] sm:$0xff]
    %v4635 = vld [vmem:[%s9 + $0x78] sm:$0xff]
    %v4636 = vld [vmem:[%s10] sm:$0x1]
    %v4638 = vperm.slane %v4636, 0
    %4640 = vmatpush.msra.mxu0 %v4635
    %4641 = vmatpush.msra.mxu0 %v4634
    %4642 = vmatpush.msra.mxu0 %v4633
    %4643 = vmatpush.msra.mxu0 %v4632
    %4644 = vmatpush.msra.mxu0 %v4631
    %4645 = vmatpush.msra.mxu0 %v4630
    %4646 = vmatpush.msra.mxu0 %v4629
    %4647 = vmatpush.msra.mxu0 %v4628
    %4648 = vmatpush.msra.mxu0 %v4627
    %4649 = vmatpush.msra.mxu0 %v4626
    %4650 = vmatpush.msra.mxu0 %v4625
    %4651 = vmatpush.msra.mxu0 %v4624
    %4652 = vmatpush.msra.mxu0 %v4623
    %4653 = vmatpush.msra.mxu0 %v4622
    %4654 = vmatpush.msra.mxu0 %v4621
    %4655 = vmatpush.msra.mxu0 %v4620
    %4656 = vmatmul.f32.gmra.mxu0 %v4619
    %v4657 = vpop.f32.mrf.mxu0
    %v4658 = vadd.f32 %v4638, %v4657
    %4659 = vdwg.mxu0
    %v4660 = vmax.f32 %v4658, 0.0
    %v4661 = vld [vmem:[%s11] sm:$0xff]
    %v4662 = vld [vmem:[%s11 + $0x8] sm:$0xff]
    %v4663 = vld [vmem:[%s11 + $0x10] sm:$0xff]
    %v4664 = vld [vmem:[%s11 + $0x18] sm:$0xff]
    %v4665 = vld [vmem:[%s11 + $0x20] sm:$0xff]
    %v4666 = vld [vmem:[%s11 + $0x28] sm:$0xff]
    %v4667 = vld [vmem:[%s11 + $0x30] sm:$0xff]
    %v4668 = vld [vmem:[%s11 + $0x38] sm:$0xff]
    %v4669 = vld [vmem:[%s11 + $0x40] sm:$0xff]
    %v4670 = vld [vmem:[%s11 + $0x48] sm:$0xff]
    %v4671 = vld [vmem:[%s11 + $0x50] sm:$0xff]
    %v4672 = vld [vmem:[%s11 + $0x58] sm:$0xff]
    %v4673 = vld [vmem:[%s11 + $0x60] sm:$0xff]
    %v4674 = vld [vmem:[%s11 + $0x68] sm:$0xff]
    %v4675 = vld [vmem:[%s11 + $0x70] sm:$0xff]
    %v4676 = vld [vmem:[%s11 + $0x78] sm:$0xff]
    %v4677 = vld [vmem:[%s12] sm:$0x1]
    %v4679 = vperm.slane %v4677, 0
    %4681 = vmatpush.msra.mxu0 %v4676
    %4682 = vmatpush.msra.mxu0 %v4675
    %4683 = vmatpush.msra.mxu0 %v4674
    %4684 = vmatpush.msra.mxu0 %v4673
    %4685 = vmatpush.msra.mxu0 %v4672
    %4686 = vmatpush.msra.mxu0 %v4671
    %4687 = vmatpush.msra.mxu0 %v4670
    %4688 = vmatpush.msra.mxu0 %v4669
    %4689 = vmatpush.msra.mxu0 %v4668
    %4690 = vmatpush.msra.mxu0 %v4667
    %4691 = vmatpush.msra.mxu0 %v4666
    %4692 = vmatpush.msra.mxu0 %v4665
    %4693 = vmatpush.msra.mxu0 %v4664
    %4694 = vmatpush.msra.mxu0 %v4663
    %4695 = vmatpush.msra.mxu0 %v4662
    %4696 = vmatpush.msra.mxu0 %v4661
    %4697 = vmatmul.f32.gmra.mxu0 %v4660
    %v4698 = vpop.f32.mrf.mxu0
    %v4699 = vadd.f32 %v4679, %v4698
    %4700 = vdwg.mxu0
    %vm4701 = vcmask 1041408
    %v4702 = vsel %vm4701, %v4699, -inf
    %4703 = vmax.xlane.f32.xlu0 %v4702
    %v4704 = vpop.xlane.xlu0 %4703
    %v4705 = vsub.f32 %v4699, %v4704
    %v4706 = vmul.f32 %v4705, 1.442695
    %v4707 = vpow.pop %v4706
    %v4708 = vsel %vm4701, %v4707, 0.0
    %4709 = vadd.xlane.f32.xlu0 %v4708
    %v4710 = vpop.xlane.xlu0 %4709
    %v4711 = vlog2.pop %v4710
    %v4712 = vmul.f32 %v4711, 0.6931472
    %v4713 = vsub.f32 %v4705, %v4712
    %4714 = vst [vmem:[#allocation7] sm:$0x3] %v4713
    // Predicated region
    $region61: #{cnn_classifier_forward.1} parent=1 // pred_check
      _
    $region62: #{cnn_classifier_forward.1} parent=1 // pred_check_branch
      %4716 = sbr.rel (0) target = $region64
    $region63: #{cnn_classifier_forward.1} parent=1 // pred_region
      %4718 = vsyncadd [#allocation8], 0
      %s4720 = sshll.u32 [#allocation7], 4
      %s4721 = int_to_ptr.vmem [resolvable:$true] %s4720
      %s4722 = sshll.u32 %s13, 4
      %s4723 = int_to_ptr.hbm [resolvable:$true] %s4722
      %4725 = dma.vmem_to_hbm [thread:$0]  %s4721, 32, %s4723, [#allocation8]
    $region64: #{cnn_classifier_forward.1} parent=1 // pred_fallthru
      _
    // Predicated region
    $region65: #{cnn_classifier_forward.1} parent=1 // pred_check
      _
    $region66: #{cnn_classifier_forward.1} parent=1 // pred_check_branch
      %4727 = sbr.rel (0) target = $region68
    $region67: #{cnn_classifier_forward.1} parent=1 // pred_region
      %4729 = dma.done [#allocation8], 32
    $region68: #{cnn_classifier_forward.1} parent=1 // pred_fallthru
      _
    %4730 = vsyncpa [#allocation8], 1

</llo_original>
